<compile_context>
chip_gen: v7x
topology: tpu7x:2x2x1
jax: 0.10.0
libtpu: 0.0.40
codegen_flags: <defaults>
</compile_context>

<pallas_src>
import numpy as np

import jax
import jax.numpy as jnp
from jax.experimental import pallas as pl
from jax.experimental.pallas import tpu as pltpu

_BN_EPS = 1e-5
_LANES = 128


# ---------------------------------------------------------------------------
# Host-side helpers: selection matrices + tap-concatenated weights
# ---------------------------------------------------------------------------

def _conv_selectors(n, lin, k, stride, pad, extra_1x1):
    """0/1 tap-selection matrices over the batch-flattened (N*L) row axis.

    g[t] @ x_flat gives the zero-padded, stride-`stride`, tap-`t`-shifted rows
    of the input, block-diagonal over the batch (batch folded into matmul M).
    If `extra_1x1`, g[k] is the selector of the kernel-1 / stride-`stride` /
    pad-0 downsample shortcut conv (same output length as the main conv).
    """
    lout = (lin + 2 * pad - k) // stride + 1
    taps = k + (1 if extra_1x1 else 0)
    g = np.zeros((taps, n * lout, n * lin), np.float32)
    for b in range(n):
        for j in range(lout):
            for t in range(k):
                src = j * stride + t - pad
                if 0 <= src < lin:
                    g[t, b * lout + j, b * lin + src] = 1.0
            if extra_1x1:
                g[k, b * lout + j, b * lin + j * stride] = 1.0
    return jnp.asarray(g), lout


def _tap_concat_weight(w, wd=None):
    """(K, Cin, Cout) [+ (Cin, Cout)] -> (Cin, K[+1]*Cout) bf16 MXU weight."""
    k, cin, cout = w.shape
    wc = jnp.transpose(w, (1, 0, 2)).reshape(cin, k * cout)
    if wd is not None:
        wc = jnp.concatenate([wc, wd], axis=1)
    return wc.astype(jnp.bfloat16)


# ---------------------------------------------------------------------------
# Parameters (deterministic, synthetic; BN folded into weights / bias)
# ---------------------------------------------------------------------------

def _bn_fold(key, c):
    k1, k2, k3, k4 = jax.random.split(key, 4)
    gamma = 1.0 + 0.1 * jax.random.normal(k1, (c,), jnp.float32)
    beta = 0.1 * jax.random.normal(k2, (c,), jnp.float32)
    mean = 0.1 * jax.random.normal(k3, (c,), jnp.float32)
    var = 1.0 + 0.1 * jax.random.uniform(k4, (c,), jnp.float32)
    scale = gamma / jnp.sqrt(var + _BN_EPS)
    bias = beta - mean * scale
    return scale, bias


def _conv_bn_params(key, k, cin, cout):
    kw, kb = jax.random.split(key)
    w = jax.random.normal(kw, (k, cin, cout), jnp.float32) / np.sqrt(k * cin)
    scale, bias = _bn_fold(kb, cout)
    return w * scale, bias.reshape(1, cout)      # BN scale folded into weight


def _block_params(key, cin, cout, stride):
    k1, k2, k3 = jax.random.split(key, 3)
    p = {"stride": stride, "cin": cin, "cout": cout}
    p["w1"], p["b1"] = _conv_bn_params(k1, 3, cin, cout)
    p["w2"], p["b2"] = _conv_bn_params(k2, 3, cout, cout)
    if stride != 1 or cin != cout:
        wd, bd = _conv_bn_params(k3, 1, cin, cout)
        p["wd"], p["bd"] = wd[0], bd             # (cin, cout), (1, cout)
    return p


def make_params(key, layers=(1, 1, 1, 1), num_classes=13):
    keys = jax.random.split(key, 7)
    params = {"num_classes": num_classes}
    params["stem_w"], params["stem_b"] = _conv_bn_params(keys[0], 7, 64, 64)
    widths, strides = (64, 128, 256, 512), (1, 2, 2, 2)
    in_c, blocks = 64, []
    for li, (w, s, nb) in enumerate(zip(widths, strides, layers)):
        lkeys = jax.random.split(keys[1 + li], nb)
        blocks.append(_block_params(lkeys[0], in_c, w, s))
        in_c = w
        for bi in range(1, nb):
            blocks.append(_block_params(lkeys[bi], w, w, 1))
    params["blocks"] = blocks
    params["fc_w"] = (jax.random.normal(keys[5], (512, num_classes), jnp.float32)
                      / np.sqrt(512.0))
    params["fc_b"] = 0.1 * jax.random.normal(keys[6], (num_classes,), jnp.float32)
    return params


# ---------------------------------------------------------------------------
# Fused forward: plan construction + single Pallas kernel
# ---------------------------------------------------------------------------

def build_fused_forward(params, n, l_in):
    """Returns (flat_operands, fused_pallas_call, num_classes)."""
    num_classes = params["num_classes"]
    cpad = ((num_classes + _LANES - 1) // _LANES) * _LANES

    flat = []

    def add(a):
        flat.append(a)
        return len(flat) - 1

    plan = {}
    l = l_in

    # Stem: Conv1d(64, 64, k=7, s=2, p=3, bias=False) + BN + ReLU.
    g, l = _conv_selectors(n, l, 7, 2, 3, False)
    plan["stem"] = dict(w=add(_tap_concat_weight(params["stem_w"])),
                        b=add(params["stem_b"].astype(jnp.float32)),
                        g=add(g), k=7, cout=64, bd=None, relu=True)

    # MaxPool1d(k=3, s=2, p=1).  Zero-fill padding is exact here because the
    # stem output is post-ReLU (non-negative), so a 0 candidate never wins.
    g, l = _conv_selectors(n, l, 3, 2, 1, False)
    plan["pool"] = dict(g=add(g))

    # Residual blocks (BasicBlock1D assumed, see TODO at top of file).
    blocks = []
    for bp in params["blocks"]:
        stride, cout, dual = bp["stride"], bp["cout"], "wd" in bp
        g1, l1 = _conv_selectors(n, l, 3, stride, 1, dual)
        conv1 = dict(w=add(_tap_concat_weight(bp["w1"], bp.get("wd"))),
                     b=add(bp["b1"].astype(jnp.float32)),
                     g=add(g1), k=3, cout=cout, relu=True,
                     bd=add(bp["bd"].astype(jnp.float32)) if dual else None)
        g2, l2 = _conv_selectors(n, l1, 3, 1, 1, False)
        conv2 = dict(w=add(_tap_concat_weight(bp["w2"])),
                     b=add(bp["b2"].astype(jnp.float32)),
                     g=add(g2), k=3, cout=cout, relu=True, bd=None)
        blocks.append(dict(conv1=conv1, conv2=conv2, dual=dual))
        l = l2
    plan["blocks"] = blocks

    # AdaptiveAvgPool1d(1): block-diagonal (N, N*L_final) averaging matrix.
    pavg = np.zeros((n, n * l), np.float32)
    for b in range(n):
        pavg[b, b * l:(b + 1) * l] = 1.0 / l
    plan["pavg"] = add(jnp.asarray(pavg))

    # FC, lane-padded to 128 output lanes so the single HBM store is lane-dense.
    fc_w = jnp.pad(params["fc_w"], ((0, 0), (0, cpad - num_classes)))
    fc_b = jnp.pad(params["fc_b"], (0, cpad - num_classes))
    plan["fc_w"] = add(fc_w.astype(jnp.bfloat16))
    plan["fc_b"] = add(fc_b.reshape(1, cpad).astype(jnp.float32))

    def kernel(*refs):
        x_ref, out_ref = refs[0], refs[-1]
        prefs = refs[1:-1]

        def conv(h, meta, residual=None):
            """Conv1d + folded-BN bias [+ residual] [+ ReLU] [+ fused 1x1 shortcut]."""
            k, cout = meta["k"], meta["cout"]
            gref = prefs[meta["g"]]
            # One fat bf16 MXU matmul over the tap-(+shortcut-)concatenated weight.
            z = jnp.dot(h.astype(jnp.bfloat16), prefs[meta["w"]][...],
                        preferred_element_type=jnp.float32)
            # Accumulator starts from the folded-BN bias (+ residual): no extra
            # zero-init / bias-add passes.
            acc = prefs[meta["b"]][...]
            if residual is not None:
                acc = acc + residual
            for t in range(k):                      # static, unrolled
                acc = acc + jnp.dot(gref[t], z[:, t * cout:(t + 1) * cout],
                                    preferred_element_type=jnp.float32)
            if meta["relu"]:
                acc = jnp.maximum(acc, 0.0)
            shortcut = None
            if meta["bd"] is not None:              # fused 1x1/stride shortcut
                shortcut = prefs[meta["bd"]][...] + jnp.dot(
                    gref[k], z[:, k * cout:(k + 1) * cout],
                    preferred_element_type=jnp.float32)
            return acc, shortcut

        # Stem conv + BN + ReLU (input already batch-flattened to (N*L, 64)).
        h, _ = conv(x_ref[...], plan["stem"])

        # MaxPool1d(3, 2, 1) via three selection matmuls + elementwise max.
        gref = prefs[plan["pool"]["g"]]
        h = jnp.maximum(
            jnp.maximum(
                jnp.dot(gref[0], h, preferred_element_type=jnp.float32),
                jnp.dot(gref[1], h, preferred_element_type=jnp.float32)),
            jnp.dot(gref[2], h, preferred_element_type=jnp.float32))

        # Residual blocks.
        for blk in plan["blocks"]:
            h1, sc = conv(h, blk["conv1"])
            h, _ = conv(h1, blk["conv2"],
                        residual=sc if blk["dual"] else h)

        # AdaptiveAvgPool1d(1) + Linear head, lane-dense (N, 128) output.
        pooled = jnp.dot(prefs[plan["pavg"]][...], h,
                         preferred_element_type=jnp.float32)
        logits = jnp.dot(pooled.astype(jnp.bfloat16), prefs[plan["fc_w"]][...],
                         preferred_element_type=jnp.float32)
        out_ref[...] = logits + prefs[plan["fc_b"]][...]

    call = pl.pallas_call(
        kernel,
        out_shape=jax.ShapeDtypeStruct((n, cpad), jnp.float32),
        compiler_params=pltpu.CompilerParams(vmem_limit_bytes=32 * 1024 * 1024),
    )
    return flat, call, num_classes


def resnet1d_forward(x, params):
    """x: (N, L, 64) channels-last (equivalent to the PyTorch pre-permute input)."""
    n, l, c = x.shape
    flat, call, num_classes = build_fused_forward(params, n, l)
    logits = call(x.reshape(n * l, c), *flat)     # reshape is free (no data move)
    return logits[:, :num_classes]


# ---------------------------------------------------------------------------
# Main
# ---------------------------------------------------------------------------

if __name__ == "__main__":
    key = jax.random.PRNGKey(0)
    k_param, k_x = jax.random.split(key)

    # ResNet1D(block=BasicBlock1D, layers=[1, 1, 1, 1], num_classes=13)
    params = make_params(k_param, layers=(1, 1, 1, 1), num_classes=13)

    # Input as the PyTorch forward expects pre-permute: (N, L, C=64)
    N, L, C = 2, 32, 64
    x = jax.random.normal(k_x, (N, L, C), jnp.float32)

    fwd = jax.jit(lambda inp: resnet1d_forward(inp, params))
    logits = jax.block_until_ready(fwd(x))
    assert logits.shape == (N, 13), logits.shape
    assert bool(jnp.all(jnp.isfinite(logits)))
    print("KERNEL_OK")
</pallas_src>

<mosaic_0001>
module attributes {stable_mosaic.version = 11 : i64} {
  func.func @kernel(%arg0: memref<64x64xf32, #tpu.memory_space<vmem>>, %arg1: memref<64x448xbf16, #tpu.memory_space<vmem>>, %arg2: memref<1x64xf32, #tpu.memory_space<vmem>>, %arg3: memref<7x32x64xf32, #tpu.memory_space<vmem>>, %arg4: memref<3x16x32xf32, #tpu.memory_space<vmem>>, %arg5: memref<64x192xbf16, #tpu.memory_space<vmem>>, %arg6: memref<1x64xf32, #tpu.memory_space<vmem>>, %arg7: memref<3x16x16xf32, #tpu.memory_space<vmem>>, %arg8: memref<64x192xbf16, #tpu.memory_space<vmem>>, %arg9: memref<1x64xf32, #tpu.memory_space<vmem>>, %arg10: memref<3x16x16xf32, #tpu.memory_space<vmem>>, %arg11: memref<64x512xbf16, #tpu.memory_space<vmem>>, %arg12: memref<1x128xf32, #tpu.memory_space<vmem>>, %arg13: memref<4x8x16xf32, #tpu.memory_space<vmem>>, %arg14: memref<1x128xf32, #tpu.memory_space<vmem>>, %arg15: memref<128x384xbf16, #tpu.memory_space<vmem>>, %arg16: memref<1x128xf32, #tpu.memory_space<vmem>>, %arg17: memref<3x8x8xf32, #tpu.memory_space<vmem>>, %arg18: memref<128x1024xbf16, #tpu.memory_space<vmem>>, %arg19: memref<1x256xf32, #tpu.memory_space<vmem>>, %arg20: memref<4x4x8xf32, #tpu.memory_space<vmem>>, %arg21: memref<1x256xf32, #tpu.memory_space<vmem>>, %arg22: memref<256x768xbf16, #tpu.memory_space<vmem>>, %arg23: memref<1x256xf32, #tpu.memory_space<vmem>>, %arg24: memref<3x4x4xf32, #tpu.memory_space<vmem>>, %arg25: memref<256x2048xbf16, #tpu.memory_space<vmem>>, %arg26: memref<1x512xf32, #tpu.memory_space<vmem>>, %arg27: memref<4x2x4xf32, #tpu.memory_space<vmem>>, %arg28: memref<1x512xf32, #tpu.memory_space<vmem>>, %arg29: memref<512x1536xbf16, #tpu.memory_space<vmem>>, %arg30: memref<1x512xf32, #tpu.memory_space<vmem>>, %arg31: memref<3x2x2xf32, #tpu.memory_space<vmem>>, %arg32: memref<2x2xf32, #tpu.memory_space<vmem>>, %arg33: memref<512x128xbf16, #tpu.memory_space<vmem>>, %arg34: memref<1x128xf32, #tpu.memory_space<vmem>>, %arg35: memref<2x128xf32, #tpu.memory_space<vmem>>) attributes {dimension_semantics = [], scalar_prefetch = 0 : i64, scratch_operands = 0 : i64, tpu.core_type = #tpu.core_type<tc>} {
    %c0 = arith.constant 0 : index
    %c0_0 = arith.constant 0 : index
    %0 = vector.load %arg0[%c0, %c0_0] : memref<64x64xf32, #tpu.memory_space<vmem>>, vector<64x64xf32>
    %1 = arith.truncf %0 : vector<64x64xf32> to vector<64x64xbf16>
    %c0_1 = arith.constant 0 : index
    %c0_2 = arith.constant 0 : index
    %2 = vector.load %arg1[%c0_1, %c0_2] : memref<64x448xbf16, #tpu.memory_space<vmem>>, vector<64x448xbf16>
    %cst = arith.constant dense<0.000000e+00> : vector<64x448xf32>
    %3 = tpu.matmul %1, %2, %cst {dimension_numbers = #tpu.dot_dimension_numbers<[1], [0], [0], [1], [0, 0, 1, 1], [], []>} : vector<64x64xbf16>, vector<64x448xbf16>, vector<64x448xf32> -> vector<64x448xf32>
    %c0_3 = arith.constant 0 : index
    %c0_4 = arith.constant 0 : index
    %4 = vector.load %arg2[%c0_3, %c0_4] : memref<1x64xf32, #tpu.memory_space<vmem>>, vector<1x64xf32>
    %c0_5 = arith.constant 0 : index
    %c0_6 = arith.constant 0 : index
    %c0_7 = arith.constant 0 : index
    %5 = vector.load %arg3[%c0_5, %c0_6, %c0_7] : memref<7x32x64xf32, #tpu.memory_space<vmem>>, vector<1x32x64xf32>
    %6 = vector.shape_cast %5 : vector<1x32x64xf32> to vector<32x64xf32>
    %7 = vector.extract_strided_slice %3 {offsets = [0, 0], sizes = [64, 64], strides = [1, 1]} : vector<64x448xf32> to vector<64x64xf32>
    %cst_8 = arith.constant dense<0.000000e+00> : vector<32x64xf32>
    %8 = tpu.matmul %6, %7, %cst_8 {dimension_numbers = #tpu.dot_dimension_numbers<[1], [0], [0], [1], [0, 0, 1, 1], [], []>} : vector<32x64xf32>, vector<64x64xf32>, vector<32x64xf32> -> vector<32x64xf32>
    %9 = vector.broadcast %4 : vector<1x64xf32> to vector<32x64xf32>
    %10 = arith.addf %9, %8 : vector<32x64xf32>
    %c1 = arith.constant 1 : index
    %c0_9 = arith.constant 0 : index
    %c0_10 = arith.constant 0 : index
    %11 = vector.load %arg3[%c1, %c0_9, %c0_10] : memref<7x32x64xf32, #tpu.memory_space<vmem>>, vector<1x32x64xf32>
    %12 = vector.shape_cast %11 : vector<1x32x64xf32> to vector<32x64xf32>
    %13 = vector.extract_strided_slice %3 {offsets = [0, 64], sizes = [64, 64], strides = [1, 1]} : vector<64x448xf32> to vector<64x64xf32>
    %cst_11 = arith.constant dense<0.000000e+00> : vector<32x64xf32>
    %14 = tpu.matmul %12, %13, %cst_11 {dimension_numbers = #tpu.dot_dimension_numbers<[1], [0], [0], [1], [0, 0, 1, 1], [], []>} : vector<32x64xf32>, vector<64x64xf32>, vector<32x64xf32> -> vector<32x64xf32>
    %15 = arith.addf %10, %14 : vector<32x64xf32>
    %c2 = arith.constant 2 : index
    %c0_12 = arith.constant 0 : index
    %c0_13 = arith.constant 0 : index
    %16 = vector.load %arg3[%c2, %c0_12, %c0_13] : memref<7x32x64xf32, #tpu.memory_space<vmem>>, vector<1x32x64xf32>
    %17 = vector.shape_cast %16 : vector<1x32x64xf32> to vector<32x64xf32>
    %18 = vector.extract_strided_slice %3 {offsets = [0, 128], sizes = [64, 64], strides = [1, 1]} : vector<64x448xf32> to vector<64x64xf32>
    %cst_14 = arith.constant dense<0.000000e+00> : vector<32x64xf32>
    %19 = tpu.matmul %17, %18, %cst_14 {dimension_numbers = #tpu.dot_dimension_numbers<[1], [0], [0], [1], [0, 0, 1, 1], [], []>} : vector<32x64xf32>, vector<64x64xf32>, vector<32x64xf32> -> vector<32x64xf32>
    %20 = arith.addf %15, %19 : vector<32x64xf32>
    %c3 = arith.constant 3 : index
    %c0_15 = arith.constant 0 : index
    %c0_16 = arith.constant 0 : index
    %21 = vector.load %arg3[%c3, %c0_15, %c0_16] : memref<7x32x64xf32, #tpu.memory_space<vmem>>, vector<1x32x64xf32>
    %22 = vector.shape_cast %21 : vector<1x32x64xf32> to vector<32x64xf32>
    %23 = vector.extract_strided_slice %3 {offsets = [0, 192], sizes = [64, 64], strides = [1, 1]} : vector<64x448xf32> to vector<64x64xf32>
    %cst_17 = arith.constant dense<0.000000e+00> : vector<32x64xf32>
    %24 = tpu.matmul %22, %23, %cst_17 {dimension_numbers = #tpu.dot_dimension_numbers<[1], [0], [0], [1], [0, 0, 1, 1], [], []>} : vector<32x64xf32>, vector<64x64xf32>, vector<32x64xf32> -> vector<32x64xf32>
    %25 = arith.addf %20, %24 : vector<32x64xf32>
    %c4 = arith.constant 4 : index
    %c0_18 = arith.constant 0 : index
    %c0_19 = arith.constant 0 : index
    %26 = vector.load %arg3[%c4, %c0_18, %c0_19] : memref<7x32x64xf32, #tpu.memory_space<vmem>>, vector<1x32x64xf32>
    %27 = vector.shape_cast %26 : vector<1x32x64xf32> to vector<32x64xf32>
    %28 = vector.extract_strided_slice %3 {offsets = [0, 256], sizes = [64, 64], strides = [1, 1]} : vector<64x448xf32> to vector<64x64xf32>
    %cst_20 = arith.constant dense<0.000000e+00> : vector<32x64xf32>
    %29 = tpu.matmul %27, %28, %cst_20 {dimension_numbers = #tpu.dot_dimension_numbers<[1], [0], [0], [1], [0, 0, 1, 1], [], []>} : vector<32x64xf32>, vector<64x64xf32>, vector<32x64xf32> -> vector<32x64xf32>
    %30 = arith.addf %25, %29 : vector<32x64xf32>
    %c5 = arith.constant 5 : index
    %c0_21 = arith.constant 0 : index
    %c0_22 = arith.constant 0 : index
    %31 = vector.load %arg3[%c5, %c0_21, %c0_22] : memref<7x32x64xf32, #tpu.memory_space<vmem>>, vector<1x32x64xf32>
    %32 = vector.shape_cast %31 : vector<1x32x64xf32> to vector<32x64xf32>
    %33 = vector.extract_strided_slice %3 {offsets = [0, 320], sizes = [64, 64], strides = [1, 1]} : vector<64x448xf32> to vector<64x64xf32>
    %cst_23 = arith.constant dense<0.000000e+00> : vector<32x64xf32>
    %34 = tpu.matmul %32, %33, %cst_23 {dimension_numbers = #tpu.dot_dimension_numbers<[1], [0], [0], [1], [0, 0, 1, 1], [], []>} : vector<32x64xf32>, vector<64x64xf32>, vector<32x64xf32> -> vector<32x64xf32>
    %35 = arith.addf %30, %34 : vector<32x64xf32>
    %c6 = arith.constant 6 : index
    %c0_24 = arith.constant 0 : index
    %c0_25 = arith.constant 0 : index
    %36 = vector.load %arg3[%c6, %c0_24, %c0_25] : memref<7x32x64xf32, #tpu.memory_space<vmem>>, vector<1x32x64xf32>
    %37 = vector.shape_cast %36 : vector<1x32x64xf32> to vector<32x64xf32>
    %38 = vector.extract_strided_slice %3 {offsets = [0, 384], sizes = [64, 64], strides = [1, 1]} : vector<64x448xf32> to vector<64x64xf32>
    %cst_26 = arith.constant dense<0.000000e+00> : vector<32x64xf32>
    %39 = tpu.matmul %37, %38, %cst_26 {dimension_numbers = #tpu.dot_dimension_numbers<[1], [0], [0], [1], [0, 0, 1, 1], [], []>} : vector<32x64xf32>, vector<64x64xf32>, vector<32x64xf32> -> vector<32x64xf32>
    %40 = arith.addf %35, %39 : vector<32x64xf32>
    %cst_27 = arith.constant 0.000000e+00 : f32
    %41 = vector.broadcast %cst_27 : f32 to vector<32x64xf32>
    %42 = arith.maximumf %40, %41 : vector<32x64xf32>
    %c0_28 = arith.constant 0 : index
    %c0_29 = arith.constant 0 : index
    %c0_30 = arith.constant 0 : index
    %43 = vector.load %arg4[%c0_28, %c0_29, %c0_30] : memref<3x16x32xf32, #tpu.memory_space<vmem>>, vector<1x16x32xf32>
    %44 = vector.shape_cast %43 : vector<1x16x32xf32> to vector<16x32xf32>
    %cst_31 = arith.constant dense<0.000000e+00> : vector<16x64xf32>
    %45 = tpu.matmul %44, %42, %cst_31 {dimension_numbers = #tpu.dot_dimension_numbers<[1], [0], [0], [1], [0, 0, 1, 1], [], []>} : vector<16x32xf32>, vector<32x64xf32>, vector<16x64xf32> -> vector<16x64xf32>
    %c1_32 = arith.constant 1 : index
    %c0_33 = arith.constant 0 : index
    %c0_34 = arith.constant 0 : index
    %46 = vector.load %arg4[%c1_32, %c0_33, %c0_34] : memref<3x16x32xf32, #tpu.memory_space<vmem>>, vector<1x16x32xf32>
    %47 = vector.shape_cast %46 : vector<1x16x32xf32> to vector<16x32xf32>
    %cst_35 = arith.constant dense<0.000000e+00> : vector<16x64xf32>
    %48 = tpu.matmul %47, %42, %cst_35 {dimension_numbers = #tpu.dot_dimension_numbers<[1], [0], [0], [1], [0, 0, 1, 1], [], []>} : vector<16x32xf32>, vector<32x64xf32>, vector<16x64xf32> -> vector<16x64xf32>
    %49 = arith.maximumf %45, %48 : vector<16x64xf32>
    %c2_36 = arith.constant 2 : index
    %c0_37 = arith.constant 0 : index
    %c0_38 = arith.constant 0 : index
    %50 = vector.load %arg4[%c2_36, %c0_37, %c0_38] : memref<3x16x32xf32, #tpu.memory_space<vmem>>, vector<1x16x32xf32>
    %51 = vector.shape_cast %50 : vector<1x16x32xf32> to vector<16x32xf32>
    %cst_39 = arith.constant dense<0.000000e+00> : vector<16x64xf32>
    %52 = tpu.matmul %51, %42, %cst_39 {dimension_numbers = #tpu.dot_dimension_numbers<[1], [0], [0], [1], [0, 0, 1, 1], [], []>} : vector<16x32xf32>, vector<32x64xf32>, vector<16x64xf32> -> vector<16x64xf32>
    %53 = arith.maximumf %49, %52 : vector<16x64xf32>
    %54 = arith.truncf %53 : vector<16x64xf32> to vector<16x64xbf16>
    %c0_40 = arith.constant 0 : index
    %c0_41 = arith.constant 0 : index
    %55 = vector.load %arg5[%c0_40, %c0_41] : memref<64x192xbf16, #tpu.memory_space<vmem>>, vector<64x192xbf16>
    %cst_42 = arith.constant dense<0.000000e+00> : vector<16x192xf32>
    %56 = tpu.matmul %54, %55, %cst_42 {dimension_numbers = #tpu.dot_dimension_numbers<[1], [0], [0], [1], [0, 0, 1, 1], [], []>} : vector<16x64xbf16>, vector<64x192xbf16>, vector<16x192xf32> -> vector<16x192xf32>
    %c0_43 = arith.constant 0 : index
    %c0_44 = arith.constant 0 : index
    %57 = vector.load %arg6[%c0_43, %c0_44] : memref<1x64xf32, #tpu.memory_space<vmem>>, vector<1x64xf32>
    %c0_45 = arith.constant 0 : index
    %c0_46 = arith.constant 0 : index
    %c0_47 = arith.constant 0 : index
    %58 = vector.load %arg7[%c0_45, %c0_46, %c0_47] : memref<3x16x16xf32, #tpu.memory_space<vmem>>, vector<1x16x16xf32>
    %59 = vector.shape_cast %58 : vector<1x16x16xf32> to vector<16x16xf32>
    %60 = vector.extract_strided_slice %56 {offsets = [0, 0], sizes = [16, 64], strides = [1, 1]} : vector<16x192xf32> to vector<16x64xf32>
    %cst_48 = arith.constant dense<0.000000e+00> : vector<16x64xf32>
    %61 = tpu.matmul %59, %60, %cst_48 {dimension_numbers = #tpu.dot_dimension_numbers<[1], [0], [0], [1], [0, 0, 1, 1], [], []>} : vector<16x16xf32>, vector<16x64xf32>, vector<16x64xf32> -> vector<16x64xf32>
    %62 = vector.broadcast %57 : vector<1x64xf32> to vector<16x64xf32>
    %63 = arith.addf %62, %61 : vector<16x64xf32>
    %c1_49 = arith.constant 1 : index
    %c0_50 = arith.constant 0 : index
    %c0_51 = arith.constant 0 : index
    %64 = vector.load %arg7[%c1_49, %c0_50, %c0_51] : memref<3x16x16xf32, #tpu.memory_space<vmem>>, vector<1x16x16xf32>
    %65 = vector.shape_cast %64 : vector<1x16x16xf32> to vector<16x16xf32>
    %66 = vector.extract_strided_slice %56 {offsets = [0, 64], sizes = [16, 64], strides = [1, 1]} : vector<16x192xf32> to vector<16x64xf32>
    %cst_52 = arith.constant dense<0.000000e+00> : vector<16x64xf32>
    %67 = tpu.matmul %65, %66, %cst_52 {dimension_numbers = #tpu.dot_dimension_numbers<[1], [0], [0], [1], [0, 0, 1, 1], [], []>} : vector<16x16xf32>, vector<16x64xf32>, vector<16x64xf32> -> vector<16x64xf32>
    %68 = arith.addf %63, %67 : vector<16x64xf32>
    %c2_53 = arith.constant 2 : index
    %c0_54 = arith.constant 0 : index
    %c0_55 = arith.constant 0 : index
    %69 = vector.load %arg7[%c2_53, %c0_54, %c0_55] : memref<3x16x16xf32, #tpu.memory_space<vmem>>, vector<1x16x16xf32>
    %70 = vector.shape_cast %69 : vector<1x16x16xf32> to vector<16x16xf32>
    %71 = vector.extract_strided_slice %56 {offsets = [0, 128], sizes = [16, 64], strides = [1, 1]} : vector<16x192xf32> to vector<16x64xf32>
    %cst_56 = arith.constant dense<0.000000e+00> : vector<16x64xf32>
    %72 = tpu.matmul %70, %71, %cst_56 {dimension_numbers = #tpu.dot_dimension_numbers<[1], [0], [0], [1], [0, 0, 1, 1], [], []>} : vector<16x16xf32>, vector<16x64xf32>, vector<16x64xf32> -> vector<16x64xf32>
    %73 = arith.addf %68, %72 : vector<16x64xf32>
    %cst_57 = arith.constant 0.000000e+00 : f32
    %74 = vector.broadcast %cst_57 : f32 to vector<16x64xf32>
    %75 = arith.maximumf %73, %74 : vector<16x64xf32>
    %76 = arith.truncf %75 : vector<16x64xf32> to vector<16x64xbf16>
    %c0_58 = arith.constant 0 : index
    %c0_59 = arith.constant 0 : index
    %77 = vector.load %arg8[%c0_58, %c0_59] : memref<64x192xbf16, #tpu.memory_space<vmem>>, vector<64x192xbf16>
    %cst_60 = arith.constant dense<0.000000e+00> : vector<16x192xf32>
    %78 = tpu.matmul %76, %77, %cst_60 {dimension_numbers = #tpu.dot_dimension_numbers<[1], [0], [0], [1], [0, 0, 1, 1], [], []>} : vector<16x64xbf16>, vector<64x192xbf16>, vector<16x192xf32> -> vector<16x192xf32>
    %c0_61 = arith.constant 0 : index
    %c0_62 = arith.constant 0 : index
    %79 = vector.load %arg9[%c0_61, %c0_62] : memref<1x64xf32, #tpu.memory_space<vmem>>, vector<1x64xf32>
    %80 = vector.broadcast %79 : vector<1x64xf32> to vector<16x64xf32>
    %81 = arith.addf %80, %53 : vector<16x64xf32>
    %c0_63 = arith.constant 0 : index
    %c0_64 = arith.constant 0 : index
    %c0_65 = arith.constant 0 : index
    %82 = vector.load %arg10[%c0_63, %c0_64, %c0_65] : memref<3x16x16xf32, #tpu.memory_space<vmem>>, vector<1x16x16xf32>
    %83 = vector.shape_cast %82 : vector<1x16x16xf32> to vector<16x16xf32>
    %84 = vector.extract_strided_slice %78 {offsets = [0, 0], sizes = [16, 64], strides = [1, 1]} : vector<16x192xf32> to vector<16x64xf32>
    %cst_66 = arith.constant dense<0.000000e+00> : vector<16x64xf32>
    %85 = tpu.matmul %83, %84, %cst_66 {dimension_numbers = #tpu.dot_dimension_numbers<[1], [0], [0], [1], [0, 0, 1, 1], [], []>} : vector<16x16xf32>, vector<16x64xf32>, vector<16x64xf32> -> vector<16x64xf32>
    %86 = arith.addf %81, %85 : vector<16x64xf32>
    %c1_67 = arith.constant 1 : index
    %c0_68 = arith.constant 0 : index
    %c0_69 = arith.constant 0 : index
    %87 = vector.load %arg10[%c1_67, %c0_68, %c0_69] : memref<3x16x16xf32, #tpu.memory_space<vmem>>, vector<1x16x16xf32>
    %88 = vector.shape_cast %87 : vector<1x16x16xf32> to vector<16x16xf32>
    %89 = vector.extract_strided_slice %78 {offsets = [0, 64], sizes = [16, 64], strides = [1, 1]} : vector<16x192xf32> to vector<16x64xf32>
    %cst_70 = arith.constant dense<0.000000e+00> : vector<16x64xf32>
    %90 = tpu.matmul %88, %89, %cst_70 {dimension_numbers = #tpu.dot_dimension_numbers<[1], [0], [0], [1], [0, 0, 1, 1], [], []>} : vector<16x16xf32>, vector<16x64xf32>, vector<16x64xf32> -> vector<16x64xf32>
    %91 = arith.addf %86, %90 : vector<16x64xf32>
    %c2_71 = arith.constant 2 : index
    %c0_72 = arith.constant 0 : index
    %c0_73 = arith.constant 0 : index
    %92 = vector.load %arg10[%c2_71, %c0_72, %c0_73] : memref<3x16x16xf32, #tpu.memory_space<vmem>>, vector<1x16x16xf32>
    %93 = vector.shape_cast %92 : vector<1x16x16xf32> to vector<16x16xf32>
    %94 = vector.extract_strided_slice %78 {offsets = [0, 128], sizes = [16, 64], strides = [1, 1]} : vector<16x192xf32> to vector<16x64xf32>
    %cst_74 = arith.constant dense<0.000000e+00> : vector<16x64xf32>
    %95 = tpu.matmul %93, %94, %cst_74 {dimension_numbers = #tpu.dot_dimension_numbers<[1], [0], [0], [1], [0, 0, 1, 1], [], []>} : vector<16x16xf32>, vector<16x64xf32>, vector<16x64xf32> -> vector<16x64xf32>
    %96 = arith.addf %91, %95 : vector<16x64xf32>
    %cst_75 = arith.constant 0.000000e+00 : f32
    %97 = vector.broadcast %cst_75 : f32 to vector<16x64xf32>
    %98 = arith.maximumf %96, %97 : vector<16x64xf32>
    %99 = arith.truncf %98 : vector<16x64xf32> to vector<16x64xbf16>
    %c0_76 = arith.constant 0 : index
    %c0_77 = arith.constant 0 : index
    %100 = vector.load %arg11[%c0_76, %c0_77] : memref<64x512xbf16, #tpu.memory_space<vmem>>, vector<64x512xbf16>
    %cst_78 = arith.constant dense<0.000000e+00> : vector<16x512xf32>
    %101 = tpu.matmul %99, %100, %cst_78 {dimension_numbers = #tpu.dot_dimension_numbers<[1], [0], [0], [1], [0, 0, 1, 1], [], []>} : vector<16x64xbf16>, vector<64x512xbf16>, vector<16x512xf32> -> vector<16x512xf32>
    %c0_79 = arith.constant 0 : index
    %c0_80 = arith.constant 0 : index
    %102 = vector.load %arg12[%c0_79, %c0_80] : memref<1x128xf32, #tpu.memory_space<vmem>>, vector<1x128xf32>
    %c0_81 = arith.constant 0 : index
    %c0_82 = arith.constant 0 : index
    %c0_83 = arith.constant 0 : index
    %103 = vector.load %arg13[%c0_81, %c0_82, %c0_83] : memref<4x8x16xf32, #tpu.memory_space<vmem>>, vector<1x8x16xf32>
    %104 = vector.shape_cast %103 : vector<1x8x16xf32> to vector<8x16xf32>
    %105 = vector.extract_strided_slice %101 {offsets = [0, 0], sizes = [16, 128], strides = [1, 1]} : vector<16x512xf32> to vector<16x128xf32>
    %cst_84 = arith.constant dense<0.000000e+00> : vector<8x128xf32>
    %106 = tpu.matmul %104, %105, %cst_84 {dimension_numbers = #tpu.dot_dimension_numbers<[1], [0], [0], [1], [0, 0, 1, 1], [], []>} : vector<8x16xf32>, vector<16x128xf32>, vector<8x128xf32> -> vector<8x128xf32>
    %107 = vector.broadcast %102 : vector<1x128xf32> to vector<8x128xf32>
    %108 = arith.addf %107, %106 : vector<8x128xf32>
    %c1_85 = arith.constant 1 : index
    %c0_86 = arith.constant 0 : index
    %c0_87 = arith.constant 0 : index
    %109 = vector.load %arg13[%c1_85, %c0_86, %c0_87] : memref<4x8x16xf32, #tpu.memory_space<vmem>>, vector<1x8x16xf32>
    %110 = vector.shape_cast %109 : vector<1x8x16xf32> to vector<8x16xf32>
    %111 = vector.extract_strided_slice %101 {offsets = [0, 128], sizes = [16, 128], strides = [1, 1]} : vector<16x512xf32> to vector<16x128xf32>
    %cst_88 = arith.constant dense<0.000000e+00> : vector<8x128xf32>
    %112 = tpu.matmul %110, %111, %cst_88 {dimension_numbers = #tpu.dot_dimension_numbers<[1], [0], [0], [1], [0, 0, 1, 1], [], []>} : vector<8x16xf32>, vector<16x128xf32>, vector<8x128xf32> -> vector<8x128xf32>
    %113 = arith.addf %108, %112 : vector<8x128xf32>
    %c2_89 = arith.constant 2 : index
    %c0_90 = arith.constant 0 : index
    %c0_91 = arith.constant 0 : index
    %114 = vector.load %arg13[%c2_89, %c0_90, %c0_91] : memref<4x8x16xf32, #tpu.memory_space<vmem>>, vector<1x8x16xf32>
    %115 = vector.shape_cast %114 : vector<1x8x16xf32> to vector<8x16xf32>
    %116 = vector.extract_strided_slice %101 {offsets = [0, 256], sizes = [16, 128], strides = [1, 1]} : vector<16x512xf32> to vector<16x128xf32>
    %cst_92 = arith.constant dense<0.000000e+00> : vector<8x128xf32>
    %117 = tpu.matmul %115, %116, %cst_92 {dimension_numbers = #tpu.dot_dimension_numbers<[1], [0], [0], [1], [0, 0, 1, 1], [], []>} : vector<8x16xf32>, vector<16x128xf32>, vector<8x128xf32> -> vector<8x128xf32>
    %118 = arith.addf %113, %117 : vector<8x128xf32>
    %cst_93 = arith.constant 0.000000e+00 : f32
    %119 = vector.broadcast %cst_93 : f32 to vector<8x128xf32>
    %120 = arith.maximumf %118, %119 : vector<8x128xf32>
    %c0_94 = arith.constant 0 : index
    %c0_95 = arith.constant 0 : index
    %121 = vector.load %arg14[%c0_94, %c0_95] : memref<1x128xf32, #tpu.memory_space<vmem>>, vector<1x128xf32>
    %c3_96 = arith.constant 3 : index
    %c0_97 = arith.constant 0 : index
    %c0_98 = arith.constant 0 : index
    %122 = vector.load %arg13[%c3_96, %c0_97, %c0_98] : memref<4x8x16xf32, #tpu.memory_space<vmem>>, vector<1x8x16xf32>
    %123 = vector.shape_cast %122 : vector<1x8x16xf32> to vector<8x16xf32>
    %124 = vector.extract_strided_slice %101 {offsets = [0, 384], sizes = [16, 128], strides = [1, 1]} : vector<16x512xf32> to vector<16x128xf32>
    %cst_99 = arith.constant dense<0.000000e+00> : vector<8x128xf32>
    %125 = tpu.matmul %123, %124, %cst_99 {dimension_numbers = #tpu.dot_dimension_numbers<[1], [0], [0], [1], [0, 0, 1, 1], [], []>} : vector<8x16xf32>, vector<16x128xf32>, vector<8x128xf32> -> vector<8x128xf32>
    %126 = vector.broadcast %121 : vector<1x128xf32> to vector<8x128xf32>
    %127 = arith.addf %126, %125 : vector<8x128xf32>
    %128 = arith.truncf %120 : vector<8x128xf32> to vector<8x128xbf16>
    %c0_100 = arith.constant 0 : index
    %c0_101 = arith.constant 0 : index
    %129 = vector.load %arg15[%c0_100, %c0_101] : memref<128x384xbf16, #tpu.memory_space<vmem>>, vector<128x384xbf16>
    %cst_102 = arith.constant dense<0.000000e+00> : vector<8x384xf32>
    %130 = tpu.matmul %128, %129, %cst_102 {dimension_numbers = #tpu.dot_dimension_numbers<[1], [0], [0], [1], [0, 0, 1, 1], [], []>} : vector<8x128xbf16>, vector<128x384xbf16>, vector<8x384xf32> -> vector<8x384xf32>
    %c0_103 = arith.constant 0 : index
    %c0_104 = arith.constant 0 : index
    %131 = vector.load %arg16[%c0_103, %c0_104] : memref<1x128xf32, #tpu.memory_space<vmem>>, vector<1x128xf32>
    %132 = vector.broadcast %131 : vector<1x128xf32> to vector<8x128xf32>
    %133 = arith.addf %132, %127 : vector<8x128xf32>
    %c0_105 = arith.constant 0 : index
    %c0_106 = arith.constant 0 : index
    %c0_107 = arith.constant 0 : index
    %134 = vector.load %arg17[%c0_105, %c0_106, %c0_107] : memref<3x8x8xf32, #tpu.memory_space<vmem>>, vector<1x8x8xf32>
    %135 = vector.shape_cast %134 : vector<1x8x8xf32> to vector<8x8xf32>
    %136 = vector.extract_strided_slice %130 {offsets = [0, 0], sizes = [8, 128], strides = [1, 1]} : vector<8x384xf32> to vector<8x128xf32>
    %cst_108 = arith.constant dense<0.000000e+00> : vector<8x128xf32>
    %137 = tpu.matmul %135, %136, %cst_108 {dimension_numbers = #tpu.dot_dimension_numbers<[1], [0], [0], [1], [0, 0, 1, 1], [], []>} : vector<8x8xf32>, vector<8x128xf32>, vector<8x128xf32> -> vector<8x128xf32>
    %138 = arith.addf %133, %137 : vector<8x128xf32>
    %c1_109 = arith.constant 1 : index
    %c0_110 = arith.constant 0 : index
    %c0_111 = arith.constant 0 : index
    %139 = vector.load %arg17[%c1_109, %c0_110, %c0_111] : memref<3x8x8xf32, #tpu.memory_space<vmem>>, vector<1x8x8xf32>
    %140 = vector.shape_cast %139 : vector<1x8x8xf32> to vector<8x8xf32>
    %141 = vector.extract_strided_slice %130 {offsets = [0, 128], sizes = [8, 128], strides = [1, 1]} : vector<8x384xf32> to vector<8x128xf32>
    %cst_112 = arith.constant dense<0.000000e+00> : vector<8x128xf32>
    %142 = tpu.matmul %140, %141, %cst_112 {dimension_numbers = #tpu.dot_dimension_numbers<[1], [0], [0], [1], [0, 0, 1, 1], [], []>} : vector<8x8xf32>, vector<8x128xf32>, vector<8x128xf32> -> vector<8x128xf32>
    %143 = arith.addf %138, %142 : vector<8x128xf32>
    %c2_113 = arith.constant 2 : index
    %c0_114 = arith.constant 0 : index
    %c0_115 = arith.constant 0 : index
    %144 = vector.load %arg17[%c2_113, %c0_114, %c0_115] : memref<3x8x8xf32, #tpu.memory_space<vmem>>, vector<1x8x8xf32>
    %145 = vector.shape_cast %144 : vector<1x8x8xf32> to vector<8x8xf32>
    %146 = vector.extract_strided_slice %130 {offsets = [0, 256], sizes = [8, 128], strides = [1, 1]} : vector<8x384xf32> to vector<8x128xf32>
    %cst_116 = arith.constant dense<0.000000e+00> : vector<8x128xf32>
    %147 = tpu.matmul %145, %146, %cst_116 {dimension_numbers = #tpu.dot_dimension_numbers<[1], [0], [0], [1], [0, 0, 1, 1], [], []>} : vector<8x8xf32>, vector<8x128xf32>, vector<8x128xf32> -> vector<8x128xf32>
    %148 = arith.addf %143, %147 : vector<8x128xf32>
    %cst_117 = arith.constant 0.000000e+00 : f32
    %149 = vector.broadcast %cst_117 : f32 to vector<8x128xf32>
    %150 = arith.maximumf %148, %149 : vector<8x128xf32>
    %151 = arith.truncf %150 : vector<8x128xf32> to vector<8x128xbf16>
    %c0_118 = arith.constant 0 : index
    %c0_119 = arith.constant 0 : index
    %152 = vector.load %arg18[%c0_118, %c0_119] : memref<128x1024xbf16, #tpu.memory_space<vmem>>, vector<128x1024xbf16>
    %cst_120 = arith.constant dense<0.000000e+00> : vector<8x1024xf32>
    %153 = tpu.matmul %151, %152, %cst_120 {dimension_numbers = #tpu.dot_dimension_numbers<[1], [0], [0], [1], [0, 0, 1, 1], [], []>} : vector<8x128xbf16>, vector<128x1024xbf16>, vector<8x1024xf32> -> vector<8x1024xf32>
    %c0_121 = arith.constant 0 : index
    %c0_122 = arith.constant 0 : index
    %154 = vector.load %arg19[%c0_121, %c0_122] : memref<1x256xf32, #tpu.memory_space<vmem>>, vector<1x256xf32>
    %c0_123 = arith.constant 0 : index
    %c0_124 = arith.constant 0 : index
    %c0_125 = arith.constant 0 : index
    %155 = vector.load %arg20[%c0_123, %c0_124, %c0_125] : memref<4x4x8xf32, #tpu.memory_space<vmem>>, vector<1x4x8xf32>
    %156 = vector.shape_cast %155 : vector<1x4x8xf32> to vector<4x8xf32>
    %157 = vector.extract_strided_slice %153 {offsets = [0, 0], sizes = [8, 256], strides = [1, 1]} : vector<8x1024xf32> to vector<8x256xf32>
    %cst_126 = arith.constant dense<0.000000e+00> : vector<4x256xf32>
    %158 = tpu.matmul %156, %157, %cst_126 {dimension_numbers = #tpu.dot_dimension_numbers<[1], [0], [0], [1], [0, 0, 1, 1], [], []>} : vector<4x8xf32>, vector<8x256xf32>, vector<4x256xf32> -> vector<4x256xf32>
    %159 = vector.broadcast %154 : vector<1x256xf32> to vector<4x256xf32>
    %160 = arith.addf %159, %158 : vector<4x256xf32>
    %c1_127 = arith.constant 1 : index
    %c0_128 = arith.constant 0 : index
    %c0_129 = arith.constant 0 : index
    %161 = vector.load %arg20[%c1_127, %c0_128, %c0_129] : memref<4x4x8xf32, #tpu.memory_space<vmem>>, vector<1x4x8xf32>
    %162 = vector.shape_cast %161 : vector<1x4x8xf32> to vector<4x8xf32>
    %163 = vector.extract_strided_slice %153 {offsets = [0, 256], sizes = [8, 256], strides = [1, 1]} : vector<8x1024xf32> to vector<8x256xf32>
    %cst_130 = arith.constant dense<0.000000e+00> : vector<4x256xf32>
    %164 = tpu.matmul %162, %163, %cst_130 {dimension_numbers = #tpu.dot_dimension_numbers<[1], [0], [0], [1], [0, 0, 1, 1], [], []>} : vector<4x8xf32>, vector<8x256xf32>, vector<4x256xf32> -> vector<4x256xf32>
    %165 = arith.addf %160, %164 : vector<4x256xf32>
    %c2_131 = arith.constant 2 : index
    %c0_132 = arith.constant 0 : index
    %c0_133 = arith.constant 0 : index
    %166 = vector.load %arg20[%c2_131, %c0_132, %c0_133] : memref<4x4x8xf32, #tpu.memory_space<vmem>>, vector<1x4x8xf32>
    %167 = vector.shape_cast %166 : vector<1x4x8xf32> to vector<4x8xf32>
    %168 = vector.extract_strided_slice %153 {offsets = [0, 512], sizes = [8, 256], strides = [1, 1]} : vector<8x1024xf32> to vector<8x256xf32>
    %cst_134 = arith.constant dense<0.000000e+00> : vector<4x256xf32>
    %169 = tpu.matmul %167, %168, %cst_134 {dimension_numbers = #tpu.dot_dimension_numbers<[1], [0], [0], [1], [0, 0, 1, 1], [], []>} : vector<4x8xf32>, vector<8x256xf32>, vector<4x256xf32> -> vector<4x256xf32>
    %170 = arith.addf %165, %169 : vector<4x256xf32>
    %cst_135 = arith.constant 0.000000e+00 : f32
    %171 = vector.broadcast %cst_135 : f32 to vector<4x256xf32>
    %172 = arith.maximumf %170, %171 : vector<4x256xf32>
    %c0_136 = arith.constant 0 : index
    %c0_137 = arith.constant 0 : index
    %173 = vector.load %arg21[%c0_136, %c0_137] : memref<1x256xf32, #tpu.memory_space<vmem>>, vector<1x256xf32>
    %c3_138 = arith.constant 3 : index
    %c0_139 = arith.constant 0 : index
    %c0_140 = arith.constant 0 : index
    %174 = vector.load %arg20[%c3_138, %c0_139, %c0_140] : memref<4x4x8xf32, #tpu.memory_space<vmem>>, vector<1x4x8xf32>
    %175 = vector.shape_cast %174 : vector<1x4x8xf32> to vector<4x8xf32>
    %176 = vector.extract_strided_slice %153 {offsets = [0, 768], sizes = [8, 256], strides = [1, 1]} : vector<8x1024xf32> to vector<8x256xf32>
    %cst_141 = arith.constant dense<0.000000e+00> : vector<4x256xf32>
    %177 = tpu.matmul %175, %176, %cst_141 {dimension_numbers = #tpu.dot_dimension_numbers<[1], [0], [0], [1], [0, 0, 1, 1], [], []>} : vector<4x8xf32>, vector<8x256xf32>, vector<4x256xf32> -> vector<4x256xf32>
    %178 = vector.broadcast %173 : vector<1x256xf32> to vector<4x256xf32>
    %179 = arith.addf %178, %177 : vector<4x256xf32>
    %180 = arith.truncf %172 : vector<4x256xf32> to vector<4x256xbf16>
    %c0_142 = arith.constant 0 : index
    %c0_143 = arith.constant 0 : index
    %181 = vector.load %arg22[%c0_142, %c0_143] : memref<256x768xbf16, #tpu.memory_space<vmem>>, vector<256x768xbf16>
    %cst_144 = arith.constant dense<0.000000e+00> : vector<4x768xf32>
    %182 = tpu.matmul %180, %181, %cst_144 {dimension_numbers = #tpu.dot_dimension_numbers<[1], [0], [0], [1], [0, 0, 1, 1], [], []>} : vector<4x256xbf16>, vector<256x768xbf16>, vector<4x768xf32> -> vector<4x768xf32>
    %c0_145 = arith.constant 0 : index
    %c0_146 = arith.constant 0 : index
    %183 = vector.load %arg23[%c0_145, %c0_146] : memref<1x256xf32, #tpu.memory_space<vmem>>, vector<1x256xf32>
    %184 = vector.broadcast %183 : vector<1x256xf32> to vector<4x256xf32>
    %185 = arith.addf %184, %179 : vector<4x256xf32>
    %c0_147 = arith.constant 0 : index
    %c0_148 = arith.constant 0 : index
    %c0_149 = arith.constant 0 : index
    %186 = vector.load %arg24[%c0_147, %c0_148, %c0_149] : memref<3x4x4xf32, #tpu.memory_space<vmem>>, vector<1x4x4xf32>
    %187 = vector.shape_cast %186 : vector<1x4x4xf32> to vector<4x4xf32>
    %188 = vector.extract_strided_slice %182 {offsets = [0, 0], sizes = [4, 256], strides = [1, 1]} : vector<4x768xf32> to vector<4x256xf32>
    %cst_150 = arith.constant dense<0.000000e+00> : vector<4x256xf32>
    %189 = tpu.matmul %187, %188, %cst_150 {dimension_numbers = #tpu.dot_dimension_numbers<[1], [0], [0], [1], [0, 0, 1, 1], [], []>} : vector<4x4xf32>, vector<4x256xf32>, vector<4x256xf32> -> vector<4x256xf32>
    %190 = arith.addf %185, %189 : vector<4x256xf32>
    %c1_151 = arith.constant 1 : index
    %c0_152 = arith.constant 0 : index
    %c0_153 = arith.constant 0 : index
    %191 = vector.load %arg24[%c1_151, %c0_152, %c0_153] : memref<3x4x4xf32, #tpu.memory_space<vmem>>, vector<1x4x4xf32>
    %192 = vector.shape_cast %191 : vector<1x4x4xf32> to vector<4x4xf32>
    %193 = vector.extract_strided_slice %182 {offsets = [0, 256], sizes = [4, 256], strides = [1, 1]} : vector<4x768xf32> to vector<4x256xf32>
    %cst_154 = arith.constant dense<0.000000e+00> : vector<4x256xf32>
    %194 = tpu.matmul %192, %193, %cst_154 {dimension_numbers = #tpu.dot_dimension_numbers<[1], [0], [0], [1], [0, 0, 1, 1], [], []>} : vector<4x4xf32>, vector<4x256xf32>, vector<4x256xf32> -> vector<4x256xf32>
    %195 = arith.addf %190, %194 : vector<4x256xf32>
    %c2_155 = arith.constant 2 : index
    %c0_156 = arith.constant 0 : index
    %c0_157 = arith.constant 0 : index
    %196 = vector.load %arg24[%c2_155, %c0_156, %c0_157] : memref<3x4x4xf32, #tpu.memory_space<vmem>>, vector<1x4x4xf32>
    %197 = vector.shape_cast %196 : vector<1x4x4xf32> to vector<4x4xf32>
    %198 = vector.extract_strided_slice %182 {offsets = [0, 512], sizes = [4, 256], strides = [1, 1]} : vector<4x768xf32> to vector<4x256xf32>
    %cst_158 = arith.constant dense<0.000000e+00> : vector<4x256xf32>
    %199 = tpu.matmul %197, %198, %cst_158 {dimension_numbers = #tpu.dot_dimension_numbers<[1], [0], [0], [1], [0, 0, 1, 1], [], []>} : vector<4x4xf32>, vector<4x256xf32>, vector<4x256xf32> -> vector<4x256xf32>
    %200 = arith.addf %195, %199 : vector<4x256xf32>
    %cst_159 = arith.constant 0.000000e+00 : f32
    %201 = vector.broadcast %cst_159 : f32 to vector<4x256xf32>
    %202 = arith.maximumf %200, %201 : vector<4x256xf32>
    %203 = arith.truncf %202 : vector<4x256xf32> to vector<4x256xbf16>
    %c0_160 = arith.constant 0 : index
    %c0_161 = arith.constant 0 : index
    %204 = vector.load %arg25[%c0_160, %c0_161] : memref<256x2048xbf16, #tpu.memory_space<vmem>>, vector<256x2048xbf16>
    %cst_162 = arith.constant dense<0.000000e+00> : vector<4x2048xf32>
    %205 = tpu.matmul %203, %204, %cst_162 {dimension_numbers = #tpu.dot_dimension_numbers<[1], [0], [0], [1], [0, 0, 1, 1], [], []>} : vector<4x256xbf16>, vector<256x2048xbf16>, vector<4x2048xf32> -> vector<4x2048xf32>
    %c0_163 = arith.constant 0 : index
    %c0_164 = arith.constant 0 : index
    %206 = vector.load %arg26[%c0_163, %c0_164] : memref<1x512xf32, #tpu.memory_space<vmem>>, vector<1x512xf32>
    %c0_165 = arith.constant 0 : index
    %c0_166 = arith.constant 0 : index
    %c0_167 = arith.constant 0 : index
    %207 = vector.load %arg27[%c0_165, %c0_166, %c0_167] : memref<4x2x4xf32, #tpu.memory_space<vmem>>, vector<1x2x4xf32>
    %208 = vector.shape_cast %207 : vector<1x2x4xf32> to vector<2x4xf32>
    %209 = vector.extract_strided_slice %205 {offsets = [0, 0], sizes = [4, 512], strides = [1, 1]} : vector<4x2048xf32> to vector<4x512xf32>
    %cst_168 = arith.constant dense<0.000000e+00> : vector<2x512xf32>
    %210 = tpu.matmul %208, %209, %cst_168 {dimension_numbers = #tpu.dot_dimension_numbers<[1], [0], [0], [1], [0, 0, 1, 1], [], []>} : vector<2x4xf32>, vector<4x512xf32>, vector<2x512xf32> -> vector<2x512xf32>
    %211 = vector.broadcast %206 : vector<1x512xf32> to vector<2x512xf32>
    %212 = arith.addf %211, %210 : vector<2x512xf32>
    %c1_169 = arith.constant 1 : index
    %c0_170 = arith.constant 0 : index
    %c0_171 = arith.constant 0 : index
    %213 = vector.load %arg27[%c1_169, %c0_170, %c0_171] : memref<4x2x4xf32, #tpu.memory_space<vmem>>, vector<1x2x4xf32>
    %214 = vector.shape_cast %213 : vector<1x2x4xf32> to vector<2x4xf32>
    %215 = vector.extract_strided_slice %205 {offsets = [0, 512], sizes = [4, 512], strides = [1, 1]} : vector<4x2048xf32> to vector<4x512xf32>
    %cst_172 = arith.constant dense<0.000000e+00> : vector<2x512xf32>
    %216 = tpu.matmul %214, %215, %cst_172 {dimension_numbers = #tpu.dot_dimension_numbers<[1], [0], [0], [1], [0, 0, 1, 1], [], []>} : vector<2x4xf32>, vector<4x512xf32>, vector<2x512xf32> -> vector<2x512xf32>
    %217 = arith.addf %212, %216 : vector<2x512xf32>
    %c2_173 = arith.constant 2 : index
    %c0_174 = arith.constant 0 : index
    %c0_175 = arith.constant 0 : index
    %218 = vector.load %arg27[%c2_173, %c0_174, %c0_175] : memref<4x2x4xf32, #tpu.memory_space<vmem>>, vector<1x2x4xf32>
    %219 = vector.shape_cast %218 : vector<1x2x4xf32> to vector<2x4xf32>
    %220 = vector.extract_strided_slice %205 {offsets = [0, 1024], sizes = [4, 512], strides = [1, 1]} : vector<4x2048xf32> to vector<4x512xf32>
    %cst_176 = arith.constant dense<0.000000e+00> : vector<2x512xf32>
    %221 = tpu.matmul %219, %220, %cst_176 {dimension_numbers = #tpu.dot_dimension_numbers<[1], [0], [0], [1], [0, 0, 1, 1], [], []>} : vector<2x4xf32>, vector<4x512xf32>, vector<2x512xf32> -> vector<2x512xf32>
    %222 = arith.addf %217, %221 : vector<2x512xf32>
    %cst_177 = arith.constant 0.000000e+00 : f32
    %223 = vector.broadcast %cst_177 : f32 to vector<2x512xf32>
    %224 = arith.maximumf %222, %223 : vector<2x512xf32>
    %c0_178 = arith.constant 0 : index
    %c0_179 = arith.constant 0 : index
    %225 = vector.load %arg28[%c0_178, %c0_179] : memref<1x512xf32, #tpu.memory_space<vmem>>, vector<1x512xf32>
    %c3_180 = arith.constant 3 : index
    %c0_181 = arith.constant 0 : index
    %c0_182 = arith.constant 0 : index
    %226 = vector.load %arg27[%c3_180, %c0_181, %c0_182] : memref<4x2x4xf32, #tpu.memory_space<vmem>>, vector<1x2x4xf32>
    %227 = vector.shape_cast %226 : vector<1x2x4xf32> to vector<2x4xf32>
    %228 = vector.extract_strided_slice %205 {offsets = [0, 1536], sizes = [4, 512], strides = [1, 1]} : vector<4x2048xf32> to vector<4x512xf32>
    %cst_183 = arith.constant dense<0.000000e+00> : vector<2x512xf32>
    %229 = tpu.matmul %227, %228, %cst_183 {dimension_numbers = #tpu.dot_dimension_numbers<[1], [0], [0], [1], [0, 0, 1, 1], [], []>} : vector<2x4xf32>, vector<4x512xf32>, vector<2x512xf32> -> vector<2x512xf32>
    %230 = vector.broadcast %225 : vector<1x512xf32> to vector<2x512xf32>
    %231 = arith.addf %230, %229 : vector<2x512xf32>
    %232 = arith.truncf %224 : vector<2x512xf32> to vector<2x512xbf16>
    %c0_184 = arith.constant 0 : index
    %c0_185 = arith.constant 0 : index
    %233 = vector.load %arg29[%c0_184, %c0_185] : memref<512x1536xbf16, #tpu.memory_space<vmem>>, vector<512x1536xbf16>
    %cst_186 = arith.constant dense<0.000000e+00> : vector<2x1536xf32>
    %234 = tpu.matmul %232, %233, %cst_186 {dimension_numbers = #tpu.dot_dimension_numbers<[1], [0], [0], [1], [0, 0, 1, 1], [], []>} : vector<2x512xbf16>, vector<512x1536xbf16>, vector<2x1536xf32> -> vector<2x1536xf32>
    %c0_187 = arith.constant 0 : index
    %c0_188 = arith.constant 0 : index
    %235 = vector.load %arg30[%c0_187, %c0_188] : memref<1x512xf32, #tpu.memory_space<vmem>>, vector<1x512xf32>
    %236 = vector.broadcast %235 : vector<1x512xf32> to vector<2x512xf32>
    %237 = arith.addf %236, %231 : vector<2x512xf32>
    %c0_189 = arith.constant 0 : index
    %c0_190 = arith.constant 0 : index
    %c0_191 = arith.constant 0 : index
    %238 = vector.load %arg31[%c0_189, %c0_190, %c0_191] : memref<3x2x2xf32, #tpu.memory_space<vmem>>, vector<1x2x2xf32>
    %239 = vector.shape_cast %238 : vector<1x2x2xf32> to vector<2x2xf32>
    %240 = vector.extract_strided_slice %234 {offsets = [0, 0], sizes = [2, 512], strides = [1, 1]} : vector<2x1536xf32> to vector<2x512xf32>
    %cst_192 = arith.constant dense<0.000000e+00> : vector<2x512xf32>
    %241 = tpu.matmul %239, %240, %cst_192 {dimension_numbers = #tpu.dot_dimension_numbers<[1], [0], [0], [1], [0, 0, 1, 1], [], []>} : vector<2x2xf32>, vector<2x512xf32>, vector<2x512xf32> -> vector<2x512xf32>
    %242 = arith.addf %237, %241 : vector<2x512xf32>
    %c1_193 = arith.constant 1 : index
    %c0_194 = arith.constant 0 : index
    %c0_195 = arith.constant 0 : index
    %243 = vector.load %arg31[%c1_193, %c0_194, %c0_195] : memref<3x2x2xf32, #tpu.memory_space<vmem>>, vector<1x2x2xf32>
    %244 = vector.shape_cast %243 : vector<1x2x2xf32> to vector<2x2xf32>
    %245 = vector.extract_strided_slice %234 {offsets = [0, 512], sizes = [2, 512], strides = [1, 1]} : vector<2x1536xf32> to vector<2x512xf32>
    %cst_196 = arith.constant dense<0.000000e+00> : vector<2x512xf32>
    %246 = tpu.matmul %244, %245, %cst_196 {dimension_numbers = #tpu.dot_dimension_numbers<[1], [0], [0], [1], [0, 0, 1, 1], [], []>} : vector<2x2xf32>, vector<2x512xf32>, vector<2x512xf32> -> vector<2x512xf32>
    %247 = arith.addf %242, %246 : vector<2x512xf32>
    %c2_197 = arith.constant 2 : index
    %c0_198 = arith.constant 0 : index
    %c0_199 = arith.constant 0 : index
    %248 = vector.load %arg31[%c2_197, %c0_198, %c0_199] : memref<3x2x2xf32, #tpu.memory_space<vmem>>, vector<1x2x2xf32>
    %249 = vector.shape_cast %248 : vector<1x2x2xf32> to vector<2x2xf32>
    %250 = vector.extract_strided_slice %234 {offsets = [0, 1024], sizes = [2, 512], strides = [1, 1]} : vector<2x1536xf32> to vector<2x512xf32>
    %cst_200 = arith.constant dense<0.000000e+00> : vector<2x512xf32>
    %251 = tpu.matmul %249, %250, %cst_200 {dimension_numbers = #tpu.dot_dimension_numbers<[1], [0], [0], [1], [0, 0, 1, 1], [], []>} : vector<2x2xf32>, vector<2x512xf32>, vector<2x512xf32> -> vector<2x512xf32>
    %252 = arith.addf %247, %251 : vector<2x512xf32>
    %cst_201 = arith.constant 0.000000e+00 : f32
    %253 = vector.broadcast %cst_201 : f32 to vector<2x512xf32>
    %254 = arith.maximumf %252, %253 : vector<2x512xf32>
    %c0_202 = arith.constant 0 : index
    %c0_203 = arith.constant 0 : index
    %255 = vector.load %arg32[%c0_202, %c0_203] : memref<2x2xf32, #tpu.memory_space<vmem>>, vector<2x2xf32>
    %cst_204 = arith.constant dense<0.000000e+00> : vector<2x512xf32>
    %256 = tpu.matmul %255, %254, %cst_204 {dimension_numbers = #tpu.dot_dimension_numbers<[1], [0], [0], [1], [0, 0, 1, 1], [], []>} : vector<2x2xf32>, vector<2x512xf32>, vector<2x512xf32> -> vector<2x512xf32>
    %257 = arith.truncf %256 : vector<2x512xf32> to vector<2x512xbf16>
    %c0_205 = arith.constant 0 : index
    %c0_206 = arith.constant 0 : index
    %258 = vector.load %arg33[%c0_205, %c0_206] : memref<512x128xbf16, #tpu.memory_space<vmem>>, vector<512x128xbf16>
    %cst_207 = arith.constant dense<0.000000e+00> : vector<2x128xf32>
    %259 = tpu.matmul %257, %258, %cst_207 {dimension_numbers = #tpu.dot_dimension_numbers<[1], [0], [0], [1], [0, 0, 1, 1], [], []>} : vector<2x512xbf16>, vector<512x128xbf16>, vector<2x128xf32> -> vector<2x128xf32>
    %c0_208 = arith.constant 0 : index
    %c0_209 = arith.constant 0 : index
    %260 = vector.load %arg34[%c0_208, %c0_209] : memref<1x128xf32, #tpu.memory_space<vmem>>, vector<1x128xf32>
    %261 = vector.broadcast %260 : vector<1x128xf32> to vector<2x128xf32>
    %262 = arith.addf %259, %261 : vector<2x128xf32>
    %c0_210 = arith.constant 0 : index
    %c0_211 = arith.constant 0 : index
    %263 = vector.load %arg35[%c0_210, %c0_211] : memref<2x128xf32, #tpu.memory_space<vmem>>, vector<2x128xf32>
    tpu.vector_store %arg35[%c0_210, %c0_211], %262 {strides = array<i32>} : memref<2x128xf32, #tpu.memory_space<vmem>>, vector<2x128xf32>,
    return
  }
}

</mosaic_0001>

<llo_original>
// kernel: _lambda_.1
$region0: #{_lambda_.1}
  #allocation0 [shape = 'u32[]', space=smem, size = 0x4, offset = 0x4, fixed_abs, tag = 'smem constant byte address 0x4 - core index']
  #allocation1 [shape = 'u32[144,128]{1,0:T(1,128)}', space=vmem, size = 0x12000, scoped, tag = 'internal scratch']
  %s0 = inlined_call_operand.smem [shape: u32[36], index: -1, kind: input, shape index: {}]
  %s1 = sld [smem:[%s0]]
  %s2 = scalar_lea.smem %s0, 1
  %s3 = sld [smem:[%s2]]
  %s4 = scalar_lea.smem %s0, 2
  %s5 = sld [smem:[%s4]]
  %s6 = scalar_lea.smem %s0, 3
  %s7 = sld [smem:[%s6]]
  %s8 = scalar_lea.smem %s0, 4
  %s9 = sld [smem:[%s8]]
  %s10 = scalar_lea.smem %s0, 5
  %s11 = sld [smem:[%s10]]
  %s12 = scalar_lea.smem %s0, 6
  %s13 = sld [smem:[%s12]]
  %s14 = scalar_lea.smem %s0, 7
  %s15 = sld [smem:[%s14]]
  %s16 = scalar_lea.smem %s0, 8
  %s17 = sld [smem:[%s16]]
  %s18 = scalar_lea.smem %s0, 9
  %s19 = sld [smem:[%s18]]
  %s20 = scalar_lea.smem %s0, 10
  %s21 = sld [smem:[%s20]]
  %s22 = scalar_lea.smem %s0, 11
  %s23 = sld [smem:[%s22]]
  %s24 = scalar_lea.smem %s0, 12
  %s25 = sld [smem:[%s24]]
  %s26 = scalar_lea.smem %s0, 13
  %s27 = sld [smem:[%s26]]
  %s28 = scalar_lea.smem %s0, 14
  %s29 = sld [smem:[%s28]]
  %s30 = scalar_lea.smem %s0, 15
  %s31 = sld [smem:[%s30]]
  %s32 = scalar_lea.smem %s0, 16
  %s33 = sld [smem:[%s32]]
  %s34 = scalar_lea.smem %s0, 17
  %s35 = sld [smem:[%s34]]
  %s36 = scalar_lea.smem %s0, 18
  %s37 = sld [smem:[%s36]]
  %s38 = scalar_lea.smem %s0, 19
  %s39 = sld [smem:[%s38]]
  %s40 = scalar_lea.smem %s0, 20
  %s41 = sld [smem:[%s40]]
  %s42 = scalar_lea.smem %s0, 21
  %s43 = sld [smem:[%s42]]
  %s44 = scalar_lea.smem %s0, 22
  %s45 = sld [smem:[%s44]]
  %s46 = scalar_lea.smem %s0, 23
  %s47 = sld [smem:[%s46]]
  %s48 = scalar_lea.smem %s0, 24
  %s49 = sld [smem:[%s48]]
  %s50 = scalar_lea.smem %s0, 25
  %s51 = sld [smem:[%s50]]
  %s52 = scalar_lea.smem %s0, 26
  %s53 = sld [smem:[%s52]]
  %s54 = scalar_lea.smem %s0, 27
  %s55 = sld [smem:[%s54]]
  %s56 = scalar_lea.smem %s0, 28
  %s57 = sld [smem:[%s56]]
  %s58 = scalar_lea.smem %s0, 29
  %s59 = sld [smem:[%s58]]
  %s60 = scalar_lea.smem %s0, 30
  %s61 = sld [smem:[%s60]]
  %s62 = scalar_lea.smem %s0, 31
  %s63 = sld [smem:[%s62]]
  %s64 = scalar_lea.smem %s0, 32
  %s65 = sld [smem:[%s64]]
  %s66 = scalar_lea.smem %s0, 33
  %s67 = sld [smem:[%s66]]
  %s68 = scalar_lea.smem %s0, 34
  %s69 = sld [smem:[%s68]]
  %s70 = scalar_lea.smem %s0, 35
  %s71 = sld [smem:[%s70]]
  %s72 = sld [smem:[#allocation0]]
  $region150: #{_lambda_.1} parent=0
    _
  %s74 = ssub.s32 1, %s72
  %s75 = scalar_select 0, %s74, %s72
  $region1: #{_lambda_.1} parent=0
    #allocation2 [shape = 'u8[1024]{0}', space=vmem, size = 0x400, scoped, tag = 'output window, operand 0, single buffered']
    #allocation3 [shape = 's32[1]{0}', space=sflag, size = 0x4, scoped, tag = 'scoped memory for _lambda_.1']
    %76 = vsyncpa [#allocation3], 0
    // Predicated region
    $region2: #{_lambda_.1} parent=1 // pred_check
      _
    $region3: #{_lambda_.1} parent=1 // pred_check_branch
      %78 = sbr.rel (0) target = $region5
    $region4: #{_lambda_.1} parent=1 // pred_region
      _
    $region5: #{_lambda_.1} parent=1 // pred_fallthru
      _
    // Predicated region
    $region6: #{_lambda_.1} parent=1 // pred_check
      _
    $region7: #{_lambda_.1} parent=1 // pred_check_branch
      %80 = sbr.rel (0) target = $region9
    $region8: #{_lambda_.1} parent=1 // pred_region
      _
    $region9: #{_lambda_.1} parent=1 // pred_fallthru
      _
    // Predicated region
    $region10: #{_lambda_.1} parent=1 // pred_check
      _
    $region11: #{_lambda_.1} parent=1 // pred_check_branch
      %82 = sbr.rel (0) target = $region13
    $region12: #{_lambda_.1} parent=1 // pred_region
      _
    $region13: #{_lambda_.1} parent=1 // pred_fallthru
      _
    // Predicated region
    $region14: #{_lambda_.1} parent=1 // pred_check
      _
    $region15: #{_lambda_.1} parent=1 // pred_check_branch
      %84 = sbr.rel (0) target = $region17
    $region16: #{_lambda_.1} parent=1 // pred_region
      _
    $region17: #{_lambda_.1} parent=1 // pred_fallthru
      _
    // Predicated region
    $region18: #{_lambda_.1} parent=1 // pred_check
      _
    $region19: #{_lambda_.1} parent=1 // pred_check_branch
      %86 = sbr.rel (0) target = $region21
    $region20: #{_lambda_.1} parent=1 // pred_region
      _
    $region21: #{_lambda_.1} parent=1 // pred_fallthru
      _
    // Predicated region
    $region22: #{_lambda_.1} parent=1 // pred_check
      _
    $region23: #{_lambda_.1} parent=1 // pred_check_branch
      %88 = sbr.rel (0) target = $region25
    $region24: #{_lambda_.1} parent=1 // pred_region
      _
    $region25: #{_lambda_.1} parent=1 // pred_fallthru
      _
    // Predicated region
    $region26: #{_lambda_.1} parent=1 // pred_check
      _
    $region27: #{_lambda_.1} parent=1 // pred_check_branch
      %90 = sbr.rel (0) target = $region29
    $region28: #{_lambda_.1} parent=1 // pred_region
      _
    $region29: #{_lambda_.1} parent=1 // pred_fallthru
      _
    // Predicated region
    $region30: #{_lambda_.1} parent=1 // pred_check
      _
    $region31: #{_lambda_.1} parent=1 // pred_check_branch
      %92 = sbr.rel (0) target = $region33
    $region32: #{_lambda_.1} parent=1 // pred_region
      _
    $region33: #{_lambda_.1} parent=1 // pred_fallthru
      _
    // Predicated region
    $region34: #{_lambda_.1} parent=1 // pred_check
      _
    $region35: #{_lambda_.1} parent=1 // pred_check_branch
      %94 = sbr.rel (0) target = $region37
    $region36: #{_lambda_.1} parent=1 // pred_region
      _
    $region37: #{_lambda_.1} parent=1 // pred_fallthru
      _
    // Predicated region
    $region38: #{_lambda_.1} parent=1 // pred_check
      _
    $region39: #{_lambda_.1} parent=1 // pred_check_branch
      %96 = sbr.rel (0) target = $region41
    $region40: #{_lambda_.1} parent=1 // pred_region
      _
    $region41: #{_lambda_.1} parent=1 // pred_fallthru
      _
    // Predicated region
    $region42: #{_lambda_.1} parent=1 // pred_check
      _
    $region43: #{_lambda_.1} parent=1 // pred_check_branch
      %98 = sbr.rel (0) target = $region45
    $region44: #{_lambda_.1} parent=1 // pred_region
      _
    $region45: #{_lambda_.1} parent=1 // pred_fallthru
      _
    // Predicated region
    $region46: #{_lambda_.1} parent=1 // pred_check
      _
    $region47: #{_lambda_.1} parent=1 // pred_check_branch
      %100 = sbr.rel (0) target = $region49
    $region48: #{_lambda_.1} parent=1 // pred_region
      _
    $region49: #{_lambda_.1} parent=1 // pred_fallthru
      _
    // Predicated region
    $region50: #{_lambda_.1} parent=1 // pred_check
      _
    $region51: #{_lambda_.1} parent=1 // pred_check_branch
      %102 = sbr.rel (0) target = $region53
    $region52: #{_lambda_.1} parent=1 // pred_region
      _
    $region53: #{_lambda_.1} parent=1 // pred_fallthru
      _
    // Predicated region
    $region54: #{_lambda_.1} parent=1 // pred_check
      _
    $region55: #{_lambda_.1} parent=1 // pred_check_branch
      %104 = sbr.rel (0) target = $region57
    $region56: #{_lambda_.1} parent=1 // pred_region
      _
    $region57: #{_lambda_.1} parent=1 // pred_fallthru
      _
    // Predicated region
    $region58: #{_lambda_.1} parent=1 // pred_check
      _
    $region59: #{_lambda_.1} parent=1 // pred_check_branch
      %106 = sbr.rel (0) target = $region61
    $region60: #{_lambda_.1} parent=1 // pred_region
      _
    $region61: #{_lambda_.1} parent=1 // pred_fallthru
      _
    // Predicated region
    $region62: #{_lambda_.1} parent=1 // pred_check
      _
    $region63: #{_lambda_.1} parent=1 // pred_check_branch
      %108 = sbr.rel (0) target = $region65
    $region64: #{_lambda_.1} parent=1 // pred_region
      _
    $region65: #{_lambda_.1} parent=1 // pred_fallthru
      _
    // Predicated region
    $region66: #{_lambda_.1} parent=1 // pred_check
      _
    $region67: #{_lambda_.1} parent=1 // pred_check_branch
      %110 = sbr.rel (0) target = $region69
    $region68: #{_lambda_.1} parent=1 // pred_region
      _
    $region69: #{_lambda_.1} parent=1 // pred_fallthru
      _
    // Predicated region
    $region70: #{_lambda_.1} parent=1 // pred_check
      _
    $region71: #{_lambda_.1} parent=1 // pred_check_branch
      %112 = sbr.rel (0) target = $region73
    $region72: #{_lambda_.1} parent=1 // pred_region
      _
    $region73: #{_lambda_.1} parent=1 // pred_fallthru
      _
    // Predicated region
    $region74: #{_lambda_.1} parent=1 // pred_check
      _
    $region75: #{_lambda_.1} parent=1 // pred_check_branch
      %114 = sbr.rel (0) target = $region77
    $region76: #{_lambda_.1} parent=1 // pred_region
      _
    $region77: #{_lambda_.1} parent=1 // pred_fallthru
      _
    // Predicated region
    $region78: #{_lambda_.1} parent=1 // pred_check
      _
    $region79: #{_lambda_.1} parent=1 // pred_check_branch
      %116 = sbr.rel (0) target = $region81
    $region80: #{_lambda_.1} parent=1 // pred_region
      _
    $region81: #{_lambda_.1} parent=1 // pred_fallthru
      _
    // Predicated region
    $region82: #{_lambda_.1} parent=1 // pred_check
      _
    $region83: #{_lambda_.1} parent=1 // pred_check_branch
      %118 = sbr.rel (0) target = $region85
    $region84: #{_lambda_.1} parent=1 // pred_region
      _
    $region85: #{_lambda_.1} parent=1 // pred_fallthru
      _
    // Predicated region
    $region86: #{_lambda_.1} parent=1 // pred_check
      _
    $region87: #{_lambda_.1} parent=1 // pred_check_branch
      %120 = sbr.rel (0) target = $region89
    $region88: #{_lambda_.1} parent=1 // pred_region
      _
    $region89: #{_lambda_.1} parent=1 // pred_fallthru
      _
    // Predicated region
    $region90: #{_lambda_.1} parent=1 // pred_check
      _
    $region91: #{_lambda_.1} parent=1 // pred_check_branch
      %122 = sbr.rel (0) target = $region93
    $region92: #{_lambda_.1} parent=1 // pred_region
      _
    $region93: #{_lambda_.1} parent=1 // pred_fallthru
      _
    // Predicated region
    $region94: #{_lambda_.1} parent=1 // pred_check
      _
    $region95: #{_lambda_.1} parent=1 // pred_check_branch
      %124 = sbr.rel (0) target = $region97
    $region96: #{_lambda_.1} parent=1 // pred_region
      _
    $region97: #{_lambda_.1} parent=1 // pred_fallthru
      _
    // Predicated region
    $region98: #{_lambda_.1} parent=1 // pred_check
      _
    $region99: #{_lambda_.1} parent=1 // pred_check_branch
      %126 = sbr.rel (0) target = $region101
    $region100: #{_lambda_.1} parent=1 // pred_region
      _
    $region101: #{_lambda_.1} parent=1 // pred_fallthru
      _
    // Predicated region
    $region102: #{_lambda_.1} parent=1 // pred_check
      _
    $region103: #{_lambda_.1} parent=1 // pred_check_branch
      %128 = sbr.rel (0) target = $region105
    $region104: #{_lambda_.1} parent=1 // pred_region
      _
    $region105: #{_lambda_.1} parent=1 // pred_fallthru
      _
    // Predicated region
    $region106: #{_lambda_.1} parent=1 // pred_check
      _
    $region107: #{_lambda_.1} parent=1 // pred_check_branch
      %130 = sbr.rel (0) target = $region109
    $region108: #{_lambda_.1} parent=1 // pred_region
      _
    $region109: #{_lambda_.1} parent=1 // pred_fallthru
      _
    // Predicated region
    $region110: #{_lambda_.1} parent=1 // pred_check
      _
    $region111: #{_lambda_.1} parent=1 // pred_check_branch
      %132 = sbr.rel (0) target = $region113
    $region112: #{_lambda_.1} parent=1 // pred_region
      _
    $region113: #{_lambda_.1} parent=1 // pred_fallthru
      _
    // Predicated region
    $region114: #{_lambda_.1} parent=1 // pred_check
      _
    $region115: #{_lambda_.1} parent=1 // pred_check_branch
      %134 = sbr.rel (0) target = $region117
    $region116: #{_lambda_.1} parent=1 // pred_region
      _
    $region117: #{_lambda_.1} parent=1 // pred_fallthru
      _
    // Predicated region
    $region118: #{_lambda_.1} parent=1 // pred_check
      _
    $region119: #{_lambda_.1} parent=1 // pred_check_branch
      %136 = sbr.rel (0) target = $region121
    $region120: #{_lambda_.1} parent=1 // pred_region
      _
    $region121: #{_lambda_.1} parent=1 // pred_fallthru
      _
    // Predicated region
    $region122: #{_lambda_.1} parent=1 // pred_check
      _
    $region123: #{_lambda_.1} parent=1 // pred_check_branch
      %138 = sbr.rel (0) target = $region125
    $region124: #{_lambda_.1} parent=1 // pred_region
      _
    $region125: #{_lambda_.1} parent=1 // pred_fallthru
      _
    // Predicated region
    $region126: #{_lambda_.1} parent=1 // pred_check
      _
    $region127: #{_lambda_.1} parent=1 // pred_check_branch
      %140 = sbr.rel (0) target = $region129
    $region128: #{_lambda_.1} parent=1 // pred_region
      _
    $region129: #{_lambda_.1} parent=1 // pred_fallthru
      _
    // Predicated region
    $region130: #{_lambda_.1} parent=1 // pred_check
      _
    $region131: #{_lambda_.1} parent=1 // pred_check_branch
      %142 = sbr.rel (0) target = $region133
    $region132: #{_lambda_.1} parent=1 // pred_region
      _
    $region133: #{_lambda_.1} parent=1 // pred_fallthru
      _
    // Predicated region
    $region134: #{_lambda_.1} parent=1 // pred_check
      _
    $region135: #{_lambda_.1} parent=1 // pred_check_branch
      %144 = sbr.rel (0) target = $region137
    $region136: #{_lambda_.1} parent=1 // pred_region
      _
    $region137: #{_lambda_.1} parent=1 // pred_fallthru
      _
    // Predicated region
    $region138: #{_lambda_.1} parent=1 // pred_check
      _
    $region139: #{_lambda_.1} parent=1 // pred_check_branch
      %146 = sbr.rel (0) target = $region141
    $region140: #{_lambda_.1} parent=1 // pred_region
      _
    $region141: #{_lambda_.1} parent=1 // pred_fallthru
      _
    %v148 = vld [vmem:[%s1] sm:$0xff]
    %v149 = vld [vmem:[%s1 + $0x8] sm:$0xff]
    %v150 = vld [vmem:[%s1 + $0x10] sm:$0xff]
    %v151 = vld [vmem:[%s1 + $0x18] sm:$0xff]
    %v152 = vld [vmem:[%s1 + $0x20] sm:$0xff]
    %v153 = vld [vmem:[%s1 + $0x28] sm:$0xff]
    %v154 = vld [vmem:[%s1 + $0x30] sm:$0xff]
    %v155 = vld [vmem:[%s1 + $0x38] sm:$0xff]
    %v156 = vpack.c.bf16 %v149, %v148
    %v157 = vpack.c.bf16 %v151, %v150
    %v158 = vpack.c.bf16 %v153, %v152
    %v159 = vpack.c.bf16 %v155, %v154
    %v160 = vld [vmem:[%s3] sm:$0xff]
    %v161 = vld [vmem:[%s3 + $0x8] sm:$0xff]
    %v162 = vld [vmem:[%s3 + $0x10] sm:$0xff]
    %v163 = vld [vmem:[%s3 + $0x18] sm:$0xff]
    %v164 = vld [vmem:[%s3 + $0x20] sm:$0xff]
    %v165 = vld [vmem:[%s3 + $0x28] sm:$0xff]
    %v166 = vld [vmem:[%s3 + $0x30] sm:$0xff]
    %v167 = vld [vmem:[%s3 + $0x38] sm:$0xff]
    %v168 = vld [vmem:[%s3 + $0x40] sm:$0xff]
    %v169 = vld [vmem:[%s3 + $0x48] sm:$0xff]
    %v170 = vld [vmem:[%s3 + $0x50] sm:$0xff]
    %v171 = vld [vmem:[%s3 + $0x58] sm:$0xff]
    %v172 = vld [vmem:[%s3 + $0x60] sm:$0xff]
    %v173 = vld [vmem:[%s3 + $0x68] sm:$0xff]
    %v174 = vld [vmem:[%s3 + $0x70] sm:$0xff]
    %v175 = vld [vmem:[%s3 + $0x78] sm:$0xff]
    %v192 = vunpack.c.l.b16 %v160
    %v193 = vunpack.c.h.b16 %v160
    %v194 = vunpack.c.l.b16 %v161
    %v195 = vunpack.c.h.b16 %v161
    %v196 = vunpack.c.l.b16 %v162
    %v197 = vunpack.c.h.b16 %v162
    %v198 = vunpack.c.l.b16 %v163
    %v199 = vunpack.c.h.b16 %v163
    %v200 = vunpack.c.l.b16 %v164
    %v201 = vunpack.c.h.b16 %v164
    %v202 = vunpack.c.l.b16 %v165
    %v203 = vunpack.c.h.b16 %v165
    %v204 = vunpack.c.l.b16 %v166
    %v205 = vunpack.c.h.b16 %v166
    %v206 = vunpack.c.l.b16 %v167
    %v207 = vunpack.c.h.b16 %v167
    %v208 = vunpack.c.l.b16 %v168
    %v209 = vunpack.c.h.b16 %v168
    %v210 = vunpack.c.l.b16 %v169
    %v211 = vunpack.c.h.b16 %v169
    %v212 = vunpack.c.l.b16 %v170
    %v213 = vunpack.c.h.b16 %v170
    %v214 = vunpack.c.l.b16 %v171
    %v215 = vunpack.c.h.b16 %v171
    %v216 = vunpack.c.l.b16 %v172
    %v217 = vunpack.c.h.b16 %v172
    %v218 = vunpack.c.l.b16 %v173
    %v219 = vunpack.c.h.b16 %v173
    %v220 = vunpack.c.l.b16 %v174
    %v221 = vunpack.c.h.b16 %v174
    %v222 = vunpack.c.l.b16 %v175
    %v223 = vunpack.c.h.b16 %v175
    %v224 = vpack.c.b16 %v196, %v192
    %v225 = vpack.c.b16 %v197, %v193
    %v226 = vpack.c.b16 %v198, %v194
    %v227 = vpack.c.b16 %v199, %v195
    %v228 = vpack.c.b16 %v204, %v200
    %v229 = vpack.c.b16 %v205, %v201
    %v230 = vpack.c.b16 %v206, %v202
    %v231 = vpack.c.b16 %v207, %v203
    %v232 = vpack.c.b16 %v212, %v208
    %v233 = vpack.c.b16 %v213, %v209
    %v234 = vpack.c.b16 %v214, %v210
    %v235 = vpack.c.b16 %v215, %v211
    %v236 = vpack.c.b16 %v220, %v216
    %v237 = vpack.c.b16 %v221, %v217
    %v238 = vpack.c.b16 %v222, %v218
    %v239 = vpack.c.b16 %v223, %v219
    %vm256 = vcmask 523264
    %v258 = vsel %vm256, %v156, 0
    %v261 = vsel %vm256, %v157, 0
    %v264 = vsel %vm256, %v158, 0
    %v267 = vsel %vm256, %v159, 0
    %269 = vmatprep.subr.bf16.mxu0 %v225
    %270 = vmatpush1.bf16.msra.mxu0 %v224
    %271 = vmatprep.subr.bf16.mxu0 %v229
    %272 = vmatpush1.bf16.msra.mxu0 %v228
    %273 = vmatprep.subr.bf16.mxu0 %v233
    %274 = vmatpush1.bf16.msra.mxu0 %v232
    %275 = vmatprep.subr.bf16.mxu0 %v237
    %276 = vmatpush1.bf16.msra.mxu0 %v236
    %277 = vmatprep.subr.bf16.mxu0 0
    %278 = vmatpush1.bf16.msra.mxu0 0
    %279 = vmatprep.subr.bf16.mxu0 0
    %280 = vmatpush1.bf16.msra.mxu0 0
    %281 = vmatprep.subr.bf16.mxu0 0
    %282 = vmatpush1.bf16.msra.mxu0 0
    %283 = vmatprep.subr.bf16.mxu0 0
    %284 = vmatpush1.bf16.msra.mxu0 0
    %285 = vmatprep.subr.bf16.mxu0 0
    %286 = vmatpush1.bf16.msra.mxu0 0
    %287 = vmatprep.subr.bf16.mxu0 0
    %288 = vmatpush1.bf16.msra.mxu0 0
    %289 = vmatprep.subr.bf16.mxu0 0
    %290 = vmatpush1.bf16.msra.mxu0 0
    %291 = vmatprep.subr.bf16.mxu0 0
    %292 = vmatpush1.bf16.msra.mxu0 0
    %293 = vmatprep.subr.bf16.mxu0 0
    %294 = vmatpush1.bf16.msra.mxu0 0
    %295 = vmatprep.subr.bf16.mxu0 0
    %296 = vmatpush1.bf16.msra.mxu0 0
    %297 = vmatprep.subr.bf16.mxu0 0
    %298 = vmatpush1.bf16.msra.mxu0 0
    %299 = vmatprep.subr.bf16.mxu0 0
    %300 = vmatpush1.bf16.msra.mxu0 0
    %301 = vmatprep.mubr.bf16.mxu0 0
    %302 = vmatmul.mubr.bf16.gmra.mrb[0].mxu0 %v258
    %v303 = vpop.f32.mrb[0].mxu0
    %v304 = vadd.f32 0.0, %v303
    %v305 = vpop.f32.mrb[0].mxu0
    %v306 = vadd.f32 0.0, %v305
    %v307 = vpop.f32.mrb[0].mxu0
    %v308 = vadd.f32 0.0, %v307
    %v309 = vpop.f32.mrb[0].mxu0
    %v310 = vadd.f32 0.0, %v309
    %311 = vmatprep.mubr.bf16.mxu0 0
    %312 = vmatmul.mubr.bf16.gmra.mrb[0].mxu0 %v261
    %v313 = vpop.f32.mrb[0].mxu0
    %v314 = vadd.f32 0.0, %v313
    %v315 = vpop.f32.mrb[0].mxu0
    %v316 = vadd.f32 0.0, %v315
    %v317 = vpop.f32.mrb[0].mxu0
    %v318 = vadd.f32 0.0, %v317
    %v319 = vpop.f32.mrb[0].mxu0
    %v320 = vadd.f32 0.0, %v319
    %321 = vmatprep.mubr.bf16.mxu0 0
    %322 = vmatmul.mubr.bf16.gmra.mrb[0].mxu0 %v264
    %v323 = vpop.f32.mrb[0].mxu0
    %v324 = vadd.f32 0.0, %v323
    %v325 = vpop.f32.mrb[0].mxu0
    %v326 = vadd.f32 0.0, %v325
    %v327 = vpop.f32.mrb[0].mxu0
    %v328 = vadd.f32 0.0, %v327
    %v329 = vpop.f32.mrb[0].mxu0
    %v330 = vadd.f32 0.0, %v329
    %331 = vmatprep.mubr.bf16.mxu0 0
    %332 = vmatmul.mubr.bf16.gmra.mrb[0].mxu0 %v267
    %v333 = vpop.f32.mrb[0].mxu0
    %v334 = vadd.f32 0.0, %v333
    %v335 = vpop.f32.mrb[0].mxu0
    %v336 = vadd.f32 0.0, %v335
    %v337 = vpop.f32.mrb[0].mxu0
    %v338 = vadd.f32 0.0, %v337
    %v339 = vpop.f32.mrb[0].mxu0
    %v340 = vadd.f32 0.0, %v339
    %341 = vdwg.mxu0
    %342 = vmatprep.subr.bf16.mxu0 %v227
    %343 = vmatpush1.bf16.msra.mxu0 %v226
    %344 = vmatprep.subr.bf16.mxu0 %v231
    %345 = vmatpush1.bf16.msra.mxu0 %v230
    %346 = vmatprep.subr.bf16.mxu0 %v235
    %347 = vmatpush1.bf16.msra.mxu0 %v234
    %348 = vmatprep.subr.bf16.mxu0 %v239
    %349 = vmatpush1.bf16.msra.mxu0 %v238
    %350 = vmatprep.subr.bf16.mxu0 0
    %351 = vmatpush1.bf16.msra.mxu0 0
    %352 = vmatprep.subr.bf16.mxu0 0
    %353 = vmatpush1.bf16.msra.mxu0 0
    %354 = vmatprep.subr.bf16.mxu0 0
    %355 = vmatpush1.bf16.msra.mxu0 0
    %356 = vmatprep.subr.bf16.mxu0 0
    %357 = vmatpush1.bf16.msra.mxu0 0
    %358 = vmatprep.subr.bf16.mxu0 0
    %359 = vmatpush1.bf16.msra.mxu0 0
    %360 = vmatprep.subr.bf16.mxu0 0
    %361 = vmatpush1.bf16.msra.mxu0 0
    %362 = vmatprep.subr.bf16.mxu0 0
    %363 = vmatpush1.bf16.msra.mxu0 0
    %364 = vmatprep.subr.bf16.mxu0 0
    %365 = vmatpush1.bf16.msra.mxu0 0
    %366 = vmatprep.subr.bf16.mxu0 0
    %367 = vmatpush1.bf16.msra.mxu0 0
    %368 = vmatprep.subr.bf16.mxu0 0
    %369 = vmatpush1.bf16.msra.mxu0 0
    %370 = vmatprep.subr.bf16.mxu0 0
    %371 = vmatpush1.bf16.msra.mxu0 0
    %372 = vmatprep.subr.bf16.mxu0 0
    %373 = vmatpush1.bf16.msra.mxu0 0
    %374 = vmatprep.mubr.bf16.mxu0 0
    %375 = vmatmul.mubr.bf16.gmra.mrb[0].mxu0 %v258
    %v376 = vpop.f32.mrb[0].mxu0
    %v377 = vadd.f32 0.0, %v376
    %v378 = vpop.f32.mrb[0].mxu0
    %v379 = vadd.f32 0.0, %v378
    %v380 = vpop.f32.mrb[0].mxu0
    %v381 = vadd.f32 0.0, %v380
    %v382 = vpop.f32.mrb[0].mxu0
    %v383 = vadd.f32 0.0, %v382
    %384 = vmatprep.mubr.bf16.mxu0 0
    %385 = vmatmul.mubr.bf16.gmra.mrb[0].mxu0 %v261
    %v386 = vpop.f32.mrb[0].mxu0
    %v387 = vadd.f32 0.0, %v386
    %v388 = vpop.f32.mrb[0].mxu0
    %v389 = vadd.f32 0.0, %v388
    %v390 = vpop.f32.mrb[0].mxu0
    %v391 = vadd.f32 0.0, %v390
    %v392 = vpop.f32.mrb[0].mxu0
    %v393 = vadd.f32 0.0, %v392
    %394 = vmatprep.mubr.bf16.mxu0 0
    %395 = vmatmul.mubr.bf16.gmra.mrb[0].mxu0 %v264
    %v396 = vpop.f32.mrb[0].mxu0
    %v397 = vadd.f32 0.0, %v396
    %v398 = vpop.f32.mrb[0].mxu0
    %v399 = vadd.f32 0.0, %v398
    %v400 = vpop.f32.mrb[0].mxu0
    %v401 = vadd.f32 0.0, %v400
    %v402 = vpop.f32.mrb[0].mxu0
    %v403 = vadd.f32 0.0, %v402
    %404 = vmatprep.mubr.bf16.mxu0 0
    %405 = vmatmul.mubr.bf16.gmra.mrb[0].mxu0 %v267
    %v406 = vpop.f32.mrb[0].mxu0
    %v407 = vadd.f32 0.0, %v406
    %v408 = vpop.f32.mrb[0].mxu0
    %v409 = vadd.f32 0.0, %v408
    %v410 = vpop.f32.mrb[0].mxu0
    %v411 = vadd.f32 0.0, %v410
    %v412 = vpop.f32.mrb[0].mxu0
    %v413 = vadd.f32 0.0, %v412
    %414 = vdwg.mxu0
    %v415 = vld [vmem:[%s5] sm:$0x1]
    %v416 = vld [vmem:[%s7] sm:$0xff]
    %v417 = vld [vmem:[%s7 + $0x8] sm:$0xff]
    %v418 = vld [vmem:[%s7 + $0x10] sm:$0xff]
    %v419 = vld [vmem:[%s7 + $0x18] sm:$0xff]
    %v421 = vsel %vm256, %v416, 0
    %v424 = vsel %vm256, %v417, 0
    %v427 = vsel %vm256, %v418, 0
    %v430 = vsel %vm256, %v419, 0
    %432 = vmatprep.subr.mxu0 0.0
    %433 = vmatpush1.msra.mxu0 %v304
    %434 = vmatprep.subr.mxu0 0.0
    %435 = vmatpush1.msra.mxu0 %v308
    %436 = vmatprep.subr.mxu0 0.0
    %437 = vmatpush1.msra.mxu0 %v314
    %438 = vmatprep.subr.mxu0 0.0
    %439 = vmatpush1.msra.mxu0 %v318
    %440 = vmatprep.subr.mxu0 0.0
    %441 = vmatpush1.msra.mxu0 %v324
    %442 = vmatprep.subr.mxu0 0.0
    %443 = vmatpush1.msra.mxu0 %v328
    %444 = vmatprep.subr.mxu0 0.0
    %445 = vmatpush1.msra.mxu0 %v334
    %446 = vmatprep.subr.mxu0 0.0
    %447 = vmatpush1.msra.mxu0 %v338
    %448 = vmatprep.subr.mxu0 0.0
    %449 = vmatpush1.msra.mxu0 0.0
    %450 = vmatprep.subr.mxu0 0.0
    %451 = vmatpush1.msra.mxu0 0.0
    %452 = vmatprep.subr.mxu0 0.0
    %453 = vmatpush1.msra.mxu0 0.0
    %454 = vmatprep.subr.mxu0 0.0
    %455 = vmatpush1.msra.mxu0 0.0
    %456 = vmatprep.subr.mxu0 0.0
    %457 = vmatpush1.msra.mxu0 0.0
    %458 = vmatprep.subr.mxu0 0.0
    %459 = vmatpush1.msra.mxu0 0.0
    %460 = vmatprep.subr.mxu0 0.0
    %461 = vmatpush1.msra.mxu0 0.0
    %462 = vmatprep.subr.mxu0 0.0
    %463 = vmatpush1.msra.mxu0 0.0
    %464 = vmatprep.subr.mxu0 0.0
    %465 = vmatpush1.msra.mxu0 0.0
    %466 = vmatprep.subr.mxu0 0.0
    %467 = vmatpush1.msra.mxu0 0.0
    %468 = vmatprep.subr.mxu0 0.0
    %469 = vmatpush1.msra.mxu0 0.0
    %470 = vmatprep.subr.mxu0 0.0
    %471 = vmatpush1.msra.mxu0 0.0
    %472 = vmatprep.subr.mxu0 0.0
    %473 = vmatpush1.msra.mxu0 0.0
    %474 = vmatprep.subr.mxu0 0.0
    %475 = vmatpush1.msra.mxu0 0.0
    %476 = vmatprep.subr.mxu0 0.0
    %477 = vmatpush1.msra.mxu0 0.0
    %478 = vmatprep.subr.mxu0 0.0
    %479 = vmatpush1.msra.mxu0 0.0
    %480 = vmatprep.subr.mxu0 0.0
    %481 = vmatpush1.msra.mxu0 0.0
    %482 = vmatprep.subr.mxu0 0.0
    %483 = vmatpush1.msra.mxu0 0.0
    %484 = vmatprep.subr.mxu0 0.0
    %485 = vmatpush1.msra.mxu0 0.0
    %486 = vmatprep.subr.mxu0 0.0
    %487 = vmatpush1.msra.mxu0 0.0
    %488 = vmatprep.subr.mxu0 0.0
    %489 = vmatpush1.msra.mxu0 0.0
    %490 = vmatprep.subr.mxu0 0.0
    %491 = vmatpush1.msra.mxu0 0.0
    %492 = vmatprep.subr.mxu0 0.0
    %493 = vmatpush1.msra.mxu0 0.0
    %494 = vmatprep.subr.mxu0 0.0
    %495 = vmatpush1.msra.mxu0 0.0
    %496 = vmatprep.mubr.f32.mxu0 0.0
    %497 = vmatmul.mubr.f32.gmra.mrb[0].mxu0 %v421
    %v498 = vpop.f32.mrb[0].mxu0
    %v499 = vadd.f32 0.0, %v498
    %v500 = vpop.f32.mrb[0].mxu0
    %501 = vmatprep.mubr.f32.mxu0 0.0
    %502 = vmatmul.mubr.f32.gmra.mrb[0].mxu0 %v424
    %v503 = vpop.f32.mrb[0].mxu0
    %v504 = vadd.f32 0.0, %v503
    %v505 = vpop.f32.mrb[0].mxu0
    %506 = vmatprep.mubr.f32.mxu0 0.0
    %507 = vmatmul.mubr.f32.gmra.mrb[0].mxu0 %v427
    %v508 = vpop.f32.mrb[0].mxu0
    %v509 = vadd.f32 0.0, %v508
    %v510 = vpop.f32.mrb[0].mxu0
    %511 = vmatprep.mubr.f32.mxu0 0.0
    %512 = vmatmul.mubr.f32.gmra.mrb[0].mxu0 %v430
    %v513 = vpop.f32.mrb[0].mxu0
    %v514 = vadd.f32 0.0, %v513
    %v515 = vpop.f32.mrb[0].mxu0
    %516 = vdwg.mxu0
    %v518 = vlaneseq
    %v519 = vshrl.u32 %v518, 7
    %v520 = vsub.s32 0, %v519
    %v521 = vrot.slane %v415, %v520
    %v523 = vadd.f32 %v521, %v499
    %v524 = vadd.f32 %v521, %v504
    %v525 = vadd.f32 %v521, %v509
    %v526 = vadd.f32 %v521, %v514
    %s527 = scalar_lea.vmem %s7, 32
    %v528 = vld [vmem:[%s527] sm:$0xff]
    %v529 = vld [vmem:[%s527 + $0x8] sm:$0xff]
    %v530 = vld [vmem:[%s527 + $0x10] sm:$0xff]
    %v531 = vld [vmem:[%s527 + $0x18] sm:$0xff]
    %540 = vrot.lane.b32.xlu0 %v304, 64
    %v541 = vpop.permute.xlu0 %540
    %542 = vrot.lane.b32.xlu0 %v308, 64
    %v543 = vpop.permute.xlu0 %542
    %544 = vrot.lane.b32.xlu0 %v314, 64
    %v545 = vpop.permute.xlu0 %544
    %546 = vrot.lane.b32.xlu0 %v318, 64
    %v547 = vpop.permute.xlu0 %546
    %548 = vrot.lane.b32.xlu0 %v324, 64
    %v549 = vpop.permute.xlu0 %548
    %550 = vrot.lane.b32.xlu0 %v328, 64
    %v551 = vpop.permute.xlu0 %550
    %552 = vrot.lane.b32.xlu0 %v334, 64
    %v553 = vpop.permute.xlu0 %552
    %554 = vrot.lane.b32.xlu0 %v338, 64
    %v555 = vpop.permute.xlu0 %554
    %v565 = vsel %vm256, %v528, 0
    %v568 = vsel %vm256, %v529, 0
    %v571 = vsel %vm256, %v530, 0
    %v574 = vsel %vm256, %v531, 0
    %576 = vmatprep.subr.mxu0 0.0
    %577 = vmatpush1.msra.mxu0 %v541
    %578 = vmatprep.subr.mxu0 0.0
    %579 = vmatpush1.msra.mxu0 %v543
    %580 = vmatprep.subr.mxu0 0.0
    %581 = vmatpush1.msra.mxu0 %v545
    %582 = vmatprep.subr.mxu0 0.0
    %583 = vmatpush1.msra.mxu0 %v547
    %584 = vmatprep.subr.mxu0 0.0
    %585 = vmatpush1.msra.mxu0 %v549
    %586 = vmatprep.subr.mxu0 0.0
    %587 = vmatpush1.msra.mxu0 %v551
    %588 = vmatprep.subr.mxu0 0.0
    %589 = vmatpush1.msra.mxu0 %v553
    %590 = vmatprep.subr.mxu0 0.0
    %591 = vmatpush1.msra.mxu0 %v555
    %592 = vmatprep.subr.mxu0 0.0
    %593 = vmatpush1.msra.mxu0 0.0
    %594 = vmatprep.subr.mxu0 0.0
    %595 = vmatpush1.msra.mxu0 0.0
    %596 = vmatprep.subr.mxu0 0.0
    %597 = vmatpush1.msra.mxu0 0.0
    %598 = vmatprep.subr.mxu0 0.0
    %599 = vmatpush1.msra.mxu0 0.0
    %600 = vmatprep.subr.mxu0 0.0
    %601 = vmatpush1.msra.mxu0 0.0
    %602 = vmatprep.subr.mxu0 0.0
    %603 = vmatpush1.msra.mxu0 0.0
    %604 = vmatprep.subr.mxu0 0.0
    %605 = vmatpush1.msra.mxu0 0.0
    %606 = vmatprep.subr.mxu0 0.0
    %607 = vmatpush1.msra.mxu0 0.0
    %608 = vmatprep.subr.mxu0 0.0
    %609 = vmatpush1.msra.mxu0 0.0
    %610 = vmatprep.subr.mxu0 0.0
    %611 = vmatpush1.msra.mxu0 0.0
    %612 = vmatprep.subr.mxu0 0.0
    %613 = vmatpush1.msra.mxu0 0.0
    %614 = vmatprep.subr.mxu0 0.0
    %615 = vmatpush1.msra.mxu0 0.0
    %616 = vmatprep.subr.mxu0 0.0
    %617 = vmatpush1.msra.mxu0 0.0
    %618 = vmatprep.subr.mxu0 0.0
    %619 = vmatpush1.msra.mxu0 0.0
    %620 = vmatprep.subr.mxu0 0.0
    %621 = vmatpush1.msra.mxu0 0.0
    %622 = vmatprep.subr.mxu0 0.0
    %623 = vmatpush1.msra.mxu0 0.0
    %624 = vmatprep.subr.mxu0 0.0
    %625 = vmatpush1.msra.mxu0 0.0
    %626 = vmatprep.subr.mxu0 0.0
    %627 = vmatpush1.msra.mxu0 0.0
    %628 = vmatprep.subr.mxu0 0.0
    %629 = vmatpush1.msra.mxu0 0.0
    %630 = vmatprep.subr.mxu0 0.0
    %631 = vmatpush1.msra.mxu0 0.0
    %632 = vmatprep.subr.mxu0 0.0
    %633 = vmatpush1.msra.mxu0 0.0
    %634 = vmatprep.subr.mxu0 0.0
    %635 = vmatpush1.msra.mxu0 0.0
    %636 = vmatprep.subr.mxu0 0.0
    %637 = vmatpush1.msra.mxu0 0.0
    %638 = vmatprep.subr.mxu0 0.0
    %639 = vmatpush1.msra.mxu0 0.0
    %640 = vmatprep.mubr.f32.mxu0 0.0
    %641 = vmatmul.mubr.f32.gmra.mrb[0].mxu0 %v565
    %v642 = vpop.f32.mrb[0].mxu0
    %v643 = vadd.f32 0.0, %v642
    %v644 = vpop.f32.mrb[0].mxu0
    %645 = vmatprep.mubr.f32.mxu0 0.0
    %646 = vmatmul.mubr.f32.gmra.mrb[0].mxu0 %v568
    %v647 = vpop.f32.mrb[0].mxu0
    %v648 = vadd.f32 0.0, %v647
    %v649 = vpop.f32.mrb[0].mxu0
    %650 = vmatprep.mubr.f32.mxu0 0.0
    %651 = vmatmul.mubr.f32.gmra.mrb[0].mxu0 %v571
    %v652 = vpop.f32.mrb[0].mxu0
    %v653 = vadd.f32 0.0, %v652
    %v654 = vpop.f32.mrb[0].mxu0
    %655 = vmatprep.mubr.f32.mxu0 0.0
    %656 = vmatmul.mubr.f32.gmra.mrb[0].mxu0 %v574
    %v657 = vpop.f32.mrb[0].mxu0
    %v658 = vadd.f32 0.0, %v657
    %v659 = vpop.f32.mrb[0].mxu0
    %660 = vdwg.mxu0
    %v661 = vadd.f32 %v523, %v643
    %v662 = vadd.f32 %v524, %v648
    %v663 = vadd.f32 %v525, %v653
    %v664 = vadd.f32 %v526, %v658
    %s665 = scalar_lea.vmem %s7, 64
    %v666 = vld [vmem:[%s665] sm:$0xff]
    %v667 = vld [vmem:[%s665 + $0x8] sm:$0xff]
    %v668 = vld [vmem:[%s665 + $0x10] sm:$0xff]
    %v669 = vld [vmem:[%s665 + $0x18] sm:$0xff]
    %v671 = vsel %vm256, %v666, 0
    %v674 = vsel %vm256, %v667, 0
    %v677 = vsel %vm256, %v668, 0
    %v680 = vsel %vm256, %v669, 0
    %682 = vmatprep.subr.mxu0 0.0
    %683 = vmatpush1.msra.mxu0 %v306
    %684 = vmatprep.subr.mxu0 0.0
    %685 = vmatpush1.msra.mxu0 %v310
    %686 = vmatprep.subr.mxu0 0.0
    %687 = vmatpush1.msra.mxu0 %v316
    %688 = vmatprep.subr.mxu0 0.0
    %689 = vmatpush1.msra.mxu0 %v320
    %690 = vmatprep.subr.mxu0 0.0
    %691 = vmatpush1.msra.mxu0 %v326
    %692 = vmatprep.subr.mxu0 0.0
    %693 = vmatpush1.msra.mxu0 %v330
    %694 = vmatprep.subr.mxu0 0.0
    %695 = vmatpush1.msra.mxu0 %v336
    %696 = vmatprep.subr.mxu0 0.0
    %697 = vmatpush1.msra.mxu0 %v340
    %698 = vmatprep.subr.mxu0 0.0
    %699 = vmatpush1.msra.mxu0 0.0
    %700 = vmatprep.subr.mxu0 0.0
    %701 = vmatpush1.msra.mxu0 0.0
    %702 = vmatprep.subr.mxu0 0.0
    %703 = vmatpush1.msra.mxu0 0.0
    %704 = vmatprep.subr.mxu0 0.0
    %705 = vmatpush1.msra.mxu0 0.0
    %706 = vmatprep.subr.mxu0 0.0
    %707 = vmatpush1.msra.mxu0 0.0
    %708 = vmatprep.subr.mxu0 0.0
    %709 = vmatpush1.msra.mxu0 0.0
    %710 = vmatprep.subr.mxu0 0.0
    %711 = vmatpush1.msra.mxu0 0.0
    %712 = vmatprep.subr.mxu0 0.0
    %713 = vmatpush1.msra.mxu0 0.0
    %714 = vmatprep.subr.mxu0 0.0
    %715 = vmatpush1.msra.mxu0 0.0
    %716 = vmatprep.subr.mxu0 0.0
    %717 = vmatpush1.msra.mxu0 0.0
    %718 = vmatprep.subr.mxu0 0.0
    %719 = vmatpush1.msra.mxu0 0.0
    %720 = vmatprep.subr.mxu0 0.0
    %721 = vmatpush1.msra.mxu0 0.0
    %722 = vmatprep.subr.mxu0 0.0
    %723 = vmatpush1.msra.mxu0 0.0
    %724 = vmatprep.subr.mxu0 0.0
    %725 = vmatpush1.msra.mxu0 0.0
    %726 = vmatprep.subr.mxu0 0.0
    %727 = vmatpush1.msra.mxu0 0.0
    %728 = vmatprep.subr.mxu0 0.0
    %729 = vmatpush1.msra.mxu0 0.0
    %730 = vmatprep.subr.mxu0 0.0
    %731 = vmatpush1.msra.mxu0 0.0
    %732 = vmatprep.subr.mxu0 0.0
    %733 = vmatpush1.msra.mxu0 0.0
    %734 = vmatprep.subr.mxu0 0.0
    %735 = vmatpush1.msra.mxu0 0.0
    %736 = vmatprep.subr.mxu0 0.0
    %737 = vmatpush1.msra.mxu0 0.0
    %738 = vmatprep.subr.mxu0 0.0
    %739 = vmatpush1.msra.mxu0 0.0
    %740 = vmatprep.subr.mxu0 0.0
    %741 = vmatpush1.msra.mxu0 0.0
    %742 = vmatprep.subr.mxu0 0.0
    %743 = vmatpush1.msra.mxu0 0.0
    %744 = vmatprep.subr.mxu0 0.0
    %745 = vmatpush1.msra.mxu0 0.0
    %746 = vmatprep.mubr.f32.mxu0 0.0
    %747 = vmatmul.mubr.f32.gmra.mrb[0].mxu0 %v671
    %v748 = vpop.f32.mrb[0].mxu0
    %v749 = vadd.f32 0.0, %v748
    %v750 = vpop.f32.mrb[0].mxu0
    %751 = vmatprep.mubr.f32.mxu0 0.0
    %752 = vmatmul.mubr.f32.gmra.mrb[0].mxu0 %v674
    %v753 = vpop.f32.mrb[0].mxu0
    %v754 = vadd.f32 0.0, %v753
    %v755 = vpop.f32.mrb[0].mxu0
    %756 = vmatprep.mubr.f32.mxu0 0.0
    %757 = vmatmul.mubr.f32.gmra.mrb[0].mxu0 %v677
    %v758 = vpop.f32.mrb[0].mxu0
    %v759 = vadd.f32 0.0, %v758
    %v760 = vpop.f32.mrb[0].mxu0
    %761 = vmatprep.mubr.f32.mxu0 0.0
    %762 = vmatmul.mubr.f32.gmra.mrb[0].mxu0 %v680
    %v763 = vpop.f32.mrb[0].mxu0
    %v764 = vadd.f32 0.0, %v763
    %v765 = vpop.f32.mrb[0].mxu0
    %766 = vdwg.mxu0
    %v767 = vadd.f32 %v661, %v749
    %v768 = vadd.f32 %v662, %v754
    %v769 = vadd.f32 %v663, %v759
    %v770 = vadd.f32 %v664, %v764
    %s771 = scalar_lea.vmem %s7, 96
    %v772 = vld [vmem:[%s771] sm:$0xff]
    %v773 = vld [vmem:[%s771 + $0x8] sm:$0xff]
    %v774 = vld [vmem:[%s771 + $0x10] sm:$0xff]
    %v775 = vld [vmem:[%s771 + $0x18] sm:$0xff]
    %784 = vrot.lane.b32.xlu0 %v306, 64
    %v785 = vpop.permute.xlu0 %784
    %786 = vrot.lane.b32.xlu0 %v310, 64
    %v787 = vpop.permute.xlu0 %786
    %788 = vrot.lane.b32.xlu0 %v316, 64
    %v789 = vpop.permute.xlu0 %788
    %790 = vrot.lane.b32.xlu0 %v320, 64
    %v791 = vpop.permute.xlu0 %790
    %792 = vrot.lane.b32.xlu0 %v326, 64
    %v793 = vpop.permute.xlu0 %792
    %794 = vrot.lane.b32.xlu0 %v330, 64
    %v795 = vpop.permute.xlu0 %794
    %796 = vrot.lane.b32.xlu0 %v336, 64
    %v797 = vpop.permute.xlu0 %796
    %798 = vrot.lane.b32.xlu0 %v340, 64
    %v799 = vpop.permute.xlu0 %798
    %v809 = vsel %vm256, %v772, 0
    %v812 = vsel %vm256, %v773, 0
    %v815 = vsel %vm256, %v774, 0
    %v818 = vsel %vm256, %v775, 0
    %820 = vmatprep.subr.mxu0 0.0
    %821 = vmatpush1.msra.mxu0 %v785
    %822 = vmatprep.subr.mxu0 0.0
    %823 = vmatpush1.msra.mxu0 %v787
    %824 = vmatprep.subr.mxu0 0.0
    %825 = vmatpush1.msra.mxu0 %v789
    %826 = vmatprep.subr.mxu0 0.0
    %827 = vmatpush1.msra.mxu0 %v791
    %828 = vmatprep.subr.mxu0 0.0
    %829 = vmatpush1.msra.mxu0 %v793
    %830 = vmatprep.subr.mxu0 0.0
    %831 = vmatpush1.msra.mxu0 %v795
    %832 = vmatprep.subr.mxu0 0.0
    %833 = vmatpush1.msra.mxu0 %v797
    %834 = vmatprep.subr.mxu0 0.0
    %835 = vmatpush1.msra.mxu0 %v799
    %836 = vmatprep.subr.mxu0 0.0
    %837 = vmatpush1.msra.mxu0 0.0
    %838 = vmatprep.subr.mxu0 0.0
    %839 = vmatpush1.msra.mxu0 0.0
    %840 = vmatprep.subr.mxu0 0.0
    %841 = vmatpush1.msra.mxu0 0.0
    %842 = vmatprep.subr.mxu0 0.0
    %843 = vmatpush1.msra.mxu0 0.0
    %844 = vmatprep.subr.mxu0 0.0
    %845 = vmatpush1.msra.mxu0 0.0
    %846 = vmatprep.subr.mxu0 0.0
    %847 = vmatpush1.msra.mxu0 0.0
    %848 = vmatprep.subr.mxu0 0.0
    %849 = vmatpush1.msra.mxu0 0.0
    %850 = vmatprep.subr.mxu0 0.0
    %851 = vmatpush1.msra.mxu0 0.0
    %852 = vmatprep.subr.mxu0 0.0
    %853 = vmatpush1.msra.mxu0 0.0
    %854 = vmatprep.subr.mxu0 0.0
    %855 = vmatpush1.msra.mxu0 0.0
    %856 = vmatprep.subr.mxu0 0.0
    %857 = vmatpush1.msra.mxu0 0.0
    %858 = vmatprep.subr.mxu0 0.0
    %859 = vmatpush1.msra.mxu0 0.0
    %860 = vmatprep.subr.mxu0 0.0
    %861 = vmatpush1.msra.mxu0 0.0
    %862 = vmatprep.subr.mxu0 0.0
    %863 = vmatpush1.msra.mxu0 0.0
    %864 = vmatprep.subr.mxu0 0.0
    %865 = vmatpush1.msra.mxu0 0.0
    %866 = vmatprep.subr.mxu0 0.0
    %867 = vmatpush1.msra.mxu0 0.0
    %868 = vmatprep.subr.mxu0 0.0
    %869 = vmatpush1.msra.mxu0 0.0
    %870 = vmatprep.subr.mxu0 0.0
    %871 = vmatpush1.msra.mxu0 0.0
    %872 = vmatprep.subr.mxu0 0.0
    %873 = vmatpush1.msra.mxu0 0.0
    %874 = vmatprep.subr.mxu0 0.0
    %875 = vmatpush1.msra.mxu0 0.0
    %876 = vmatprep.subr.mxu0 0.0
    %877 = vmatpush1.msra.mxu0 0.0
    %878 = vmatprep.subr.mxu0 0.0
    %879 = vmatpush1.msra.mxu0 0.0
    %880 = vmatprep.subr.mxu0 0.0
    %881 = vmatpush1.msra.mxu0 0.0
    %882 = vmatprep.subr.mxu0 0.0
    %883 = vmatpush1.msra.mxu0 0.0
    %884 = vmatprep.mubr.f32.mxu0 0.0
    %885 = vmatmul.mubr.f32.gmra.mrb[0].mxu0 %v809
    %v886 = vpop.f32.mrb[0].mxu0
    %v887 = vadd.f32 0.0, %v886
    %v888 = vpop.f32.mrb[0].mxu0
    %889 = vmatprep.mubr.f32.mxu0 0.0
    %890 = vmatmul.mubr.f32.gmra.mrb[0].mxu0 %v812
    %v891 = vpop.f32.mrb[0].mxu0
    %v892 = vadd.f32 0.0, %v891
    %v893 = vpop.f32.mrb[0].mxu0
    %894 = vmatprep.mubr.f32.mxu0 0.0
    %895 = vmatmul.mubr.f32.gmra.mrb[0].mxu0 %v815
    %v896 = vpop.f32.mrb[0].mxu0
    %v897 = vadd.f32 0.0, %v896
    %v898 = vpop.f32.mrb[0].mxu0
    %899 = vmatprep.mubr.f32.mxu0 0.0
    %900 = vmatmul.mubr.f32.gmra.mrb[0].mxu0 %v818
    %v901 = vpop.f32.mrb[0].mxu0
    %v902 = vadd.f32 0.0, %v901
    %v903 = vpop.f32.mrb[0].mxu0
    %904 = vdwg.mxu0
    %v905 = vadd.f32 %v767, %v887
    %v906 = vadd.f32 %v768, %v892
    %v907 = vadd.f32 %v769, %v897
    %v908 = vadd.f32 %v770, %v902
    %s909 = scalar_lea.vmem %s7, 128
    %v910 = vld [vmem:[%s909] sm:$0xff]
    %v911 = vld [vmem:[%s909 + $0x8] sm:$0xff]
    %v912 = vld [vmem:[%s909 + $0x10] sm:$0xff]
    %v913 = vld [vmem:[%s909 + $0x18] sm:$0xff]
    %v915 = vsel %vm256, %v910, 0
    %v918 = vsel %vm256, %v911, 0
    %v921 = vsel %vm256, %v912, 0
    %v924 = vsel %vm256, %v913, 0
    %926 = vmatprep.subr.mxu0 0.0
    %927 = vmatpush1.msra.mxu0 %v377
    %928 = vmatprep.subr.mxu0 0.0
    %929 = vmatpush1.msra.mxu0 %v381
    %930 = vmatprep.subr.mxu0 0.0
    %931 = vmatpush1.msra.mxu0 %v387
    %932 = vmatprep.subr.mxu0 0.0
    %933 = vmatpush1.msra.mxu0 %v391
    %934 = vmatprep.subr.mxu0 0.0
    %935 = vmatpush1.msra.mxu0 %v397
    %936 = vmatprep.subr.mxu0 0.0
    %937 = vmatpush1.msra.mxu0 %v401
    %938 = vmatprep.subr.mxu0 0.0
    %939 = vmatpush1.msra.mxu0 %v407
    %940 = vmatprep.subr.mxu0 0.0
    %941 = vmatpush1.msra.mxu0 %v411
    %942 = vmatprep.subr.mxu0 0.0
    %943 = vmatpush1.msra.mxu0 0.0
    %944 = vmatprep.subr.mxu0 0.0
    %945 = vmatpush1.msra.mxu0 0.0
    %946 = vmatprep.subr.mxu0 0.0
    %947 = vmatpush1.msra.mxu0 0.0
    %948 = vmatprep.subr.mxu0 0.0
    %949 = vmatpush1.msra.mxu0 0.0
    %950 = vmatprep.subr.mxu0 0.0
    %951 = vmatpush1.msra.mxu0 0.0
    %952 = vmatprep.subr.mxu0 0.0
    %953 = vmatpush1.msra.mxu0 0.0
    %954 = vmatprep.subr.mxu0 0.0
    %955 = vmatpush1.msra.mxu0 0.0
    %956 = vmatprep.subr.mxu0 0.0
    %957 = vmatpush1.msra.mxu0 0.0
    %958 = vmatprep.subr.mxu0 0.0
    %959 = vmatpush1.msra.mxu0 0.0
    %960 = vmatprep.subr.mxu0 0.0
    %961 = vmatpush1.msra.mxu0 0.0
    %962 = vmatprep.subr.mxu0 0.0
    %963 = vmatpush1.msra.mxu0 0.0
    %964 = vmatprep.subr.mxu0 0.0
    %965 = vmatpush1.msra.mxu0 0.0
    %966 = vmatprep.subr.mxu0 0.0
    %967 = vmatpush1.msra.mxu0 0.0
    %968 = vmatprep.subr.mxu0 0.0
    %969 = vmatpush1.msra.mxu0 0.0
    %970 = vmatprep.subr.mxu0 0.0
    %971 = vmatpush1.msra.mxu0 0.0
    %972 = vmatprep.subr.mxu0 0.0
    %973 = vmatpush1.msra.mxu0 0.0
    %974 = vmatprep.subr.mxu0 0.0
    %975 = vmatpush1.msra.mxu0 0.0
    %976 = vmatprep.subr.mxu0 0.0
    %977 = vmatpush1.msra.mxu0 0.0
    %978 = vmatprep.subr.mxu0 0.0
    %979 = vmatpush1.msra.mxu0 0.0
    %980 = vmatprep.subr.mxu0 0.0
    %981 = vmatpush1.msra.mxu0 0.0
    %982 = vmatprep.subr.mxu0 0.0
    %983 = vmatpush1.msra.mxu0 0.0
    %984 = vmatprep.subr.mxu0 0.0
    %985 = vmatpush1.msra.mxu0 0.0
    %986 = vmatprep.subr.mxu0 0.0
    %987 = vmatpush1.msra.mxu0 0.0
    %988 = vmatprep.subr.mxu0 0.0
    %989 = vmatpush1.msra.mxu0 0.0
    %990 = vmatprep.mubr.f32.mxu0 0.0
    %991 = vmatmul.mubr.f32.gmra.mrb[0].mxu0 %v915
    %v992 = vpop.f32.mrb[0].mxu0
    %v993 = vadd.f32 0.0, %v992
    %v994 = vpop.f32.mrb[0].mxu0
    %995 = vmatprep.mubr.f32.mxu0 0.0
    %996 = vmatmul.mubr.f32.gmra.mrb[0].mxu0 %v918
    %v997 = vpop.f32.mrb[0].mxu0
    %v998 = vadd.f32 0.0, %v997
    %v999 = vpop.f32.mrb[0].mxu0
    %1000 = vmatprep.mubr.f32.mxu0 0.0
    %1001 = vmatmul.mubr.f32.gmra.mrb[0].mxu0 %v921
    %v1002 = vpop.f32.mrb[0].mxu0
    %v1003 = vadd.f32 0.0, %v1002
    %v1004 = vpop.f32.mrb[0].mxu0
    %1005 = vmatprep.mubr.f32.mxu0 0.0
    %1006 = vmatmul.mubr.f32.gmra.mrb[0].mxu0 %v924
    %v1007 = vpop.f32.mrb[0].mxu0
    %v1008 = vadd.f32 0.0, %v1007
    %v1009 = vpop.f32.mrb[0].mxu0
    %1010 = vdwg.mxu0
    %v1011 = vadd.f32 %v905, %v993
    %v1012 = vadd.f32 %v906, %v998
    %v1013 = vadd.f32 %v907, %v1003
    %v1014 = vadd.f32 %v908, %v1008
    %s1015 = scalar_lea.vmem %s7, 160
    %v1016 = vld [vmem:[%s1015] sm:$0xff]
    %v1017 = vld [vmem:[%s1015 + $0x8] sm:$0xff]
    %v1018 = vld [vmem:[%s1015 + $0x10] sm:$0xff]
    %v1019 = vld [vmem:[%s1015 + $0x18] sm:$0xff]
    %1028 = vrot.lane.b32.xlu0 %v377, 64
    %v1029 = vpop.permute.xlu0 %1028
    %1030 = vrot.lane.b32.xlu0 %v381, 64
    %v1031 = vpop.permute.xlu0 %1030
    %1032 = vrot.lane.b32.xlu0 %v387, 64
    %v1033 = vpop.permute.xlu0 %1032
    %1034 = vrot.lane.b32.xlu0 %v391, 64
    %v1035 = vpop.permute.xlu0 %1034
    %1036 = vrot.lane.b32.xlu0 %v397, 64
    %v1037 = vpop.permute.xlu0 %1036
    %1038 = vrot.lane.b32.xlu0 %v401, 64
    %v1039 = vpop.permute.xlu0 %1038
    %1040 = vrot.lane.b32.xlu0 %v407, 64
    %v1041 = vpop.permute.xlu0 %1040
    %1042 = vrot.lane.b32.xlu0 %v411, 64
    %v1043 = vpop.permute.xlu0 %1042
    %v1053 = vsel %vm256, %v1016, 0
    %v1056 = vsel %vm256, %v1017, 0
    %v1059 = vsel %vm256, %v1018, 0
    %v1062 = vsel %vm256, %v1019, 0
    %1064 = vmatprep.subr.mxu0 0.0
    %1065 = vmatpush1.msra.mxu0 %v1029
    %1066 = vmatprep.subr.mxu0 0.0
    %1067 = vmatpush1.msra.mxu0 %v1031
    %1068 = vmatprep.subr.mxu0 0.0
    %1069 = vmatpush1.msra.mxu0 %v1033
    %1070 = vmatprep.subr.mxu0 0.0
    %1071 = vmatpush1.msra.mxu0 %v1035
    %1072 = vmatprep.subr.mxu0 0.0
    %1073 = vmatpush1.msra.mxu0 %v1037
    %1074 = vmatprep.subr.mxu0 0.0
    %1075 = vmatpush1.msra.mxu0 %v1039
    %1076 = vmatprep.subr.mxu0 0.0
    %1077 = vmatpush1.msra.mxu0 %v1041
    %1078 = vmatprep.subr.mxu0 0.0
    %1079 = vmatpush1.msra.mxu0 %v1043
    %1080 = vmatprep.subr.mxu0 0.0
    %1081 = vmatpush1.msra.mxu0 0.0
    %1082 = vmatprep.subr.mxu0 0.0
    %1083 = vmatpush1.msra.mxu0 0.0
    %1084 = vmatprep.subr.mxu0 0.0
    %1085 = vmatpush1.msra.mxu0 0.0
    %1086 = vmatprep.subr.mxu0 0.0
    %1087 = vmatpush1.msra.mxu0 0.0
    %1088 = vmatprep.subr.mxu0 0.0
    %1089 = vmatpush1.msra.mxu0 0.0
    %1090 = vmatprep.subr.mxu0 0.0
    %1091 = vmatpush1.msra.mxu0 0.0
    %1092 = vmatprep.subr.mxu0 0.0
    %1093 = vmatpush1.msra.mxu0 0.0
    %1094 = vmatprep.subr.mxu0 0.0
    %1095 = vmatpush1.msra.mxu0 0.0
    %1096 = vmatprep.subr.mxu0 0.0
    %1097 = vmatpush1.msra.mxu0 0.0
    %1098 = vmatprep.subr.mxu0 0.0
    %1099 = vmatpush1.msra.mxu0 0.0
    %1100 = vmatprep.subr.mxu0 0.0
    %1101 = vmatpush1.msra.mxu0 0.0
    %1102 = vmatprep.subr.mxu0 0.0
    %1103 = vmatpush1.msra.mxu0 0.0
    %1104 = vmatprep.subr.mxu0 0.0
    %1105 = vmatpush1.msra.mxu0 0.0
    %1106 = vmatprep.subr.mxu0 0.0
    %1107 = vmatpush1.msra.mxu0 0.0
    %1108 = vmatprep.subr.mxu0 0.0
    %1109 = vmatpush1.msra.mxu0 0.0
    %1110 = vmatprep.subr.mxu0 0.0
    %1111 = vmatpush1.msra.mxu0 0.0
    %1112 = vmatprep.subr.mxu0 0.0
    %1113 = vmatpush1.msra.mxu0 0.0
    %1114 = vmatprep.subr.mxu0 0.0
    %1115 = vmatpush1.msra.mxu0 0.0
    %1116 = vmatprep.subr.mxu0 0.0
    %1117 = vmatpush1.msra.mxu0 0.0
    %1118 = vmatprep.subr.mxu0 0.0
    %1119 = vmatpush1.msra.mxu0 0.0
    %1120 = vmatprep.subr.mxu0 0.0
    %1121 = vmatpush1.msra.mxu0 0.0
    %1122 = vmatprep.subr.mxu0 0.0
    %1123 = vmatpush1.msra.mxu0 0.0
    %1124 = vmatprep.subr.mxu0 0.0
    %1125 = vmatpush1.msra.mxu0 0.0
    %1126 = vmatprep.subr.mxu0 0.0
    %1127 = vmatpush1.msra.mxu0 0.0
    %1128 = vmatprep.mubr.f32.mxu0 0.0
    %1129 = vmatmul.mubr.f32.gmra.mrb[0].mxu0 %v1053
    %v1130 = vpop.f32.mrb[0].mxu0
    %v1131 = vadd.f32 0.0, %v1130
    %v1132 = vpop.f32.mrb[0].mxu0
    %1133 = vmatprep.mubr.f32.mxu0 0.0
    %1134 = vmatmul.mubr.f32.gmra.mrb[0].mxu0 %v1056
    %v1135 = vpop.f32.mrb[0].mxu0
    %v1136 = vadd.f32 0.0, %v1135
    %v1137 = vpop.f32.mrb[0].mxu0
    %1138 = vmatprep.mubr.f32.mxu0 0.0
    %1139 = vmatmul.mubr.f32.gmra.mrb[0].mxu0 %v1059
    %v1140 = vpop.f32.mrb[0].mxu0
    %v1141 = vadd.f32 0.0, %v1140
    %v1142 = vpop.f32.mrb[0].mxu0
    %1143 = vmatprep.mubr.f32.mxu0 0.0
    %1144 = vmatmul.mubr.f32.gmra.mrb[0].mxu0 %v1062
    %v1145 = vpop.f32.mrb[0].mxu0
    %v1146 = vadd.f32 0.0, %v1145
    %v1147 = vpop.f32.mrb[0].mxu0
    %1148 = vdwg.mxu0
    %v1149 = vadd.f32 %v1011, %v1131
    %v1150 = vadd.f32 %v1012, %v1136
    %v1151 = vadd.f32 %v1013, %v1141
    %v1152 = vadd.f32 %v1014, %v1146
    %s1153 = scalar_lea.vmem %s7, 192
    %v1154 = vld [vmem:[%s1153] sm:$0xff]
    %v1155 = vld [vmem:[%s1153 + $0x8] sm:$0xff]
    %v1156 = vld [vmem:[%s1153 + $0x10] sm:$0xff]
    %v1157 = vld [vmem:[%s1153 + $0x18] sm:$0xff]
    %v1159 = vsel %vm256, %v1154, 0
    %v1162 = vsel %vm256, %v1155, 0
    %v1165 = vsel %vm256, %v1156, 0
    %v1168 = vsel %vm256, %v1157, 0
    %1170 = vmatprep.subr.mxu0 0.0
    %1171 = vmatpush1.msra.mxu0 %v379
    %1172 = vmatprep.subr.mxu0 0.0
    %1173 = vmatpush1.msra.mxu0 %v383
    %1174 = vmatprep.subr.mxu0 0.0
    %1175 = vmatpush1.msra.mxu0 %v389
    %1176 = vmatprep.subr.mxu0 0.0
    %1177 = vmatpush1.msra.mxu0 %v393
    %1178 = vmatprep.subr.mxu0 0.0
    %1179 = vmatpush1.msra.mxu0 %v399
    %1180 = vmatprep.subr.mxu0 0.0
    %1181 = vmatpush1.msra.mxu0 %v403
    %1182 = vmatprep.subr.mxu0 0.0
    %1183 = vmatpush1.msra.mxu0 %v409
    %1184 = vmatprep.subr.mxu0 0.0
    %1185 = vmatpush1.msra.mxu0 %v413
    %1186 = vmatprep.subr.mxu0 0.0
    %1187 = vmatpush1.msra.mxu0 0.0
    %1188 = vmatprep.subr.mxu0 0.0
    %1189 = vmatpush1.msra.mxu0 0.0
    %1190 = vmatprep.subr.mxu0 0.0
    %1191 = vmatpush1.msra.mxu0 0.0
    %1192 = vmatprep.subr.mxu0 0.0
    %1193 = vmatpush1.msra.mxu0 0.0
    %1194 = vmatprep.subr.mxu0 0.0
    %1195 = vmatpush1.msra.mxu0 0.0
    %1196 = vmatprep.subr.mxu0 0.0
    %1197 = vmatpush1.msra.mxu0 0.0
    %1198 = vmatprep.subr.mxu0 0.0
    %1199 = vmatpush1.msra.mxu0 0.0
    %1200 = vmatprep.subr.mxu0 0.0
    %1201 = vmatpush1.msra.mxu0 0.0
    %1202 = vmatprep.subr.mxu0 0.0
    %1203 = vmatpush1.msra.mxu0 0.0
    %1204 = vmatprep.subr.mxu0 0.0
    %1205 = vmatpush1.msra.mxu0 0.0
    %1206 = vmatprep.subr.mxu0 0.0
    %1207 = vmatpush1.msra.mxu0 0.0
    %1208 = vmatprep.subr.mxu0 0.0
    %1209 = vmatpush1.msra.mxu0 0.0
    %1210 = vmatprep.subr.mxu0 0.0
    %1211 = vmatpush1.msra.mxu0 0.0
    %1212 = vmatprep.subr.mxu0 0.0
    %1213 = vmatpush1.msra.mxu0 0.0
    %1214 = vmatprep.subr.mxu0 0.0
    %1215 = vmatpush1.msra.mxu0 0.0
    %1216 = vmatprep.subr.mxu0 0.0
    %1217 = vmatpush1.msra.mxu0 0.0
    %1218 = vmatprep.subr.mxu0 0.0
    %1219 = vmatpush1.msra.mxu0 0.0
    %1220 = vmatprep.subr.mxu0 0.0
    %1221 = vmatpush1.msra.mxu0 0.0
    %1222 = vmatprep.subr.mxu0 0.0
    %1223 = vmatpush1.msra.mxu0 0.0
    %1224 = vmatprep.subr.mxu0 0.0
    %1225 = vmatpush1.msra.mxu0 0.0
    %1226 = vmatprep.subr.mxu0 0.0
    %1227 = vmatpush1.msra.mxu0 0.0
    %1228 = vmatprep.subr.mxu0 0.0
    %1229 = vmatpush1.msra.mxu0 0.0
    %1230 = vmatprep.subr.mxu0 0.0
    %1231 = vmatpush1.msra.mxu0 0.0
    %1232 = vmatprep.subr.mxu0 0.0
    %1233 = vmatpush1.msra.mxu0 0.0
    %1234 = vmatprep.mubr.f32.mxu0 0.0
    %1235 = vmatmul.mubr.f32.gmra.mrb[0].mxu0 %v1159
    %v1236 = vpop.f32.mrb[0].mxu0
    %v1237 = vadd.f32 0.0, %v1236
    %v1238 = vpop.f32.mrb[0].mxu0
    %1239 = vmatprep.mubr.f32.mxu0 0.0
    %1240 = vmatmul.mubr.f32.gmra.mrb[0].mxu0 %v1162
    %v1241 = vpop.f32.mrb[0].mxu0
    %v1242 = vadd.f32 0.0, %v1241
    %v1243 = vpop.f32.mrb[0].mxu0
    %1244 = vmatprep.mubr.f32.mxu0 0.0
    %1245 = vmatmul.mubr.f32.gmra.mrb[0].mxu0 %v1165
    %v1246 = vpop.f32.mrb[0].mxu0
    %v1247 = vadd.f32 0.0, %v1246
    %v1248 = vpop.f32.mrb[0].mxu0
    %1249 = vmatprep.mubr.f32.mxu0 0.0
    %1250 = vmatmul.mubr.f32.gmra.mrb[0].mxu0 %v1168
    %v1251 = vpop.f32.mrb[0].mxu0
    %v1252 = vadd.f32 0.0, %v1251
    %v1253 = vpop.f32.mrb[0].mxu0
    %1254 = vdwg.mxu0
    %v1255 = vadd.f32 %v1149, %v1237
    %v1256 = vadd.f32 %v1150, %v1242
    %v1257 = vadd.f32 %v1151, %v1247
    %v1258 = vadd.f32 %v1152, %v1252
    %v1259 = vmax.f32 %v1255, 0.0
    %v1260 = vmax.f32 %v1256, 0.0
    %v1261 = vmax.f32 %v1257, 0.0
    %v1262 = vmax.f32 %v1258, 0.0
    %v1263 = vld [vmem:[%s9] sm:$0xff]
    %v1264 = vld [vmem:[%s9 + $0x8] sm:$0xff]
    %vm1265 = vcmask 261120
    %v1267 = vsel %vm1265, %v1263, 0
    %v1270 = vsel %vm1265, %v1264, 0
    %1272 = vmatprep.subr.mxu0 0.0
    %1273 = vmatpush1.msra.mxu0 %v1259
    %1274 = vmatprep.subr.mxu0 0.0
    %1275 = vmatpush1.msra.mxu0 %v1260
    %1276 = vmatprep.subr.mxu0 0.0
    %1277 = vmatpush1.msra.mxu0 %v1261
    %1278 = vmatprep.subr.mxu0 0.0
    %1279 = vmatpush1.msra.mxu0 %v1262
    %1280 = vmatprep.subr.mxu0 0.0
    %1281 = vmatpush1.msra.mxu0 0.0
    %1282 = vmatprep.subr.mxu0 0.0
    %1283 = vmatpush1.msra.mxu0 0.0
    %1284 = vmatprep.subr.mxu0 0.0
    %1285 = vmatpush1.msra.mxu0 0.0
    %1286 = vmatprep.subr.mxu0 0.0
    %1287 = vmatpush1.msra.mxu0 0.0
    %1288 = vmatprep.subr.mxu0 0.0
    %1289 = vmatpush1.msra.mxu0 0.0
    %1290 = vmatprep.subr.mxu0 0.0
    %1291 = vmatpush1.msra.mxu0 0.0
    %1292 = vmatprep.subr.mxu0 0.0
    %1293 = vmatpush1.msra.mxu0 0.0
    %1294 = vmatprep.subr.mxu0 0.0
    %1295 = vmatpush1.msra.mxu0 0.0
    %1296 = vmatprep.subr.mxu0 0.0
    %1297 = vmatpush1.msra.mxu0 0.0
    %1298 = vmatprep.subr.mxu0 0.0
    %1299 = vmatpush1.msra.mxu0 0.0
    %1300 = vmatprep.subr.mxu0 0.0
    %1301 = vmatpush1.msra.mxu0 0.0
    %1302 = vmatprep.subr.mxu0 0.0
    %1303 = vmatpush1.msra.mxu0 0.0
    %1304 = vmatprep.subr.mxu0 0.0
    %1305 = vmatpush1.msra.mxu0 0.0
    %1306 = vmatprep.subr.mxu0 0.0
    %1307 = vmatpush1.msra.mxu0 0.0
    %1308 = vmatprep.subr.mxu0 0.0
    %1309 = vmatpush1.msra.mxu0 0.0
    %1310 = vmatprep.subr.mxu0 0.0
    %1311 = vmatpush1.msra.mxu0 0.0
    %1312 = vmatprep.subr.mxu0 0.0
    %1313 = vmatpush1.msra.mxu0 0.0
    %1314 = vmatprep.subr.mxu0 0.0
    %1315 = vmatpush1.msra.mxu0 0.0
    %1316 = vmatprep.subr.mxu0 0.0
    %1317 = vmatpush1.msra.mxu0 0.0
    %1318 = vmatprep.subr.mxu0 0.0
    %1319 = vmatpush1.msra.mxu0 0.0
    %1320 = vmatprep.subr.mxu0 0.0
    %1321 = vmatpush1.msra.mxu0 0.0
    %1322 = vmatprep.subr.mxu0 0.0
    %1323 = vmatpush1.msra.mxu0 0.0
    %1324 = vmatprep.subr.mxu0 0.0
    %1325 = vmatpush1.msra.mxu0 0.0
    %1326 = vmatprep.subr.mxu0 0.0
    %1327 = vmatpush1.msra.mxu0 0.0
    %1328 = vmatprep.subr.mxu0 0.0
    %1329 = vmatpush1.msra.mxu0 0.0
    %1330 = vmatprep.subr.mxu0 0.0
    %1331 = vmatpush1.msra.mxu0 0.0
    %1332 = vmatprep.subr.mxu0 0.0
    %1333 = vmatpush1.msra.mxu0 0.0
    %1334 = vmatprep.subr.mxu0 0.0
    %1335 = vmatpush1.msra.mxu0 0.0
    %1336 = vmatprep.mubr.f32.mxu0 0.0
    %1337 = vmatmul.mubr.f32.gmra.mrb[0].mxu0 %v1267
    %v1338 = vpop.f32.mrb[0].mxu0
    %v1339 = vadd.f32 0.0, %v1338
    %v1340 = vpop.f32.mrb[0].mxu0
    %1341 = vmatprep.mubr.f32.mxu0 0.0
    %1342 = vmatmul.mubr.f32.gmra.mrb[0].mxu0 %v1270
    %v1343 = vpop.f32.mrb[0].mxu0
    %v1344 = vadd.f32 0.0, %v1343
    %v1345 = vpop.f32.mrb[0].mxu0
    %1346 = vdwg.mxu0
    %s1347 = scalar_lea.vmem %s9, 16
    %v1348 = vld [vmem:[%s1347] sm:$0xff]
    %v1349 = vld [vmem:[%s1347 + $0x8] sm:$0xff]
    %v1351 = vsel %vm1265, %v1348, 0
    %v1354 = vsel %vm1265, %v1349, 0
    %1356 = vmatprep.subr.mxu0 0.0
    %1357 = vmatpush1.msra.mxu0 %v1259
    %1358 = vmatprep.subr.mxu0 0.0
    %1359 = vmatpush1.msra.mxu0 %v1260
    %1360 = vmatprep.subr.mxu0 0.0
    %1361 = vmatpush1.msra.mxu0 %v1261
    %1362 = vmatprep.subr.mxu0 0.0
    %1363 = vmatpush1.msra.mxu0 %v1262
    %1364 = vmatprep.subr.mxu0 0.0
    %1365 = vmatpush1.msra.mxu0 0.0
    %1366 = vmatprep.subr.mxu0 0.0
    %1367 = vmatpush1.msra.mxu0 0.0
    %1368 = vmatprep.subr.mxu0 0.0
    %1369 = vmatpush1.msra.mxu0 0.0
    %1370 = vmatprep.subr.mxu0 0.0
    %1371 = vmatpush1.msra.mxu0 0.0
    %1372 = vmatprep.subr.mxu0 0.0
    %1373 = vmatpush1.msra.mxu0 0.0
    %1374 = vmatprep.subr.mxu0 0.0
    %1375 = vmatpush1.msra.mxu0 0.0
    %1376 = vmatprep.subr.mxu0 0.0
    %1377 = vmatpush1.msra.mxu0 0.0
    %1378 = vmatprep.subr.mxu0 0.0
    %1379 = vmatpush1.msra.mxu0 0.0
    %1380 = vmatprep.subr.mxu0 0.0
    %1381 = vmatpush1.msra.mxu0 0.0
    %1382 = vmatprep.subr.mxu0 0.0
    %1383 = vmatpush1.msra.mxu0 0.0
    %1384 = vmatprep.subr.mxu0 0.0
    %1385 = vmatpush1.msra.mxu0 0.0
    %1386 = vmatprep.subr.mxu0 0.0
    %1387 = vmatpush1.msra.mxu0 0.0
    %1388 = vmatprep.subr.mxu0 0.0
    %1389 = vmatpush1.msra.mxu0 0.0
    %1390 = vmatprep.subr.mxu0 0.0
    %1391 = vmatpush1.msra.mxu0 0.0
    %1392 = vmatprep.subr.mxu0 0.0
    %1393 = vmatpush1.msra.mxu0 0.0
    %1394 = vmatprep.subr.mxu0 0.0
    %1395 = vmatpush1.msra.mxu0 0.0
    %1396 = vmatprep.subr.mxu0 0.0
    %1397 = vmatpush1.msra.mxu0 0.0
    %1398 = vmatprep.subr.mxu0 0.0
    %1399 = vmatpush1.msra.mxu0 0.0
    %1400 = vmatprep.subr.mxu0 0.0
    %1401 = vmatpush1.msra.mxu0 0.0
    %1402 = vmatprep.subr.mxu0 0.0
    %1403 = vmatpush1.msra.mxu0 0.0
    %1404 = vmatprep.subr.mxu0 0.0
    %1405 = vmatpush1.msra.mxu0 0.0
    %1406 = vmatprep.subr.mxu0 0.0
    %1407 = vmatpush1.msra.mxu0 0.0
    %1408 = vmatprep.subr.mxu0 0.0
    %1409 = vmatpush1.msra.mxu0 0.0
    %1410 = vmatprep.subr.mxu0 0.0
    %1411 = vmatpush1.msra.mxu0 0.0
    %1412 = vmatprep.subr.mxu0 0.0
    %1413 = vmatpush1.msra.mxu0 0.0
    %1414 = vmatprep.subr.mxu0 0.0
    %1415 = vmatpush1.msra.mxu0 0.0
    %1416 = vmatprep.subr.mxu0 0.0
    %1417 = vmatpush1.msra.mxu0 0.0
    %1418 = vmatprep.subr.mxu0 0.0
    %1419 = vmatpush1.msra.mxu0 0.0
    %1420 = vmatprep.mubr.f32.mxu0 0.0
    %1421 = vmatmul.mubr.f32.gmra.mrb[0].mxu0 %v1351
    %v1422 = vpop.f32.mrb[0].mxu0
    %v1423 = vadd.f32 0.0, %v1422
    %v1424 = vpop.f32.mrb[0].mxu0
    %1425 = vmatprep.mubr.f32.mxu0 0.0
    %1426 = vmatmul.mubr.f32.gmra.mrb[0].mxu0 %v1354
    %v1427 = vpop.f32.mrb[0].mxu0
    %v1428 = vadd.f32 0.0, %v1427
    %v1429 = vpop.f32.mrb[0].mxu0
    %1430 = vdwg.mxu0
    %v1431 = vmax.f32 %v1339, %v1423
    %v1432 = vmax.f32 %v1344, %v1428
    %s1433 = scalar_lea.vmem %s9, 32
    %v1434 = vld [vmem:[%s1433] sm:$0xff]
    %v1435 = vld [vmem:[%s1433 + $0x8] sm:$0xff]
    %v1437 = vsel %vm1265, %v1434, 0
    %v1440 = vsel %vm1265, %v1435, 0
    %1442 = vmatprep.subr.mxu0 0.0
    %1443 = vmatpush1.msra.mxu0 %v1259
    %1444 = vmatprep.subr.mxu0 0.0
    %1445 = vmatpush1.msra.mxu0 %v1260
    %1446 = vmatprep.subr.mxu0 0.0
    %1447 = vmatpush1.msra.mxu0 %v1261
    %1448 = vmatprep.subr.mxu0 0.0
    %1449 = vmatpush1.msra.mxu0 %v1262
    %1450 = vmatprep.subr.mxu0 0.0
    %1451 = vmatpush1.msra.mxu0 0.0
    %1452 = vmatprep.subr.mxu0 0.0
    %1453 = vmatpush1.msra.mxu0 0.0
    %1454 = vmatprep.subr.mxu0 0.0
    %1455 = vmatpush1.msra.mxu0 0.0
    %1456 = vmatprep.subr.mxu0 0.0
    %1457 = vmatpush1.msra.mxu0 0.0
    %1458 = vmatprep.subr.mxu0 0.0
    %1459 = vmatpush1.msra.mxu0 0.0
    %1460 = vmatprep.subr.mxu0 0.0
    %1461 = vmatpush1.msra.mxu0 0.0
    %1462 = vmatprep.subr.mxu0 0.0
    %1463 = vmatpush1.msra.mxu0 0.0
    %1464 = vmatprep.subr.mxu0 0.0
    %1465 = vmatpush1.msra.mxu0 0.0
    %1466 = vmatprep.subr.mxu0 0.0
    %1467 = vmatpush1.msra.mxu0 0.0
    %1468 = vmatprep.subr.mxu0 0.0
    %1469 = vmatpush1.msra.mxu0 0.0
    %1470 = vmatprep.subr.mxu0 0.0
    %1471 = vmatpush1.msra.mxu0 0.0
    %1472 = vmatprep.subr.mxu0 0.0
    %1473 = vmatpush1.msra.mxu0 0.0
    %1474 = vmatprep.subr.mxu0 0.0
    %1475 = vmatpush1.msra.mxu0 0.0
    %1476 = vmatprep.subr.mxu0 0.0
    %1477 = vmatpush1.msra.mxu0 0.0
    %1478 = vmatprep.subr.mxu0 0.0
    %1479 = vmatpush1.msra.mxu0 0.0
    %1480 = vmatprep.subr.mxu0 0.0
    %1481 = vmatpush1.msra.mxu0 0.0
    %1482 = vmatprep.subr.mxu0 0.0
    %1483 = vmatpush1.msra.mxu0 0.0
    %1484 = vmatprep.subr.mxu0 0.0
    %1485 = vmatpush1.msra.mxu0 0.0
    %1486 = vmatprep.subr.mxu0 0.0
    %1487 = vmatpush1.msra.mxu0 0.0
    %1488 = vmatprep.subr.mxu0 0.0
    %1489 = vmatpush1.msra.mxu0 0.0
    %1490 = vmatprep.subr.mxu0 0.0
    %1491 = vmatpush1.msra.mxu0 0.0
    %1492 = vmatprep.subr.mxu0 0.0
    %1493 = vmatpush1.msra.mxu0 0.0
    %1494 = vmatprep.subr.mxu0 0.0
    %1495 = vmatpush1.msra.mxu0 0.0
    %1496 = vmatprep.subr.mxu0 0.0
    %1497 = vmatpush1.msra.mxu0 0.0
    %1498 = vmatprep.subr.mxu0 0.0
    %1499 = vmatpush1.msra.mxu0 0.0
    %1500 = vmatprep.subr.mxu0 0.0
    %1501 = vmatpush1.msra.mxu0 0.0
    %1502 = vmatprep.subr.mxu0 0.0
    %1503 = vmatpush1.msra.mxu0 0.0
    %1504 = vmatprep.subr.mxu0 0.0
    %1505 = vmatpush1.msra.mxu0 0.0
    %1506 = vmatprep.mubr.f32.mxu0 0.0
    %1507 = vmatmul.mubr.f32.gmra.mrb[0].mxu0 %v1437
    %v1508 = vpop.f32.mrb[0].mxu0
    %v1509 = vadd.f32 0.0, %v1508
    %v1510 = vpop.f32.mrb[0].mxu0
    %1511 = vmatprep.mubr.f32.mxu0 0.0
    %1512 = vmatmul.mubr.f32.gmra.mrb[0].mxu0 %v1440
    %v1513 = vpop.f32.mrb[0].mxu0
    %v1514 = vadd.f32 0.0, %v1513
    %v1515 = vpop.f32.mrb[0].mxu0
    %1516 = vdwg.mxu0
    %v1517 = vmax.f32 %v1431, %v1509
    %v1518 = vmax.f32 %v1432, %v1514
    %v1519 = vpack.c.bf16 %v1518, %v1517
    %v1520 = vld [vmem:[%s11] sm:$0xff]
    %v1521 = vld [vmem:[%s11 + $0x8] sm:$0xff]
    %v1522 = vld [vmem:[%s11 + $0x10] sm:$0xff]
    %v1523 = vld [vmem:[%s11 + $0x18] sm:$0xff]
    %v1524 = vld [vmem:[%s11 + $0x20] sm:$0xff]
    %v1525 = vld [vmem:[%s11 + $0x28] sm:$0xff]
    %v1526 = vld [vmem:[%s11 + $0x30] sm:$0xff]
    %v1527 = vld [vmem:[%s11 + $0x38] sm:$0xff]
    %v1536 = vunpack.c.l.b16 %v1520
    %v1537 = vunpack.c.h.b16 %v1520
    %v1538 = vunpack.c.l.b16 %v1521
    %v1539 = vunpack.c.h.b16 %v1521
    %v1540 = vunpack.c.l.b16 %v1522
    %v1541 = vunpack.c.h.b16 %v1522
    %v1542 = vunpack.c.l.b16 %v1523
    %v1543 = vunpack.c.h.b16 %v1523
    %v1544 = vunpack.c.l.b16 %v1524
    %v1545 = vunpack.c.h.b16 %v1524
    %v1546 = vunpack.c.l.b16 %v1525
    %v1547 = vunpack.c.h.b16 %v1525
    %v1548 = vunpack.c.l.b16 %v1526
    %v1549 = vunpack.c.h.b16 %v1526
    %v1550 = vunpack.c.l.b16 %v1527
    %v1551 = vunpack.c.h.b16 %v1527
    %v1552 = vpack.c.b16 %v1538, %v1536
    %v1553 = vpack.c.b16 %v1539, %v1537
    %v1554 = vpack.c.b16 %v1542, %v1540
    %v1555 = vpack.c.b16 %v1543, %v1541
    %v1556 = vpack.c.b16 %v1546, %v1544
    %v1557 = vpack.c.b16 %v1547, %v1545
    %v1558 = vpack.c.b16 %v1550, %v1548
    %v1559 = vpack.c.b16 %v1551, %v1549
    %v1569 = vsel %vm256, %v1519, 0
    %1571 = vmatprep.subr.bf16.mxu0 %v1553
    %1572 = vmatpush1.bf16.msra.mxu0 %v1552
    %1573 = vmatprep.subr.bf16.mxu0 %v1555
    %1574 = vmatpush1.bf16.msra.mxu0 %v1554
    %1575 = vmatprep.subr.bf16.mxu0 %v1557
    %1576 = vmatpush1.bf16.msra.mxu0 %v1556
    %1577 = vmatprep.subr.bf16.mxu0 %v1559
    %1578 = vmatpush1.bf16.msra.mxu0 %v1558
    %1579 = vmatprep.subr.bf16.mxu0 0
    %1580 = vmatpush1.bf16.msra.mxu0 0
    %1581 = vmatprep.subr.bf16.mxu0 0
    %1582 = vmatpush1.bf16.msra.mxu0 0
    %1583 = vmatprep.subr.bf16.mxu0 0
    %1584 = vmatpush1.bf16.msra.mxu0 0
    %1585 = vmatprep.subr.bf16.mxu0 0
    %1586 = vmatpush1.bf16.msra.mxu0 0
    %1587 = vmatprep.subr.bf16.mxu0 0
    %1588 = vmatpush1.bf16.msra.mxu0 0
    %1589 = vmatprep.subr.bf16.mxu0 0
    %1590 = vmatpush1.bf16.msra.mxu0 0
    %1591 = vmatprep.subr.bf16.mxu0 0
    %1592 = vmatpush1.bf16.msra.mxu0 0
    %1593 = vmatprep.subr.bf16.mxu0 0
    %1594 = vmatpush1.bf16.msra.mxu0 0
    %1595 = vmatprep.subr.bf16.mxu0 0
    %1596 = vmatpush1.bf16.msra.mxu0 0
    %1597 = vmatprep.subr.bf16.mxu0 0
    %1598 = vmatpush1.bf16.msra.mxu0 0
    %1599 = vmatprep.subr.bf16.mxu0 0
    %1600 = vmatpush1.bf16.msra.mxu0 0
    %1601 = vmatprep.subr.bf16.mxu0 0
    %1602 = vmatpush1.bf16.msra.mxu0 0
    %1603 = vmatprep.mubr.bf16.mxu0 0
    %1604 = vmatmul.mubr.bf16.gmra.mrb[0].mxu0 %v1569
    %v1605 = vpop.f32.mrb[0].mxu0
    %v1606 = vadd.f32 0.0, %v1605
    %v1607 = vpop.f32.mrb[0].mxu0
    %v1608 = vadd.f32 0.0, %v1607
    %v1609 = vpop.f32.mrb[0].mxu0
    %v1610 = vadd.f32 0.0, %v1609
    %v1611 = vpop.f32.mrb[0].mxu0
    %v1612 = vadd.f32 0.0, %v1611
    %1613 = vdwg.mxu0
    %v1614 = vld [vmem:[%s13] sm:$0x1]
    %v1615 = vld [vmem:[%s15] sm:$0xff]
    %v1616 = vld [vmem:[%s15 + $0x8] sm:$0xff]
    %vm1617 = vcmask 130048
    %v1619 = vsel %vm1617, %v1615, 0
    %v1622 = vsel %vm1617, %v1616, 0
    %1624 = vmatprep.subr.mxu0 0.0
    %1625 = vmatpush1.msra.mxu0 %v1606
    %1626 = vmatprep.subr.mxu0 0.0
    %1627 = vmatpush1.msra.mxu0 %v1610
    %1628 = vmatprep.subr.mxu0 0.0
    %1629 = vmatpush1.msra.mxu0 0.0
    %1630 = vmatprep.subr.mxu0 0.0
    %1631 = vmatpush1.msra.mxu0 0.0
    %1632 = vmatprep.subr.mxu0 0.0
    %1633 = vmatpush1.msra.mxu0 0.0
    %1634 = vmatprep.subr.mxu0 0.0
    %1635 = vmatpush1.msra.mxu0 0.0
    %1636 = vmatprep.subr.mxu0 0.0
    %1637 = vmatpush1.msra.mxu0 0.0
    %1638 = vmatprep.subr.mxu0 0.0
    %1639 = vmatpush1.msra.mxu0 0.0
    %1640 = vmatprep.subr.mxu0 0.0
    %1641 = vmatpush1.msra.mxu0 0.0
    %1642 = vmatprep.subr.mxu0 0.0
    %1643 = vmatpush1.msra.mxu0 0.0
    %1644 = vmatprep.subr.mxu0 0.0
    %1645 = vmatpush1.msra.mxu0 0.0
    %1646 = vmatprep.subr.mxu0 0.0
    %1647 = vmatpush1.msra.mxu0 0.0
    %1648 = vmatprep.subr.mxu0 0.0
    %1649 = vmatpush1.msra.mxu0 0.0
    %1650 = vmatprep.subr.mxu0 0.0
    %1651 = vmatpush1.msra.mxu0 0.0
    %1652 = vmatprep.subr.mxu0 0.0
    %1653 = vmatpush1.msra.mxu0 0.0
    %1654 = vmatprep.subr.mxu0 0.0
    %1655 = vmatpush1.msra.mxu0 0.0
    %1656 = vmatprep.subr.mxu0 0.0
    %1657 = vmatpush1.msra.mxu0 0.0
    %1658 = vmatprep.subr.mxu0 0.0
    %1659 = vmatpush1.msra.mxu0 0.0
    %1660 = vmatprep.subr.mxu0 0.0
    %1661 = vmatpush1.msra.mxu0 0.0
    %1662 = vmatprep.subr.mxu0 0.0
    %1663 = vmatpush1.msra.mxu0 0.0
    %1664 = vmatprep.subr.mxu0 0.0
    %1665 = vmatpush1.msra.mxu0 0.0
    %1666 = vmatprep.subr.mxu0 0.0
    %1667 = vmatpush1.msra.mxu0 0.0
    %1668 = vmatprep.subr.mxu0 0.0
    %1669 = vmatpush1.msra.mxu0 0.0
    %1670 = vmatprep.subr.mxu0 0.0
    %1671 = vmatpush1.msra.mxu0 0.0
    %1672 = vmatprep.subr.mxu0 0.0
    %1673 = vmatpush1.msra.mxu0 0.0
    %1674 = vmatprep.subr.mxu0 0.0
    %1675 = vmatpush1.msra.mxu0 0.0
    %1676 = vmatprep.subr.mxu0 0.0
    %1677 = vmatpush1.msra.mxu0 0.0
    %1678 = vmatprep.subr.mxu0 0.0
    %1679 = vmatpush1.msra.mxu0 0.0
    %1680 = vmatprep.subr.mxu0 0.0
    %1681 = vmatpush1.msra.mxu0 0.0
    %1682 = vmatprep.subr.mxu0 0.0
    %1683 = vmatpush1.msra.mxu0 0.0
    %1684 = vmatprep.subr.mxu0 0.0
    %1685 = vmatpush1.msra.mxu0 0.0
    %1686 = vmatprep.subr.mxu0 0.0
    %1687 = vmatpush1.msra.mxu0 0.0
    %1688 = vmatprep.mubr.f32.mxu0 0.0
    %1689 = vmatmul.mubr.f32.gmra.mrb[0].mxu0 %v1619
    %v1690 = vpop.f32.mrb[0].mxu0
    %v1691 = vadd.f32 0.0, %v1690
    %v1692 = vpop.f32.mrb[0].mxu0
    %1693 = vmatprep.mubr.f32.mxu0 0.0
    %1694 = vmatmul.mubr.f32.gmra.mrb[0].mxu0 %v1622
    %v1695 = vpop.f32.mrb[0].mxu0
    %v1696 = vadd.f32 0.0, %v1695
    %v1697 = vpop.f32.mrb[0].mxu0
    %1698 = vdwg.mxu0
    %v1700 = vlaneseq
    %v1701 = vshrl.u32 %v1700, 7
    %v1702 = vsub.s32 0, %v1701
    %v1703 = vrot.slane %v1614, %v1702
    %v1705 = vadd.f32 %v1703, %v1691
    %v1706 = vadd.f32 %v1703, %v1696
    %s1707 = scalar_lea.vmem %s15, 16
    %v1708 = vld [vmem:[%s1707] sm:$0xff]
    %v1709 = vld [vmem:[%s1707 + $0x8] sm:$0xff]
    %1712 = vrot.lane.b32.xlu0 %v1606, 64
    %v1713 = vpop.permute.xlu0 %1712
    %1714 = vrot.lane.b32.xlu0 %v1610, 64
    %v1715 = vpop.permute.xlu0 %1714
    %v1719 = vsel %vm1617, %v1708, 0
    %v1722 = vsel %vm1617, %v1709, 0
    %1724 = vmatprep.subr.mxu0 0.0
    %1725 = vmatpush1.msra.mxu0 %v1713
    %1726 = vmatprep.subr.mxu0 0.0
    %1727 = vmatpush1.msra.mxu0 %v1715
    %1728 = vmatprep.subr.mxu0 0.0
    %1729 = vmatpush1.msra.mxu0 0.0
    %1730 = vmatprep.subr.mxu0 0.0
    %1731 = vmatpush1.msra.mxu0 0.0
    %1732 = vmatprep.subr.mxu0 0.0
    %1733 = vmatpush1.msra.mxu0 0.0
    %1734 = vmatprep.subr.mxu0 0.0
    %1735 = vmatpush1.msra.mxu0 0.0
    %1736 = vmatprep.subr.mxu0 0.0
    %1737 = vmatpush1.msra.mxu0 0.0
    %1738 = vmatprep.subr.mxu0 0.0
    %1739 = vmatpush1.msra.mxu0 0.0
    %1740 = vmatprep.subr.mxu0 0.0
    %1741 = vmatpush1.msra.mxu0 0.0
    %1742 = vmatprep.subr.mxu0 0.0
    %1743 = vmatpush1.msra.mxu0 0.0
    %1744 = vmatprep.subr.mxu0 0.0
    %1745 = vmatpush1.msra.mxu0 0.0
    %1746 = vmatprep.subr.mxu0 0.0
    %1747 = vmatpush1.msra.mxu0 0.0
    %1748 = vmatprep.subr.mxu0 0.0
    %1749 = vmatpush1.msra.mxu0 0.0
    %1750 = vmatprep.subr.mxu0 0.0
    %1751 = vmatpush1.msra.mxu0 0.0
    %1752 = vmatprep.subr.mxu0 0.0
    %1753 = vmatpush1.msra.mxu0 0.0
    %1754 = vmatprep.subr.mxu0 0.0
    %1755 = vmatpush1.msra.mxu0 0.0
    %1756 = vmatprep.subr.mxu0 0.0
    %1757 = vmatpush1.msra.mxu0 0.0
    %1758 = vmatprep.subr.mxu0 0.0
    %1759 = vmatpush1.msra.mxu0 0.0
    %1760 = vmatprep.subr.mxu0 0.0
    %1761 = vmatpush1.msra.mxu0 0.0
    %1762 = vmatprep.subr.mxu0 0.0
    %1763 = vmatpush1.msra.mxu0 0.0
    %1764 = vmatprep.subr.mxu0 0.0
    %1765 = vmatpush1.msra.mxu0 0.0
    %1766 = vmatprep.subr.mxu0 0.0
    %1767 = vmatpush1.msra.mxu0 0.0
    %1768 = vmatprep.subr.mxu0 0.0
    %1769 = vmatpush1.msra.mxu0 0.0
    %1770 = vmatprep.subr.mxu0 0.0
    %1771 = vmatpush1.msra.mxu0 0.0
    %1772 = vmatprep.subr.mxu0 0.0
    %1773 = vmatpush1.msra.mxu0 0.0
    %1774 = vmatprep.subr.mxu0 0.0
    %1775 = vmatpush1.msra.mxu0 0.0
    %1776 = vmatprep.subr.mxu0 0.0
    %1777 = vmatpush1.msra.mxu0 0.0
    %1778 = vmatprep.subr.mxu0 0.0
    %1779 = vmatpush1.msra.mxu0 0.0
    %1780 = vmatprep.subr.mxu0 0.0
    %1781 = vmatpush1.msra.mxu0 0.0
    %1782 = vmatprep.subr.mxu0 0.0
    %1783 = vmatpush1.msra.mxu0 0.0
    %1784 = vmatprep.subr.mxu0 0.0
    %1785 = vmatpush1.msra.mxu0 0.0
    %1786 = vmatprep.subr.mxu0 0.0
    %1787 = vmatpush1.msra.mxu0 0.0
    %1788 = vmatprep.mubr.f32.mxu0 0.0
    %1789 = vmatmul.mubr.f32.gmra.mrb[0].mxu0 %v1719
    %v1790 = vpop.f32.mrb[0].mxu0
    %v1791 = vadd.f32 0.0, %v1790
    %v1792 = vpop.f32.mrb[0].mxu0
    %1793 = vmatprep.mubr.f32.mxu0 0.0
    %1794 = vmatmul.mubr.f32.gmra.mrb[0].mxu0 %v1722
    %v1795 = vpop.f32.mrb[0].mxu0
    %v1796 = vadd.f32 0.0, %v1795
    %v1797 = vpop.f32.mrb[0].mxu0
    %1798 = vdwg.mxu0
    %v1799 = vadd.f32 %v1705, %v1791
    %v1800 = vadd.f32 %v1706, %v1796
    %s1801 = scalar_lea.vmem %s15, 32
    %v1802 = vld [vmem:[%s1801] sm:$0xff]
    %v1803 = vld [vmem:[%s1801 + $0x8] sm:$0xff]
    %v1805 = vsel %vm1617, %v1802, 0
    %v1808 = vsel %vm1617, %v1803, 0
    %1810 = vmatprep.subr.mxu0 0.0
    %1811 = vmatpush1.msra.mxu0 %v1608
    %1812 = vmatprep.subr.mxu0 0.0
    %1813 = vmatpush1.msra.mxu0 %v1612
    %1814 = vmatprep.subr.mxu0 0.0
    %1815 = vmatpush1.msra.mxu0 0.0
    %1816 = vmatprep.subr.mxu0 0.0
    %1817 = vmatpush1.msra.mxu0 0.0
    %1818 = vmatprep.subr.mxu0 0.0
    %1819 = vmatpush1.msra.mxu0 0.0
    %1820 = vmatprep.subr.mxu0 0.0
    %1821 = vmatpush1.msra.mxu0 0.0
    %1822 = vmatprep.subr.mxu0 0.0
    %1823 = vmatpush1.msra.mxu0 0.0
    %1824 = vmatprep.subr.mxu0 0.0
    %1825 = vmatpush1.msra.mxu0 0.0
    %1826 = vmatprep.subr.mxu0 0.0
    %1827 = vmatpush1.msra.mxu0 0.0
    %1828 = vmatprep.subr.mxu0 0.0
    %1829 = vmatpush1.msra.mxu0 0.0
    %1830 = vmatprep.subr.mxu0 0.0
    %1831 = vmatpush1.msra.mxu0 0.0
    %1832 = vmatprep.subr.mxu0 0.0
    %1833 = vmatpush1.msra.mxu0 0.0
    %1834 = vmatprep.subr.mxu0 0.0
    %1835 = vmatpush1.msra.mxu0 0.0
    %1836 = vmatprep.subr.mxu0 0.0
    %1837 = vmatpush1.msra.mxu0 0.0
    %1838 = vmatprep.subr.mxu0 0.0
    %1839 = vmatpush1.msra.mxu0 0.0
    %1840 = vmatprep.subr.mxu0 0.0
    %1841 = vmatpush1.msra.mxu0 0.0
    %1842 = vmatprep.subr.mxu0 0.0
    %1843 = vmatpush1.msra.mxu0 0.0
    %1844 = vmatprep.subr.mxu0 0.0
    %1845 = vmatpush1.msra.mxu0 0.0
    %1846 = vmatprep.subr.mxu0 0.0
    %1847 = vmatpush1.msra.mxu0 0.0
    %1848 = vmatprep.subr.mxu0 0.0
    %1849 = vmatpush1.msra.mxu0 0.0
    %1850 = vmatprep.subr.mxu0 0.0
    %1851 = vmatpush1.msra.mxu0 0.0
    %1852 = vmatprep.subr.mxu0 0.0
    %1853 = vmatpush1.msra.mxu0 0.0
    %1854 = vmatprep.subr.mxu0 0.0
    %1855 = vmatpush1.msra.mxu0 0.0
    %1856 = vmatprep.subr.mxu0 0.0
    %1857 = vmatpush1.msra.mxu0 0.0
    %1858 = vmatprep.subr.mxu0 0.0
    %1859 = vmatpush1.msra.mxu0 0.0
    %1860 = vmatprep.subr.mxu0 0.0
    %1861 = vmatpush1.msra.mxu0 0.0
    %1862 = vmatprep.subr.mxu0 0.0
    %1863 = vmatpush1.msra.mxu0 0.0
    %1864 = vmatprep.subr.mxu0 0.0
    %1865 = vmatpush1.msra.mxu0 0.0
    %1866 = vmatprep.subr.mxu0 0.0
    %1867 = vmatpush1.msra.mxu0 0.0
    %1868 = vmatprep.subr.mxu0 0.0
    %1869 = vmatpush1.msra.mxu0 0.0
    %1870 = vmatprep.subr.mxu0 0.0
    %1871 = vmatpush1.msra.mxu0 0.0
    %1872 = vmatprep.subr.mxu0 0.0
    %1873 = vmatpush1.msra.mxu0 0.0
    %1874 = vmatprep.mubr.f32.mxu0 0.0
    %1875 = vmatmul.mubr.f32.gmra.mrb[0].mxu0 %v1805
    %v1876 = vpop.f32.mrb[0].mxu0
    %v1877 = vadd.f32 0.0, %v1876
    %v1878 = vpop.f32.mrb[0].mxu0
    %1879 = vmatprep.mubr.f32.mxu0 0.0
    %1880 = vmatmul.mubr.f32.gmra.mrb[0].mxu0 %v1808
    %v1881 = vpop.f32.mrb[0].mxu0
    %v1882 = vadd.f32 0.0, %v1881
    %v1883 = vpop.f32.mrb[0].mxu0
    %1884 = vdwg.mxu0
    %v1885 = vadd.f32 %v1799, %v1877
    %v1886 = vadd.f32 %v1800, %v1882
    %v1887 = vmax.f32 %v1885, 0.0
    %v1888 = vmax.f32 %v1886, 0.0
    %v1889 = vpack.c.bf16 %v1888, %v1887
    %v1890 = vld [vmem:[%s17] sm:$0xff]
    %v1891 = vld [vmem:[%s17 + $0x8] sm:$0xff]
    %v1892 = vld [vmem:[%s17 + $0x10] sm:$0xff]
    %v1893 = vld [vmem:[%s17 + $0x18] sm:$0xff]
    %v1894 = vld [vmem:[%s17 + $0x20] sm:$0xff]
    %v1895 = vld [vmem:[%s17 + $0x28] sm:$0xff]
    %v1896 = vld [vmem:[%s17 + $0x30] sm:$0xff]
    %v1897 = vld [vmem:[%s17 + $0x38] sm:$0xff]
    %v1906 = vunpack.c.l.b16 %v1890
    %v1907 = vunpack.c.h.b16 %v1890
    %v1908 = vunpack.c.l.b16 %v1891
    %v1909 = vunpack.c.h.b16 %v1891
    %v1910 = vunpack.c.l.b16 %v1892
    %v1911 = vunpack.c.h.b16 %v1892
    %v1912 = vunpack.c.l.b16 %v1893
    %v1913 = vunpack.c.h.b16 %v1893
    %v1914 = vunpack.c.l.b16 %v1894
    %v1915 = vunpack.c.h.b16 %v1894
    %v1916 = vunpack.c.l.b16 %v1895
    %v1917 = vunpack.c.h.b16 %v1895
    %v1918 = vunpack.c.l.b16 %v1896
    %v1919 = vunpack.c.h.b16 %v1896
    %v1920 = vunpack.c.l.b16 %v1897
    %v1921 = vunpack.c.h.b16 %v1897
    %v1922 = vpack.c.b16 %v1908, %v1906
    %v1923 = vpack.c.b16 %v1909, %v1907
    %v1924 = vpack.c.b16 %v1912, %v1910
    %v1925 = vpack.c.b16 %v1913, %v1911
    %v1926 = vpack.c.b16 %v1916, %v1914
    %v1927 = vpack.c.b16 %v1917, %v1915
    %v1928 = vpack.c.b16 %v1920, %v1918
    %v1929 = vpack.c.b16 %v1921, %v1919
    %v1939 = vsel %vm256, %v1889, 0
    %1941 = vmatprep.subr.bf16.mxu0 %v1923
    %1942 = vmatpush1.bf16.msra.mxu0 %v1922
    %1943 = vmatprep.subr.bf16.mxu0 %v1925
    %1944 = vmatpush1.bf16.msra.mxu0 %v1924
    %1945 = vmatprep.subr.bf16.mxu0 %v1927
    %1946 = vmatpush1.bf16.msra.mxu0 %v1926
    %1947 = vmatprep.subr.bf16.mxu0 %v1929
    %1948 = vmatpush1.bf16.msra.mxu0 %v1928
    %1949 = vmatprep.subr.bf16.mxu0 0
    %1950 = vmatpush1.bf16.msra.mxu0 0
    %1951 = vmatprep.subr.bf16.mxu0 0
    %1952 = vmatpush1.bf16.msra.mxu0 0
    %1953 = vmatprep.subr.bf16.mxu0 0
    %1954 = vmatpush1.bf16.msra.mxu0 0
    %1955 = vmatprep.subr.bf16.mxu0 0
    %1956 = vmatpush1.bf16.msra.mxu0 0
    %1957 = vmatprep.subr.bf16.mxu0 0
    %1958 = vmatpush1.bf16.msra.mxu0 0
    %1959 = vmatprep.subr.bf16.mxu0 0
    %1960 = vmatpush1.bf16.msra.mxu0 0
    %1961 = vmatprep.subr.bf16.mxu0 0
    %1962 = vmatpush1.bf16.msra.mxu0 0
    %1963 = vmatprep.subr.bf16.mxu0 0
    %1964 = vmatpush1.bf16.msra.mxu0 0
    %1965 = vmatprep.subr.bf16.mxu0 0
    %1966 = vmatpush1.bf16.msra.mxu0 0
    %1967 = vmatprep.subr.bf16.mxu0 0
    %1968 = vmatpush1.bf16.msra.mxu0 0
    %1969 = vmatprep.subr.bf16.mxu0 0
    %1970 = vmatpush1.bf16.msra.mxu0 0
    %1971 = vmatprep.subr.bf16.mxu0 0
    %1972 = vmatpush1.bf16.msra.mxu0 0
    %1973 = vmatprep.mubr.bf16.mxu0 0
    %1974 = vmatmul.mubr.bf16.gmra.mrb[0].mxu0 %v1939
    %v1975 = vpop.f32.mrb[0].mxu0
    %v1976 = vadd.f32 0.0, %v1975
    %v1977 = vpop.f32.mrb[0].mxu0
    %v1978 = vadd.f32 0.0, %v1977
    %v1979 = vpop.f32.mrb[0].mxu0
    %v1980 = vadd.f32 0.0, %v1979
    %v1981 = vpop.f32.mrb[0].mxu0
    %v1982 = vadd.f32 0.0, %v1981
    %1983 = vdwg.mxu0
    %v1984 = vld [vmem:[%s19] sm:$0x1]
    %v1986 = vlaneseq
    %v1987 = vshrl.u32 %v1986, 7
    %v1988 = vsub.s32 0, %v1987
    %v1989 = vrot.slane %v1984, %v1988
    %v1991 = vadd.f32 %v1989, %v1517
    %v1992 = vadd.f32 %v1989, %v1518
    %v1993 = vld [vmem:[%s21] sm:$0xff]
    %v1994 = vld [vmem:[%s21 + $0x8] sm:$0xff]
    %v1996 = vsel %vm1617, %v1993, 0
    %v1999 = vsel %vm1617, %v1994, 0
    %2001 = vmatprep.subr.mxu0 0.0
    %2002 = vmatpush1.msra.mxu0 %v1976
    %2003 = vmatprep.subr.mxu0 0.0
    %2004 = vmatpush1.msra.mxu0 %v1980
    %2005 = vmatprep.subr.mxu0 0.0
    %2006 = vmatpush1.msra.mxu0 0.0
    %2007 = vmatprep.subr.mxu0 0.0
    %2008 = vmatpush1.msra.mxu0 0.0
    %2009 = vmatprep.subr.mxu0 0.0
    %2010 = vmatpush1.msra.mxu0 0.0
    %2011 = vmatprep.subr.mxu0 0.0
    %2012 = vmatpush1.msra.mxu0 0.0
    %2013 = vmatprep.subr.mxu0 0.0
    %2014 = vmatpush1.msra.mxu0 0.0
    %2015 = vmatprep.subr.mxu0 0.0
    %2016 = vmatpush1.msra.mxu0 0.0
    %2017 = vmatprep.subr.mxu0 0.0
    %2018 = vmatpush1.msra.mxu0 0.0
    %2019 = vmatprep.subr.mxu0 0.0
    %2020 = vmatpush1.msra.mxu0 0.0
    %2021 = vmatprep.subr.mxu0 0.0
    %2022 = vmatpush1.msra.mxu0 0.0
    %2023 = vmatprep.subr.mxu0 0.0
    %2024 = vmatpush1.msra.mxu0 0.0
    %2025 = vmatprep.subr.mxu0 0.0
    %2026 = vmatpush1.msra.mxu0 0.0
    %2027 = vmatprep.subr.mxu0 0.0
    %2028 = vmatpush1.msra.mxu0 0.0
    %2029 = vmatprep.subr.mxu0 0.0
    %2030 = vmatpush1.msra.mxu0 0.0
    %2031 = vmatprep.subr.mxu0 0.0
    %2032 = vmatpush1.msra.mxu0 0.0
    %2033 = vmatprep.subr.mxu0 0.0
    %2034 = vmatpush1.msra.mxu0 0.0
    %2035 = vmatprep.subr.mxu0 0.0
    %2036 = vmatpush1.msra.mxu0 0.0
    %2037 = vmatprep.subr.mxu0 0.0
    %2038 = vmatpush1.msra.mxu0 0.0
    %2039 = vmatprep.subr.mxu0 0.0
    %2040 = vmatpush1.msra.mxu0 0.0
    %2041 = vmatprep.subr.mxu0 0.0
    %2042 = vmatpush1.msra.mxu0 0.0
    %2043 = vmatprep.subr.mxu0 0.0
    %2044 = vmatpush1.msra.mxu0 0.0
    %2045 = vmatprep.subr.mxu0 0.0
    %2046 = vmatpush1.msra.mxu0 0.0
    %2047 = vmatprep.subr.mxu0 0.0
    %2048 = vmatpush1.msra.mxu0 0.0
    %2049 = vmatprep.subr.mxu0 0.0
    %2050 = vmatpush1.msra.mxu0 0.0
    %2051 = vmatprep.subr.mxu0 0.0
    %2052 = vmatpush1.msra.mxu0 0.0
    %2053 = vmatprep.subr.mxu0 0.0
    %2054 = vmatpush1.msra.mxu0 0.0
    %2055 = vmatprep.subr.mxu0 0.0
    %2056 = vmatpush1.msra.mxu0 0.0
    %2057 = vmatprep.subr.mxu0 0.0
    %2058 = vmatpush1.msra.mxu0 0.0
    %2059 = vmatprep.subr.mxu0 0.0
    %2060 = vmatpush1.msra.mxu0 0.0
    %2061 = vmatprep.subr.mxu0 0.0
    %2062 = vmatpush1.msra.mxu0 0.0
    %2063 = vmatprep.subr.mxu0 0.0
    %2064 = vmatpush1.msra.mxu0 0.0
    %2065 = vmatprep.mubr.f32.mxu0 0.0
    %2066 = vmatmul.mubr.f32.gmra.mrb[0].mxu0 %v1996
    %v2067 = vpop.f32.mrb[0].mxu0
    %v2068 = vadd.f32 0.0, %v2067
    %v2069 = vpop.f32.mrb[0].mxu0
    %2070 = vmatprep.mubr.f32.mxu0 0.0
    %2071 = vmatmul.mubr.f32.gmra.mrb[0].mxu0 %v1999
    %v2072 = vpop.f32.mrb[0].mxu0
    %v2073 = vadd.f32 0.0, %v2072
    %v2074 = vpop.f32.mrb[0].mxu0
    %2075 = vdwg.mxu0
    %v2076 = vadd.f32 %v1991, %v2068
    %v2077 = vadd.f32 %v1992, %v2073
    %s2078 = scalar_lea.vmem %s21, 16
    %v2079 = vld [vmem:[%s2078] sm:$0xff]
    %v2080 = vld [vmem:[%s2078 + $0x8] sm:$0xff]
    %2083 = vrot.lane.b32.xlu0 %v1976, 64
    %v2084 = vpop.permute.xlu0 %2083
    %2085 = vrot.lane.b32.xlu0 %v1980, 64
    %v2086 = vpop.permute.xlu0 %2085
    %v2090 = vsel %vm1617, %v2079, 0
    %v2093 = vsel %vm1617, %v2080, 0
    %2095 = vmatprep.subr.mxu0 0.0
    %2096 = vmatpush1.msra.mxu0 %v2084
    %2097 = vmatprep.subr.mxu0 0.0
    %2098 = vmatpush1.msra.mxu0 %v2086
    %2099 = vmatprep.subr.mxu0 0.0
    %2100 = vmatpush1.msra.mxu0 0.0
    %2101 = vmatprep.subr.mxu0 0.0
    %2102 = vmatpush1.msra.mxu0 0.0
    %2103 = vmatprep.subr.mxu0 0.0
    %2104 = vmatpush1.msra.mxu0 0.0
    %2105 = vmatprep.subr.mxu0 0.0
    %2106 = vmatpush1.msra.mxu0 0.0
    %2107 = vmatprep.subr.mxu0 0.0
    %2108 = vmatpush1.msra.mxu0 0.0
    %2109 = vmatprep.subr.mxu0 0.0
    %2110 = vmatpush1.msra.mxu0 0.0
    %2111 = vmatprep.subr.mxu0 0.0
    %2112 = vmatpush1.msra.mxu0 0.0
    %2113 = vmatprep.subr.mxu0 0.0
    %2114 = vmatpush1.msra.mxu0 0.0
    %2115 = vmatprep.subr.mxu0 0.0
    %2116 = vmatpush1.msra.mxu0 0.0
    %2117 = vmatprep.subr.mxu0 0.0
    %2118 = vmatpush1.msra.mxu0 0.0
    %2119 = vmatprep.subr.mxu0 0.0
    %2120 = vmatpush1.msra.mxu0 0.0
    %2121 = vmatprep.subr.mxu0 0.0
    %2122 = vmatpush1.msra.mxu0 0.0
    %2123 = vmatprep.subr.mxu0 0.0
    %2124 = vmatpush1.msra.mxu0 0.0
    %2125 = vmatprep.subr.mxu0 0.0
    %2126 = vmatpush1.msra.mxu0 0.0
    %2127 = vmatprep.subr.mxu0 0.0
    %2128 = vmatpush1.msra.mxu0 0.0
    %2129 = vmatprep.subr.mxu0 0.0
    %2130 = vmatpush1.msra.mxu0 0.0
    %2131 = vmatprep.subr.mxu0 0.0
    %2132 = vmatpush1.msra.mxu0 0.0
    %2133 = vmatprep.subr.mxu0 0.0
    %2134 = vmatpush1.msra.mxu0 0.0
    %2135 = vmatprep.subr.mxu0 0.0
    %2136 = vmatpush1.msra.mxu0 0.0
    %2137 = vmatprep.subr.mxu0 0.0
    %2138 = vmatpush1.msra.mxu0 0.0
    %2139 = vmatprep.subr.mxu0 0.0
    %2140 = vmatpush1.msra.mxu0 0.0
    %2141 = vmatprep.subr.mxu0 0.0
    %2142 = vmatpush1.msra.mxu0 0.0
    %2143 = vmatprep.subr.mxu0 0.0
    %2144 = vmatpush1.msra.mxu0 0.0
    %2145 = vmatprep.subr.mxu0 0.0
    %2146 = vmatpush1.msra.mxu0 0.0
    %2147 = vmatprep.subr.mxu0 0.0
    %2148 = vmatpush1.msra.mxu0 0.0
    %2149 = vmatprep.subr.mxu0 0.0
    %2150 = vmatpush1.msra.mxu0 0.0
    %2151 = vmatprep.subr.mxu0 0.0
    %2152 = vmatpush1.msra.mxu0 0.0
    %2153 = vmatprep.subr.mxu0 0.0
    %2154 = vmatpush1.msra.mxu0 0.0
    %2155 = vmatprep.subr.mxu0 0.0
    %2156 = vmatpush1.msra.mxu0 0.0
    %2157 = vmatprep.subr.mxu0 0.0
    %2158 = vmatpush1.msra.mxu0 0.0
    %2159 = vmatprep.mubr.f32.mxu0 0.0
    %2160 = vmatmul.mubr.f32.gmra.mrb[0].mxu0 %v2090
    %v2161 = vpop.f32.mrb[0].mxu0
    %v2162 = vadd.f32 0.0, %v2161
    %v2163 = vpop.f32.mrb[0].mxu0
    %2164 = vmatprep.mubr.f32.mxu0 0.0
    %2165 = vmatmul.mubr.f32.gmra.mrb[0].mxu0 %v2093
    %v2166 = vpop.f32.mrb[0].mxu0
    %v2167 = vadd.f32 0.0, %v2166
    %v2168 = vpop.f32.mrb[0].mxu0
    %2169 = vdwg.mxu0
    %v2170 = vadd.f32 %v2076, %v2162
    %v2171 = vadd.f32 %v2077, %v2167
    %s2172 = scalar_lea.vmem %s21, 32
    %v2173 = vld [vmem:[%s2172] sm:$0xff]
    %v2174 = vld [vmem:[%s2172 + $0x8] sm:$0xff]
    %v2176 = vsel %vm1617, %v2173, 0
    %v2179 = vsel %vm1617, %v2174, 0
    %2181 = vmatprep.subr.mxu0 0.0
    %2182 = vmatpush1.msra.mxu0 %v1978
    %2183 = vmatprep.subr.mxu0 0.0
    %2184 = vmatpush1.msra.mxu0 %v1982
    %2185 = vmatprep.subr.mxu0 0.0
    %2186 = vmatpush1.msra.mxu0 0.0
    %2187 = vmatprep.subr.mxu0 0.0
    %2188 = vmatpush1.msra.mxu0 0.0
    %2189 = vmatprep.subr.mxu0 0.0
    %2190 = vmatpush1.msra.mxu0 0.0
    %2191 = vmatprep.subr.mxu0 0.0
    %2192 = vmatpush1.msra.mxu0 0.0
    %2193 = vmatprep.subr.mxu0 0.0
    %2194 = vmatpush1.msra.mxu0 0.0
    %2195 = vmatprep.subr.mxu0 0.0
    %2196 = vmatpush1.msra.mxu0 0.0
    %2197 = vmatprep.subr.mxu0 0.0
    %2198 = vmatpush1.msra.mxu0 0.0
    %2199 = vmatprep.subr.mxu0 0.0
    %2200 = vmatpush1.msra.mxu0 0.0
    %2201 = vmatprep.subr.mxu0 0.0
    %2202 = vmatpush1.msra.mxu0 0.0
    %2203 = vmatprep.subr.mxu0 0.0
    %2204 = vmatpush1.msra.mxu0 0.0
    %2205 = vmatprep.subr.mxu0 0.0
    %2206 = vmatpush1.msra.mxu0 0.0
    %2207 = vmatprep.subr.mxu0 0.0
    %2208 = vmatpush1.msra.mxu0 0.0
    %2209 = vmatprep.subr.mxu0 0.0
    %2210 = vmatpush1.msra.mxu0 0.0
    %2211 = vmatprep.subr.mxu0 0.0
    %2212 = vmatpush1.msra.mxu0 0.0
    %2213 = vmatprep.subr.mxu0 0.0
    %2214 = vmatpush1.msra.mxu0 0.0
    %2215 = vmatprep.subr.mxu0 0.0
    %2216 = vmatpush1.msra.mxu0 0.0
    %2217 = vmatprep.subr.mxu0 0.0
    %2218 = vmatpush1.msra.mxu0 0.0
    %2219 = vmatprep.subr.mxu0 0.0
    %2220 = vmatpush1.msra.mxu0 0.0
    %2221 = vmatprep.subr.mxu0 0.0
    %2222 = vmatpush1.msra.mxu0 0.0
    %2223 = vmatprep.subr.mxu0 0.0
    %2224 = vmatpush1.msra.mxu0 0.0
    %2225 = vmatprep.subr.mxu0 0.0
    %2226 = vmatpush1.msra.mxu0 0.0
    %2227 = vmatprep.subr.mxu0 0.0
    %2228 = vmatpush1.msra.mxu0 0.0
    %2229 = vmatprep.subr.mxu0 0.0
    %2230 = vmatpush1.msra.mxu0 0.0
    %2231 = vmatprep.subr.mxu0 0.0
    %2232 = vmatpush1.msra.mxu0 0.0
    %2233 = vmatprep.subr.mxu0 0.0
    %2234 = vmatpush1.msra.mxu0 0.0
    %2235 = vmatprep.subr.mxu0 0.0
    %2236 = vmatpush1.msra.mxu0 0.0
    %2237 = vmatprep.subr.mxu0 0.0
    %2238 = vmatpush1.msra.mxu0 0.0
    %2239 = vmatprep.subr.mxu0 0.0
    %2240 = vmatpush1.msra.mxu0 0.0
    %2241 = vmatprep.subr.mxu0 0.0
    %2242 = vmatpush1.msra.mxu0 0.0
    %2243 = vmatprep.subr.mxu0 0.0
    %2244 = vmatpush1.msra.mxu0 0.0
    %2245 = vmatprep.mubr.f32.mxu0 0.0
    %2246 = vmatmul.mubr.f32.gmra.mrb[0].mxu0 %v2176
    %v2247 = vpop.f32.mrb[0].mxu0
    %v2248 = vadd.f32 0.0, %v2247
    %v2249 = vpop.f32.mrb[0].mxu0
    %2250 = vmatprep.mubr.f32.mxu0 0.0
    %2251 = vmatmul.mubr.f32.gmra.mrb[0].mxu0 %v2179
    %v2252 = vpop.f32.mrb[0].mxu0
    %v2253 = vadd.f32 0.0, %v2252
    %v2254 = vpop.f32.mrb[0].mxu0
    %2255 = vdwg.mxu0
    %v2256 = vadd.f32 %v2170, %v2248
    %v2257 = vadd.f32 %v2171, %v2253
    %v2258 = vmax.f32 %v2256, 0.0
    %v2259 = vmax.f32 %v2257, 0.0
    %v2260 = vpack.c.bf16 %v2259, %v2258
    %v2261 = vld [vmem:[%s23] sm:$0xff]
    %v2262 = vld [vmem:[%s23 + $0x8] sm:$0xff]
    %v2263 = vld [vmem:[%s23 + $0x10] sm:$0xff]
    %v2264 = vld [vmem:[%s23 + $0x18] sm:$0xff]
    %v2265 = vld [vmem:[%s23 + $0x20] sm:$0xff]
    %v2266 = vld [vmem:[%s23 + $0x28] sm:$0xff]
    %v2267 = vld [vmem:[%s23 + $0x30] sm:$0xff]
    %v2268 = vld [vmem:[%s23 + $0x38] sm:$0xff]
    %v2269 = vld [vmem:[%s23 + $0x40] sm:$0xff]
    %v2270 = vld [vmem:[%s23 + $0x48] sm:$0xff]
    %v2271 = vld [vmem:[%s23 + $0x50] sm:$0xff]
    %v2272 = vld [vmem:[%s23 + $0x58] sm:$0xff]
    %v2273 = vld [vmem:[%s23 + $0x60] sm:$0xff]
    %v2274 = vld [vmem:[%s23 + $0x68] sm:$0xff]
    %v2275 = vld [vmem:[%s23 + $0x70] sm:$0xff]
    %v2276 = vld [vmem:[%s23 + $0x78] sm:$0xff]
    %v2293 = vunpack.c.l.b16 %v2261
    %v2294 = vunpack.c.h.b16 %v2261
    %v2295 = vunpack.c.l.b16 %v2262
    %v2296 = vunpack.c.h.b16 %v2262
    %v2297 = vunpack.c.l.b16 %v2263
    %v2298 = vunpack.c.h.b16 %v2263
    %v2299 = vunpack.c.l.b16 %v2264
    %v2300 = vunpack.c.h.b16 %v2264
    %v2301 = vunpack.c.l.b16 %v2265
    %v2302 = vunpack.c.h.b16 %v2265
    %v2303 = vunpack.c.l.b16 %v2266
    %v2304 = vunpack.c.h.b16 %v2266
    %v2305 = vunpack.c.l.b16 %v2267
    %v2306 = vunpack.c.h.b16 %v2267
    %v2307 = vunpack.c.l.b16 %v2268
    %v2308 = vunpack.c.h.b16 %v2268
    %v2309 = vunpack.c.l.b16 %v2269
    %v2310 = vunpack.c.h.b16 %v2269
    %v2311 = vunpack.c.l.b16 %v2270
    %v2312 = vunpack.c.h.b16 %v2270
    %v2313 = vunpack.c.l.b16 %v2271
    %v2314 = vunpack.c.h.b16 %v2271
    %v2315 = vunpack.c.l.b16 %v2272
    %v2316 = vunpack.c.h.b16 %v2272
    %v2317 = vunpack.c.l.b16 %v2273
    %v2318 = vunpack.c.h.b16 %v2273
    %v2319 = vunpack.c.l.b16 %v2274
    %v2320 = vunpack.c.h.b16 %v2274
    %v2321 = vunpack.c.l.b16 %v2275
    %v2322 = vunpack.c.h.b16 %v2275
    %v2323 = vunpack.c.l.b16 %v2276
    %v2324 = vunpack.c.h.b16 %v2276
    %v2325 = vpack.c.b16 %v2297, %v2293
    %v2326 = vpack.c.b16 %v2298, %v2294
    %v2327 = vpack.c.b16 %v2299, %v2295
    %v2328 = vpack.c.b16 %v2300, %v2296
    %v2329 = vpack.c.b16 %v2305, %v2301
    %v2330 = vpack.c.b16 %v2306, %v2302
    %v2331 = vpack.c.b16 %v2307, %v2303
    %v2332 = vpack.c.b16 %v2308, %v2304
    %v2333 = vpack.c.b16 %v2313, %v2309
    %v2334 = vpack.c.b16 %v2314, %v2310
    %v2335 = vpack.c.b16 %v2315, %v2311
    %v2336 = vpack.c.b16 %v2316, %v2312
    %v2337 = vpack.c.b16 %v2321, %v2317
    %v2338 = vpack.c.b16 %v2322, %v2318
    %v2339 = vpack.c.b16 %v2323, %v2319
    %v2340 = vpack.c.b16 %v2324, %v2320
    %v2358 = vsel %vm256, %v2260, 0
    %2360 = vmatprep.subr.bf16.mxu0 %v2326
    %2361 = vmatpush1.bf16.msra.mxu0 %v2325
    %2362 = vmatprep.subr.bf16.mxu0 %v2330
    %2363 = vmatpush1.bf16.msra.mxu0 %v2329
    %2364 = vmatprep.subr.bf16.mxu0 %v2334
    %2365 = vmatpush1.bf16.msra.mxu0 %v2333
    %2366 = vmatprep.subr.bf16.mxu0 %v2338
    %2367 = vmatpush1.bf16.msra.mxu0 %v2337
    %2368 = vmatprep.subr.bf16.mxu0 0
    %2369 = vmatpush1.bf16.msra.mxu0 0
    %2370 = vmatprep.subr.bf16.mxu0 0
    %2371 = vmatpush1.bf16.msra.mxu0 0
    %2372 = vmatprep.subr.bf16.mxu0 0
    %2373 = vmatpush1.bf16.msra.mxu0 0
    %2374 = vmatprep.subr.bf16.mxu0 0
    %2375 = vmatpush1.bf16.msra.mxu0 0
    %2376 = vmatprep.subr.bf16.mxu0 0
    %2377 = vmatpush1.bf16.msra.mxu0 0
    %2378 = vmatprep.subr.bf16.mxu0 0
    %2379 = vmatpush1.bf16.msra.mxu0 0
    %2380 = vmatprep.subr.bf16.mxu0 0
    %2381 = vmatpush1.bf16.msra.mxu0 0
    %2382 = vmatprep.subr.bf16.mxu0 0
    %2383 = vmatpush1.bf16.msra.mxu0 0
    %2384 = vmatprep.subr.bf16.mxu0 0
    %2385 = vmatpush1.bf16.msra.mxu0 0
    %2386 = vmatprep.subr.bf16.mxu0 0
    %2387 = vmatpush1.bf16.msra.mxu0 0
    %2388 = vmatprep.subr.bf16.mxu0 0
    %2389 = vmatpush1.bf16.msra.mxu0 0
    %2390 = vmatprep.subr.bf16.mxu0 0
    %2391 = vmatpush1.bf16.msra.mxu0 0
    %2392 = vmatprep.mubr.bf16.mxu0 0
    %2393 = vmatmul.mubr.bf16.gmra.mrb[0].mxu0 %v2358
    %v2394 = vpop.f32.mrb[0].mxu0
    %v2395 = vadd.f32 0.0, %v2394
    %v2396 = vpop.f32.mrb[0].mxu0
    %v2397 = vadd.f32 0.0, %v2396
    %v2398 = vpop.f32.mrb[0].mxu0
    %v2399 = vadd.f32 0.0, %v2398
    %v2400 = vpop.f32.mrb[0].mxu0
    %v2401 = vadd.f32 0.0, %v2400
    %2402 = vdwg.mxu0
    %2403 = vmatprep.subr.bf16.mxu0 %v2328
    %2404 = vmatpush1.bf16.msra.mxu0 %v2327
    %2405 = vmatprep.subr.bf16.mxu0 %v2332
    %2406 = vmatpush1.bf16.msra.mxu0 %v2331
    %2407 = vmatprep.subr.bf16.mxu0 %v2336
    %2408 = vmatpush1.bf16.msra.mxu0 %v2335
    %2409 = vmatprep.subr.bf16.mxu0 %v2340
    %2410 = vmatpush1.bf16.msra.mxu0 %v2339
    %2411 = vmatprep.subr.bf16.mxu0 0
    %2412 = vmatpush1.bf16.msra.mxu0 0
    %2413 = vmatprep.subr.bf16.mxu0 0
    %2414 = vmatpush1.bf16.msra.mxu0 0
    %2415 = vmatprep.subr.bf16.mxu0 0
    %2416 = vmatpush1.bf16.msra.mxu0 0
    %2417 = vmatprep.subr.bf16.mxu0 0
    %2418 = vmatpush1.bf16.msra.mxu0 0
    %2419 = vmatprep.subr.bf16.mxu0 0
    %2420 = vmatpush1.bf16.msra.mxu0 0
    %2421 = vmatprep.subr.bf16.mxu0 0
    %2422 = vmatpush1.bf16.msra.mxu0 0
    %2423 = vmatprep.subr.bf16.mxu0 0
    %2424 = vmatpush1.bf16.msra.mxu0 0
    %2425 = vmatprep.subr.bf16.mxu0 0
    %2426 = vmatpush1.bf16.msra.mxu0 0
    %2427 = vmatprep.subr.bf16.mxu0 0
    %2428 = vmatpush1.bf16.msra.mxu0 0
    %2429 = vmatprep.subr.bf16.mxu0 0
    %2430 = vmatpush1.bf16.msra.mxu0 0
    %2431 = vmatprep.subr.bf16.mxu0 0
    %2432 = vmatpush1.bf16.msra.mxu0 0
    %2433 = vmatprep.subr.bf16.mxu0 0
    %2434 = vmatpush1.bf16.msra.mxu0 0
    %2435 = vmatprep.mubr.bf16.mxu0 0
    %2436 = vmatmul.mubr.bf16.gmra.mrb[0].mxu0 %v2358
    %v2437 = vpop.f32.mrb[0].mxu0
    %v2438 = vadd.f32 0.0, %v2437
    %v2439 = vpop.f32.mrb[0].mxu0
    %v2440 = vadd.f32 0.0, %v2439
    %v2441 = vpop.f32.mrb[0].mxu0
    %v2442 = vadd.f32 0.0, %v2441
    %v2443 = vpop.f32.mrb[0].mxu0
    %v2444 = vadd.f32 0.0, %v2443
    %2445 = vdwg.mxu0
    %v2446 = vld [vmem:[%s25] sm:$0x1]
    %v2447 = vld [vmem:[%s27] sm:$0xff]
    %v2449 = vsel %vm1617, %v2447, 0
    %2451 = vmatprep.subr.mxu0 0.0
    %2452 = vmatpush1.msra.mxu0 %v2395
    %2453 = vmatprep.subr.mxu0 0.0
    %2454 = vmatpush1.msra.mxu0 %v2399
    %2455 = vmatprep.subr.mxu0 0.0
    %2456 = vmatpush1.msra.mxu0 0.0
    %2457 = vmatprep.subr.mxu0 0.0
    %2458 = vmatpush1.msra.mxu0 0.0
    %2459 = vmatprep.subr.mxu0 0.0
    %2460 = vmatpush1.msra.mxu0 0.0
    %2461 = vmatprep.subr.mxu0 0.0
    %2462 = vmatpush1.msra.mxu0 0.0
    %2463 = vmatprep.subr.mxu0 0.0
    %2464 = vmatpush1.msra.mxu0 0.0
    %2465 = vmatprep.subr.mxu0 0.0
    %2466 = vmatpush1.msra.mxu0 0.0
    %2467 = vmatprep.subr.mxu0 0.0
    %2468 = vmatpush1.msra.mxu0 0.0
    %2469 = vmatprep.subr.mxu0 0.0
    %2470 = vmatpush1.msra.mxu0 0.0
    %2471 = vmatprep.subr.mxu0 0.0
    %2472 = vmatpush1.msra.mxu0 0.0
    %2473 = vmatprep.subr.mxu0 0.0
    %2474 = vmatpush1.msra.mxu0 0.0
    %2475 = vmatprep.subr.mxu0 0.0
    %2476 = vmatpush1.msra.mxu0 0.0
    %2477 = vmatprep.subr.mxu0 0.0
    %2478 = vmatpush1.msra.mxu0 0.0
    %2479 = vmatprep.subr.mxu0 0.0
    %2480 = vmatpush1.msra.mxu0 0.0
    %2481 = vmatprep.subr.mxu0 0.0
    %2482 = vmatpush1.msra.mxu0 0.0
    %2483 = vmatprep.subr.mxu0 0.0
    %2484 = vmatpush1.msra.mxu0 0.0
    %2485 = vmatprep.subr.mxu0 0.0
    %2486 = vmatpush1.msra.mxu0 0.0
    %2487 = vmatprep.subr.mxu0 0.0
    %2488 = vmatpush1.msra.mxu0 0.0
    %2489 = vmatprep.subr.mxu0 0.0
    %2490 = vmatpush1.msra.mxu0 0.0
    %2491 = vmatprep.subr.mxu0 0.0
    %2492 = vmatpush1.msra.mxu0 0.0
    %2493 = vmatprep.subr.mxu0 0.0
    %2494 = vmatpush1.msra.mxu0 0.0
    %2495 = vmatprep.subr.mxu0 0.0
    %2496 = vmatpush1.msra.mxu0 0.0
    %2497 = vmatprep.subr.mxu0 0.0
    %2498 = vmatpush1.msra.mxu0 0.0
    %2499 = vmatprep.subr.mxu0 0.0
    %2500 = vmatpush1.msra.mxu0 0.0
    %2501 = vmatprep.subr.mxu0 0.0
    %2502 = vmatpush1.msra.mxu0 0.0
    %2503 = vmatprep.subr.mxu0 0.0
    %2504 = vmatpush1.msra.mxu0 0.0
    %2505 = vmatprep.subr.mxu0 0.0
    %2506 = vmatpush1.msra.mxu0 0.0
    %2507 = vmatprep.subr.mxu0 0.0
    %2508 = vmatpush1.msra.mxu0 0.0
    %2509 = vmatprep.subr.mxu0 0.0
    %2510 = vmatpush1.msra.mxu0 0.0
    %2511 = vmatprep.subr.mxu0 0.0
    %2512 = vmatpush1.msra.mxu0 0.0
    %2513 = vmatprep.subr.mxu0 0.0
    %2514 = vmatpush1.msra.mxu0 0.0
    %2515 = vmatprep.mubr.f32.mxu0 0.0
    %2516 = vmatmul.mubr.f32.gmra.mrb[0].mxu0 %v2449
    %v2517 = vpop.f32.mrb[0].mxu0
    %v2518 = vadd.f32 0.0, %v2517
    %v2519 = vpop.f32.mrb[0].mxu0
    %2520 = vdwg.mxu0
    %v2522 = vlaneseq
    %v2523 = vshrl.u32 %v2522, 7
    %v2524 = vsub.s32 0, %v2523
    %v2525 = vrot.slane %v2446, %v2524
    %v2527 = vadd.f32 %v2525, %v2518
    %s2528 = scalar_lea.vmem %s27, 8
    %v2529 = vld [vmem:[%s2528] sm:$0xff]
    %v2531 = vsel %vm1617, %v2529, 0
    %2533 = vmatprep.subr.mxu0 0.0
    %2534 = vmatpush1.msra.mxu0 %v2397
    %2535 = vmatprep.subr.mxu0 0.0
    %2536 = vmatpush1.msra.mxu0 %v2401
    %2537 = vmatprep.subr.mxu0 0.0
    %2538 = vmatpush1.msra.mxu0 0.0
    %2539 = vmatprep.subr.mxu0 0.0
    %2540 = vmatpush1.msra.mxu0 0.0
    %2541 = vmatprep.subr.mxu0 0.0
    %2542 = vmatpush1.msra.mxu0 0.0
    %2543 = vmatprep.subr.mxu0 0.0
    %2544 = vmatpush1.msra.mxu0 0.0
    %2545 = vmatprep.subr.mxu0 0.0
    %2546 = vmatpush1.msra.mxu0 0.0
    %2547 = vmatprep.subr.mxu0 0.0
    %2548 = vmatpush1.msra.mxu0 0.0
    %2549 = vmatprep.subr.mxu0 0.0
    %2550 = vmatpush1.msra.mxu0 0.0
    %2551 = vmatprep.subr.mxu0 0.0
    %2552 = vmatpush1.msra.mxu0 0.0
    %2553 = vmatprep.subr.mxu0 0.0
    %2554 = vmatpush1.msra.mxu0 0.0
    %2555 = vmatprep.subr.mxu0 0.0
    %2556 = vmatpush1.msra.mxu0 0.0
    %2557 = vmatprep.subr.mxu0 0.0
    %2558 = vmatpush1.msra.mxu0 0.0
    %2559 = vmatprep.subr.mxu0 0.0
    %2560 = vmatpush1.msra.mxu0 0.0
    %2561 = vmatprep.subr.mxu0 0.0
    %2562 = vmatpush1.msra.mxu0 0.0
    %2563 = vmatprep.subr.mxu0 0.0
    %2564 = vmatpush1.msra.mxu0 0.0
    %2565 = vmatprep.subr.mxu0 0.0
    %2566 = vmatpush1.msra.mxu0 0.0
    %2567 = vmatprep.subr.mxu0 0.0
    %2568 = vmatpush1.msra.mxu0 0.0
    %2569 = vmatprep.subr.mxu0 0.0
    %2570 = vmatpush1.msra.mxu0 0.0
    %2571 = vmatprep.subr.mxu0 0.0
    %2572 = vmatpush1.msra.mxu0 0.0
    %2573 = vmatprep.subr.mxu0 0.0
    %2574 = vmatpush1.msra.mxu0 0.0
    %2575 = vmatprep.subr.mxu0 0.0
    %2576 = vmatpush1.msra.mxu0 0.0
    %2577 = vmatprep.subr.mxu0 0.0
    %2578 = vmatpush1.msra.mxu0 0.0
    %2579 = vmatprep.subr.mxu0 0.0
    %2580 = vmatpush1.msra.mxu0 0.0
    %2581 = vmatprep.subr.mxu0 0.0
    %2582 = vmatpush1.msra.mxu0 0.0
    %2583 = vmatprep.subr.mxu0 0.0
    %2584 = vmatpush1.msra.mxu0 0.0
    %2585 = vmatprep.subr.mxu0 0.0
    %2586 = vmatpush1.msra.mxu0 0.0
    %2587 = vmatprep.subr.mxu0 0.0
    %2588 = vmatpush1.msra.mxu0 0.0
    %2589 = vmatprep.subr.mxu0 0.0
    %2590 = vmatpush1.msra.mxu0 0.0
    %2591 = vmatprep.subr.mxu0 0.0
    %2592 = vmatpush1.msra.mxu0 0.0
    %2593 = vmatprep.subr.mxu0 0.0
    %2594 = vmatpush1.msra.mxu0 0.0
    %2595 = vmatprep.subr.mxu0 0.0
    %2596 = vmatpush1.msra.mxu0 0.0
    %2597 = vmatprep.mubr.f32.mxu0 0.0
    %2598 = vmatmul.mubr.f32.gmra.mrb[0].mxu0 %v2531
    %v2599 = vpop.f32.mrb[0].mxu0
    %v2600 = vadd.f32 0.0, %v2599
    %v2601 = vpop.f32.mrb[0].mxu0
    %2602 = vdwg.mxu0
    %v2603 = vadd.f32 %v2527, %v2600
    %s2604 = scalar_lea.vmem %s27, 16
    %v2605 = vld [vmem:[%s2604] sm:$0xff]
    %v2607 = vsel %vm1617, %v2605, 0
    %2609 = vmatprep.subr.mxu0 0.0
    %2610 = vmatpush1.msra.mxu0 %v2438
    %2611 = vmatprep.subr.mxu0 0.0
    %2612 = vmatpush1.msra.mxu0 %v2442
    %2613 = vmatprep.subr.mxu0 0.0
    %2614 = vmatpush1.msra.mxu0 0.0
    %2615 = vmatprep.subr.mxu0 0.0
    %2616 = vmatpush1.msra.mxu0 0.0
    %2617 = vmatprep.subr.mxu0 0.0
    %2618 = vmatpush1.msra.mxu0 0.0
    %2619 = vmatprep.subr.mxu0 0.0
    %2620 = vmatpush1.msra.mxu0 0.0
    %2621 = vmatprep.subr.mxu0 0.0
    %2622 = vmatpush1.msra.mxu0 0.0
    %2623 = vmatprep.subr.mxu0 0.0
    %2624 = vmatpush1.msra.mxu0 0.0
    %2625 = vmatprep.subr.mxu0 0.0
    %2626 = vmatpush1.msra.mxu0 0.0
    %2627 = vmatprep.subr.mxu0 0.0
    %2628 = vmatpush1.msra.mxu0 0.0
    %2629 = vmatprep.subr.mxu0 0.0
    %2630 = vmatpush1.msra.mxu0 0.0
    %2631 = vmatprep.subr.mxu0 0.0
    %2632 = vmatpush1.msra.mxu0 0.0
    %2633 = vmatprep.subr.mxu0 0.0
    %2634 = vmatpush1.msra.mxu0 0.0
    %2635 = vmatprep.subr.mxu0 0.0
    %2636 = vmatpush1.msra.mxu0 0.0
    %2637 = vmatprep.subr.mxu0 0.0
    %2638 = vmatpush1.msra.mxu0 0.0
    %2639 = vmatprep.subr.mxu0 0.0
    %2640 = vmatpush1.msra.mxu0 0.0
    %2641 = vmatprep.subr.mxu0 0.0
    %2642 = vmatpush1.msra.mxu0 0.0
    %2643 = vmatprep.subr.mxu0 0.0
    %2644 = vmatpush1.msra.mxu0 0.0
    %2645 = vmatprep.subr.mxu0 0.0
    %2646 = vmatpush1.msra.mxu0 0.0
    %2647 = vmatprep.subr.mxu0 0.0
    %2648 = vmatpush1.msra.mxu0 0.0
    %2649 = vmatprep.subr.mxu0 0.0
    %2650 = vmatpush1.msra.mxu0 0.0
    %2651 = vmatprep.subr.mxu0 0.0
    %2652 = vmatpush1.msra.mxu0 0.0
    %2653 = vmatprep.subr.mxu0 0.0
    %2654 = vmatpush1.msra.mxu0 0.0
    %2655 = vmatprep.subr.mxu0 0.0
    %2656 = vmatpush1.msra.mxu0 0.0
    %2657 = vmatprep.subr.mxu0 0.0
    %2658 = vmatpush1.msra.mxu0 0.0
    %2659 = vmatprep.subr.mxu0 0.0
    %2660 = vmatpush1.msra.mxu0 0.0
    %2661 = vmatprep.subr.mxu0 0.0
    %2662 = vmatpush1.msra.mxu0 0.0
    %2663 = vmatprep.subr.mxu0 0.0
    %2664 = vmatpush1.msra.mxu0 0.0
    %2665 = vmatprep.subr.mxu0 0.0
    %2666 = vmatpush1.msra.mxu0 0.0
    %2667 = vmatprep.subr.mxu0 0.0
    %2668 = vmatpush1.msra.mxu0 0.0
    %2669 = vmatprep.subr.mxu0 0.0
    %2670 = vmatpush1.msra.mxu0 0.0
    %2671 = vmatprep.subr.mxu0 0.0
    %2672 = vmatpush1.msra.mxu0 0.0
    %2673 = vmatprep.mubr.f32.mxu0 0.0
    %2674 = vmatmul.mubr.f32.gmra.mrb[0].mxu0 %v2607
    %v2675 = vpop.f32.mrb[0].mxu0
    %v2676 = vadd.f32 0.0, %v2675
    %v2677 = vpop.f32.mrb[0].mxu0
    %2678 = vdwg.mxu0
    %v2679 = vadd.f32 %v2603, %v2676
    %v2680 = vmax.f32 %v2679, 0.0
    %v2681 = vld [vmem:[%s29] sm:$0x1]
    %s2682 = scalar_lea.vmem %s27, 24
    %v2683 = vld [vmem:[%s2682] sm:$0xff]
    %v2685 = vsel %vm1617, %v2683, 0
    %2687 = vmatprep.subr.mxu0 0.0
    %2688 = vmatpush1.msra.mxu0 %v2440
    %2689 = vmatprep.subr.mxu0 0.0
    %2690 = vmatpush1.msra.mxu0 %v2444
    %2691 = vmatprep.subr.mxu0 0.0
    %2692 = vmatpush1.msra.mxu0 0.0
    %2693 = vmatprep.subr.mxu0 0.0
    %2694 = vmatpush1.msra.mxu0 0.0
    %2695 = vmatprep.subr.mxu0 0.0
    %2696 = vmatpush1.msra.mxu0 0.0
    %2697 = vmatprep.subr.mxu0 0.0
    %2698 = vmatpush1.msra.mxu0 0.0
    %2699 = vmatprep.subr.mxu0 0.0
    %2700 = vmatpush1.msra.mxu0 0.0
    %2701 = vmatprep.subr.mxu0 0.0
    %2702 = vmatpush1.msra.mxu0 0.0
    %2703 = vmatprep.subr.mxu0 0.0
    %2704 = vmatpush1.msra.mxu0 0.0
    %2705 = vmatprep.subr.mxu0 0.0
    %2706 = vmatpush1.msra.mxu0 0.0
    %2707 = vmatprep.subr.mxu0 0.0
    %2708 = vmatpush1.msra.mxu0 0.0
    %2709 = vmatprep.subr.mxu0 0.0
    %2710 = vmatpush1.msra.mxu0 0.0
    %2711 = vmatprep.subr.mxu0 0.0
    %2712 = vmatpush1.msra.mxu0 0.0
    %2713 = vmatprep.subr.mxu0 0.0
    %2714 = vmatpush1.msra.mxu0 0.0
    %2715 = vmatprep.subr.mxu0 0.0
    %2716 = vmatpush1.msra.mxu0 0.0
    %2717 = vmatprep.subr.mxu0 0.0
    %2718 = vmatpush1.msra.mxu0 0.0
    %2719 = vmatprep.subr.mxu0 0.0
    %2720 = vmatpush1.msra.mxu0 0.0
    %2721 = vmatprep.subr.mxu0 0.0
    %2722 = vmatpush1.msra.mxu0 0.0
    %2723 = vmatprep.subr.mxu0 0.0
    %2724 = vmatpush1.msra.mxu0 0.0
    %2725 = vmatprep.subr.mxu0 0.0
    %2726 = vmatpush1.msra.mxu0 0.0
    %2727 = vmatprep.subr.mxu0 0.0
    %2728 = vmatpush1.msra.mxu0 0.0
    %2729 = vmatprep.subr.mxu0 0.0
    %2730 = vmatpush1.msra.mxu0 0.0
    %2731 = vmatprep.subr.mxu0 0.0
    %2732 = vmatpush1.msra.mxu0 0.0
    %2733 = vmatprep.subr.mxu0 0.0
    %2734 = vmatpush1.msra.mxu0 0.0
    %2735 = vmatprep.subr.mxu0 0.0
    %2736 = vmatpush1.msra.mxu0 0.0
    %2737 = vmatprep.subr.mxu0 0.0
    %2738 = vmatpush1.msra.mxu0 0.0
    %2739 = vmatprep.subr.mxu0 0.0
    %2740 = vmatpush1.msra.mxu0 0.0
    %2741 = vmatprep.subr.mxu0 0.0
    %2742 = vmatpush1.msra.mxu0 0.0
    %2743 = vmatprep.subr.mxu0 0.0
    %2744 = vmatpush1.msra.mxu0 0.0
    %2745 = vmatprep.subr.mxu0 0.0
    %2746 = vmatpush1.msra.mxu0 0.0
    %2747 = vmatprep.subr.mxu0 0.0
    %2748 = vmatpush1.msra.mxu0 0.0
    %2749 = vmatprep.subr.mxu0 0.0
    %2750 = vmatpush1.msra.mxu0 0.0
    %2751 = vmatprep.mubr.f32.mxu0 0.0
    %2752 = vmatmul.mubr.f32.gmra.mrb[0].mxu0 %v2685
    %v2753 = vpop.f32.mrb[0].mxu0
    %v2754 = vadd.f32 0.0, %v2753
    %v2755 = vpop.f32.mrb[0].mxu0
    %2756 = vdwg.mxu0
    %v2758 = vlaneseq
    %v2759 = vshrl.u32 %v2758, 7
    %v2760 = vsub.s32 0, %v2759
    %v2761 = vrot.slane %v2681, %v2760
    %v2763 = vadd.f32 %v2761, %v2754
    %v2764 = vpack.c.bf16 %v2680, %v2680
    %v2765 = vld [vmem:[%s31] sm:$0xff]
    %v2766 = vld [vmem:[%s31 + $0x8] sm:$0xf]
    %v2767 = vld [vmem:[%s31 + $0xc] sm:$0xff]
    %v2768 = vld [vmem:[%s31 + $0x14] sm:$0xf]
    %v2769 = vld [vmem:[%s31 + $0x18] sm:$0xff]
    %v2770 = vld [vmem:[%s31 + $0x20] sm:$0xf]
    %v2771 = vld [vmem:[%s31 + $0x24] sm:$0xff]
    %v2772 = vld [vmem:[%s31 + $0x2c] sm:$0xf]
    %v2773 = vld [vmem:[%s31 + $0x30] sm:$0xff]
    %v2774 = vld [vmem:[%s31 + $0x38] sm:$0xf]
    %v2775 = vld [vmem:[%s31 + $0x3c] sm:$0xff]
    %v2776 = vld [vmem:[%s31 + $0x44] sm:$0xf]
    %v2777 = vld [vmem:[%s31 + $0x48] sm:$0xff]
    %v2778 = vld [vmem:[%s31 + $0x50] sm:$0xf]
    %v2779 = vld [vmem:[%s31 + $0x54] sm:$0xff]
    %v2780 = vld [vmem:[%s31 + $0x5c] sm:$0xf]
    %v2781 = vld [vmem:[%s31 + $0x60] sm:$0xff]
    %v2782 = vld [vmem:[%s31 + $0x68] sm:$0xf]
    %v2783 = vld [vmem:[%s31 + $0x6c] sm:$0xff]
    %v2784 = vld [vmem:[%s31 + $0x74] sm:$0xf]
    %v2785 = vld [vmem:[%s31 + $0x78] sm:$0xff]
    %v2786 = vld [vmem:[%s31 + $0x80] sm:$0xf]
    %v2787 = vld [vmem:[%s31 + $0x84] sm:$0xff]
    %v2788 = vld [vmem:[%s31 + $0x8c] sm:$0xf]
    %v2789 = vld [vmem:[%s31 + $0x90] sm:$0xff]
    %v2790 = vld [vmem:[%s31 + $0x98] sm:$0xf]
    %v2791 = vld [vmem:[%s31 + $0x9c] sm:$0xff]
    %v2792 = vld [vmem:[%s31 + $0xa4] sm:$0xf]
    %v2793 = vld [vmem:[%s31 + $0xa8] sm:$0xff]
    %v2794 = vld [vmem:[%s31 + $0xb0] sm:$0xf]
    %v2795 = vld [vmem:[%s31 + $0xb4] sm:$0xff]
    %v2796 = vld [vmem:[%s31 + $0xbc] sm:$0xf]
    %v2829 = vunpack.c.l.b16 %v2765
    %v2830 = vunpack.c.h.b16 %v2765
    %v2831 = vunpack.c.l.b16 %v2766
    %v2832 = vunpack.c.l.b16 %v2767
    %v2833 = vunpack.c.h.b16 %v2767
    %v2834 = vunpack.c.l.b16 %v2768
    %v2835 = vunpack.c.l.b16 %v2769
    %v2836 = vunpack.c.h.b16 %v2769
    %v2837 = vunpack.c.l.b16 %v2770
    %v2838 = vunpack.c.l.b16 %v2771
    %v2839 = vunpack.c.h.b16 %v2771
    %v2840 = vunpack.c.l.b16 %v2772
    %v2841 = vunpack.c.l.b16 %v2773
    %v2842 = vunpack.c.h.b16 %v2773
    %v2843 = vunpack.c.l.b16 %v2774
    %v2844 = vunpack.c.l.b16 %v2775
    %v2845 = vunpack.c.h.b16 %v2775
    %v2846 = vunpack.c.l.b16 %v2776
    %v2847 = vunpack.c.l.b16 %v2777
    %v2848 = vunpack.c.h.b16 %v2777
    %v2849 = vunpack.c.l.b16 %v2778
    %v2850 = vunpack.c.l.b16 %v2779
    %v2851 = vunpack.c.h.b16 %v2779
    %v2852 = vunpack.c.l.b16 %v2780
    %v2853 = vunpack.c.l.b16 %v2781
    %v2854 = vunpack.c.h.b16 %v2781
    %v2855 = vunpack.c.l.b16 %v2782
    %v2856 = vunpack.c.l.b16 %v2783
    %v2857 = vunpack.c.h.b16 %v2783
    %v2858 = vunpack.c.l.b16 %v2784
    %v2859 = vunpack.c.l.b16 %v2785
    %v2860 = vunpack.c.h.b16 %v2785
    %v2861 = vunpack.c.l.b16 %v2786
    %v2862 = vunpack.c.l.b16 %v2787
    %v2863 = vunpack.c.h.b16 %v2787
    %v2864 = vunpack.c.l.b16 %v2788
    %v2865 = vunpack.c.l.b16 %v2789
    %v2866 = vunpack.c.h.b16 %v2789
    %v2867 = vunpack.c.l.b16 %v2790
    %v2868 = vunpack.c.l.b16 %v2791
    %v2869 = vunpack.c.h.b16 %v2791
    %v2870 = vunpack.c.l.b16 %v2792
    %v2871 = vunpack.c.l.b16 %v2793
    %v2872 = vunpack.c.h.b16 %v2793
    %v2873 = vunpack.c.l.b16 %v2794
    %v2874 = vunpack.c.l.b16 %v2795
    %v2875 = vunpack.c.h.b16 %v2795
    %v2876 = vunpack.c.l.b16 %v2796
    %v2877 = vpack.c.b16 %v2832, %v2829
    %v2878 = vpack.c.b16 %v2833, %v2830
    %v2879 = vpack.c.b16 %v2834, %v2831
    %v2880 = vpack.c.b16 %v2838, %v2835
    %v2881 = vpack.c.b16 %v2839, %v2836
    %v2882 = vpack.c.b16 %v2840, %v2837
    %v2883 = vpack.c.b16 %v2844, %v2841
    %v2884 = vpack.c.b16 %v2845, %v2842
    %v2885 = vpack.c.b16 %v2846, %v2843
    %v2886 = vpack.c.b16 %v2850, %v2847
    %v2887 = vpack.c.b16 %v2851, %v2848
    %v2888 = vpack.c.b16 %v2852, %v2849
    %v2889 = vpack.c.b16 %v2856, %v2853
    %v2890 = vpack.c.b16 %v2857, %v2854
    %v2891 = vpack.c.b16 %v2858, %v2855
    %v2892 = vpack.c.b16 %v2862, %v2859
    %v2893 = vpack.c.b16 %v2863, %v2860
    %v2894 = vpack.c.b16 %v2864, %v2861
    %v2895 = vpack.c.b16 %v2868, %v2865
    %v2896 = vpack.c.b16 %v2869, %v2866
    %v2897 = vpack.c.b16 %v2870, %v2867
    %v2898 = vpack.c.b16 %v2874, %v2871
    %v2899 = vpack.c.b16 %v2875, %v2872
    %v2900 = vpack.c.b16 %v2876, %v2873
    %2925 = vmatprep.subr.bf16.mxu0 %v2878
    %2926 = vmatpush1.bf16.msra.mxu0 %v2877
    %2927 = vmatprep.subr.bf16.mxu0 %v2881
    %2928 = vmatpush1.bf16.msra.mxu0 %v2880
    %2929 = vmatprep.subr.bf16.mxu0 %v2884
    %2930 = vmatpush1.bf16.msra.mxu0 %v2883
    %2931 = vmatprep.subr.bf16.mxu0 %v2887
    %2932 = vmatpush1.bf16.msra.mxu0 %v2886
    %2933 = vmatprep.subr.bf16.mxu0 %v2890
    %2934 = vmatpush1.bf16.msra.mxu0 %v2889
    %2935 = vmatprep.subr.bf16.mxu0 %v2893
    %2936 = vmatpush1.bf16.msra.mxu0 %v2892
    %2937 = vmatprep.subr.bf16.mxu0 %v2896
    %2938 = vmatpush1.bf16.msra.mxu0 %v2895
    %2939 = vmatprep.subr.bf16.mxu0 %v2899
    %2940 = vmatpush1.bf16.msra.mxu0 %v2898
    %2941 = vmatprep.subr.bf16.mxu0 0
    %2942 = vmatpush1.bf16.msra.mxu0 0
    %2943 = vmatprep.subr.bf16.mxu0 0
    %2944 = vmatpush1.bf16.msra.mxu0 0
    %2945 = vmatprep.subr.bf16.mxu0 0
    %2946 = vmatpush1.bf16.msra.mxu0 0
    %2947 = vmatprep.subr.bf16.mxu0 0
    %2948 = vmatpush1.bf16.msra.mxu0 0
    %2949 = vmatprep.subr.bf16.mxu0 0
    %2950 = vmatpush1.bf16.msra.mxu0 0
    %2951 = vmatprep.subr.bf16.mxu0 0
    %2952 = vmatpush1.bf16.msra.mxu0 0
    %2953 = vmatprep.subr.bf16.mxu0 0
    %2954 = vmatpush1.bf16.msra.mxu0 0
    %2955 = vmatprep.subr.bf16.mxu0 0
    %2956 = vmatpush1.bf16.msra.mxu0 0
    %2957 = vmatprep.mubr.bf16.mxu0 0
    %2958 = vmatmul.mubr.bf16.gmra.mrb[0].mxu0 %v2764
    %v2959 = vpop.f32.mrb[0].mxu0
    %v2960 = vadd.f32 0.0, %v2959
    %v2961 = vpop.f32.mrb[0].mxu0
    %v2962 = vadd.f32 0.0, %v2961
    %v2963 = vpop.f32.mrb[0].mxu0
    %v2964 = vpop.f32.mrb[0].mxu0
    %2965 = vdwg.mxu0
    %2966 = vmatprep.subr.bf16.mxu0 0
    %2967 = vmatpush1.bf16.msra.mxu0 %v2879
    %2968 = vmatprep.subr.bf16.mxu0 0
    %2969 = vmatpush1.bf16.msra.mxu0 %v2882
    %2970 = vmatprep.subr.bf16.mxu0 0
    %2971 = vmatpush1.bf16.msra.mxu0 %v2885
    %2972 = vmatprep.subr.bf16.mxu0 0
    %2973 = vmatpush1.bf16.msra.mxu0 %v2888
    %2974 = vmatprep.subr.bf16.mxu0 0
    %2975 = vmatpush1.bf16.msra.mxu0 %v2891
    %2976 = vmatprep.subr.bf16.mxu0 0
    %2977 = vmatpush1.bf16.msra.mxu0 %v2894
    %2978 = vmatprep.subr.bf16.mxu0 0
    %2979 = vmatpush1.bf16.msra.mxu0 %v2897
    %2980 = vmatprep.subr.bf16.mxu0 0
    %2981 = vmatpush1.bf16.msra.mxu0 %v2900
    %2982 = vmatprep.subr.bf16.mxu0 0
    %2983 = vmatpush1.bf16.msra.mxu0 0
    %2984 = vmatprep.subr.bf16.mxu0 0
    %2985 = vmatpush1.bf16.msra.mxu0 0
    %2986 = vmatprep.subr.bf16.mxu0 0
    %2987 = vmatpush1.bf16.msra.mxu0 0
    %2988 = vmatprep.subr.bf16.mxu0 0
    %2989 = vmatpush1.bf16.msra.mxu0 0
    %2990 = vmatprep.subr.bf16.mxu0 0
    %2991 = vmatpush1.bf16.msra.mxu0 0
    %2992 = vmatprep.subr.bf16.mxu0 0
    %2993 = vmatpush1.bf16.msra.mxu0 0
    %2994 = vmatprep.subr.bf16.mxu0 0
    %2995 = vmatpush1.bf16.msra.mxu0 0
    %2996 = vmatprep.subr.bf16.mxu0 0
    %2997 = vmatpush1.bf16.msra.mxu0 0
    %2998 = vmatprep.mubr.bf16.mxu0 0
    %2999 = vmatmul.mubr.bf16.gmra.mrb[0].mxu0 %v2764
    %v3000 = vpop.f32.mrb[0].mxu0
    %v3001 = vadd.f32 0.0, %v3000
    %v3002 = vpop.f32.mrb[0].mxu0
    %v3003 = vpop.f32.mrb[0].mxu0
    %v3004 = vpop.f32.mrb[0].mxu0
    %3005 = vdwg.mxu0
    %v3006 = vld [vmem:[%s33] sm:$0x1]
    %v3008 = vlaneseq
    %v3009 = vshrl.u32 %v3008, 7
    %v3010 = vsub.s32 0, %v3009
    %v3011 = vrot.slane %v3006, %v3010
    %v3013 = vadd.f32 %v3011, %v2763
    %v3014 = vld [vmem:[%s35] sm:$0xff]
    %vm3015 = vcmask 64512
    %v3017 = vsel %vm3015, %v3014, 0
    %3019 = vmatprep.subr.mxu0 0.0
    %3020 = vmatpush1.msra.mxu0 %v2960
    %3021 = vmatprep.subr.mxu0 0.0
    %3022 = vmatpush1.msra.mxu0 0.0
    %3023 = vmatprep.subr.mxu0 0.0
    %3024 = vmatpush1.msra.mxu0 0.0
    %3025 = vmatprep.subr.mxu0 0.0
    %3026 = vmatpush1.msra.mxu0 0.0
    %3027 = vmatprep.subr.mxu0 0.0
    %3028 = vmatpush1.msra.mxu0 0.0
    %3029 = vmatprep.subr.mxu0 0.0
    %3030 = vmatpush1.msra.mxu0 0.0
    %3031 = vmatprep.subr.mxu0 0.0
    %3032 = vmatpush1.msra.mxu0 0.0
    %3033 = vmatprep.subr.mxu0 0.0
    %3034 = vmatpush1.msra.mxu0 0.0
    %3035 = vmatprep.subr.mxu0 0.0
    %3036 = vmatpush1.msra.mxu0 0.0
    %3037 = vmatprep.subr.mxu0 0.0
    %3038 = vmatpush1.msra.mxu0 0.0
    %3039 = vmatprep.subr.mxu0 0.0
    %3040 = vmatpush1.msra.mxu0 0.0
    %3041 = vmatprep.subr.mxu0 0.0
    %3042 = vmatpush1.msra.mxu0 0.0
    %3043 = vmatprep.subr.mxu0 0.0
    %3044 = vmatpush1.msra.mxu0 0.0
    %3045 = vmatprep.subr.mxu0 0.0
    %3046 = vmatpush1.msra.mxu0 0.0
    %3047 = vmatprep.subr.mxu0 0.0
    %3048 = vmatpush1.msra.mxu0 0.0
    %3049 = vmatprep.subr.mxu0 0.0
    %3050 = vmatpush1.msra.mxu0 0.0
    %3051 = vmatprep.subr.mxu0 0.0
    %3052 = vmatpush1.msra.mxu0 0.0
    %3053 = vmatprep.subr.mxu0 0.0
    %3054 = vmatpush1.msra.mxu0 0.0
    %3055 = vmatprep.subr.mxu0 0.0
    %3056 = vmatpush1.msra.mxu0 0.0
    %3057 = vmatprep.subr.mxu0 0.0
    %3058 = vmatpush1.msra.mxu0 0.0
    %3059 = vmatprep.subr.mxu0 0.0
    %3060 = vmatpush1.msra.mxu0 0.0
    %3061 = vmatprep.subr.mxu0 0.0
    %3062 = vmatpush1.msra.mxu0 0.0
    %3063 = vmatprep.subr.mxu0 0.0
    %3064 = vmatpush1.msra.mxu0 0.0
    %3065 = vmatprep.subr.mxu0 0.0
    %3066 = vmatpush1.msra.mxu0 0.0
    %3067 = vmatprep.subr.mxu0 0.0
    %3068 = vmatpush1.msra.mxu0 0.0
    %3069 = vmatprep.subr.mxu0 0.0
    %3070 = vmatpush1.msra.mxu0 0.0
    %3071 = vmatprep.subr.mxu0 0.0
    %3072 = vmatpush1.msra.mxu0 0.0
    %3073 = vmatprep.subr.mxu0 0.0
    %3074 = vmatpush1.msra.mxu0 0.0
    %3075 = vmatprep.subr.mxu0 0.0
    %3076 = vmatpush1.msra.mxu0 0.0
    %3077 = vmatprep.subr.mxu0 0.0
    %3078 = vmatpush1.msra.mxu0 0.0
    %3079 = vmatprep.subr.mxu0 0.0
    %3080 = vmatpush1.msra.mxu0 0.0
    %3081 = vmatprep.subr.mxu0 0.0
    %3082 = vmatpush1.msra.mxu0 0.0
    %3083 = vmatprep.mubr.f32.mxu0 0.0
    %3084 = vmatmul.mubr.f32.gmra.mrb[0].mxu0 %v3017
    %v3085 = vpop.f32.mrb[0].mxu0
    %v3086 = vadd.f32 0.0, %v3085
    %v3087 = vpop.f32.mrb[0].mxu0
    %3088 = vdwg.mxu0
    %v3089 = vadd.f32 %v3013, %v3086
    %s3090 = scalar_lea.vmem %s35, 8
    %v3091 = vld [vmem:[%s3090] sm:$0xff]
    %v3093 = vsel %vm3015, %v3091, 0
    %3095 = vmatprep.subr.mxu0 0.0
    %3096 = vmatpush1.msra.mxu0 %v2962
    %3097 = vmatprep.subr.mxu0 0.0
    %3098 = vmatpush1.msra.mxu0 0.0
    %3099 = vmatprep.subr.mxu0 0.0
    %3100 = vmatpush1.msra.mxu0 0.0
    %3101 = vmatprep.subr.mxu0 0.0
    %3102 = vmatpush1.msra.mxu0 0.0
    %3103 = vmatprep.subr.mxu0 0.0
    %3104 = vmatpush1.msra.mxu0 0.0
    %3105 = vmatprep.subr.mxu0 0.0
    %3106 = vmatpush1.msra.mxu0 0.0
    %3107 = vmatprep.subr.mxu0 0.0
    %3108 = vmatpush1.msra.mxu0 0.0
    %3109 = vmatprep.subr.mxu0 0.0
    %3110 = vmatpush1.msra.mxu0 0.0
    %3111 = vmatprep.subr.mxu0 0.0
    %3112 = vmatpush1.msra.mxu0 0.0
    %3113 = vmatprep.subr.mxu0 0.0
    %3114 = vmatpush1.msra.mxu0 0.0
    %3115 = vmatprep.subr.mxu0 0.0
    %3116 = vmatpush1.msra.mxu0 0.0
    %3117 = vmatprep.subr.mxu0 0.0
    %3118 = vmatpush1.msra.mxu0 0.0
    %3119 = vmatprep.subr.mxu0 0.0
    %3120 = vmatpush1.msra.mxu0 0.0
    %3121 = vmatprep.subr.mxu0 0.0
    %3122 = vmatpush1.msra.mxu0 0.0
    %3123 = vmatprep.subr.mxu0 0.0
    %3124 = vmatpush1.msra.mxu0 0.0
    %3125 = vmatprep.subr.mxu0 0.0
    %3126 = vmatpush1.msra.mxu0 0.0
    %3127 = vmatprep.subr.mxu0 0.0
    %3128 = vmatpush1.msra.mxu0 0.0
    %3129 = vmatprep.subr.mxu0 0.0
    %3130 = vmatpush1.msra.mxu0 0.0
    %3131 = vmatprep.subr.mxu0 0.0
    %3132 = vmatpush1.msra.mxu0 0.0
    %3133 = vmatprep.subr.mxu0 0.0
    %3134 = vmatpush1.msra.mxu0 0.0
    %3135 = vmatprep.subr.mxu0 0.0
    %3136 = vmatpush1.msra.mxu0 0.0
    %3137 = vmatprep.subr.mxu0 0.0
    %3138 = vmatpush1.msra.mxu0 0.0
    %3139 = vmatprep.subr.mxu0 0.0
    %3140 = vmatpush1.msra.mxu0 0.0
    %3141 = vmatprep.subr.mxu0 0.0
    %3142 = vmatpush1.msra.mxu0 0.0
    %3143 = vmatprep.subr.mxu0 0.0
    %3144 = vmatpush1.msra.mxu0 0.0
    %3145 = vmatprep.subr.mxu0 0.0
    %3146 = vmatpush1.msra.mxu0 0.0
    %3147 = vmatprep.subr.mxu0 0.0
    %3148 = vmatpush1.msra.mxu0 0.0
    %3149 = vmatprep.subr.mxu0 0.0
    %3150 = vmatpush1.msra.mxu0 0.0
    %3151 = vmatprep.subr.mxu0 0.0
    %3152 = vmatpush1.msra.mxu0 0.0
    %3153 = vmatprep.subr.mxu0 0.0
    %3154 = vmatpush1.msra.mxu0 0.0
    %3155 = vmatprep.subr.mxu0 0.0
    %3156 = vmatpush1.msra.mxu0 0.0
    %3157 = vmatprep.subr.mxu0 0.0
    %3158 = vmatpush1.msra.mxu0 0.0
    %3159 = vmatprep.mubr.f32.mxu0 0.0
    %3160 = vmatmul.mubr.f32.gmra.mrb[0].mxu0 %v3093
    %v3161 = vpop.f32.mrb[0].mxu0
    %v3162 = vadd.f32 0.0, %v3161
    %v3163 = vpop.f32.mrb[0].mxu0
    %3164 = vdwg.mxu0
    %v3165 = vadd.f32 %v3089, %v3162
    %s3166 = scalar_lea.vmem %s35, 16
    %v3167 = vld [vmem:[%s3166] sm:$0xff]
    %v3169 = vsel %vm3015, %v3167, 0
    %3171 = vmatprep.subr.mxu0 0.0
    %3172 = vmatpush1.msra.mxu0 %v3001
    %3173 = vmatprep.subr.mxu0 0.0
    %3174 = vmatpush1.msra.mxu0 0.0
    %3175 = vmatprep.subr.mxu0 0.0
    %3176 = vmatpush1.msra.mxu0 0.0
    %3177 = vmatprep.subr.mxu0 0.0
    %3178 = vmatpush1.msra.mxu0 0.0
    %3179 = vmatprep.subr.mxu0 0.0
    %3180 = vmatpush1.msra.mxu0 0.0
    %3181 = vmatprep.subr.mxu0 0.0
    %3182 = vmatpush1.msra.mxu0 0.0
    %3183 = vmatprep.subr.mxu0 0.0
    %3184 = vmatpush1.msra.mxu0 0.0
    %3185 = vmatprep.subr.mxu0 0.0
    %3186 = vmatpush1.msra.mxu0 0.0
    %3187 = vmatprep.subr.mxu0 0.0
    %3188 = vmatpush1.msra.mxu0 0.0
    %3189 = vmatprep.subr.mxu0 0.0
    %3190 = vmatpush1.msra.mxu0 0.0
    %3191 = vmatprep.subr.mxu0 0.0
    %3192 = vmatpush1.msra.mxu0 0.0
    %3193 = vmatprep.subr.mxu0 0.0
    %3194 = vmatpush1.msra.mxu0 0.0
    %3195 = vmatprep.subr.mxu0 0.0
    %3196 = vmatpush1.msra.mxu0 0.0
    %3197 = vmatprep.subr.mxu0 0.0
    %3198 = vmatpush1.msra.mxu0 0.0
    %3199 = vmatprep.subr.mxu0 0.0
    %3200 = vmatpush1.msra.mxu0 0.0
    %3201 = vmatprep.subr.mxu0 0.0
    %3202 = vmatpush1.msra.mxu0 0.0
    %3203 = vmatprep.subr.mxu0 0.0
    %3204 = vmatpush1.msra.mxu0 0.0
    %3205 = vmatprep.subr.mxu0 0.0
    %3206 = vmatpush1.msra.mxu0 0.0
    %3207 = vmatprep.subr.mxu0 0.0
    %3208 = vmatpush1.msra.mxu0 0.0
    %3209 = vmatprep.subr.mxu0 0.0
    %3210 = vmatpush1.msra.mxu0 0.0
    %3211 = vmatprep.subr.mxu0 0.0
    %3212 = vmatpush1.msra.mxu0 0.0
    %3213 = vmatprep.subr.mxu0 0.0
    %3214 = vmatpush1.msra.mxu0 0.0
    %3215 = vmatprep.subr.mxu0 0.0
    %3216 = vmatpush1.msra.mxu0 0.0
    %3217 = vmatprep.subr.mxu0 0.0
    %3218 = vmatpush1.msra.mxu0 0.0
    %3219 = vmatprep.subr.mxu0 0.0
    %3220 = vmatpush1.msra.mxu0 0.0
    %3221 = vmatprep.subr.mxu0 0.0
    %3222 = vmatpush1.msra.mxu0 0.0
    %3223 = vmatprep.subr.mxu0 0.0
    %3224 = vmatpush1.msra.mxu0 0.0
    %3225 = vmatprep.subr.mxu0 0.0
    %3226 = vmatpush1.msra.mxu0 0.0
    %3227 = vmatprep.subr.mxu0 0.0
    %3228 = vmatpush1.msra.mxu0 0.0
    %3229 = vmatprep.subr.mxu0 0.0
    %3230 = vmatpush1.msra.mxu0 0.0
    %3231 = vmatprep.subr.mxu0 0.0
    %3232 = vmatpush1.msra.mxu0 0.0
    %3233 = vmatprep.subr.mxu0 0.0
    %3234 = vmatpush1.msra.mxu0 0.0
    %3235 = vmatprep.mubr.f32.mxu0 0.0
    %3236 = vmatmul.mubr.f32.gmra.mrb[0].mxu0 %v3169
    %v3237 = vpop.f32.mrb[0].mxu0
    %v3238 = vadd.f32 0.0, %v3237
    %v3239 = vpop.f32.mrb[0].mxu0
    %3240 = vdwg.mxu0
    %v3241 = vadd.f32 %v3165, %v3238
    %v3242 = vmax.f32 %v3241, 0.0
    %v3243 = vpack.c.bf16 %v3242, %v3242
    %v3244 = vld [vmem:[%s37] sm:$0xff]
    %v3245 = vld [vmem:[%s37 + $0x8] sm:$0xff]
    %v3246 = vld [vmem:[%s37 + $0x10] sm:$0xff]
    %v3247 = vld [vmem:[%s37 + $0x18] sm:$0xff]
    %v3248 = vld [vmem:[%s37 + $0x20] sm:$0xff]
    %v3249 = vld [vmem:[%s37 + $0x28] sm:$0xff]
    %v3250 = vld [vmem:[%s37 + $0x30] sm:$0xff]
    %v3251 = vld [vmem:[%s37 + $0x38] sm:$0xff]
    %v3252 = vld [vmem:[%s37 + $0x40] sm:$0xff]
    %v3253 = vld [vmem:[%s37 + $0x48] sm:$0xff]
    %v3254 = vld [vmem:[%s37 + $0x50] sm:$0xff]
    %v3255 = vld [vmem:[%s37 + $0x58] sm:$0xff]
    %v3256 = vld [vmem:[%s37 + $0x60] sm:$0xff]
    %v3257 = vld [vmem:[%s37 + $0x68] sm:$0xff]
    %v3258 = vld [vmem:[%s37 + $0x70] sm:$0xff]
    %v3259 = vld [vmem:[%s37 + $0x78] sm:$0xff]
    %v3260 = vld [vmem:[%s37 + $0x80] sm:$0xff]
    %v3261 = vld [vmem:[%s37 + $0x88] sm:$0xff]
    %v3262 = vld [vmem:[%s37 + $0x90] sm:$0xff]
    %v3263 = vld [vmem:[%s37 + $0x98] sm:$0xff]
    %v3264 = vld [vmem:[%s37 + $0xa0] sm:$0xff]
    %v3265 = vld [vmem:[%s37 + $0xa8] sm:$0xff]
    %v3266 = vld [vmem:[%s37 + $0xb0] sm:$0xff]
    %v3267 = vld [vmem:[%s37 + $0xb8] sm:$0xff]
    %v3268 = vld [vmem:[%s37 + $0xc0] sm:$0xff]
    %v3269 = vld [vmem:[%s37 + $0xc8] sm:$0xff]
    %v3270 = vld [vmem:[%s37 + $0xd0] sm:$0xff]
    %v3271 = vld [vmem:[%s37 + $0xd8] sm:$0xff]
    %v3272 = vld [vmem:[%s37 + $0xe0] sm:$0xff]
    %v3273 = vld [vmem:[%s37 + $0xe8] sm:$0xff]
    %v3274 = vld [vmem:[%s37 + $0xf0] sm:$0xff]
    %v3275 = vld [vmem:[%s37 + $0xf8] sm:$0xff]
    %v3276 = vld [vmem:[%s37 + $0x100] sm:$0xff]
    %v3277 = vld [vmem:[%s37 + $0x108] sm:$0xff]
    %v3278 = vld [vmem:[%s37 + $0x110] sm:$0xff]
    %v3279 = vld [vmem:[%s37 + $0x118] sm:$0xff]
    %v3280 = vld [vmem:[%s37 + $0x120] sm:$0xff]
    %v3281 = vld [vmem:[%s37 + $0x128] sm:$0xff]
    %v3282 = vld [vmem:[%s37 + $0x130] sm:$0xff]
    %v3283 = vld [vmem:[%s37 + $0x138] sm:$0xff]
    %v3284 = vld [vmem:[%s37 + $0x140] sm:$0xff]
    %v3285 = vld [vmem:[%s37 + $0x148] sm:$0xff]
    %v3286 = vld [vmem:[%s37 + $0x150] sm:$0xff]
    %v3287 = vld [vmem:[%s37 + $0x158] sm:$0xff]
    %v3288 = vld [vmem:[%s37 + $0x160] sm:$0xff]
    %v3289 = vld [vmem:[%s37 + $0x168] sm:$0xff]
    %v3290 = vld [vmem:[%s37 + $0x170] sm:$0xff]
    %v3291 = vld [vmem:[%s37 + $0x178] sm:$0xff]
    %v3292 = vld [vmem:[%s37 + $0x180] sm:$0xff]
    %v3293 = vld [vmem:[%s37 + $0x188] sm:$0xff]
    %v3294 = vld [vmem:[%s37 + $0x190] sm:$0xff]
    %v3295 = vld [vmem:[%s37 + $0x198] sm:$0xff]
    %v3296 = vld [vmem:[%s37 + $0x1a0] sm:$0xff]
    %v3297 = vld [vmem:[%s37 + $0x1a8] sm:$0xff]
    %v3298 = vld [vmem:[%s37 + $0x1b0] sm:$0xff]
    %v3299 = vld [vmem:[%s37 + $0x1b8] sm:$0xff]
    %v3300 = vld [vmem:[%s37 + $0x1c0] sm:$0xff]
    %v3301 = vld [vmem:[%s37 + $0x1c8] sm:$0xff]
    %v3302 = vld [vmem:[%s37 + $0x1d0] sm:$0xff]
    %v3303 = vld [vmem:[%s37 + $0x1d8] sm:$0xff]
    %v3304 = vld [vmem:[%s37 + $0x1e0] sm:$0xff]
    %v3305 = vld [vmem:[%s37 + $0x1e8] sm:$0xff]
    %v3306 = vld [vmem:[%s37 + $0x1f0] sm:$0xff]
    %v3307 = vld [vmem:[%s37 + $0x1f8] sm:$0xff]
    %v3372 = vunpack.c.l.b16 %v3244
    %v3373 = vunpack.c.h.b16 %v3244
    %v3374 = vunpack.c.l.b16 %v3245
    %v3375 = vunpack.c.h.b16 %v3245
    %v3376 = vunpack.c.l.b16 %v3246
    %v3377 = vunpack.c.h.b16 %v3246
    %v3378 = vunpack.c.l.b16 %v3247
    %v3379 = vunpack.c.h.b16 %v3247
    %v3380 = vunpack.c.l.b16 %v3248
    %v3381 = vunpack.c.h.b16 %v3248
    %v3382 = vunpack.c.l.b16 %v3249
    %v3383 = vunpack.c.h.b16 %v3249
    %v3384 = vunpack.c.l.b16 %v3250
    %v3385 = vunpack.c.h.b16 %v3250
    %v3386 = vunpack.c.l.b16 %v3251
    %v3387 = vunpack.c.h.b16 %v3251
    %v3388 = vunpack.c.l.b16 %v3252
    %v3389 = vunpack.c.h.b16 %v3252
    %v3390 = vunpack.c.l.b16 %v3253
    %v3391 = vunpack.c.h.b16 %v3253
    %v3392 = vunpack.c.l.b16 %v3254
    %v3393 = vunpack.c.h.b16 %v3254
    %v3394 = vunpack.c.l.b16 %v3255
    %v3395 = vunpack.c.h.b16 %v3255
    %v3396 = vunpack.c.l.b16 %v3256
    %v3397 = vunpack.c.h.b16 %v3256
    %v3398 = vunpack.c.l.b16 %v3257
    %v3399 = vunpack.c.h.b16 %v3257
    %v3400 = vunpack.c.l.b16 %v3258
    %v3401 = vunpack.c.h.b16 %v3258
    %v3402 = vunpack.c.l.b16 %v3259
    %v3403 = vunpack.c.h.b16 %v3259
    %v3404 = vunpack.c.l.b16 %v3260
    %v3405 = vunpack.c.h.b16 %v3260
    %v3406 = vunpack.c.l.b16 %v3261
    %v3407 = vunpack.c.h.b16 %v3261
    %v3408 = vunpack.c.l.b16 %v3262
    %v3409 = vunpack.c.h.b16 %v3262
    %v3410 = vunpack.c.l.b16 %v3263
    %v3411 = vunpack.c.h.b16 %v3263
    %v3412 = vunpack.c.l.b16 %v3264
    %v3413 = vunpack.c.h.b16 %v3264
    %v3414 = vunpack.c.l.b16 %v3265
    %v3415 = vunpack.c.h.b16 %v3265
    %v3416 = vunpack.c.l.b16 %v3266
    %v3417 = vunpack.c.h.b16 %v3266
    %v3418 = vunpack.c.l.b16 %v3267
    %v3419 = vunpack.c.h.b16 %v3267
    %v3420 = vunpack.c.l.b16 %v3268
    %v3421 = vunpack.c.h.b16 %v3268
    %v3422 = vunpack.c.l.b16 %v3269
    %v3423 = vunpack.c.h.b16 %v3269
    %v3424 = vunpack.c.l.b16 %v3270
    %v3425 = vunpack.c.h.b16 %v3270
    %v3426 = vunpack.c.l.b16 %v3271
    %v3427 = vunpack.c.h.b16 %v3271
    %v3428 = vunpack.c.l.b16 %v3272
    %v3429 = vunpack.c.h.b16 %v3272
    %v3430 = vunpack.c.l.b16 %v3273
    %v3431 = vunpack.c.h.b16 %v3273
    %v3432 = vunpack.c.l.b16 %v3274
    %v3433 = vunpack.c.h.b16 %v3274
    %v3434 = vunpack.c.l.b16 %v3275
    %v3435 = vunpack.c.h.b16 %v3275
    %v3436 = vunpack.c.l.b16 %v3276
    %v3437 = vunpack.c.h.b16 %v3276
    %v3438 = vunpack.c.l.b16 %v3277
    %v3439 = vunpack.c.h.b16 %v3277
    %v3440 = vunpack.c.l.b16 %v3278
    %v3441 = vunpack.c.h.b16 %v3278
    %v3442 = vunpack.c.l.b16 %v3279
    %v3443 = vunpack.c.h.b16 %v3279
    %v3444 = vunpack.c.l.b16 %v3280
    %v3445 = vunpack.c.h.b16 %v3280
    %v3446 = vunpack.c.l.b16 %v3281
    %v3447 = vunpack.c.h.b16 %v3281
    %v3448 = vunpack.c.l.b16 %v3282
    %v3449 = vunpack.c.h.b16 %v3282
    %v3450 = vunpack.c.l.b16 %v3283
    %v3451 = vunpack.c.h.b16 %v3283
    %v3452 = vunpack.c.l.b16 %v3284
    %v3453 = vunpack.c.h.b16 %v3284
    %v3454 = vunpack.c.l.b16 %v3285
    %v3455 = vunpack.c.h.b16 %v3285
    %v3456 = vunpack.c.l.b16 %v3286
    %v3457 = vunpack.c.h.b16 %v3286
    %v3458 = vunpack.c.l.b16 %v3287
    %v3459 = vunpack.c.h.b16 %v3287
    %v3460 = vunpack.c.l.b16 %v3288
    %v3461 = vunpack.c.h.b16 %v3288
    %v3462 = vunpack.c.l.b16 %v3289
    %v3463 = vunpack.c.h.b16 %v3289
    %v3464 = vunpack.c.l.b16 %v3290
    %v3465 = vunpack.c.h.b16 %v3290
    %v3466 = vunpack.c.l.b16 %v3291
    %v3467 = vunpack.c.h.b16 %v3291
    %v3468 = vunpack.c.l.b16 %v3292
    %v3469 = vunpack.c.h.b16 %v3292
    %v3470 = vunpack.c.l.b16 %v3293
    %v3471 = vunpack.c.h.b16 %v3293
    %v3472 = vunpack.c.l.b16 %v3294
    %v3473 = vunpack.c.h.b16 %v3294
    %v3474 = vunpack.c.l.b16 %v3295
    %v3475 = vunpack.c.h.b16 %v3295
    %v3476 = vunpack.c.l.b16 %v3296
    %v3477 = vunpack.c.h.b16 %v3296
    %v3478 = vunpack.c.l.b16 %v3297
    %v3479 = vunpack.c.h.b16 %v3297
    %v3480 = vunpack.c.l.b16 %v3298
    %v3481 = vunpack.c.h.b16 %v3298
    %v3482 = vunpack.c.l.b16 %v3299
    %v3483 = vunpack.c.h.b16 %v3299
    %v3484 = vunpack.c.l.b16 %v3300
    %v3485 = vunpack.c.h.b16 %v3300
    %v3486 = vunpack.c.l.b16 %v3301
    %v3487 = vunpack.c.h.b16 %v3301
    %v3488 = vunpack.c.l.b16 %v3302
    %v3489 = vunpack.c.h.b16 %v3302
    %v3490 = vunpack.c.l.b16 %v3303
    %v3491 = vunpack.c.h.b16 %v3303
    %v3492 = vunpack.c.l.b16 %v3304
    %v3493 = vunpack.c.h.b16 %v3304
    %v3494 = vunpack.c.l.b16 %v3305
    %v3495 = vunpack.c.h.b16 %v3305
    %v3496 = vunpack.c.l.b16 %v3306
    %v3497 = vunpack.c.h.b16 %v3306
    %v3498 = vunpack.c.l.b16 %v3307
    %v3499 = vunpack.c.h.b16 %v3307
    %v3500 = vpack.c.b16 %v3380, %v3372
    %v3501 = vpack.c.b16 %v3381, %v3373
    %v3502 = vpack.c.b16 %v3382, %v3374
    %v3503 = vpack.c.b16 %v3383, %v3375
    %v3504 = vpack.c.b16 %v3384, %v3376
    %v3505 = vpack.c.b16 %v3385, %v3377
    %v3506 = vpack.c.b16 %v3386, %v3378
    %v3507 = vpack.c.b16 %v3387, %v3379
    %v3508 = vpack.c.b16 %v3396, %v3388
    %v3509 = vpack.c.b16 %v3397, %v3389
    %v3510 = vpack.c.b16 %v3398, %v3390
    %v3511 = vpack.c.b16 %v3399, %v3391
    %v3512 = vpack.c.b16 %v3400, %v3392
    %v3513 = vpack.c.b16 %v3401, %v3393
    %v3514 = vpack.c.b16 %v3402, %v3394
    %v3515 = vpack.c.b16 %v3403, %v3395
    %v3516 = vpack.c.b16 %v3412, %v3404
    %v3517 = vpack.c.b16 %v3413, %v3405
    %v3518 = vpack.c.b16 %v3414, %v3406
    %v3519 = vpack.c.b16 %v3415, %v3407
    %v3520 = vpack.c.b16 %v3416, %v3408
    %v3521 = vpack.c.b16 %v3417, %v3409
    %v3522 = vpack.c.b16 %v3418, %v3410
    %v3523 = vpack.c.b16 %v3419, %v3411
    %v3524 = vpack.c.b16 %v3428, %v3420
    %v3525 = vpack.c.b16 %v3429, %v3421
    %v3526 = vpack.c.b16 %v3430, %v3422
    %v3527 = vpack.c.b16 %v3431, %v3423
    %v3528 = vpack.c.b16 %v3432, %v3424
    %v3529 = vpack.c.b16 %v3433, %v3425
    %v3530 = vpack.c.b16 %v3434, %v3426
    %v3531 = vpack.c.b16 %v3435, %v3427
    %v3532 = vpack.c.b16 %v3444, %v3436
    %v3533 = vpack.c.b16 %v3445, %v3437
    %v3534 = vpack.c.b16 %v3446, %v3438
    %v3535 = vpack.c.b16 %v3447, %v3439
    %v3536 = vpack.c.b16 %v3448, %v3440
    %v3537 = vpack.c.b16 %v3449, %v3441
    %v3538 = vpack.c.b16 %v3450, %v3442
    %v3539 = vpack.c.b16 %v3451, %v3443
    %v3540 = vpack.c.b16 %v3460, %v3452
    %v3541 = vpack.c.b16 %v3461, %v3453
    %v3542 = vpack.c.b16 %v3462, %v3454
    %v3543 = vpack.c.b16 %v3463, %v3455
    %v3544 = vpack.c.b16 %v3464, %v3456
    %v3545 = vpack.c.b16 %v3465, %v3457
    %v3546 = vpack.c.b16 %v3466, %v3458
    %v3547 = vpack.c.b16 %v3467, %v3459
    %v3548 = vpack.c.b16 %v3476, %v3468
    %v3549 = vpack.c.b16 %v3477, %v3469
    %v3550 = vpack.c.b16 %v3478, %v3470
    %v3551 = vpack.c.b16 %v3479, %v3471
    %v3552 = vpack.c.b16 %v3480, %v3472
    %v3553 = vpack.c.b16 %v3481, %v3473
    %v3554 = vpack.c.b16 %v3482, %v3474
    %v3555 = vpack.c.b16 %v3483, %v3475
    %v3556 = vpack.c.b16 %v3492, %v3484
    %v3557 = vpack.c.b16 %v3493, %v3485
    %v3558 = vpack.c.b16 %v3494, %v3486
    %v3559 = vpack.c.b16 %v3495, %v3487
    %v3560 = vpack.c.b16 %v3496, %v3488
    %v3561 = vpack.c.b16 %v3497, %v3489
    %v3562 = vpack.c.b16 %v3498, %v3490
    %v3563 = vpack.c.b16 %v3499, %v3491
    %3628 = vmatprep.subr.bf16.mxu0 %v3501
    %3629 = vmatpush1.bf16.msra.mxu0 %v3500
    %3630 = vmatprep.subr.bf16.mxu0 %v3509
    %3631 = vmatpush1.bf16.msra.mxu0 %v3508
    %3632 = vmatprep.subr.bf16.mxu0 %v3517
    %3633 = vmatpush1.bf16.msra.mxu0 %v3516
    %3634 = vmatprep.subr.bf16.mxu0 %v3525
    %3635 = vmatpush1.bf16.msra.mxu0 %v3524
    %3636 = vmatprep.subr.bf16.mxu0 %v3533
    %3637 = vmatpush1.bf16.msra.mxu0 %v3532
    %3638 = vmatprep.subr.bf16.mxu0 %v3541
    %3639 = vmatpush1.bf16.msra.mxu0 %v3540
    %3640 = vmatprep.subr.bf16.mxu0 %v3549
    %3641 = vmatpush1.bf16.msra.mxu0 %v3548
    %3642 = vmatprep.subr.bf16.mxu0 %v3557
    %3643 = vmatpush1.bf16.msra.mxu0 %v3556
    %3644 = vmatprep.subr.bf16.mxu0 0
    %3645 = vmatpush1.bf16.msra.mxu0 0
    %3646 = vmatprep.subr.bf16.mxu0 0
    %3647 = vmatpush1.bf16.msra.mxu0 0
    %3648 = vmatprep.subr.bf16.mxu0 0
    %3649 = vmatpush1.bf16.msra.mxu0 0
    %3650 = vmatprep.subr.bf16.mxu0 0
    %3651 = vmatpush1.bf16.msra.mxu0 0
    %3652 = vmatprep.subr.bf16.mxu0 0
    %3653 = vmatpush1.bf16.msra.mxu0 0
    %3654 = vmatprep.subr.bf16.mxu0 0
    %3655 = vmatpush1.bf16.msra.mxu0 0
    %3656 = vmatprep.subr.bf16.mxu0 0
    %3657 = vmatpush1.bf16.msra.mxu0 0
    %3658 = vmatprep.subr.bf16.mxu0 0
    %3659 = vmatpush1.bf16.msra.mxu0 0
    %3660 = vmatprep.mubr.bf16.mxu0 0
    %3661 = vmatmul.mubr.bf16.gmra.mrb[0].mxu0 %v3243
    %v3662 = vpop.f32.mrb[0].mxu0
    %v3663 = vadd.f32 0.0, %v3662
    %v3664 = vpop.f32.mrb[0].mxu0
    %v3665 = vadd.f32 0.0, %v3664
    %v3666 = vpop.f32.mrb[0].mxu0
    %v3667 = vpop.f32.mrb[0].mxu0
    %3668 = vdwg.mxu0
    %3669 = vmatprep.subr.bf16.mxu0 %v3503
    %3670 = vmatpush1.bf16.msra.mxu0 %v3502
    %3671 = vmatprep.subr.bf16.mxu0 %v3511
    %3672 = vmatpush1.bf16.msra.mxu0 %v3510
    %3673 = vmatprep.subr.bf16.mxu0 %v3519
    %3674 = vmatpush1.bf16.msra.mxu0 %v3518
    %3675 = vmatprep.subr.bf16.mxu0 %v3527
    %3676 = vmatpush1.bf16.msra.mxu0 %v3526
    %3677 = vmatprep.subr.bf16.mxu0 %v3535
    %3678 = vmatpush1.bf16.msra.mxu0 %v3534
    %3679 = vmatprep.subr.bf16.mxu0 %v3543
    %3680 = vmatpush1.bf16.msra.mxu0 %v3542
    %3681 = vmatprep.subr.bf16.mxu0 %v3551
    %3682 = vmatpush1.bf16.msra.mxu0 %v3550
    %3683 = vmatprep.subr.bf16.mxu0 %v3559
    %3684 = vmatpush1.bf16.msra.mxu0 %v3558
    %3685 = vmatprep.subr.bf16.mxu0 0
    %3686 = vmatpush1.bf16.msra.mxu0 0
    %3687 = vmatprep.subr.bf16.mxu0 0
    %3688 = vmatpush1.bf16.msra.mxu0 0
    %3689 = vmatprep.subr.bf16.mxu0 0
    %3690 = vmatpush1.bf16.msra.mxu0 0
    %3691 = vmatprep.subr.bf16.mxu0 0
    %3692 = vmatpush1.bf16.msra.mxu0 0
    %3693 = vmatprep.subr.bf16.mxu0 0
    %3694 = vmatpush1.bf16.msra.mxu0 0
    %3695 = vmatprep.subr.bf16.mxu0 0
    %3696 = vmatpush1.bf16.msra.mxu0 0
    %3697 = vmatprep.subr.bf16.mxu0 0
    %3698 = vmatpush1.bf16.msra.mxu0 0
    %3699 = vmatprep.subr.bf16.mxu0 0
    %3700 = vmatpush1.bf16.msra.mxu0 0
    %3701 = vmatprep.mubr.bf16.mxu0 0
    %3702 = vmatmul.mubr.bf16.gmra.mrb[0].mxu0 %v3243
    %v3703 = vpop.f32.mrb[0].mxu0
    %v3704 = vadd.f32 0.0, %v3703
    %v3705 = vpop.f32.mrb[0].mxu0
    %v3706 = vadd.f32 0.0, %v3705
    %v3707 = vpop.f32.mrb[0].mxu0
    %v3708 = vpop.f32.mrb[0].mxu0
    %3709 = vdwg.mxu0
    %3710 = vmatprep.subr.bf16.mxu0 %v3505
    %3711 = vmatpush1.bf16.msra.mxu0 %v3504
    %3712 = vmatprep.subr.bf16.mxu0 %v3513
    %3713 = vmatpush1.bf16.msra.mxu0 %v3512
    %3714 = vmatprep.subr.bf16.mxu0 %v3521
    %3715 = vmatpush1.bf16.msra.mxu0 %v3520
    %3716 = vmatprep.subr.bf16.mxu0 %v3529
    %3717 = vmatpush1.bf16.msra.mxu0 %v3528
    %3718 = vmatprep.subr.bf16.mxu0 %v3537
    %3719 = vmatpush1.bf16.msra.mxu0 %v3536
    %3720 = vmatprep.subr.bf16.mxu0 %v3545
    %3721 = vmatpush1.bf16.msra.mxu0 %v3544
    %3722 = vmatprep.subr.bf16.mxu0 %v3553
    %3723 = vmatpush1.bf16.msra.mxu0 %v3552
    %3724 = vmatprep.subr.bf16.mxu0 %v3561
    %3725 = vmatpush1.bf16.msra.mxu0 %v3560
    %3726 = vmatprep.subr.bf16.mxu0 0
    %3727 = vmatpush1.bf16.msra.mxu0 0
    %3728 = vmatprep.subr.bf16.mxu0 0
    %3729 = vmatpush1.bf16.msra.mxu0 0
    %3730 = vmatprep.subr.bf16.mxu0 0
    %3731 = vmatpush1.bf16.msra.mxu0 0
    %3732 = vmatprep.subr.bf16.mxu0 0
    %3733 = vmatpush1.bf16.msra.mxu0 0
    %3734 = vmatprep.subr.bf16.mxu0 0
    %3735 = vmatpush1.bf16.msra.mxu0 0
    %3736 = vmatprep.subr.bf16.mxu0 0
    %3737 = vmatpush1.bf16.msra.mxu0 0
    %3738 = vmatprep.subr.bf16.mxu0 0
    %3739 = vmatpush1.bf16.msra.mxu0 0
    %3740 = vmatprep.subr.bf16.mxu0 0
    %3741 = vmatpush1.bf16.msra.mxu0 0
    %3742 = vmatprep.mubr.bf16.mxu0 0
    %3743 = vmatmul.mubr.bf16.gmra.mrb[0].mxu0 %v3243
    %v3744 = vpop.f32.mrb[0].mxu0
    %v3745 = vadd.f32 0.0, %v3744
    %v3746 = vpop.f32.mrb[0].mxu0
    %v3747 = vadd.f32 0.0, %v3746
    %v3748 = vpop.f32.mrb[0].mxu0
    %v3749 = vpop.f32.mrb[0].mxu0
    %3750 = vdwg.mxu0
    %3751 = vmatprep.subr.bf16.mxu0 %v3507
    %3752 = vmatpush1.bf16.msra.mxu0 %v3506
    %3753 = vmatprep.subr.bf16.mxu0 %v3515
    %3754 = vmatpush1.bf16.msra.mxu0 %v3514
    %3755 = vmatprep.subr.bf16.mxu0 %v3523
    %3756 = vmatpush1.bf16.msra.mxu0 %v3522
    %3757 = vmatprep.subr.bf16.mxu0 %v3531
    %3758 = vmatpush1.bf16.msra.mxu0 %v3530
    %3759 = vmatprep.subr.bf16.mxu0 %v3539
    %3760 = vmatpush1.bf16.msra.mxu0 %v3538
    %3761 = vmatprep.subr.bf16.mxu0 %v3547
    %3762 = vmatpush1.bf16.msra.mxu0 %v3546
    %3763 = vmatprep.subr.bf16.mxu0 %v3555
    %3764 = vmatpush1.bf16.msra.mxu0 %v3554
    %3765 = vmatprep.subr.bf16.mxu0 %v3563
    %3766 = vmatpush1.bf16.msra.mxu0 %v3562
    %3767 = vmatprep.subr.bf16.mxu0 0
    %3768 = vmatpush1.bf16.msra.mxu0 0
    %3769 = vmatprep.subr.bf16.mxu0 0
    %3770 = vmatpush1.bf16.msra.mxu0 0
    %3771 = vmatprep.subr.bf16.mxu0 0
    %3772 = vmatpush1.bf16.msra.mxu0 0
    %3773 = vmatprep.subr.bf16.mxu0 0
    %3774 = vmatpush1.bf16.msra.mxu0 0
    %3775 = vmatprep.subr.bf16.mxu0 0
    %3776 = vmatpush1.bf16.msra.mxu0 0
    %3777 = vmatprep.subr.bf16.mxu0 0
    %3778 = vmatpush1.bf16.msra.mxu0 0
    %3779 = vmatprep.subr.bf16.mxu0 0
    %3780 = vmatpush1.bf16.msra.mxu0 0
    %3781 = vmatprep.subr.bf16.mxu0 0
    %3782 = vmatpush1.bf16.msra.mxu0 0
    %3783 = vmatprep.mubr.bf16.mxu0 0
    %3784 = vmatmul.mubr.bf16.gmra.mrb[0].mxu0 %v3243
    %v3785 = vpop.f32.mrb[0].mxu0
    %v3786 = vadd.f32 0.0, %v3785
    %v3787 = vpop.f32.mrb[0].mxu0
    %v3788 = vadd.f32 0.0, %v3787
    %v3789 = vpop.f32.mrb[0].mxu0
    %v3790 = vpop.f32.mrb[0].mxu0
    %3791 = vdwg.mxu0
    %v3792 = vld [vmem:[%s39] sm:$0x3]
    %v3793 = vld [vmem:[%s41] sm:$0xf]
    %v3795 = vsel %vm3015, %v3793, 0
    %3797 = vmatprep.subr.mxu0 %v3665
    %3798 = vmatpush1.msra.mxu0 %v3663
    %3799 = vmatprep.subr.mxu0 0.0
    %3800 = vmatpush1.msra.mxu0 0.0
    %3801 = vmatprep.subr.mxu0 0.0
    %3802 = vmatpush1.msra.mxu0 0.0
    %3803 = vmatprep.subr.mxu0 0.0
    %3804 = vmatpush1.msra.mxu0 0.0
    %3805 = vmatprep.subr.mxu0 0.0
    %3806 = vmatpush1.msra.mxu0 0.0
    %3807 = vmatprep.subr.mxu0 0.0
    %3808 = vmatpush1.msra.mxu0 0.0
    %3809 = vmatprep.subr.mxu0 0.0
    %3810 = vmatpush1.msra.mxu0 0.0
    %3811 = vmatprep.subr.mxu0 0.0
    %3812 = vmatpush1.msra.mxu0 0.0
    %3813 = vmatprep.subr.mxu0 0.0
    %3814 = vmatpush1.msra.mxu0 0.0
    %3815 = vmatprep.subr.mxu0 0.0
    %3816 = vmatpush1.msra.mxu0 0.0
    %3817 = vmatprep.subr.mxu0 0.0
    %3818 = vmatpush1.msra.mxu0 0.0
    %3819 = vmatprep.subr.mxu0 0.0
    %3820 = vmatpush1.msra.mxu0 0.0
    %3821 = vmatprep.subr.mxu0 0.0
    %3822 = vmatpush1.msra.mxu0 0.0
    %3823 = vmatprep.subr.mxu0 0.0
    %3824 = vmatpush1.msra.mxu0 0.0
    %3825 = vmatprep.subr.mxu0 0.0
    %3826 = vmatpush1.msra.mxu0 0.0
    %3827 = vmatprep.subr.mxu0 0.0
    %3828 = vmatpush1.msra.mxu0 0.0
    %3829 = vmatprep.subr.mxu0 0.0
    %3830 = vmatpush1.msra.mxu0 0.0
    %3831 = vmatprep.subr.mxu0 0.0
    %3832 = vmatpush1.msra.mxu0 0.0
    %3833 = vmatprep.subr.mxu0 0.0
    %3834 = vmatpush1.msra.mxu0 0.0
    %3835 = vmatprep.subr.mxu0 0.0
    %3836 = vmatpush1.msra.mxu0 0.0
    %3837 = vmatprep.subr.mxu0 0.0
    %3838 = vmatpush1.msra.mxu0 0.0
    %3839 = vmatprep.subr.mxu0 0.0
    %3840 = vmatpush1.msra.mxu0 0.0
    %3841 = vmatprep.subr.mxu0 0.0
    %3842 = vmatpush1.msra.mxu0 0.0
    %3843 = vmatprep.subr.mxu0 0.0
    %3844 = vmatpush1.msra.mxu0 0.0
    %3845 = vmatprep.subr.mxu0 0.0
    %3846 = vmatpush1.msra.mxu0 0.0
    %3847 = vmatprep.subr.mxu0 0.0
    %3848 = vmatpush1.msra.mxu0 0.0
    %3849 = vmatprep.subr.mxu0 0.0
    %3850 = vmatpush1.msra.mxu0 0.0
    %3851 = vmatprep.subr.mxu0 0.0
    %3852 = vmatpush1.msra.mxu0 0.0
    %3853 = vmatprep.subr.mxu0 0.0
    %3854 = vmatpush1.msra.mxu0 0.0
    %3855 = vmatprep.subr.mxu0 0.0
    %3856 = vmatpush1.msra.mxu0 0.0
    %3857 = vmatprep.subr.mxu0 0.0
    %3858 = vmatpush1.msra.mxu0 0.0
    %3859 = vmatprep.subr.mxu0 0.0
    %3860 = vmatpush1.msra.mxu0 0.0
    %3861 = vmatprep.mubr.f32.mxu0 0.0
    %3862 = vmatmul.mubr.f32.gmra.mrb[0].mxu0 %v3795
    %v3863 = vpop.f32.mrb[0].mxu0
    %v3864 = vadd.f32 0.0, %v3863
    %v3865 = vpop.f32.mrb[0].mxu0
    %v3866 = vadd.f32 0.0, %v3865
    %3867 = vdwg.mxu0
    %v3869 = vlaneseq
    %v3870 = vshrl.u32 %v3869, 7
    %v3871 = vsub.s32 0, %v3870
    %v3872 = vrot.slane %v3792, %v3871
    %v3873 = vlaneseq
    %v3874 = vshrl.u32 %v3873, 7
    %v3875 = vsub.s32 1, %v3874
    %v3876 = vrot.slane %v3792, %v3875
    %v3879 = vadd.f32 %v3872, %v3864
    %v3880 = vadd.f32 %v3876, %v3866
    %s3881 = scalar_lea.vmem %s41, 4
    %v3882 = vld [vmem:[%s3881] sm:$0xf]
    %v3884 = vsel %vm3015, %v3882, 0
    %3886 = vmatprep.subr.mxu0 %v3706
    %3887 = vmatpush1.msra.mxu0 %v3704
    %3888 = vmatprep.subr.mxu0 0.0
    %3889 = vmatpush1.msra.mxu0 0.0
    %3890 = vmatprep.subr.mxu0 0.0
    %3891 = vmatpush1.msra.mxu0 0.0
    %3892 = vmatprep.subr.mxu0 0.0
    %3893 = vmatpush1.msra.mxu0 0.0
    %3894 = vmatprep.subr.mxu0 0.0
    %3895 = vmatpush1.msra.mxu0 0.0
    %3896 = vmatprep.subr.mxu0 0.0
    %3897 = vmatpush1.msra.mxu0 0.0
    %3898 = vmatprep.subr.mxu0 0.0
    %3899 = vmatpush1.msra.mxu0 0.0
    %3900 = vmatprep.subr.mxu0 0.0
    %3901 = vmatpush1.msra.mxu0 0.0
    %3902 = vmatprep.subr.mxu0 0.0
    %3903 = vmatpush1.msra.mxu0 0.0
    %3904 = vmatprep.subr.mxu0 0.0
    %3905 = vmatpush1.msra.mxu0 0.0
    %3906 = vmatprep.subr.mxu0 0.0
    %3907 = vmatpush1.msra.mxu0 0.0
    %3908 = vmatprep.subr.mxu0 0.0
    %3909 = vmatpush1.msra.mxu0 0.0
    %3910 = vmatprep.subr.mxu0 0.0
    %3911 = vmatpush1.msra.mxu0 0.0
    %3912 = vmatprep.subr.mxu0 0.0
    %3913 = vmatpush1.msra.mxu0 0.0
    %3914 = vmatprep.subr.mxu0 0.0
    %3915 = vmatpush1.msra.mxu0 0.0
    %3916 = vmatprep.subr.mxu0 0.0
    %3917 = vmatpush1.msra.mxu0 0.0
    %3918 = vmatprep.subr.mxu0 0.0
    %3919 = vmatpush1.msra.mxu0 0.0
    %3920 = vmatprep.subr.mxu0 0.0
    %3921 = vmatpush1.msra.mxu0 0.0
    %3922 = vmatprep.subr.mxu0 0.0
    %3923 = vmatpush1.msra.mxu0 0.0
    %3924 = vmatprep.subr.mxu0 0.0
    %3925 = vmatpush1.msra.mxu0 0.0
    %3926 = vmatprep.subr.mxu0 0.0
    %3927 = vmatpush1.msra.mxu0 0.0
    %3928 = vmatprep.subr.mxu0 0.0
    %3929 = vmatpush1.msra.mxu0 0.0
    %3930 = vmatprep.subr.mxu0 0.0
    %3931 = vmatpush1.msra.mxu0 0.0
    %3932 = vmatprep.subr.mxu0 0.0
    %3933 = vmatpush1.msra.mxu0 0.0
    %3934 = vmatprep.subr.mxu0 0.0
    %3935 = vmatpush1.msra.mxu0 0.0
    %3936 = vmatprep.subr.mxu0 0.0
    %3937 = vmatpush1.msra.mxu0 0.0
    %3938 = vmatprep.subr.mxu0 0.0
    %3939 = vmatpush1.msra.mxu0 0.0
    %3940 = vmatprep.subr.mxu0 0.0
    %3941 = vmatpush1.msra.mxu0 0.0
    %3942 = vmatprep.subr.mxu0 0.0
    %3943 = vmatpush1.msra.mxu0 0.0
    %3944 = vmatprep.subr.mxu0 0.0
    %3945 = vmatpush1.msra.mxu0 0.0
    %3946 = vmatprep.subr.mxu0 0.0
    %3947 = vmatpush1.msra.mxu0 0.0
    %3948 = vmatprep.subr.mxu0 0.0
    %3949 = vmatpush1.msra.mxu0 0.0
    %3950 = vmatprep.mubr.f32.mxu0 0.0
    %3951 = vmatmul.mubr.f32.gmra.mrb[0].mxu0 %v3884
    %v3952 = vpop.f32.mrb[0].mxu0
    %v3953 = vadd.f32 0.0, %v3952
    %v3954 = vpop.f32.mrb[0].mxu0
    %v3955 = vadd.f32 0.0, %v3954
    %3956 = vdwg.mxu0
    %v3957 = vadd.f32 %v3879, %v3953
    %v3958 = vadd.f32 %v3880, %v3955
    %s3959 = scalar_lea.vmem %s41, 8
    %v3960 = vld [vmem:[%s3959] sm:$0xf]
    %v3962 = vsel %vm3015, %v3960, 0
    %3964 = vmatprep.subr.mxu0 %v3747
    %3965 = vmatpush1.msra.mxu0 %v3745
    %3966 = vmatprep.subr.mxu0 0.0
    %3967 = vmatpush1.msra.mxu0 0.0
    %3968 = vmatprep.subr.mxu0 0.0
    %3969 = vmatpush1.msra.mxu0 0.0
    %3970 = vmatprep.subr.mxu0 0.0
    %3971 = vmatpush1.msra.mxu0 0.0
    %3972 = vmatprep.subr.mxu0 0.0
    %3973 = vmatpush1.msra.mxu0 0.0
    %3974 = vmatprep.subr.mxu0 0.0
    %3975 = vmatpush1.msra.mxu0 0.0
    %3976 = vmatprep.subr.mxu0 0.0
    %3977 = vmatpush1.msra.mxu0 0.0
    %3978 = vmatprep.subr.mxu0 0.0
    %3979 = vmatpush1.msra.mxu0 0.0
    %3980 = vmatprep.subr.mxu0 0.0
    %3981 = vmatpush1.msra.mxu0 0.0
    %3982 = vmatprep.subr.mxu0 0.0
    %3983 = vmatpush1.msra.mxu0 0.0
    %3984 = vmatprep.subr.mxu0 0.0
    %3985 = vmatpush1.msra.mxu0 0.0
    %3986 = vmatprep.subr.mxu0 0.0
    %3987 = vmatpush1.msra.mxu0 0.0
    %3988 = vmatprep.subr.mxu0 0.0
    %3989 = vmatpush1.msra.mxu0 0.0
    %3990 = vmatprep.subr.mxu0 0.0
    %3991 = vmatpush1.msra.mxu0 0.0
    %3992 = vmatprep.subr.mxu0 0.0
    %3993 = vmatpush1.msra.mxu0 0.0
    %3994 = vmatprep.subr.mxu0 0.0
    %3995 = vmatpush1.msra.mxu0 0.0
    %3996 = vmatprep.subr.mxu0 0.0
    %3997 = vmatpush1.msra.mxu0 0.0
    %3998 = vmatprep.subr.mxu0 0.0
    %3999 = vmatpush1.msra.mxu0 0.0
    %4000 = vmatprep.subr.mxu0 0.0
    %4001 = vmatpush1.msra.mxu0 0.0
    %4002 = vmatprep.subr.mxu0 0.0
    %4003 = vmatpush1.msra.mxu0 0.0
    %4004 = vmatprep.subr.mxu0 0.0
    %4005 = vmatpush1.msra.mxu0 0.0
    %4006 = vmatprep.subr.mxu0 0.0
    %4007 = vmatpush1.msra.mxu0 0.0
    %4008 = vmatprep.subr.mxu0 0.0
    %4009 = vmatpush1.msra.mxu0 0.0
    %4010 = vmatprep.subr.mxu0 0.0
    %4011 = vmatpush1.msra.mxu0 0.0
    %4012 = vmatprep.subr.mxu0 0.0
    %4013 = vmatpush1.msra.mxu0 0.0
    %4014 = vmatprep.subr.mxu0 0.0
    %4015 = vmatpush1.msra.mxu0 0.0
    %4016 = vmatprep.subr.mxu0 0.0
    %4017 = vmatpush1.msra.mxu0 0.0
    %4018 = vmatprep.subr.mxu0 0.0
    %4019 = vmatpush1.msra.mxu0 0.0
    %4020 = vmatprep.subr.mxu0 0.0
    %4021 = vmatpush1.msra.mxu0 0.0
    %4022 = vmatprep.subr.mxu0 0.0
    %4023 = vmatpush1.msra.mxu0 0.0
    %4024 = vmatprep.subr.mxu0 0.0
    %4025 = vmatpush1.msra.mxu0 0.0
    %4026 = vmatprep.subr.mxu0 0.0
    %4027 = vmatpush1.msra.mxu0 0.0
    %4028 = vmatprep.mubr.f32.mxu0 0.0
    %4029 = vmatmul.mubr.f32.gmra.mrb[0].mxu0 %v3962
    %v4030 = vpop.f32.mrb[0].mxu0
    %v4031 = vadd.f32 0.0, %v4030
    %v4032 = vpop.f32.mrb[0].mxu0
    %v4033 = vadd.f32 0.0, %v4032
    %4034 = vdwg.mxu0
    %v4035 = vadd.f32 %v3957, %v4031
    %v4036 = vadd.f32 %v3958, %v4033
    %v4037 = vmax.f32 %v4035, 0.0
    %v4038 = vmax.f32 %v4036, 0.0
    %v4039 = vld [vmem:[%s43] sm:$0x3]
    %s4040 = scalar_lea.vmem %s41, 12
    %v4041 = vld [vmem:[%s4040] sm:$0xf]
    %v4043 = vsel %vm3015, %v4041, 0
    %4045 = vmatprep.subr.mxu0 %v3788
    %4046 = vmatpush1.msra.mxu0 %v3786
    %4047 = vmatprep.subr.mxu0 0.0
    %4048 = vmatpush1.msra.mxu0 0.0
    %4049 = vmatprep.subr.mxu0 0.0
    %4050 = vmatpush1.msra.mxu0 0.0
    %4051 = vmatprep.subr.mxu0 0.0
    %4052 = vmatpush1.msra.mxu0 0.0
    %4053 = vmatprep.subr.mxu0 0.0
    %4054 = vmatpush1.msra.mxu0 0.0
    %4055 = vmatprep.subr.mxu0 0.0
    %4056 = vmatpush1.msra.mxu0 0.0
    %4057 = vmatprep.subr.mxu0 0.0
    %4058 = vmatpush1.msra.mxu0 0.0
    %4059 = vmatprep.subr.mxu0 0.0
    %4060 = vmatpush1.msra.mxu0 0.0
    %4061 = vmatprep.subr.mxu0 0.0
    %4062 = vmatpush1.msra.mxu0 0.0
    %4063 = vmatprep.subr.mxu0 0.0
    %4064 = vmatpush1.msra.mxu0 0.0
    %4065 = vmatprep.subr.mxu0 0.0
    %4066 = vmatpush1.msra.mxu0 0.0
    %4067 = vmatprep.subr.mxu0 0.0
    %4068 = vmatpush1.msra.mxu0 0.0
    %4069 = vmatprep.subr.mxu0 0.0
    %4070 = vmatpush1.msra.mxu0 0.0
    %4071 = vmatprep.subr.mxu0 0.0
    %4072 = vmatpush1.msra.mxu0 0.0
    %4073 = vmatprep.subr.mxu0 0.0
    %4074 = vmatpush1.msra.mxu0 0.0
    %4075 = vmatprep.subr.mxu0 0.0
    %4076 = vmatpush1.msra.mxu0 0.0
    %4077 = vmatprep.subr.mxu0 0.0
    %4078 = vmatpush1.msra.mxu0 0.0
    %4079 = vmatprep.subr.mxu0 0.0
    %4080 = vmatpush1.msra.mxu0 0.0
    %4081 = vmatprep.subr.mxu0 0.0
    %4082 = vmatpush1.msra.mxu0 0.0
    %4083 = vmatprep.subr.mxu0 0.0
    %4084 = vmatpush1.msra.mxu0 0.0
    %4085 = vmatprep.subr.mxu0 0.0
    %4086 = vmatpush1.msra.mxu0 0.0
    %4087 = vmatprep.subr.mxu0 0.0
    %4088 = vmatpush1.msra.mxu0 0.0
    %4089 = vmatprep.subr.mxu0 0.0
    %4090 = vmatpush1.msra.mxu0 0.0
    %4091 = vmatprep.subr.mxu0 0.0
    %4092 = vmatpush1.msra.mxu0 0.0
    %4093 = vmatprep.subr.mxu0 0.0
    %4094 = vmatpush1.msra.mxu0 0.0
    %4095 = vmatprep.subr.mxu0 0.0
    %4096 = vmatpush1.msra.mxu0 0.0
    %4097 = vmatprep.subr.mxu0 0.0
    %4098 = vmatpush1.msra.mxu0 0.0
    %4099 = vmatprep.subr.mxu0 0.0
    %4100 = vmatpush1.msra.mxu0 0.0
    %4101 = vmatprep.subr.mxu0 0.0
    %4102 = vmatpush1.msra.mxu0 0.0
    %4103 = vmatprep.subr.mxu0 0.0
    %4104 = vmatpush1.msra.mxu0 0.0
    %4105 = vmatprep.subr.mxu0 0.0
    %4106 = vmatpush1.msra.mxu0 0.0
    %4107 = vmatprep.subr.mxu0 0.0
    %4108 = vmatpush1.msra.mxu0 0.0
    %4109 = vmatprep.mubr.f32.mxu0 0.0
    %4110 = vmatmul.mubr.f32.gmra.mrb[0].mxu0 %v4043
    %v4111 = vpop.f32.mrb[0].mxu0
    %v4112 = vadd.f32 0.0, %v4111
    %v4113 = vpop.f32.mrb[0].mxu0
    %v4114 = vadd.f32 0.0, %v4113
    %4115 = vdwg.mxu0
    %v4117 = vlaneseq
    %v4118 = vshrl.u32 %v4117, 7
    %v4119 = vsub.s32 0, %v4118
    %v4120 = vrot.slane %v4039, %v4119
    %v4121 = vlaneseq
    %v4122 = vshrl.u32 %v4121, 7
    %v4123 = vsub.s32 1, %v4122
    %v4124 = vrot.slane %v4039, %v4123
    %v4127 = vadd.f32 %v4120, %v4112
    %v4128 = vadd.f32 %v4124, %v4114
    %v4129 = vpack.c.bf16 %v4037, %v4037
    %v4130 = vpack.c.bf16 %v4038, %v4038
    %v4131 = vld [vmem:[%s45] sm:$0xff]
    %v4132 = vld [vmem:[%s45 + $0x8] sm:$0xff]
    %v4133 = vld [vmem:[%s45 + $0x10] sm:$0xff]
    %v4134 = vld [vmem:[%s45 + $0x18] sm:$0xff]
    %v4135 = vld [vmem:[%s45 + $0x20] sm:$0xff]
    %v4136 = vld [vmem:[%s45 + $0x28] sm:$0xff]
    %v4137 = vld [vmem:[%s45 + $0x30] sm:$0xff]
    %v4138 = vld [vmem:[%s45 + $0x38] sm:$0xff]
    %v4139 = vld [vmem:[%s45 + $0x40] sm:$0xff]
    %v4140 = vld [vmem:[%s45 + $0x48] sm:$0xff]
    %v4141 = vld [vmem:[%s45 + $0x50] sm:$0xff]
    %v4142 = vld [vmem:[%s45 + $0x58] sm:$0xff]
    %v4143 = vld [vmem:[%s45 + $0x60] sm:$0xff]
    %v4144 = vld [vmem:[%s45 + $0x68] sm:$0xff]
    %v4145 = vld [vmem:[%s45 + $0x70] sm:$0xff]
    %v4146 = vld [vmem:[%s45 + $0x78] sm:$0xff]
    %v4147 = vld [vmem:[%s45 + $0x80] sm:$0xff]
    %v4148 = vld [vmem:[%s45 + $0x88] sm:$0xff]
    %v4149 = vld [vmem:[%s45 + $0x90] sm:$0xff]
    %v4150 = vld [vmem:[%s45 + $0x98] sm:$0xff]
    %v4151 = vld [vmem:[%s45 + $0xa0] sm:$0xff]
    %v4152 = vld [vmem:[%s45 + $0xa8] sm:$0xff]
    %v4153 = vld [vmem:[%s45 + $0xb0] sm:$0xff]
    %v4154 = vld [vmem:[%s45 + $0xb8] sm:$0xff]
    %v4155 = vld [vmem:[%s45 + $0xc0] sm:$0xff]
    %v4156 = vld [vmem:[%s45 + $0xc8] sm:$0xff]
    %v4157 = vld [vmem:[%s45 + $0xd0] sm:$0xff]
    %v4158 = vld [vmem:[%s45 + $0xd8] sm:$0xff]
    %v4159 = vld [vmem:[%s45 + $0xe0] sm:$0xff]
    %v4160 = vld [vmem:[%s45 + $0xe8] sm:$0xff]
    %v4161 = vld [vmem:[%s45 + $0xf0] sm:$0xff]
    %v4162 = vld [vmem:[%s45 + $0xf8] sm:$0xff]
    %v4163 = vld [vmem:[%s45 + $0x100] sm:$0xff]
    %v4164 = vld [vmem:[%s45 + $0x108] sm:$0xff]
    %v4165 = vld [vmem:[%s45 + $0x110] sm:$0xff]
    %v4166 = vld [vmem:[%s45 + $0x118] sm:$0xff]
    %v4167 = vld [vmem:[%s45 + $0x120] sm:$0xff]
    %v4168 = vld [vmem:[%s45 + $0x128] sm:$0xff]
    %v4169 = vld [vmem:[%s45 + $0x130] sm:$0xff]
    %v4170 = vld [vmem:[%s45 + $0x138] sm:$0xff]
    %v4171 = vld [vmem:[%s45 + $0x140] sm:$0xff]
    %v4172 = vld [vmem:[%s45 + $0x148] sm:$0xff]
    %v4173 = vld [vmem:[%s45 + $0x150] sm:$0xff]
    %v4174 = vld [vmem:[%s45 + $0x158] sm:$0xff]
    %v4175 = vld [vmem:[%s45 + $0x160] sm:$0xff]
    %v4176 = vld [vmem:[%s45 + $0x168] sm:$0xff]
    %v4177 = vld [vmem:[%s45 + $0x170] sm:$0xff]
    %v4178 = vld [vmem:[%s45 + $0x178] sm:$0xff]
    %v4179 = vld [vmem:[%s45 + $0x180] sm:$0xff]
    %v4180 = vld [vmem:[%s45 + $0x188] sm:$0xff]
    %v4181 = vld [vmem:[%s45 + $0x190] sm:$0xff]
    %v4182 = vld [vmem:[%s45 + $0x198] sm:$0xff]
    %v4183 = vld [vmem:[%s45 + $0x1a0] sm:$0xff]
    %v4184 = vld [vmem:[%s45 + $0x1a8] sm:$0xff]
    %v4185 = vld [vmem:[%s45 + $0x1b0] sm:$0xff]
    %v4186 = vld [vmem:[%s45 + $0x1b8] sm:$0xff]
    %v4187 = vld [vmem:[%s45 + $0x1c0] sm:$0xff]
    %v4188 = vld [vmem:[%s45 + $0x1c8] sm:$0xff]
    %v4189 = vld [vmem:[%s45 + $0x1d0] sm:$0xff]
    %v4190 = vld [vmem:[%s45 + $0x1d8] sm:$0xff]
    %v4191 = vld [vmem:[%s45 + $0x1e0] sm:$0xff]
    %v4192 = vld [vmem:[%s45 + $0x1e8] sm:$0xff]
    %v4193 = vld [vmem:[%s45 + $0x1f0] sm:$0xff]
    %v4194 = vld [vmem:[%s45 + $0x1f8] sm:$0xff]
    %v4195 = vld [vmem:[%s45 + $0x200] sm:$0xff]
    %v4196 = vld [vmem:[%s45 + $0x208] sm:$0xff]
    %v4197 = vld [vmem:[%s45 + $0x210] sm:$0xff]
    %v4198 = vld [vmem:[%s45 + $0x218] sm:$0xff]
    %v4199 = vld [vmem:[%s45 + $0x220] sm:$0xff]
    %v4200 = vld [vmem:[%s45 + $0x228] sm:$0xff]
    %v4201 = vld [vmem:[%s45 + $0x230] sm:$0xff]
    %v4202 = vld [vmem:[%s45 + $0x238] sm:$0xff]
    %v4203 = vld [vmem:[%s45 + $0x240] sm:$0xff]
    %v4204 = vld [vmem:[%s45 + $0x248] sm:$0xff]
    %v4205 = vld [vmem:[%s45 + $0x250] sm:$0xff]
    %v4206 = vld [vmem:[%s45 + $0x258] sm:$0xff]
    %v4207 = vld [vmem:[%s45 + $0x260] sm:$0xff]
    %v4208 = vld [vmem:[%s45 + $0x268] sm:$0xff]
    %v4209 = vld [vmem:[%s45 + $0x270] sm:$0xff]
    %v4210 = vld [vmem:[%s45 + $0x278] sm:$0xff]
    %v4211 = vld [vmem:[%s45 + $0x280] sm:$0xff]
    %v4212 = vld [vmem:[%s45 + $0x288] sm:$0xff]
    %v4213 = vld [vmem:[%s45 + $0x290] sm:$0xff]
    %v4214 = vld [vmem:[%s45 + $0x298] sm:$0xff]
    %v4215 = vld [vmem:[%s45 + $0x2a0] sm:$0xff]
    %v4216 = vld [vmem:[%s45 + $0x2a8] sm:$0xff]
    %v4217 = vld [vmem:[%s45 + $0x2b0] sm:$0xff]
    %v4218 = vld [vmem:[%s45 + $0x2b8] sm:$0xff]
    %v4219 = vld [vmem:[%s45 + $0x2c0] sm:$0xff]
    %v4220 = vld [vmem:[%s45 + $0x2c8] sm:$0xff]
    %v4221 = vld [vmem:[%s45 + $0x2d0] sm:$0xff]
    %v4222 = vld [vmem:[%s45 + $0x2d8] sm:$0xff]
    %v4223 = vld [vmem:[%s45 + $0x2e0] sm:$0xff]
    %v4224 = vld [vmem:[%s45 + $0x2e8] sm:$0xff]
    %v4225 = vld [vmem:[%s45 + $0x2f0] sm:$0xff]
    %v4226 = vld [vmem:[%s45 + $0x2f8] sm:$0xff]
    %v4323 = vunpack.c.l.b16 %v4131
    %v4324 = vunpack.c.h.b16 %v4131
    %v4325 = vunpack.c.l.b16 %v4132
    %v4326 = vunpack.c.h.b16 %v4132
    %v4327 = vunpack.c.l.b16 %v4133
    %v4328 = vunpack.c.h.b16 %v4133
    %v4329 = vunpack.c.l.b16 %v4134
    %v4330 = vunpack.c.h.b16 %v4134
    %v4331 = vunpack.c.l.b16 %v4135
    %v4332 = vunpack.c.h.b16 %v4135
    %v4333 = vunpack.c.l.b16 %v4136
    %v4334 = vunpack.c.h.b16 %v4136
    %v4335 = vunpack.c.l.b16 %v4137
    %v4336 = vunpack.c.h.b16 %v4137
    %v4337 = vunpack.c.l.b16 %v4138
    %v4338 = vunpack.c.h.b16 %v4138
    %v4339 = vunpack.c.l.b16 %v4139
    %v4340 = vunpack.c.h.b16 %v4139
    %v4341 = vunpack.c.l.b16 %v4140
    %v4342 = vunpack.c.h.b16 %v4140
    %v4343 = vunpack.c.l.b16 %v4141
    %v4344 = vunpack.c.h.b16 %v4141
    %v4345 = vunpack.c.l.b16 %v4142
    %v4346 = vunpack.c.h.b16 %v4142
    %v4347 = vunpack.c.l.b16 %v4143
    %v4348 = vunpack.c.h.b16 %v4143
    %v4349 = vunpack.c.l.b16 %v4144
    %v4350 = vunpack.c.h.b16 %v4144
    %v4351 = vunpack.c.l.b16 %v4145
    %v4352 = vunpack.c.h.b16 %v4145
    %v4353 = vunpack.c.l.b16 %v4146
    %v4354 = vunpack.c.h.b16 %v4146
    %v4355 = vunpack.c.l.b16 %v4147
    %v4356 = vunpack.c.h.b16 %v4147
    %v4357 = vunpack.c.l.b16 %v4148
    %v4358 = vunpack.c.h.b16 %v4148
    %v4359 = vunpack.c.l.b16 %v4149
    %v4360 = vunpack.c.h.b16 %v4149
    %v4361 = vunpack.c.l.b16 %v4150
    %v4362 = vunpack.c.h.b16 %v4150
    %v4363 = vunpack.c.l.b16 %v4151
    %v4364 = vunpack.c.h.b16 %v4151
    %v4365 = vunpack.c.l.b16 %v4152
    %v4366 = vunpack.c.h.b16 %v4152
    %v4367 = vunpack.c.l.b16 %v4153
    %v4368 = vunpack.c.h.b16 %v4153
    %v4369 = vunpack.c.l.b16 %v4154
    %v4370 = vunpack.c.h.b16 %v4154
    %v4371 = vunpack.c.l.b16 %v4155
    %v4372 = vunpack.c.h.b16 %v4155
    %v4373 = vunpack.c.l.b16 %v4156
    %v4374 = vunpack.c.h.b16 %v4156
    %v4375 = vunpack.c.l.b16 %v4157
    %v4376 = vunpack.c.h.b16 %v4157
    %v4377 = vunpack.c.l.b16 %v4158
    %v4378 = vunpack.c.h.b16 %v4158
    %v4379 = vunpack.c.l.b16 %v4159
    %v4380 = vunpack.c.h.b16 %v4159
    %v4381 = vunpack.c.l.b16 %v4160
    %v4382 = vunpack.c.h.b16 %v4160
    %v4383 = vunpack.c.l.b16 %v4161
    %v4384 = vunpack.c.h.b16 %v4161
    %v4385 = vunpack.c.l.b16 %v4162
    %v4386 = vunpack.c.h.b16 %v4162
    %v4387 = vunpack.c.l.b16 %v4163
    %v4388 = vunpack.c.h.b16 %v4163
    %v4389 = vunpack.c.l.b16 %v4164
    %v4390 = vunpack.c.h.b16 %v4164
    %v4391 = vunpack.c.l.b16 %v4165
    %v4392 = vunpack.c.h.b16 %v4165
    %v4393 = vunpack.c.l.b16 %v4166
    %v4394 = vunpack.c.h.b16 %v4166
    %v4395 = vunpack.c.l.b16 %v4167
    %v4396 = vunpack.c.h.b16 %v4167
    %v4397 = vunpack.c.l.b16 %v4168
    %v4398 = vunpack.c.h.b16 %v4168
    %v4399 = vunpack.c.l.b16 %v4169
    %v4400 = vunpack.c.h.b16 %v4169
    %v4401 = vunpack.c.l.b16 %v4170
    %v4402 = vunpack.c.h.b16 %v4170
    %v4403 = vunpack.c.l.b16 %v4171
    %v4404 = vunpack.c.h.b16 %v4171
    %v4405 = vunpack.c.l.b16 %v4172
    %v4406 = vunpack.c.h.b16 %v4172
    %v4407 = vunpack.c.l.b16 %v4173
    %v4408 = vunpack.c.h.b16 %v4173
    %v4409 = vunpack.c.l.b16 %v4174
    %v4410 = vunpack.c.h.b16 %v4174
    %v4411 = vunpack.c.l.b16 %v4175
    %v4412 = vunpack.c.h.b16 %v4175
    %v4413 = vunpack.c.l.b16 %v4176
    %v4414 = vunpack.c.h.b16 %v4176
    %v4415 = vunpack.c.l.b16 %v4177
    %v4416 = vunpack.c.h.b16 %v4177
    %v4417 = vunpack.c.l.b16 %v4178
    %v4418 = vunpack.c.h.b16 %v4178
    %v4419 = vunpack.c.l.b16 %v4179
    %v4420 = vunpack.c.h.b16 %v4179
    %v4421 = vunpack.c.l.b16 %v4180
    %v4422 = vunpack.c.h.b16 %v4180
    %v4423 = vunpack.c.l.b16 %v4181
    %v4424 = vunpack.c.h.b16 %v4181
    %v4425 = vunpack.c.l.b16 %v4182
    %v4426 = vunpack.c.h.b16 %v4182
    %v4427 = vunpack.c.l.b16 %v4183
    %v4428 = vunpack.c.h.b16 %v4183
    %v4429 = vunpack.c.l.b16 %v4184
    %v4430 = vunpack.c.h.b16 %v4184
    %v4431 = vunpack.c.l.b16 %v4185
    %v4432 = vunpack.c.h.b16 %v4185
    %v4433 = vunpack.c.l.b16 %v4186
    %v4434 = vunpack.c.h.b16 %v4186
    %v4435 = vunpack.c.l.b16 %v4187
    %v4436 = vunpack.c.h.b16 %v4187
    %v4437 = vunpack.c.l.b16 %v4188
    %v4438 = vunpack.c.h.b16 %v4188
    %v4439 = vunpack.c.l.b16 %v4189
    %v4440 = vunpack.c.h.b16 %v4189
    %v4441 = vunpack.c.l.b16 %v4190
    %v4442 = vunpack.c.h.b16 %v4190
    %v4443 = vunpack.c.l.b16 %v4191
    %v4444 = vunpack.c.h.b16 %v4191
    %v4445 = vunpack.c.l.b16 %v4192
    %v4446 = vunpack.c.h.b16 %v4192
    %v4447 = vunpack.c.l.b16 %v4193
    %v4448 = vunpack.c.h.b16 %v4193
    %v4449 = vunpack.c.l.b16 %v4194
    %v4450 = vunpack.c.h.b16 %v4194
    %v4451 = vunpack.c.l.b16 %v4195
    %v4452 = vunpack.c.h.b16 %v4195
    %v4453 = vunpack.c.l.b16 %v4196
    %v4454 = vunpack.c.h.b16 %v4196
    %v4455 = vunpack.c.l.b16 %v4197
    %v4456 = vunpack.c.h.b16 %v4197
    %v4457 = vunpack.c.l.b16 %v4198
    %v4458 = vunpack.c.h.b16 %v4198
    %v4459 = vunpack.c.l.b16 %v4199
    %v4460 = vunpack.c.h.b16 %v4199
    %v4461 = vunpack.c.l.b16 %v4200
    %v4462 = vunpack.c.h.b16 %v4200
    %v4463 = vunpack.c.l.b16 %v4201
    %v4464 = vunpack.c.h.b16 %v4201
    %v4465 = vunpack.c.l.b16 %v4202
    %v4466 = vunpack.c.h.b16 %v4202
    %v4467 = vunpack.c.l.b16 %v4203
    %v4468 = vunpack.c.h.b16 %v4203
    %v4469 = vunpack.c.l.b16 %v4204
    %v4470 = vunpack.c.h.b16 %v4204
    %v4471 = vunpack.c.l.b16 %v4205
    %v4472 = vunpack.c.h.b16 %v4205
    %v4473 = vunpack.c.l.b16 %v4206
    %v4474 = vunpack.c.h.b16 %v4206
    %v4475 = vunpack.c.l.b16 %v4207
    %v4476 = vunpack.c.h.b16 %v4207
    %v4477 = vunpack.c.l.b16 %v4208
    %v4478 = vunpack.c.h.b16 %v4208
    %v4479 = vunpack.c.l.b16 %v4209
    %v4480 = vunpack.c.h.b16 %v4209
    %v4481 = vunpack.c.l.b16 %v4210
    %v4482 = vunpack.c.h.b16 %v4210
    %v4483 = vunpack.c.l.b16 %v4211
    %v4484 = vunpack.c.h.b16 %v4211
    %v4485 = vunpack.c.l.b16 %v4212
    %v4486 = vunpack.c.h.b16 %v4212
    %v4487 = vunpack.c.l.b16 %v4213
    %v4488 = vunpack.c.h.b16 %v4213
    %v4489 = vunpack.c.l.b16 %v4214
    %v4490 = vunpack.c.h.b16 %v4214
    %v4491 = vunpack.c.l.b16 %v4215
    %v4492 = vunpack.c.h.b16 %v4215
    %v4493 = vunpack.c.l.b16 %v4216
    %v4494 = vunpack.c.h.b16 %v4216
    %v4495 = vunpack.c.l.b16 %v4217
    %v4496 = vunpack.c.h.b16 %v4217
    %v4497 = vunpack.c.l.b16 %v4218
    %v4498 = vunpack.c.h.b16 %v4218
    %v4499 = vunpack.c.l.b16 %v4219
    %v4500 = vunpack.c.h.b16 %v4219
    %v4501 = vunpack.c.l.b16 %v4220
    %v4502 = vunpack.c.h.b16 %v4220
    %v4503 = vunpack.c.l.b16 %v4221
    %v4504 = vunpack.c.h.b16 %v4221
    %v4505 = vunpack.c.l.b16 %v4222
    %v4506 = vunpack.c.h.b16 %v4222
    %v4507 = vunpack.c.l.b16 %v4223
    %v4508 = vunpack.c.h.b16 %v4223
    %v4509 = vunpack.c.l.b16 %v4224
    %v4510 = vunpack.c.h.b16 %v4224
    %v4511 = vunpack.c.l.b16 %v4225
    %v4512 = vunpack.c.h.b16 %v4225
    %v4513 = vunpack.c.l.b16 %v4226
    %v4514 = vunpack.c.h.b16 %v4226
    %v4515 = vpack.c.b16 %v4329, %v4323
    %v4516 = vpack.c.b16 %v4330, %v4324
    %v4517 = vpack.c.b16 %v4331, %v4325
    %v4518 = vpack.c.b16 %v4332, %v4326
    %v4519 = vpack.c.b16 %v4333, %v4327
    %v4520 = vpack.c.b16 %v4334, %v4328
    %v4521 = vpack.c.b16 %v4341, %v4335
    %v4522 = vpack.c.b16 %v4342, %v4336
    %v4523 = vpack.c.b16 %v4343, %v4337
    %v4524 = vpack.c.b16 %v4344, %v4338
    %v4525 = vpack.c.b16 %v4345, %v4339
    %v4526 = vpack.c.b16 %v4346, %v4340
    %v4527 = vpack.c.b16 %v4353, %v4347
    %v4528 = vpack.c.b16 %v4354, %v4348
    %v4529 = vpack.c.b16 %v4355, %v4349
    %v4530 = vpack.c.b16 %v4356, %v4350
    %v4531 = vpack.c.b16 %v4357, %v4351
    %v4532 = vpack.c.b16 %v4358, %v4352
    %v4533 = vpack.c.b16 %v4365, %v4359
    %v4534 = vpack.c.b16 %v4366, %v4360
    %v4535 = vpack.c.b16 %v4367, %v4361
    %v4536 = vpack.c.b16 %v4368, %v4362
    %v4537 = vpack.c.b16 %v4369, %v4363
    %v4538 = vpack.c.b16 %v4370, %v4364
    %v4539 = vpack.c.b16 %v4377, %v4371
    %v4540 = vpack.c.b16 %v4378, %v4372
    %v4541 = vpack.c.b16 %v4379, %v4373
    %v4542 = vpack.c.b16 %v4380, %v4374
    %v4543 = vpack.c.b16 %v4381, %v4375
    %v4544 = vpack.c.b16 %v4382, %v4376
    %v4545 = vpack.c.b16 %v4389, %v4383
    %v4546 = vpack.c.b16 %v4390, %v4384
    %v4547 = vpack.c.b16 %v4391, %v4385
    %v4548 = vpack.c.b16 %v4392, %v4386
    %v4549 = vpack.c.b16 %v4393, %v4387
    %v4550 = vpack.c.b16 %v4394, %v4388
    %v4551 = vpack.c.b16 %v4401, %v4395
    %v4552 = vpack.c.b16 %v4402, %v4396
    %v4553 = vpack.c.b16 %v4403, %v4397
    %v4554 = vpack.c.b16 %v4404, %v4398
    %v4555 = vpack.c.b16 %v4405, %v4399
    %v4556 = vpack.c.b16 %v4406, %v4400
    %v4557 = vpack.c.b16 %v4413, %v4407
    %v4558 = vpack.c.b16 %v4414, %v4408
    %v4559 = vpack.c.b16 %v4415, %v4409
    %v4560 = vpack.c.b16 %v4416, %v4410
    %v4561 = vpack.c.b16 %v4417, %v4411
    %v4562 = vpack.c.b16 %v4418, %v4412
    %v4563 = vpack.c.b16 %v4425, %v4419
    %v4564 = vpack.c.b16 %v4426, %v4420
    %v4565 = vpack.c.b16 %v4427, %v4421
    %v4566 = vpack.c.b16 %v4428, %v4422
    %v4567 = vpack.c.b16 %v4429, %v4423
    %v4568 = vpack.c.b16 %v4430, %v4424
    %v4569 = vpack.c.b16 %v4437, %v4431
    %v4570 = vpack.c.b16 %v4438, %v4432
    %v4571 = vpack.c.b16 %v4439, %v4433
    %v4572 = vpack.c.b16 %v4440, %v4434
    %v4573 = vpack.c.b16 %v4441, %v4435
    %v4574 = vpack.c.b16 %v4442, %v4436
    %v4575 = vpack.c.b16 %v4449, %v4443
    %v4576 = vpack.c.b16 %v4450, %v4444
    %v4577 = vpack.c.b16 %v4451, %v4445
    %v4578 = vpack.c.b16 %v4452, %v4446
    %v4579 = vpack.c.b16 %v4453, %v4447
    %v4580 = vpack.c.b16 %v4454, %v4448
    %v4581 = vpack.c.b16 %v4461, %v4455
    %v4582 = vpack.c.b16 %v4462, %v4456
    %v4583 = vpack.c.b16 %v4463, %v4457
    %v4584 = vpack.c.b16 %v4464, %v4458
    %v4585 = vpack.c.b16 %v4465, %v4459
    %v4586 = vpack.c.b16 %v4466, %v4460
    %v4587 = vpack.c.b16 %v4473, %v4467
    %v4588 = vpack.c.b16 %v4474, %v4468
    %v4589 = vpack.c.b16 %v4475, %v4469
    %v4590 = vpack.c.b16 %v4476, %v4470
    %v4591 = vpack.c.b16 %v4477, %v4471
    %v4592 = vpack.c.b16 %v4478, %v4472
    %v4593 = vpack.c.b16 %v4485, %v4479
    %v4594 = vpack.c.b16 %v4486, %v4480
    %v4595 = vpack.c.b16 %v4487, %v4481
    %v4596 = vpack.c.b16 %v4488, %v4482
    %v4597 = vpack.c.b16 %v4489, %v4483
    %v4598 = vpack.c.b16 %v4490, %v4484
    %v4599 = vpack.c.b16 %v4497, %v4491
    %v4600 = vpack.c.b16 %v4498, %v4492
    %v4601 = vpack.c.b16 %v4499, %v4493
    %v4602 = vpack.c.b16 %v4500, %v4494
    %v4603 = vpack.c.b16 %v4501, %v4495
    %v4604 = vpack.c.b16 %v4502, %v4496
    %v4605 = vpack.c.b16 %v4509, %v4503
    %v4606 = vpack.c.b16 %v4510, %v4504
    %v4607 = vpack.c.b16 %v4511, %v4505
    %v4608 = vpack.c.b16 %v4512, %v4506
    %v4609 = vpack.c.b16 %v4513, %v4507
    %v4610 = vpack.c.b16 %v4514, %v4508
    %4707 = vmatprep.subr.bf16.mxu0 %v4516
    %4708 = vmatpush1.bf16.msra.mxu0 %v4515
    %4709 = vmatprep.subr.bf16.mxu0 %v4522
    %4710 = vmatpush1.bf16.msra.mxu0 %v4521
    %4711 = vmatprep.subr.bf16.mxu0 %v4528
    %4712 = vmatpush1.bf16.msra.mxu0 %v4527
    %4713 = vmatprep.subr.bf16.mxu0 %v4534
    %4714 = vmatpush1.bf16.msra.mxu0 %v4533
    %4715 = vmatprep.subr.bf16.mxu0 %v4540
    %4716 = vmatpush1.bf16.msra.mxu0 %v4539
    %4717 = vmatprep.subr.bf16.mxu0 %v4546
    %4718 = vmatpush1.bf16.msra.mxu0 %v4545
    %4719 = vmatprep.subr.bf16.mxu0 %v4552
    %4720 = vmatpush1.bf16.msra.mxu0 %v4551
    %4721 = vmatprep.subr.bf16.mxu0 %v4558
    %4722 = vmatpush1.bf16.msra.mxu0 %v4557
    %4723 = vmatprep.subr.bf16.mxu0 %v4564
    %4724 = vmatpush1.bf16.msra.mxu0 %v4563
    %4725 = vmatprep.subr.bf16.mxu0 %v4570
    %4726 = vmatpush1.bf16.msra.mxu0 %v4569
    %4727 = vmatprep.subr.bf16.mxu0 %v4576
    %4728 = vmatpush1.bf16.msra.mxu0 %v4575
    %4729 = vmatprep.subr.bf16.mxu0 %v4582
    %4730 = vmatpush1.bf16.msra.mxu0 %v4581
    %4731 = vmatprep.subr.bf16.mxu0 %v4588
    %4732 = vmatpush1.bf16.msra.mxu0 %v4587
    %4733 = vmatprep.subr.bf16.mxu0 %v4594
    %4734 = vmatpush1.bf16.msra.mxu0 %v4593
    %4735 = vmatprep.subr.bf16.mxu0 %v4600
    %4736 = vmatpush1.bf16.msra.mxu0 %v4599
    %4737 = vmatprep.subr.bf16.mxu0 %v4606
    %4738 = vmatpush1.bf16.msra.mxu0 %v4605
    %4739 = vmatprep.mubr.bf16.mxu0 %v4130
    %4740 = vmatmul.mubr.bf16.gmra.mrb[0].mxu0 %v4129
    %v4741 = vpop.f32.mrb[0].mxu0
    %v4742 = vadd.f32 0.0, %v4741
    %v4743 = vpop.f32.mrb[0].mxu0
    %v4744 = vadd.f32 0.0, %v4743
    %v4745 = vpop.f32.mrb[0].mxu0
    %v4746 = vpop.f32.mrb[0].mxu0
    %4747 = vdwg.mxu0
    %4748 = vmatprep.subr.bf16.mxu0 %v4518
    %4749 = vmatpush1.bf16.msra.mxu0 %v4517
    %4750 = vmatprep.subr.bf16.mxu0 %v4524
    %4751 = vmatpush1.bf16.msra.mxu0 %v4523
    %4752 = vmatprep.subr.bf16.mxu0 %v4530
    %4753 = vmatpush1.bf16.msra.mxu0 %v4529
    %4754 = vmatprep.subr.bf16.mxu0 %v4536
    %4755 = vmatpush1.bf16.msra.mxu0 %v4535
    %4756 = vmatprep.subr.bf16.mxu0 %v4542
    %4757 = vmatpush1.bf16.msra.mxu0 %v4541
    %4758 = vmatprep.subr.bf16.mxu0 %v4548
    %4759 = vmatpush1.bf16.msra.mxu0 %v4547
    %4760 = vmatprep.subr.bf16.mxu0 %v4554
    %4761 = vmatpush1.bf16.msra.mxu0 %v4553
    %4762 = vmatprep.subr.bf16.mxu0 %v4560
    %4763 = vmatpush1.bf16.msra.mxu0 %v4559
    %4764 = vmatprep.subr.bf16.mxu0 %v4566
    %4765 = vmatpush1.bf16.msra.mxu0 %v4565
    %4766 = vmatprep.subr.bf16.mxu0 %v4572
    %4767 = vmatpush1.bf16.msra.mxu0 %v4571
    %4768 = vmatprep.subr.bf16.mxu0 %v4578
    %4769 = vmatpush1.bf16.msra.mxu0 %v4577
    %4770 = vmatprep.subr.bf16.mxu0 %v4584
    %4771 = vmatpush1.bf16.msra.mxu0 %v4583
    %4772 = vmatprep.subr.bf16.mxu0 %v4590
    %4773 = vmatpush1.bf16.msra.mxu0 %v4589
    %4774 = vmatprep.subr.bf16.mxu0 %v4596
    %4775 = vmatpush1.bf16.msra.mxu0 %v4595
    %4776 = vmatprep.subr.bf16.mxu0 %v4602
    %4777 = vmatpush1.bf16.msra.mxu0 %v4601
    %4778 = vmatprep.subr.bf16.mxu0 %v4608
    %4779 = vmatpush1.bf16.msra.mxu0 %v4607
    %4780 = vmatprep.mubr.bf16.mxu0 %v4130
    %4781 = vmatmul.mubr.bf16.gmra.mrb[0].mxu0 %v4129
    %v4782 = vpop.f32.mrb[0].mxu0
    %v4783 = vadd.f32 0.0, %v4782
    %v4784 = vpop.f32.mrb[0].mxu0
    %v4785 = vadd.f32 0.0, %v4784
    %v4786 = vpop.f32.mrb[0].mxu0
    %v4787 = vpop.f32.mrb[0].mxu0
    %4788 = vdwg.mxu0
    %4789 = vmatprep.subr.bf16.mxu0 %v4520
    %4790 = vmatpush1.bf16.msra.mxu0 %v4519
    %4791 = vmatprep.subr.bf16.mxu0 %v4526
    %4792 = vmatpush1.bf16.msra.mxu0 %v4525
    %4793 = vmatprep.subr.bf16.mxu0 %v4532
    %4794 = vmatpush1.bf16.msra.mxu0 %v4531
    %4795 = vmatprep.subr.bf16.mxu0 %v4538
    %4796 = vmatpush1.bf16.msra.mxu0 %v4537
    %4797 = vmatprep.subr.bf16.mxu0 %v4544
    %4798 = vmatpush1.bf16.msra.mxu0 %v4543
    %4799 = vmatprep.subr.bf16.mxu0 %v4550
    %4800 = vmatpush1.bf16.msra.mxu0 %v4549
    %4801 = vmatprep.subr.bf16.mxu0 %v4556
    %4802 = vmatpush1.bf16.msra.mxu0 %v4555
    %4803 = vmatprep.subr.bf16.mxu0 %v4562
    %4804 = vmatpush1.bf16.msra.mxu0 %v4561
    %4805 = vmatprep.subr.bf16.mxu0 %v4568
    %4806 = vmatpush1.bf16.msra.mxu0 %v4567
    %4807 = vmatprep.subr.bf16.mxu0 %v4574
    %4808 = vmatpush1.bf16.msra.mxu0 %v4573
    %4809 = vmatprep.subr.bf16.mxu0 %v4580
    %4810 = vmatpush1.bf16.msra.mxu0 %v4579
    %4811 = vmatprep.subr.bf16.mxu0 %v4586
    %4812 = vmatpush1.bf16.msra.mxu0 %v4585
    %4813 = vmatprep.subr.bf16.mxu0 %v4592
    %4814 = vmatpush1.bf16.msra.mxu0 %v4591
    %4815 = vmatprep.subr.bf16.mxu0 %v4598
    %4816 = vmatpush1.bf16.msra.mxu0 %v4597
    %4817 = vmatprep.subr.bf16.mxu0 %v4604
    %4818 = vmatpush1.bf16.msra.mxu0 %v4603
    %4819 = vmatprep.subr.bf16.mxu0 %v4610
    %4820 = vmatpush1.bf16.msra.mxu0 %v4609
    %4821 = vmatprep.mubr.bf16.mxu0 %v4130
    %4822 = vmatmul.mubr.bf16.gmra.mrb[0].mxu0 %v4129
    %v4823 = vpop.f32.mrb[0].mxu0
    %v4824 = vadd.f32 0.0, %v4823
    %v4825 = vpop.f32.mrb[0].mxu0
    %v4826 = vadd.f32 0.0, %v4825
    %v4827 = vpop.f32.mrb[0].mxu0
    %v4828 = vpop.f32.mrb[0].mxu0
    %4829 = vdwg.mxu0
    %v4830 = vld [vmem:[%s47] sm:$0x3]
    %v4832 = vlaneseq
    %v4833 = vshrl.u32 %v4832, 7
    %v4834 = vsub.s32 0, %v4833
    %v4835 = vrot.slane %v4830, %v4834
    %v4836 = vlaneseq
    %v4837 = vshrl.u32 %v4836, 7
    %v4838 = vsub.s32 1, %v4837
    %v4839 = vrot.slane %v4830, %v4838
    %v4842 = vadd.f32 %v4835, %v4127
    %v4843 = vadd.f32 %v4839, %v4128
    %v4844 = vld [vmem:[%s49] sm:$0xf]
    %vm4845 = vcmask 31744
    %v4847 = vsel %vm4845, %v4844, 0
    %vm4849 = vcmask 1043456
    %v4851 = vsel %vm4849, %v4742, 0
    %v4854 = vsel %vm4849, %v4744, 0
    %4856 = vmatprep.subr.mxu0 %v4854
    %4857 = vmatpush1.msra.mxu0 %v4851
    %4858 = vmatprep.subr.mxu0 0.0
    %4859 = vmatpush1.msra.mxu0 0.0
    %4860 = vmatprep.subr.mxu0 0.0
    %4861 = vmatpush1.msra.mxu0 0.0
    %4862 = vmatprep.subr.mxu0 0.0
    %4863 = vmatpush1.msra.mxu0 0.0
    %4864 = vmatprep.subr.mxu0 0.0
    %4865 = vmatpush1.msra.mxu0 0.0
    %4866 = vmatprep.subr.mxu0 0.0
    %4867 = vmatpush1.msra.mxu0 0.0
    %4868 = vmatprep.subr.mxu0 0.0
    %4869 = vmatpush1.msra.mxu0 0.0
    %4870 = vmatprep.subr.mxu0 0.0
    %4871 = vmatpush1.msra.mxu0 0.0
    %4872 = vmatprep.subr.mxu0 0.0
    %4873 = vmatpush1.msra.mxu0 0.0
    %4874 = vmatprep.subr.mxu0 0.0
    %4875 = vmatpush1.msra.mxu0 0.0
    %4876 = vmatprep.subr.mxu0 0.0
    %4877 = vmatpush1.msra.mxu0 0.0
    %4878 = vmatprep.subr.mxu0 0.0
    %4879 = vmatpush1.msra.mxu0 0.0
    %4880 = vmatprep.subr.mxu0 0.0
    %4881 = vmatpush1.msra.mxu0 0.0
    %4882 = vmatprep.subr.mxu0 0.0
    %4883 = vmatpush1.msra.mxu0 0.0
    %4884 = vmatprep.subr.mxu0 0.0
    %4885 = vmatpush1.msra.mxu0 0.0
    %4886 = vmatprep.subr.mxu0 0.0
    %4887 = vmatpush1.msra.mxu0 0.0
    %4888 = vmatprep.subr.mxu0 0.0
    %4889 = vmatpush1.msra.mxu0 0.0
    %4890 = vmatprep.subr.mxu0 0.0
    %4891 = vmatpush1.msra.mxu0 0.0
    %4892 = vmatprep.subr.mxu0 0.0
    %4893 = vmatpush1.msra.mxu0 0.0
    %4894 = vmatprep.subr.mxu0 0.0
    %4895 = vmatpush1.msra.mxu0 0.0
    %4896 = vmatprep.subr.mxu0 0.0
    %4897 = vmatpush1.msra.mxu0 0.0
    %4898 = vmatprep.subr.mxu0 0.0
    %4899 = vmatpush1.msra.mxu0 0.0
    %4900 = vmatprep.subr.mxu0 0.0
    %4901 = vmatpush1.msra.mxu0 0.0
    %4902 = vmatprep.subr.mxu0 0.0
    %4903 = vmatpush1.msra.mxu0 0.0
    %4904 = vmatprep.subr.mxu0 0.0
    %4905 = vmatpush1.msra.mxu0 0.0
    %4906 = vmatprep.subr.mxu0 0.0
    %4907 = vmatpush1.msra.mxu0 0.0
    %4908 = vmatprep.subr.mxu0 0.0
    %4909 = vmatpush1.msra.mxu0 0.0
    %4910 = vmatprep.subr.mxu0 0.0
    %4911 = vmatpush1.msra.mxu0 0.0
    %4912 = vmatprep.subr.mxu0 0.0
    %4913 = vmatpush1.msra.mxu0 0.0
    %4914 = vmatprep.subr.mxu0 0.0
    %4915 = vmatpush1.msra.mxu0 0.0
    %4916 = vmatprep.subr.mxu0 0.0
    %4917 = vmatpush1.msra.mxu0 0.0
    %4918 = vmatprep.subr.mxu0 0.0
    %4919 = vmatpush1.msra.mxu0 0.0
    %4920 = vmatprep.mubr.f32.mxu0 0.0
    %4921 = vmatmul.mubr.f32.gmra.mrb[0].mxu0 %v4847
    %v4922 = vpop.f32.mrb[0].mxu0
    %v4923 = vadd.f32 0.0, %v4922
    %v4924 = vpop.f32.mrb[0].mxu0
    %v4925 = vadd.f32 0.0, %v4924
    %4926 = vdwg.mxu0
    %v4927 = vadd.f32 %v4842, %v4923
    %v4928 = vadd.f32 %v4843, %v4925
    %s4929 = scalar_lea.vmem %s49, 4
    %v4930 = vld [vmem:[%s4929] sm:$0xf]
    %v4932 = vsel %vm4845, %v4930, 0
    %v4935 = vsel %vm4849, %v4783, 0
    %v4938 = vsel %vm4849, %v4785, 0
    %4940 = vmatprep.subr.mxu0 %v4938
    %4941 = vmatpush1.msra.mxu0 %v4935
    %4942 = vmatprep.subr.mxu0 0.0
    %4943 = vmatpush1.msra.mxu0 0.0
    %4944 = vmatprep.subr.mxu0 0.0
    %4945 = vmatpush1.msra.mxu0 0.0
    %4946 = vmatprep.subr.mxu0 0.0
    %4947 = vmatpush1.msra.mxu0 0.0
    %4948 = vmatprep.subr.mxu0 0.0
    %4949 = vmatpush1.msra.mxu0 0.0
    %4950 = vmatprep.subr.mxu0 0.0
    %4951 = vmatpush1.msra.mxu0 0.0
    %4952 = vmatprep.subr.mxu0 0.0
    %4953 = vmatpush1.msra.mxu0 0.0
    %4954 = vmatprep.subr.mxu0 0.0
    %4955 = vmatpush1.msra.mxu0 0.0
    %4956 = vmatprep.subr.mxu0 0.0
    %4957 = vmatpush1.msra.mxu0 0.0
    %4958 = vmatprep.subr.mxu0 0.0
    %4959 = vmatpush1.msra.mxu0 0.0
    %4960 = vmatprep.subr.mxu0 0.0
    %4961 = vmatpush1.msra.mxu0 0.0
    %4962 = vmatprep.subr.mxu0 0.0
    %4963 = vmatpush1.msra.mxu0 0.0
    %4964 = vmatprep.subr.mxu0 0.0
    %4965 = vmatpush1.msra.mxu0 0.0
    %4966 = vmatprep.subr.mxu0 0.0
    %4967 = vmatpush1.msra.mxu0 0.0
    %4968 = vmatprep.subr.mxu0 0.0
    %4969 = vmatpush1.msra.mxu0 0.0
    %4970 = vmatprep.subr.mxu0 0.0
    %4971 = vmatpush1.msra.mxu0 0.0
    %4972 = vmatprep.subr.mxu0 0.0
    %4973 = vmatpush1.msra.mxu0 0.0
    %4974 = vmatprep.subr.mxu0 0.0
    %4975 = vmatpush1.msra.mxu0 0.0
    %4976 = vmatprep.subr.mxu0 0.0
    %4977 = vmatpush1.msra.mxu0 0.0
    %4978 = vmatprep.subr.mxu0 0.0
    %4979 = vmatpush1.msra.mxu0 0.0
    %4980 = vmatprep.subr.mxu0 0.0
    %4981 = vmatpush1.msra.mxu0 0.0
    %4982 = vmatprep.subr.mxu0 0.0
    %4983 = vmatpush1.msra.mxu0 0.0
    %4984 = vmatprep.subr.mxu0 0.0
    %4985 = vmatpush1.msra.mxu0 0.0
    %4986 = vmatprep.subr.mxu0 0.0
    %4987 = vmatpush1.msra.mxu0 0.0
    %4988 = vmatprep.subr.mxu0 0.0
    %4989 = vmatpush1.msra.mxu0 0.0
    %4990 = vmatprep.subr.mxu0 0.0
    %4991 = vmatpush1.msra.mxu0 0.0
    %4992 = vmatprep.subr.mxu0 0.0
    %4993 = vmatpush1.msra.mxu0 0.0
    %4994 = vmatprep.subr.mxu0 0.0
    %4995 = vmatpush1.msra.mxu0 0.0
    %4996 = vmatprep.subr.mxu0 0.0
    %4997 = vmatpush1.msra.mxu0 0.0
    %4998 = vmatprep.subr.mxu0 0.0
    %4999 = vmatpush1.msra.mxu0 0.0
    %5000 = vmatprep.subr.mxu0 0.0
    %5001 = vmatpush1.msra.mxu0 0.0
    %5002 = vmatprep.subr.mxu0 0.0
    %5003 = vmatpush1.msra.mxu0 0.0
    %5004 = vmatprep.mubr.f32.mxu0 0.0
    %5005 = vmatmul.mubr.f32.gmra.mrb[0].mxu0 %v4932
    %v5006 = vpop.f32.mrb[0].mxu0
    %v5007 = vadd.f32 0.0, %v5006
    %v5008 = vpop.f32.mrb[0].mxu0
    %v5009 = vadd.f32 0.0, %v5008
    %5010 = vdwg.mxu0
    %v5011 = vadd.f32 %v4927, %v5007
    %v5012 = vadd.f32 %v4928, %v5009
    %s5013 = scalar_lea.vmem %s49, 8
    %v5014 = vld [vmem:[%s5013] sm:$0xf]
    %v5016 = vsel %vm4845, %v5014, 0
    %v5019 = vsel %vm4849, %v4824, 0
    %v5022 = vsel %vm4849, %v4826, 0
    %5024 = vmatprep.subr.mxu0 %v5022
    %5025 = vmatpush1.msra.mxu0 %v5019
    %5026 = vmatprep.subr.mxu0 0.0
    %5027 = vmatpush1.msra.mxu0 0.0
    %5028 = vmatprep.subr.mxu0 0.0
    %5029 = vmatpush1.msra.mxu0 0.0
    %5030 = vmatprep.subr.mxu0 0.0
    %5031 = vmatpush1.msra.mxu0 0.0
    %5032 = vmatprep.subr.mxu0 0.0
    %5033 = vmatpush1.msra.mxu0 0.0
    %5034 = vmatprep.subr.mxu0 0.0
    %5035 = vmatpush1.msra.mxu0 0.0
    %5036 = vmatprep.subr.mxu0 0.0
    %5037 = vmatpush1.msra.mxu0 0.0
    %5038 = vmatprep.subr.mxu0 0.0
    %5039 = vmatpush1.msra.mxu0 0.0
    %5040 = vmatprep.subr.mxu0 0.0
    %5041 = vmatpush1.msra.mxu0 0.0
    %5042 = vmatprep.subr.mxu0 0.0
    %5043 = vmatpush1.msra.mxu0 0.0
    %5044 = vmatprep.subr.mxu0 0.0
    %5045 = vmatpush1.msra.mxu0 0.0
    %5046 = vmatprep.subr.mxu0 0.0
    %5047 = vmatpush1.msra.mxu0 0.0
    %5048 = vmatprep.subr.mxu0 0.0
    %5049 = vmatpush1.msra.mxu0 0.0
    %5050 = vmatprep.subr.mxu0 0.0
    %5051 = vmatpush1.msra.mxu0 0.0
    %5052 = vmatprep.subr.mxu0 0.0
    %5053 = vmatpush1.msra.mxu0 0.0
    %5054 = vmatprep.subr.mxu0 0.0
    %5055 = vmatpush1.msra.mxu0 0.0
    %5056 = vmatprep.subr.mxu0 0.0
    %5057 = vmatpush1.msra.mxu0 0.0
    %5058 = vmatprep.subr.mxu0 0.0
    %5059 = vmatpush1.msra.mxu0 0.0
    %5060 = vmatprep.subr.mxu0 0.0
    %5061 = vmatpush1.msra.mxu0 0.0
    %5062 = vmatprep.subr.mxu0 0.0
    %5063 = vmatpush1.msra.mxu0 0.0
    %5064 = vmatprep.subr.mxu0 0.0
    %5065 = vmatpush1.msra.mxu0 0.0
    %5066 = vmatprep.subr.mxu0 0.0
    %5067 = vmatpush1.msra.mxu0 0.0
    %5068 = vmatprep.subr.mxu0 0.0
    %5069 = vmatpush1.msra.mxu0 0.0
    %5070 = vmatprep.subr.mxu0 0.0
    %5071 = vmatpush1.msra.mxu0 0.0
    %5072 = vmatprep.subr.mxu0 0.0
    %5073 = vmatpush1.msra.mxu0 0.0
    %5074 = vmatprep.subr.mxu0 0.0
    %5075 = vmatpush1.msra.mxu0 0.0
    %5076 = vmatprep.subr.mxu0 0.0
    %5077 = vmatpush1.msra.mxu0 0.0
    %5078 = vmatprep.subr.mxu0 0.0
    %5079 = vmatpush1.msra.mxu0 0.0
    %5080 = vmatprep.subr.mxu0 0.0
    %5081 = vmatpush1.msra.mxu0 0.0
    %5082 = vmatprep.subr.mxu0 0.0
    %5083 = vmatpush1.msra.mxu0 0.0
    %5084 = vmatprep.subr.mxu0 0.0
    %5085 = vmatpush1.msra.mxu0 0.0
    %5086 = vmatprep.subr.mxu0 0.0
    %5087 = vmatpush1.msra.mxu0 0.0
    %5088 = vmatprep.mubr.f32.mxu0 0.0
    %5089 = vmatmul.mubr.f32.gmra.mrb[0].mxu0 %v5016
    %v5090 = vpop.f32.mrb[0].mxu0
    %v5091 = vadd.f32 0.0, %v5090
    %v5092 = vpop.f32.mrb[0].mxu0
    %v5093 = vadd.f32 0.0, %v5092
    %5094 = vdwg.mxu0
    %v5095 = vadd.f32 %v5011, %v5091
    %v5096 = vadd.f32 %v5012, %v5093
    %v5097 = vmax.f32 %v5095, 0.0
    %v5098 = vmax.f32 %v5096, 0.0
    %v5099 = vpack.c.bf16 %v5097, %v5097
    %v5100 = vpack.c.bf16 %v5098, %v5098
    %v5101 = vld [vmem:[%s51] sm:$0xff]
    %v5102 = vld [vmem:[%s51 + $0x8] sm:$0xff]
    %v5103 = vld [vmem:[%s51 + $0x10] sm:$0xff]
    %v5104 = vld [vmem:[%s51 + $0x18] sm:$0xff]
    %v5105 = vld [vmem:[%s51 + $0x20] sm:$0xff]
    %v5106 = vld [vmem:[%s51 + $0x28] sm:$0xff]
    %v5107 = vld [vmem:[%s51 + $0x30] sm:$0xff]
    %v5108 = vld [vmem:[%s51 + $0x38] sm:$0xff]
    %v5109 = vld [vmem:[%s51 + $0x40] sm:$0xff]
    %v5110 = vld [vmem:[%s51 + $0x48] sm:$0xff]
    %v5111 = vld [vmem:[%s51 + $0x50] sm:$0xff]
    %v5112 = vld [vmem:[%s51 + $0x58] sm:$0xff]
    %v5113 = vld [vmem:[%s51 + $0x60] sm:$0xff]
    %v5114 = vld [vmem:[%s51 + $0x68] sm:$0xff]
    %v5115 = vld [vmem:[%s51 + $0x70] sm:$0xff]
    %v5116 = vld [vmem:[%s51 + $0x78] sm:$0xff]
    %v5117 = vld [vmem:[%s51 + $0x80] sm:$0xff]
    %v5118 = vld [vmem:[%s51 + $0x88] sm:$0xff]
    %v5119 = vld [vmem:[%s51 + $0x90] sm:$0xff]
    %v5120 = vld [vmem:[%s51 + $0x98] sm:$0xff]
    %v5121 = vld [vmem:[%s51 + $0xa0] sm:$0xff]
    %v5122 = vld [vmem:[%s51 + $0xa8] sm:$0xff]
    %v5123 = vld [vmem:[%s51 + $0xb0] sm:$0xff]
    %v5124 = vld [vmem:[%s51 + $0xb8] sm:$0xff]
    %v5125 = vld [vmem:[%s51 + $0xc0] sm:$0xff]
    %v5126 = vld [vmem:[%s51 + $0xc8] sm:$0xff]
    %v5127 = vld [vmem:[%s51 + $0xd0] sm:$0xff]
    %v5128 = vld [vmem:[%s51 + $0xd8] sm:$0xff]
    %v5129 = vld [vmem:[%s51 + $0xe0] sm:$0xff]
    %v5130 = vld [vmem:[%s51 + $0xe8] sm:$0xff]
    %v5131 = vld [vmem:[%s51 + $0xf0] sm:$0xff]
    %v5132 = vld [vmem:[%s51 + $0xf8] sm:$0xff]
    %v5133 = vld [vmem:[%s51 + $0x100] sm:$0xff]
    %v5134 = vld [vmem:[%s51 + $0x108] sm:$0xff]
    %v5135 = vld [vmem:[%s51 + $0x110] sm:$0xff]
    %v5136 = vld [vmem:[%s51 + $0x118] sm:$0xff]
    %v5137 = vld [vmem:[%s51 + $0x120] sm:$0xff]
    %v5138 = vld [vmem:[%s51 + $0x128] sm:$0xff]
    %v5139 = vld [vmem:[%s51 + $0x130] sm:$0xff]
    %v5140 = vld [vmem:[%s51 + $0x138] sm:$0xff]
    %v5141 = vld [vmem:[%s51 + $0x140] sm:$0xff]
    %v5142 = vld [vmem:[%s51 + $0x148] sm:$0xff]
    %v5143 = vld [vmem:[%s51 + $0x150] sm:$0xff]
    %v5144 = vld [vmem:[%s51 + $0x158] sm:$0xff]
    %v5145 = vld [vmem:[%s51 + $0x160] sm:$0xff]
    %v5146 = vld [vmem:[%s51 + $0x168] sm:$0xff]
    %v5147 = vld [vmem:[%s51 + $0x170] sm:$0xff]
    %v5148 = vld [vmem:[%s51 + $0x178] sm:$0xff]
    %v5149 = vld [vmem:[%s51 + $0x180] sm:$0xff]
    %v5150 = vld [vmem:[%s51 + $0x188] sm:$0xff]
    %v5151 = vld [vmem:[%s51 + $0x190] sm:$0xff]
    %v5152 = vld [vmem:[%s51 + $0x198] sm:$0xff]
    %v5153 = vld [vmem:[%s51 + $0x1a0] sm:$0xff]
    %v5154 = vld [vmem:[%s51 + $0x1a8] sm:$0xff]
    %v5155 = vld [vmem:[%s51 + $0x1b0] sm:$0xff]
    %v5156 = vld [vmem:[%s51 + $0x1b8] sm:$0xff]
    %v5157 = vld [vmem:[%s51 + $0x1c0] sm:$0xff]
    %v5158 = vld [vmem:[%s51 + $0x1c8] sm:$0xff]
    %v5159 = vld [vmem:[%s51 + $0x1d0] sm:$0xff]
    %v5160 = vld [vmem:[%s51 + $0x1d8] sm:$0xff]
    %v5161 = vld [vmem:[%s51 + $0x1e0] sm:$0xff]
    %v5162 = vld [vmem:[%s51 + $0x1e8] sm:$0xff]
    %v5163 = vld [vmem:[%s51 + $0x1f0] sm:$0xff]
    %v5164 = vld [vmem:[%s51 + $0x1f8] sm:$0xff]
    %v5165 = vld [vmem:[%s51 + $0x200] sm:$0xff]
    %v5166 = vld [vmem:[%s51 + $0x208] sm:$0xff]
    %v5167 = vld [vmem:[%s51 + $0x210] sm:$0xff]
    %v5168 = vld [vmem:[%s51 + $0x218] sm:$0xff]
    %v5169 = vld [vmem:[%s51 + $0x220] sm:$0xff]
    %v5170 = vld [vmem:[%s51 + $0x228] sm:$0xff]
    %v5171 = vld [vmem:[%s51 + $0x230] sm:$0xff]
    %v5172 = vld [vmem:[%s51 + $0x238] sm:$0xff]
    %v5173 = vld [vmem:[%s51 + $0x240] sm:$0xff]
    %v5174 = vld [vmem:[%s51 + $0x248] sm:$0xff]
    %v5175 = vld [vmem:[%s51 + $0x250] sm:$0xff]
    %v5176 = vld [vmem:[%s51 + $0x258] sm:$0xff]
    %v5177 = vld [vmem:[%s51 + $0x260] sm:$0xff]
    %v5178 = vld [vmem:[%s51 + $0x268] sm:$0xff]
    %v5179 = vld [vmem:[%s51 + $0x270] sm:$0xff]
    %v5180 = vld [vmem:[%s51 + $0x278] sm:$0xff]
    %v5181 = vld [vmem:[%s51 + $0x280] sm:$0xff]
    %v5182 = vld [vmem:[%s51 + $0x288] sm:$0xff]
    %v5183 = vld [vmem:[%s51 + $0x290] sm:$0xff]
    %v5184 = vld [vmem:[%s51 + $0x298] sm:$0xff]
    %v5185 = vld [vmem:[%s51 + $0x2a0] sm:$0xff]
    %v5186 = vld [vmem:[%s51 + $0x2a8] sm:$0xff]
    %v5187 = vld [vmem:[%s51 + $0x2b0] sm:$0xff]
    %v5188 = vld [vmem:[%s51 + $0x2b8] sm:$0xff]
    %v5189 = vld [vmem:[%s51 + $0x2c0] sm:$0xff]
    %v5190 = vld [vmem:[%s51 + $0x2c8] sm:$0xff]
    %v5191 = vld [vmem:[%s51 + $0x2d0] sm:$0xff]
    %v5192 = vld [vmem:[%s51 + $0x2d8] sm:$0xff]
    %v5193 = vld [vmem:[%s51 + $0x2e0] sm:$0xff]
    %v5194 = vld [vmem:[%s51 + $0x2e8] sm:$0xff]
    %v5195 = vld [vmem:[%s51 + $0x2f0] sm:$0xff]
    %v5196 = vld [vmem:[%s51 + $0x2f8] sm:$0xff]
    %v5197 = vld [vmem:[%s51 + $0x300] sm:$0xff]
    %v5198 = vld [vmem:[%s51 + $0x308] sm:$0xff]
    %v5199 = vld [vmem:[%s51 + $0x310] sm:$0xff]
    %v5200 = vld [vmem:[%s51 + $0x318] sm:$0xff]
    %v5201 = vld [vmem:[%s51 + $0x320] sm:$0xff]
    %v5202 = vld [vmem:[%s51 + $0x328] sm:$0xff]
    %v5203 = vld [vmem:[%s51 + $0x330] sm:$0xff]
    %v5204 = vld [vmem:[%s51 + $0x338] sm:$0xff]
    %v5205 = vld [vmem:[%s51 + $0x340] sm:$0xff]
    %v5206 = vld [vmem:[%s51 + $0x348] sm:$0xff]
    %v5207 = vld [vmem:[%s51 + $0x350] sm:$0xff]
    %v5208 = vld [vmem:[%s51 + $0x358] sm:$0xff]
    %v5209 = vld [vmem:[%s51 + $0x360] sm:$0xff]
    %v5210 = vld [vmem:[%s51 + $0x368] sm:$0xff]
    %v5211 = vld [vmem:[%s51 + $0x370] sm:$0xff]
    %v5212 = vld [vmem:[%s51 + $0x378] sm:$0xff]
    %v5213 = vld [vmem:[%s51 + $0x380] sm:$0xff]
    %v5214 = vld [vmem:[%s51 + $0x388] sm:$0xff]
    %v5215 = vld [vmem:[%s51 + $0x390] sm:$0xff]
    %v5216 = vld [vmem:[%s51 + $0x398] sm:$0xff]
    %v5217 = vld [vmem:[%s51 + $0x3a0] sm:$0xff]
    %v5218 = vld [vmem:[%s51 + $0x3a8] sm:$0xff]
    %v5219 = vld [vmem:[%s51 + $0x3b0] sm:$0xff]
    %v5220 = vld [vmem:[%s51 + $0x3b8] sm:$0xff]
    %v5221 = vld [vmem:[%s51 + $0x3c0] sm:$0xff]
    %v5222 = vld [vmem:[%s51 + $0x3c8] sm:$0xff]
    %v5223 = vld [vmem:[%s51 + $0x3d0] sm:$0xff]
    %v5224 = vld [vmem:[%s51 + $0x3d8] sm:$0xff]
    %v5225 = vld [vmem:[%s51 + $0x3e0] sm:$0xff]
    %v5226 = vld [vmem:[%s51 + $0x3e8] sm:$0xff]
    %v5227 = vld [vmem:[%s51 + $0x3f0] sm:$0xff]
    %v5228 = vld [vmem:[%s51 + $0x3f8] sm:$0xff]
    %v5229 = vld [vmem:[%s51 + $0x400] sm:$0xff]
    %v5230 = vld [vmem:[%s51 + $0x408] sm:$0xff]
    %v5231 = vld [vmem:[%s51 + $0x410] sm:$0xff]
    %v5232 = vld [vmem:[%s51 + $0x418] sm:$0xff]
    %v5233 = vld [vmem:[%s51 + $0x420] sm:$0xff]
    %v5234 = vld [vmem:[%s51 + $0x428] sm:$0xff]
    %v5235 = vld [vmem:[%s51 + $0x430] sm:$0xff]
    %v5236 = vld [vmem:[%s51 + $0x438] sm:$0xff]
    %v5237 = vld [vmem:[%s51 + $0x440] sm:$0xff]
    %v5238 = vld [vmem:[%s51 + $0x448] sm:$0xff]
    %v5239 = vld [vmem:[%s51 + $0x450] sm:$0xff]
    %v5240 = vld [vmem:[%s51 + $0x458] sm:$0xff]
    %v5241 = vld [vmem:[%s51 + $0x460] sm:$0xff]
    %v5242 = vld [vmem:[%s51 + $0x468] sm:$0xff]
    %v5243 = vld [vmem:[%s51 + $0x470] sm:$0xff]
    %v5244 = vld [vmem:[%s51 + $0x478] sm:$0xff]
    %v5245 = vld [vmem:[%s51 + $0x480] sm:$0xff]
    %v5246 = vld [vmem:[%s51 + $0x488] sm:$0xff]
    %v5247 = vld [vmem:[%s51 + $0x490] sm:$0xff]
    %v5248 = vld [vmem:[%s51 + $0x498] sm:$0xff]
    %v5249 = vld [vmem:[%s51 + $0x4a0] sm:$0xff]
    %v5250 = vld [vmem:[%s51 + $0x4a8] sm:$0xff]
    %v5251 = vld [vmem:[%s51 + $0x4b0] sm:$0xff]
    %v5252 = vld [vmem:[%s51 + $0x4b8] sm:$0xff]
    %v5253 = vld [vmem:[%s51 + $0x4c0] sm:$0xff]
    %v5254 = vld [vmem:[%s51 + $0x4c8] sm:$0xff]
    %v5255 = vld [vmem:[%s51 + $0x4d0] sm:$0xff]
    %v5256 = vld [vmem:[%s51 + $0x4d8] sm:$0xff]
    %v5257 = vld [vmem:[%s51 + $0x4e0] sm:$0xff]
    %v5258 = vld [vmem:[%s51 + $0x4e8] sm:$0xff]
    %v5259 = vld [vmem:[%s51 + $0x4f0] sm:$0xff]
    %v5260 = vld [vmem:[%s51 + $0x4f8] sm:$0xff]
    %v5261 = vld [vmem:[%s51 + $0x500] sm:$0xff]
    %v5262 = vld [vmem:[%s51 + $0x508] sm:$0xff]
    %v5263 = vld [vmem:[%s51 + $0x510] sm:$0xff]
    %v5264 = vld [vmem:[%s51 + $0x518] sm:$0xff]
    %v5265 = vld [vmem:[%s51 + $0x520] sm:$0xff]
    %v5266 = vld [vmem:[%s51 + $0x528] sm:$0xff]
    %v5267 = vld [vmem:[%s51 + $0x530] sm:$0xff]
    %v5268 = vld [vmem:[%s51 + $0x538] sm:$0xff]
    %v5269 = vld [vmem:[%s51 + $0x540] sm:$0xff]
    %v5270 = vld [vmem:[%s51 + $0x548] sm:$0xff]
    %v5271 = vld [vmem:[%s51 + $0x550] sm:$0xff]
    %v5272 = vld [vmem:[%s51 + $0x558] sm:$0xff]
    %v5273 = vld [vmem:[%s51 + $0x560] sm:$0xff]
    %v5274 = vld [vmem:[%s51 + $0x568] sm:$0xff]
    %v5275 = vld [vmem:[%s51 + $0x570] sm:$0xff]
    %v5276 = vld [vmem:[%s51 + $0x578] sm:$0xff]
    %v5277 = vld [vmem:[%s51 + $0x580] sm:$0xff]
    %v5278 = vld [vmem:[%s51 + $0x588] sm:$0xff]
    %v5279 = vld [vmem:[%s51 + $0x590] sm:$0xff]
    %v5280 = vld [vmem:[%s51 + $0x598] sm:$0xff]
    %v5281 = vld [vmem:[%s51 + $0x5a0] sm:$0xff]
    %v5282 = vld [vmem:[%s51 + $0x5a8] sm:$0xff]
    %v5283 = vld [vmem:[%s51 + $0x5b0] sm:$0xff]
    %v5284 = vld [vmem:[%s51 + $0x5b8] sm:$0xff]
    %v5285 = vld [vmem:[%s51 + $0x5c0] sm:$0xff]
    %v5286 = vld [vmem:[%s51 + $0x5c8] sm:$0xff]
    %v5287 = vld [vmem:[%s51 + $0x5d0] sm:$0xff]
    %v5288 = vld [vmem:[%s51 + $0x5d8] sm:$0xff]
    %v5289 = vld [vmem:[%s51 + $0x5e0] sm:$0xff]
    %v5290 = vld [vmem:[%s51 + $0x5e8] sm:$0xff]
    %v5291 = vld [vmem:[%s51 + $0x5f0] sm:$0xff]
    %v5292 = vld [vmem:[%s51 + $0x5f8] sm:$0xff]
    %v5293 = vld [vmem:[%s51 + $0x600] sm:$0xff]
    %v5294 = vld [vmem:[%s51 + $0x608] sm:$0xff]
    %v5295 = vld [vmem:[%s51 + $0x610] sm:$0xff]
    %v5296 = vld [vmem:[%s51 + $0x618] sm:$0xff]
    %v5297 = vld [vmem:[%s51 + $0x620] sm:$0xff]
    %v5298 = vld [vmem:[%s51 + $0x628] sm:$0xff]
    %v5299 = vld [vmem:[%s51 + $0x630] sm:$0xff]
    %v5300 = vld [vmem:[%s51 + $0x638] sm:$0xff]
    %v5301 = vld [vmem:[%s51 + $0x640] sm:$0xff]
    %v5302 = vld [vmem:[%s51 + $0x648] sm:$0xff]
    %v5303 = vld [vmem:[%s51 + $0x650] sm:$0xff]
    %v5304 = vld [vmem:[%s51 + $0x658] sm:$0xff]
    %v5305 = vld [vmem:[%s51 + $0x660] sm:$0xff]
    %v5306 = vld [vmem:[%s51 + $0x668] sm:$0xff]
    %v5307 = vld [vmem:[%s51 + $0x670] sm:$0xff]
    %v5308 = vld [vmem:[%s51 + $0x678] sm:$0xff]
    %v5309 = vld [vmem:[%s51 + $0x680] sm:$0xff]
    %v5310 = vld [vmem:[%s51 + $0x688] sm:$0xff]
    %v5311 = vld [vmem:[%s51 + $0x690] sm:$0xff]
    %v5312 = vld [vmem:[%s51 + $0x698] sm:$0xff]
    %v5313 = vld [vmem:[%s51 + $0x6a0] sm:$0xff]
    %v5314 = vld [vmem:[%s51 + $0x6a8] sm:$0xff]
    %v5315 = vld [vmem:[%s51 + $0x6b0] sm:$0xff]
    %v5316 = vld [vmem:[%s51 + $0x6b8] sm:$0xff]
    %v5317 = vld [vmem:[%s51 + $0x6c0] sm:$0xff]
    %v5318 = vld [vmem:[%s51 + $0x6c8] sm:$0xff]
    %v5319 = vld [vmem:[%s51 + $0x6d0] sm:$0xff]
    %v5320 = vld [vmem:[%s51 + $0x6d8] sm:$0xff]
    %v5321 = vld [vmem:[%s51 + $0x6e0] sm:$0xff]
    %v5322 = vld [vmem:[%s51 + $0x6e8] sm:$0xff]
    %v5323 = vld [vmem:[%s51 + $0x6f0] sm:$0xff]
    %v5324 = vld [vmem:[%s51 + $0x6f8] sm:$0xff]
    %v5325 = vld [vmem:[%s51 + $0x700] sm:$0xff]
    %v5326 = vld [vmem:[%s51 + $0x708] sm:$0xff]
    %v5327 = vld [vmem:[%s51 + $0x710] sm:$0xff]
    %v5328 = vld [vmem:[%s51 + $0x718] sm:$0xff]
    %v5329 = vld [vmem:[%s51 + $0x720] sm:$0xff]
    %v5330 = vld [vmem:[%s51 + $0x728] sm:$0xff]
    %v5331 = vld [vmem:[%s51 + $0x730] sm:$0xff]
    %v5332 = vld [vmem:[%s51 + $0x738] sm:$0xff]
    %v5333 = vld [vmem:[%s51 + $0x740] sm:$0xff]
    %v5334 = vld [vmem:[%s51 + $0x748] sm:$0xff]
    %v5335 = vld [vmem:[%s51 + $0x750] sm:$0xff]
    %v5336 = vld [vmem:[%s51 + $0x758] sm:$0xff]
    %v5337 = vld [vmem:[%s51 + $0x760] sm:$0xff]
    %v5338 = vld [vmem:[%s51 + $0x768] sm:$0xff]
    %v5339 = vld [vmem:[%s51 + $0x770] sm:$0xff]
    %v5340 = vld [vmem:[%s51 + $0x778] sm:$0xff]
    %v5341 = vld [vmem:[%s51 + $0x780] sm:$0xff]
    %v5342 = vld [vmem:[%s51 + $0x788] sm:$0xff]
    %v5343 = vld [vmem:[%s51 + $0x790] sm:$0xff]
    %v5344 = vld [vmem:[%s51 + $0x798] sm:$0xff]
    %v5345 = vld [vmem:[%s51 + $0x7a0] sm:$0xff]
    %v5346 = vld [vmem:[%s51 + $0x7a8] sm:$0xff]
    %v5347 = vld [vmem:[%s51 + $0x7b0] sm:$0xff]
    %v5348 = vld [vmem:[%s51 + $0x7b8] sm:$0xff]
    %v5349 = vld [vmem:[%s51 + $0x7c0] sm:$0xff]
    %v5350 = vld [vmem:[%s51 + $0x7c8] sm:$0xff]
    %v5351 = vld [vmem:[%s51 + $0x7d0] sm:$0xff]
    %v5352 = vld [vmem:[%s51 + $0x7d8] sm:$0xff]
    %v5353 = vld [vmem:[%s51 + $0x7e0] sm:$0xff]
    %v5354 = vld [vmem:[%s51 + $0x7e8] sm:$0xff]
    %v5355 = vld [vmem:[%s51 + $0x7f0] sm:$0xff]
    %v5356 = vld [vmem:[%s51 + $0x7f8] sm:$0xff]
    %v5613 = vunpack.c.l.b16 %v5101
    %v5614 = vunpack.c.h.b16 %v5101
    %v5615 = vunpack.c.l.b16 %v5102
    %v5616 = vunpack.c.h.b16 %v5102
    %v5617 = vunpack.c.l.b16 %v5103
    %v5618 = vunpack.c.h.b16 %v5103
    %v5619 = vunpack.c.l.b16 %v5104
    %v5620 = vunpack.c.h.b16 %v5104
    %v5621 = vunpack.c.l.b16 %v5105
    %v5622 = vunpack.c.h.b16 %v5105
    %v5623 = vunpack.c.l.b16 %v5106
    %v5624 = vunpack.c.h.b16 %v5106
    %v5625 = vunpack.c.l.b16 %v5107
    %v5626 = vunpack.c.h.b16 %v5107
    %v5627 = vunpack.c.l.b16 %v5108
    %v5628 = vunpack.c.h.b16 %v5108
    %v5629 = vunpack.c.l.b16 %v5109
    %v5630 = vunpack.c.h.b16 %v5109
    %v5631 = vunpack.c.l.b16 %v5110
    %v5632 = vunpack.c.h.b16 %v5110
    %v5633 = vunpack.c.l.b16 %v5111
    %v5634 = vunpack.c.h.b16 %v5111
    %v5635 = vunpack.c.l.b16 %v5112
    %v5636 = vunpack.c.h.b16 %v5112
    %v5637 = vunpack.c.l.b16 %v5113
    %v5638 = vunpack.c.h.b16 %v5113
    %v5639 = vunpack.c.l.b16 %v5114
    %v5640 = vunpack.c.h.b16 %v5114
    %v5641 = vunpack.c.l.b16 %v5115
    %v5642 = vunpack.c.h.b16 %v5115
    %v5643 = vunpack.c.l.b16 %v5116
    %v5644 = vunpack.c.h.b16 %v5116
    %v5645 = vunpack.c.l.b16 %v5117
    %v5646 = vunpack.c.h.b16 %v5117
    %v5647 = vunpack.c.l.b16 %v5118
    %v5648 = vunpack.c.h.b16 %v5118
    %v5649 = vunpack.c.l.b16 %v5119
    %v5650 = vunpack.c.h.b16 %v5119
    %v5651 = vunpack.c.l.b16 %v5120
    %v5652 = vunpack.c.h.b16 %v5120
    %v5653 = vunpack.c.l.b16 %v5121
    %v5654 = vunpack.c.h.b16 %v5121
    %v5655 = vunpack.c.l.b16 %v5122
    %v5656 = vunpack.c.h.b16 %v5122
    %v5657 = vunpack.c.l.b16 %v5123
    %v5658 = vunpack.c.h.b16 %v5123
    %v5659 = vunpack.c.l.b16 %v5124
    %v5660 = vunpack.c.h.b16 %v5124
    %v5661 = vunpack.c.l.b16 %v5125
    %v5662 = vunpack.c.h.b16 %v5125
    %v5663 = vunpack.c.l.b16 %v5126
    %v5664 = vunpack.c.h.b16 %v5126
    %v5665 = vunpack.c.l.b16 %v5127
    %v5666 = vunpack.c.h.b16 %v5127
    %v5667 = vunpack.c.l.b16 %v5128
    %v5668 = vunpack.c.h.b16 %v5128
    %v5669 = vunpack.c.l.b16 %v5129
    %v5670 = vunpack.c.h.b16 %v5129
    %v5671 = vunpack.c.l.b16 %v5130
    %v5672 = vunpack.c.h.b16 %v5130
    %v5673 = vunpack.c.l.b16 %v5131
    %v5674 = vunpack.c.h.b16 %v5131
    %v5675 = vunpack.c.l.b16 %v5132
    %v5676 = vunpack.c.h.b16 %v5132
    %v5677 = vunpack.c.l.b16 %v5133
    %v5678 = vunpack.c.h.b16 %v5133
    %v5679 = vunpack.c.l.b16 %v5134
    %v5680 = vunpack.c.h.b16 %v5134
    %v5681 = vunpack.c.l.b16 %v5135
    %v5682 = vunpack.c.h.b16 %v5135
    %v5683 = vunpack.c.l.b16 %v5136
    %v5684 = vunpack.c.h.b16 %v5136
    %v5685 = vunpack.c.l.b16 %v5137
    %v5686 = vunpack.c.h.b16 %v5137
    %v5687 = vunpack.c.l.b16 %v5138
    %v5688 = vunpack.c.h.b16 %v5138
    %v5689 = vunpack.c.l.b16 %v5139
    %v5690 = vunpack.c.h.b16 %v5139
    %v5691 = vunpack.c.l.b16 %v5140
    %v5692 = vunpack.c.h.b16 %v5140
    %v5693 = vunpack.c.l.b16 %v5141
    %v5694 = vunpack.c.h.b16 %v5141
    %v5695 = vunpack.c.l.b16 %v5142
    %v5696 = vunpack.c.h.b16 %v5142
    %v5697 = vunpack.c.l.b16 %v5143
    %v5698 = vunpack.c.h.b16 %v5143
    %v5699 = vunpack.c.l.b16 %v5144
    %v5700 = vunpack.c.h.b16 %v5144
    %v5701 = vunpack.c.l.b16 %v5145
    %v5702 = vunpack.c.h.b16 %v5145
    %v5703 = vunpack.c.l.b16 %v5146
    %v5704 = vunpack.c.h.b16 %v5146
    %v5705 = vunpack.c.l.b16 %v5147
    %v5706 = vunpack.c.h.b16 %v5147
    %v5707 = vunpack.c.l.b16 %v5148
    %v5708 = vunpack.c.h.b16 %v5148
    %v5709 = vunpack.c.l.b16 %v5149
    %v5710 = vunpack.c.h.b16 %v5149
    %v5711 = vunpack.c.l.b16 %v5150
    %v5712 = vunpack.c.h.b16 %v5150
    %v5713 = vunpack.c.l.b16 %v5151
    %v5714 = vunpack.c.h.b16 %v5151
    %v5715 = vunpack.c.l.b16 %v5152
    %v5716 = vunpack.c.h.b16 %v5152
    %v5717 = vunpack.c.l.b16 %v5153
    %v5718 = vunpack.c.h.b16 %v5153
    %v5719 = vunpack.c.l.b16 %v5154
    %v5720 = vunpack.c.h.b16 %v5154
    %v5721 = vunpack.c.l.b16 %v5155
    %v5722 = vunpack.c.h.b16 %v5155
    %v5723 = vunpack.c.l.b16 %v5156
    %v5724 = vunpack.c.h.b16 %v5156
    %v5725 = vunpack.c.l.b16 %v5157
    %v5726 = vunpack.c.h.b16 %v5157
    %v5727 = vunpack.c.l.b16 %v5158
    %v5728 = vunpack.c.h.b16 %v5158
    %v5729 = vunpack.c.l.b16 %v5159
    %v5730 = vunpack.c.h.b16 %v5159
    %v5731 = vunpack.c.l.b16 %v5160
    %v5732 = vunpack.c.h.b16 %v5160
    %v5733 = vunpack.c.l.b16 %v5161
    %v5734 = vunpack.c.h.b16 %v5161
    %v5735 = vunpack.c.l.b16 %v5162
    %v5736 = vunpack.c.h.b16 %v5162
    %v5737 = vunpack.c.l.b16 %v5163
    %v5738 = vunpack.c.h.b16 %v5163
    %v5739 = vunpack.c.l.b16 %v5164
    %v5740 = vunpack.c.h.b16 %v5164
    %v5741 = vunpack.c.l.b16 %v5165
    %v5742 = vunpack.c.h.b16 %v5165
    %v5743 = vunpack.c.l.b16 %v5166
    %v5744 = vunpack.c.h.b16 %v5166
    %v5745 = vunpack.c.l.b16 %v5167
    %v5746 = vunpack.c.h.b16 %v5167
    %v5747 = vunpack.c.l.b16 %v5168
    %v5748 = vunpack.c.h.b16 %v5168
    %v5749 = vunpack.c.l.b16 %v5169
    %v5750 = vunpack.c.h.b16 %v5169
    %v5751 = vunpack.c.l.b16 %v5170
    %v5752 = vunpack.c.h.b16 %v5170
    %v5753 = vunpack.c.l.b16 %v5171
    %v5754 = vunpack.c.h.b16 %v5171
    %v5755 = vunpack.c.l.b16 %v5172
    %v5756 = vunpack.c.h.b16 %v5172
    %v5757 = vunpack.c.l.b16 %v5173
    %v5758 = vunpack.c.h.b16 %v5173
    %v5759 = vunpack.c.l.b16 %v5174
    %v5760 = vunpack.c.h.b16 %v5174
    %v5761 = vunpack.c.l.b16 %v5175
    %v5762 = vunpack.c.h.b16 %v5175
    %v5763 = vunpack.c.l.b16 %v5176
    %v5764 = vunpack.c.h.b16 %v5176
    %v5765 = vunpack.c.l.b16 %v5177
    %v5766 = vunpack.c.h.b16 %v5177
    %v5767 = vunpack.c.l.b16 %v5178
    %v5768 = vunpack.c.h.b16 %v5178
    %v5769 = vunpack.c.l.b16 %v5179
    %v5770 = vunpack.c.h.b16 %v5179
    %v5771 = vunpack.c.l.b16 %v5180
    %v5772 = vunpack.c.h.b16 %v5180
    %v5773 = vunpack.c.l.b16 %v5181
    %v5774 = vunpack.c.h.b16 %v5181
    %v5775 = vunpack.c.l.b16 %v5182
    %v5776 = vunpack.c.h.b16 %v5182
    %v5777 = vunpack.c.l.b16 %v5183
    %v5778 = vunpack.c.h.b16 %v5183
    %v5779 = vunpack.c.l.b16 %v5184
    %v5780 = vunpack.c.h.b16 %v5184
    %v5781 = vunpack.c.l.b16 %v5185
    %v5782 = vunpack.c.h.b16 %v5185
    %v5783 = vunpack.c.l.b16 %v5186
    %v5784 = vunpack.c.h.b16 %v5186
    %v5785 = vunpack.c.l.b16 %v5187
    %v5786 = vunpack.c.h.b16 %v5187
    %v5787 = vunpack.c.l.b16 %v5188
    %v5788 = vunpack.c.h.b16 %v5188
    %v5789 = vunpack.c.l.b16 %v5189
    %v5790 = vunpack.c.h.b16 %v5189
    %v5791 = vunpack.c.l.b16 %v5190
    %v5792 = vunpack.c.h.b16 %v5190
    %v5793 = vunpack.c.l.b16 %v5191
    %v5794 = vunpack.c.h.b16 %v5191
    %v5795 = vunpack.c.l.b16 %v5192
    %v5796 = vunpack.c.h.b16 %v5192
    %v5797 = vunpack.c.l.b16 %v5193
    %v5798 = vunpack.c.h.b16 %v5193
    %v5799 = vunpack.c.l.b16 %v5194
    %v5800 = vunpack.c.h.b16 %v5194
    %v5801 = vunpack.c.l.b16 %v5195
    %v5802 = vunpack.c.h.b16 %v5195
    %v5803 = vunpack.c.l.b16 %v5196
    %v5804 = vunpack.c.h.b16 %v5196
    %v5805 = vunpack.c.l.b16 %v5197
    %v5806 = vunpack.c.h.b16 %v5197
    %v5807 = vunpack.c.l.b16 %v5198
    %v5808 = vunpack.c.h.b16 %v5198
    %v5809 = vunpack.c.l.b16 %v5199
    %v5810 = vunpack.c.h.b16 %v5199
    %v5811 = vunpack.c.l.b16 %v5200
    %v5812 = vunpack.c.h.b16 %v5200
    %v5813 = vunpack.c.l.b16 %v5201
    %v5814 = vunpack.c.h.b16 %v5201
    %v5815 = vunpack.c.l.b16 %v5202
    %v5816 = vunpack.c.h.b16 %v5202
    %v5817 = vunpack.c.l.b16 %v5203
    %v5818 = vunpack.c.h.b16 %v5203
    %v5819 = vunpack.c.l.b16 %v5204
    %v5820 = vunpack.c.h.b16 %v5204
    %v5821 = vunpack.c.l.b16 %v5205
    %v5822 = vunpack.c.h.b16 %v5205
    %v5823 = vunpack.c.l.b16 %v5206
    %v5824 = vunpack.c.h.b16 %v5206
    %v5825 = vunpack.c.l.b16 %v5207
    %v5826 = vunpack.c.h.b16 %v5207
    %v5827 = vunpack.c.l.b16 %v5208
    %v5828 = vunpack.c.h.b16 %v5208
    %v5829 = vunpack.c.l.b16 %v5209
    %v5830 = vunpack.c.h.b16 %v5209
    %v5831 = vunpack.c.l.b16 %v5210
    %v5832 = vunpack.c.h.b16 %v5210
    %v5833 = vunpack.c.l.b16 %v5211
    %v5834 = vunpack.c.h.b16 %v5211
    %v5835 = vunpack.c.l.b16 %v5212
    %v5836 = vunpack.c.h.b16 %v5212
    %v5837 = vunpack.c.l.b16 %v5213
    %v5838 = vunpack.c.h.b16 %v5213
    %v5839 = vunpack.c.l.b16 %v5214
    %v5840 = vunpack.c.h.b16 %v5214
    %v5841 = vunpack.c.l.b16 %v5215
    %v5842 = vunpack.c.h.b16 %v5215
    %v5843 = vunpack.c.l.b16 %v5216
    %v5844 = vunpack.c.h.b16 %v5216
    %v5845 = vunpack.c.l.b16 %v5217
    %v5846 = vunpack.c.h.b16 %v5217
    %v5847 = vunpack.c.l.b16 %v5218
    %v5848 = vunpack.c.h.b16 %v5218
    %v5849 = vunpack.c.l.b16 %v5219
    %v5850 = vunpack.c.h.b16 %v5219
    %v5851 = vunpack.c.l.b16 %v5220
    %v5852 = vunpack.c.h.b16 %v5220
    %v5853 = vunpack.c.l.b16 %v5221
    %v5854 = vunpack.c.h.b16 %v5221
    %v5855 = vunpack.c.l.b16 %v5222
    %v5856 = vunpack.c.h.b16 %v5222
    %v5857 = vunpack.c.l.b16 %v5223
    %v5858 = vunpack.c.h.b16 %v5223
    %v5859 = vunpack.c.l.b16 %v5224
    %v5860 = vunpack.c.h.b16 %v5224
    %v5861 = vunpack.c.l.b16 %v5225
    %v5862 = vunpack.c.h.b16 %v5225
    %v5863 = vunpack.c.l.b16 %v5226
    %v5864 = vunpack.c.h.b16 %v5226
    %v5865 = vunpack.c.l.b16 %v5227
    %v5866 = vunpack.c.h.b16 %v5227
    %v5867 = vunpack.c.l.b16 %v5228
    %v5868 = vunpack.c.h.b16 %v5228
    %v5869 = vunpack.c.l.b16 %v5229
    %v5870 = vunpack.c.h.b16 %v5229
    %v5871 = vunpack.c.l.b16 %v5230
    %v5872 = vunpack.c.h.b16 %v5230
    %v5873 = vunpack.c.l.b16 %v5231
    %v5874 = vunpack.c.h.b16 %v5231
    %v5875 = vunpack.c.l.b16 %v5232
    %v5876 = vunpack.c.h.b16 %v5232
    %v5877 = vunpack.c.l.b16 %v5233
    %v5878 = vunpack.c.h.b16 %v5233
    %v5879 = vunpack.c.l.b16 %v5234
    %v5880 = vunpack.c.h.b16 %v5234
    %v5881 = vunpack.c.l.b16 %v5235
    %v5882 = vunpack.c.h.b16 %v5235
    %v5883 = vunpack.c.l.b16 %v5236
    %v5884 = vunpack.c.h.b16 %v5236
    %v5885 = vunpack.c.l.b16 %v5237
    %v5886 = vunpack.c.h.b16 %v5237
    %v5887 = vunpack.c.l.b16 %v5238
    %v5888 = vunpack.c.h.b16 %v5238
    %v5889 = vunpack.c.l.b16 %v5239
    %v5890 = vunpack.c.h.b16 %v5239
    %v5891 = vunpack.c.l.b16 %v5240
    %v5892 = vunpack.c.h.b16 %v5240
    %v5893 = vunpack.c.l.b16 %v5241
    %v5894 = vunpack.c.h.b16 %v5241
    %v5895 = vunpack.c.l.b16 %v5242
    %v5896 = vunpack.c.h.b16 %v5242
    %v5897 = vunpack.c.l.b16 %v5243
    %v5898 = vunpack.c.h.b16 %v5243
    %v5899 = vunpack.c.l.b16 %v5244
    %v5900 = vunpack.c.h.b16 %v5244
    %v5901 = vunpack.c.l.b16 %v5245
    %v5902 = vunpack.c.h.b16 %v5245
    %v5903 = vunpack.c.l.b16 %v5246
    %v5904 = vunpack.c.h.b16 %v5246
    %v5905 = vunpack.c.l.b16 %v5247
    %v5906 = vunpack.c.h.b16 %v5247
    %v5907 = vunpack.c.l.b16 %v5248
    %v5908 = vunpack.c.h.b16 %v5248
    %v5909 = vunpack.c.l.b16 %v5249
    %v5910 = vunpack.c.h.b16 %v5249
    %v5911 = vunpack.c.l.b16 %v5250
    %v5912 = vunpack.c.h.b16 %v5250
    %v5913 = vunpack.c.l.b16 %v5251
    %v5914 = vunpack.c.h.b16 %v5251
    %v5915 = vunpack.c.l.b16 %v5252
    %v5916 = vunpack.c.h.b16 %v5252
    %v5917 = vunpack.c.l.b16 %v5253
    %v5918 = vunpack.c.h.b16 %v5253
    %v5919 = vunpack.c.l.b16 %v5254
    %v5920 = vunpack.c.h.b16 %v5254
    %v5921 = vunpack.c.l.b16 %v5255
    %v5922 = vunpack.c.h.b16 %v5255
    %v5923 = vunpack.c.l.b16 %v5256
    %v5924 = vunpack.c.h.b16 %v5256
    %v5925 = vunpack.c.l.b16 %v5257
    %v5926 = vunpack.c.h.b16 %v5257
    %v5927 = vunpack.c.l.b16 %v5258
    %v5928 = vunpack.c.h.b16 %v5258
    %v5929 = vunpack.c.l.b16 %v5259
    %v5930 = vunpack.c.h.b16 %v5259
    %v5931 = vunpack.c.l.b16 %v5260
    %v5932 = vunpack.c.h.b16 %v5260
    %v5933 = vunpack.c.l.b16 %v5261
    %v5934 = vunpack.c.h.b16 %v5261
    %v5935 = vunpack.c.l.b16 %v5262
    %v5936 = vunpack.c.h.b16 %v5262
    %v5937 = vunpack.c.l.b16 %v5263
    %v5938 = vunpack.c.h.b16 %v5263
    %v5939 = vunpack.c.l.b16 %v5264
    %v5940 = vunpack.c.h.b16 %v5264
    %v5941 = vunpack.c.l.b16 %v5265
    %v5942 = vunpack.c.h.b16 %v5265
    %v5943 = vunpack.c.l.b16 %v5266
    %v5944 = vunpack.c.h.b16 %v5266
    %v5945 = vunpack.c.l.b16 %v5267
    %v5946 = vunpack.c.h.b16 %v5267
    %v5947 = vunpack.c.l.b16 %v5268
    %v5948 = vunpack.c.h.b16 %v5268
    %v5949 = vunpack.c.l.b16 %v5269
    %v5950 = vunpack.c.h.b16 %v5269
    %v5951 = vunpack.c.l.b16 %v5270
    %v5952 = vunpack.c.h.b16 %v5270
    %v5953 = vunpack.c.l.b16 %v5271
    %v5954 = vunpack.c.h.b16 %v5271
    %v5955 = vunpack.c.l.b16 %v5272
    %v5956 = vunpack.c.h.b16 %v5272
    %v5957 = vunpack.c.l.b16 %v5273
    %v5958 = vunpack.c.h.b16 %v5273
    %v5959 = vunpack.c.l.b16 %v5274
    %v5960 = vunpack.c.h.b16 %v5274
    %v5961 = vunpack.c.l.b16 %v5275
    %v5962 = vunpack.c.h.b16 %v5275
    %v5963 = vunpack.c.l.b16 %v5276
    %v5964 = vunpack.c.h.b16 %v5276
    %v5965 = vunpack.c.l.b16 %v5277
    %v5966 = vunpack.c.h.b16 %v5277
    %v5967 = vunpack.c.l.b16 %v5278
    %v5968 = vunpack.c.h.b16 %v5278
    %v5969 = vunpack.c.l.b16 %v5279
    %v5970 = vunpack.c.h.b16 %v5279
    %v5971 = vunpack.c.l.b16 %v5280
    %v5972 = vunpack.c.h.b16 %v5280
    %v5973 = vunpack.c.l.b16 %v5281
    %v5974 = vunpack.c.h.b16 %v5281
    %v5975 = vunpack.c.l.b16 %v5282
    %v5976 = vunpack.c.h.b16 %v5282
    %v5977 = vunpack.c.l.b16 %v5283
    %v5978 = vunpack.c.h.b16 %v5283
    %v5979 = vunpack.c.l.b16 %v5284
    %v5980 = vunpack.c.h.b16 %v5284
    %v5981 = vunpack.c.l.b16 %v5285
    %v5982 = vunpack.c.h.b16 %v5285
    %v5983 = vunpack.c.l.b16 %v5286
    %v5984 = vunpack.c.h.b16 %v5286
    %v5985 = vunpack.c.l.b16 %v5287
    %v5986 = vunpack.c.h.b16 %v5287
    %v5987 = vunpack.c.l.b16 %v5288
    %v5988 = vunpack.c.h.b16 %v5288
    %v5989 = vunpack.c.l.b16 %v5289
    %v5990 = vunpack.c.h.b16 %v5289
    %v5991 = vunpack.c.l.b16 %v5290
    %v5992 = vunpack.c.h.b16 %v5290
    %v5993 = vunpack.c.l.b16 %v5291
    %v5994 = vunpack.c.h.b16 %v5291
    %v5995 = vunpack.c.l.b16 %v5292
    %v5996 = vunpack.c.h.b16 %v5292
    %v5997 = vunpack.c.l.b16 %v5293
    %v5998 = vunpack.c.h.b16 %v5293
    %v5999 = vunpack.c.l.b16 %v5294
    %v6000 = vunpack.c.h.b16 %v5294
    %v6001 = vunpack.c.l.b16 %v5295
    %v6002 = vunpack.c.h.b16 %v5295
    %v6003 = vunpack.c.l.b16 %v5296
    %v6004 = vunpack.c.h.b16 %v5296
    %v6005 = vunpack.c.l.b16 %v5297
    %v6006 = vunpack.c.h.b16 %v5297
    %v6007 = vunpack.c.l.b16 %v5298
    %v6008 = vunpack.c.h.b16 %v5298
    %v6009 = vunpack.c.l.b16 %v5299
    %v6010 = vunpack.c.h.b16 %v5299
    %v6011 = vunpack.c.l.b16 %v5300
    %v6012 = vunpack.c.h.b16 %v5300
    %v6013 = vunpack.c.l.b16 %v5301
    %v6014 = vunpack.c.h.b16 %v5301
    %v6015 = vunpack.c.l.b16 %v5302
    %v6016 = vunpack.c.h.b16 %v5302
    %v6017 = vunpack.c.l.b16 %v5303
    %v6018 = vunpack.c.h.b16 %v5303
    %v6019 = vunpack.c.l.b16 %v5304
    %v6020 = vunpack.c.h.b16 %v5304
    %v6021 = vunpack.c.l.b16 %v5305
    %v6022 = vunpack.c.h.b16 %v5305
    %v6023 = vunpack.c.l.b16 %v5306
    %v6024 = vunpack.c.h.b16 %v5306
    %v6025 = vunpack.c.l.b16 %v5307
    %v6026 = vunpack.c.h.b16 %v5307
    %v6027 = vunpack.c.l.b16 %v5308
    %v6028 = vunpack.c.h.b16 %v5308
    %v6029 = vunpack.c.l.b16 %v5309
    %v6030 = vunpack.c.h.b16 %v5309
    %v6031 = vunpack.c.l.b16 %v5310
    %v6032 = vunpack.c.h.b16 %v5310
    %v6033 = vunpack.c.l.b16 %v5311
    %v6034 = vunpack.c.h.b16 %v5311
    %v6035 = vunpack.c.l.b16 %v5312
    %v6036 = vunpack.c.h.b16 %v5312
    %v6037 = vunpack.c.l.b16 %v5313
    %v6038 = vunpack.c.h.b16 %v5313
    %v6039 = vunpack.c.l.b16 %v5314
    %v6040 = vunpack.c.h.b16 %v5314
    %v6041 = vunpack.c.l.b16 %v5315
    %v6042 = vunpack.c.h.b16 %v5315
    %v6043 = vunpack.c.l.b16 %v5316
    %v6044 = vunpack.c.h.b16 %v5316
    %v6045 = vunpack.c.l.b16 %v5317
    %v6046 = vunpack.c.h.b16 %v5317
    %v6047 = vunpack.c.l.b16 %v5318
    %v6048 = vunpack.c.h.b16 %v5318
    %v6049 = vunpack.c.l.b16 %v5319
    %v6050 = vunpack.c.h.b16 %v5319
    %v6051 = vunpack.c.l.b16 %v5320
    %v6052 = vunpack.c.h.b16 %v5320
    %v6053 = vunpack.c.l.b16 %v5321
    %v6054 = vunpack.c.h.b16 %v5321
    %v6055 = vunpack.c.l.b16 %v5322
    %v6056 = vunpack.c.h.b16 %v5322
    %v6057 = vunpack.c.l.b16 %v5323
    %v6058 = vunpack.c.h.b16 %v5323
    %v6059 = vunpack.c.l.b16 %v5324
    %v6060 = vunpack.c.h.b16 %v5324
    %v6061 = vunpack.c.l.b16 %v5325
    %v6062 = vunpack.c.h.b16 %v5325
    %v6063 = vunpack.c.l.b16 %v5326
    %v6064 = vunpack.c.h.b16 %v5326
    %v6065 = vunpack.c.l.b16 %v5327
    %v6066 = vunpack.c.h.b16 %v5327
    %v6067 = vunpack.c.l.b16 %v5328
    %v6068 = vunpack.c.h.b16 %v5328
    %v6069 = vunpack.c.l.b16 %v5329
    %v6070 = vunpack.c.h.b16 %v5329
    %v6071 = vunpack.c.l.b16 %v5330
    %v6072 = vunpack.c.h.b16 %v5330
    %v6073 = vunpack.c.l.b16 %v5331
    %v6074 = vunpack.c.h.b16 %v5331
    %v6075 = vunpack.c.l.b16 %v5332
    %v6076 = vunpack.c.h.b16 %v5332
    %v6077 = vunpack.c.l.b16 %v5333
    %v6078 = vunpack.c.h.b16 %v5333
    %v6079 = vunpack.c.l.b16 %v5334
    %v6080 = vunpack.c.h.b16 %v5334
    %v6081 = vunpack.c.l.b16 %v5335
    %v6082 = vunpack.c.h.b16 %v5335
    %v6083 = vunpack.c.l.b16 %v5336
    %v6084 = vunpack.c.h.b16 %v5336
    %v6085 = vunpack.c.l.b16 %v5337
    %v6086 = vunpack.c.h.b16 %v5337
    %v6087 = vunpack.c.l.b16 %v5338
    %v6088 = vunpack.c.h.b16 %v5338
    %v6089 = vunpack.c.l.b16 %v5339
    %v6090 = vunpack.c.h.b16 %v5339
    %v6091 = vunpack.c.l.b16 %v5340
    %v6092 = vunpack.c.h.b16 %v5340
    %v6093 = vunpack.c.l.b16 %v5341
    %v6094 = vunpack.c.h.b16 %v5341
    %v6095 = vunpack.c.l.b16 %v5342
    %v6096 = vunpack.c.h.b16 %v5342
    %v6097 = vunpack.c.l.b16 %v5343
    %v6098 = vunpack.c.h.b16 %v5343
    %v6099 = vunpack.c.l.b16 %v5344
    %v6100 = vunpack.c.h.b16 %v5344
    %v6101 = vunpack.c.l.b16 %v5345
    %v6102 = vunpack.c.h.b16 %v5345
    %v6103 = vunpack.c.l.b16 %v5346
    %v6104 = vunpack.c.h.b16 %v5346
    %v6105 = vunpack.c.l.b16 %v5347
    %v6106 = vunpack.c.h.b16 %v5347
    %v6107 = vunpack.c.l.b16 %v5348
    %v6108 = vunpack.c.h.b16 %v5348
    %v6109 = vunpack.c.l.b16 %v5349
    %v6110 = vunpack.c.h.b16 %v5349
    %v6111 = vunpack.c.l.b16 %v5350
    %v6112 = vunpack.c.h.b16 %v5350
    %v6113 = vunpack.c.l.b16 %v5351
    %v6114 = vunpack.c.h.b16 %v5351
    %v6115 = vunpack.c.l.b16 %v5352
    %v6116 = vunpack.c.h.b16 %v5352
    %v6117 = vunpack.c.l.b16 %v5353
    %v6118 = vunpack.c.h.b16 %v5353
    %v6119 = vunpack.c.l.b16 %v5354
    %v6120 = vunpack.c.h.b16 %v5354
    %v6121 = vunpack.c.l.b16 %v5355
    %v6122 = vunpack.c.h.b16 %v5355
    %v6123 = vunpack.c.l.b16 %v5356
    %v6124 = vunpack.c.h.b16 %v5356
    %v6125 = vpack.c.b16 %v5629, %v5613
    %v6126 = vpack.c.b16 %v5630, %v5614
    %v6127 = vpack.c.b16 %v5631, %v5615
    %v6128 = vpack.c.b16 %v5632, %v5616
    %v6129 = vpack.c.b16 %v5633, %v5617
    %v6130 = vpack.c.b16 %v5634, %v5618
    %v6131 = vpack.c.b16 %v5635, %v5619
    %v6132 = vpack.c.b16 %v5636, %v5620
    %v6133 = vpack.c.b16 %v5637, %v5621
    %v6134 = vpack.c.b16 %v5638, %v5622
    %v6135 = vpack.c.b16 %v5639, %v5623
    %v6136 = vpack.c.b16 %v5640, %v5624
    %v6137 = vpack.c.b16 %v5641, %v5625
    %v6138 = vpack.c.b16 %v5642, %v5626
    %v6139 = vpack.c.b16 %v5643, %v5627
    %v6140 = vpack.c.b16 %v5644, %v5628
    %v6141 = vpack.c.b16 %v5661, %v5645
    %v6142 = vpack.c.b16 %v5662, %v5646
    %v6143 = vpack.c.b16 %v5663, %v5647
    %v6144 = vpack.c.b16 %v5664, %v5648
    %v6145 = vpack.c.b16 %v5665, %v5649
    %v6146 = vpack.c.b16 %v5666, %v5650
    %v6147 = vpack.c.b16 %v5667, %v5651
    %v6148 = vpack.c.b16 %v5668, %v5652
    %v6149 = vpack.c.b16 %v5669, %v5653
    %v6150 = vpack.c.b16 %v5670, %v5654
    %v6151 = vpack.c.b16 %v5671, %v5655
    %v6152 = vpack.c.b16 %v5672, %v5656
    %v6153 = vpack.c.b16 %v5673, %v5657
    %v6154 = vpack.c.b16 %v5674, %v5658
    %v6155 = vpack.c.b16 %v5675, %v5659
    %v6156 = vpack.c.b16 %v5676, %v5660
    %v6157 = vpack.c.b16 %v5693, %v5677
    %v6158 = vpack.c.b16 %v5694, %v5678
    %v6159 = vpack.c.b16 %v5695, %v5679
    %v6160 = vpack.c.b16 %v5696, %v5680
    %v6161 = vpack.c.b16 %v5697, %v5681
    %v6162 = vpack.c.b16 %v5698, %v5682
    %v6163 = vpack.c.b16 %v5699, %v5683
    %v6164 = vpack.c.b16 %v5700, %v5684
    %v6165 = vpack.c.b16 %v5701, %v5685
    %v6166 = vpack.c.b16 %v5702, %v5686
    %v6167 = vpack.c.b16 %v5703, %v5687
    %v6168 = vpack.c.b16 %v5704, %v5688
    %v6169 = vpack.c.b16 %v5705, %v5689
    %v6170 = vpack.c.b16 %v5706, %v5690
    %v6171 = vpack.c.b16 %v5707, %v5691
    %v6172 = vpack.c.b16 %v5708, %v5692
    %v6173 = vpack.c.b16 %v5725, %v5709
    %v6174 = vpack.c.b16 %v5726, %v5710
    %v6175 = vpack.c.b16 %v5727, %v5711
    %v6176 = vpack.c.b16 %v5728, %v5712
    %v6177 = vpack.c.b16 %v5729, %v5713
    %v6178 = vpack.c.b16 %v5730, %v5714
    %v6179 = vpack.c.b16 %v5731, %v5715
    %v6180 = vpack.c.b16 %v5732, %v5716
    %v6181 = vpack.c.b16 %v5733, %v5717
    %v6182 = vpack.c.b16 %v5734, %v5718
    %v6183 = vpack.c.b16 %v5735, %v5719
    %v6184 = vpack.c.b16 %v5736, %v5720
    %v6185 = vpack.c.b16 %v5737, %v5721
    %v6186 = vpack.c.b16 %v5738, %v5722
    %v6187 = vpack.c.b16 %v5739, %v5723
    %v6188 = vpack.c.b16 %v5740, %v5724
    %v6189 = vpack.c.b16 %v5757, %v5741
    %v6190 = vpack.c.b16 %v5758, %v5742
    %v6191 = vpack.c.b16 %v5759, %v5743
    %v6192 = vpack.c.b16 %v5760, %v5744
    %v6193 = vpack.c.b16 %v5761, %v5745
    %v6194 = vpack.c.b16 %v5762, %v5746
    %v6195 = vpack.c.b16 %v5763, %v5747
    %v6196 = vpack.c.b16 %v5764, %v5748
    %v6197 = vpack.c.b16 %v5765, %v5749
    %v6198 = vpack.c.b16 %v5766, %v5750
    %v6199 = vpack.c.b16 %v5767, %v5751
    %v6200 = vpack.c.b16 %v5768, %v5752
    %v6201 = vpack.c.b16 %v5769, %v5753
    %v6202 = vpack.c.b16 %v5770, %v5754
    %v6203 = vpack.c.b16 %v5771, %v5755
    %v6204 = vpack.c.b16 %v5772, %v5756
    %v6205 = vpack.c.b16 %v5789, %v5773
    %v6206 = vpack.c.b16 %v5790, %v5774
    %v6207 = vpack.c.b16 %v5791, %v5775
    %v6208 = vpack.c.b16 %v5792, %v5776
    %v6209 = vpack.c.b16 %v5793, %v5777
    %v6210 = vpack.c.b16 %v5794, %v5778
    %v6211 = vpack.c.b16 %v5795, %v5779
    %v6212 = vpack.c.b16 %v5796, %v5780
    %v6213 = vpack.c.b16 %v5797, %v5781
    %v6214 = vpack.c.b16 %v5798, %v5782
    %v6215 = vpack.c.b16 %v5799, %v5783
    %v6216 = vpack.c.b16 %v5800, %v5784
    %v6217 = vpack.c.b16 %v5801, %v5785
    %v6218 = vpack.c.b16 %v5802, %v5786
    %v6219 = vpack.c.b16 %v5803, %v5787
    %v6220 = vpack.c.b16 %v5804, %v5788
    %v6221 = vpack.c.b16 %v5821, %v5805
    %v6222 = vpack.c.b16 %v5822, %v5806
    %v6223 = vpack.c.b16 %v5823, %v5807
    %v6224 = vpack.c.b16 %v5824, %v5808
    %v6225 = vpack.c.b16 %v5825, %v5809
    %v6226 = vpack.c.b16 %v5826, %v5810
    %v6227 = vpack.c.b16 %v5827, %v5811
    %v6228 = vpack.c.b16 %v5828, %v5812
    %v6229 = vpack.c.b16 %v5829, %v5813
    %v6230 = vpack.c.b16 %v5830, %v5814
    %v6231 = vpack.c.b16 %v5831, %v5815
    %v6232 = vpack.c.b16 %v5832, %v5816
    %v6233 = vpack.c.b16 %v5833, %v5817
    %v6234 = vpack.c.b16 %v5834, %v5818
    %v6235 = vpack.c.b16 %v5835, %v5819
    %v6236 = vpack.c.b16 %v5836, %v5820
    %v6237 = vpack.c.b16 %v5853, %v5837
    %v6238 = vpack.c.b16 %v5854, %v5838
    %v6239 = vpack.c.b16 %v5855, %v5839
    %v6240 = vpack.c.b16 %v5856, %v5840
    %v6241 = vpack.c.b16 %v5857, %v5841
    %v6242 = vpack.c.b16 %v5858, %v5842
    %v6243 = vpack.c.b16 %v5859, %v5843
    %v6244 = vpack.c.b16 %v5860, %v5844
    %v6245 = vpack.c.b16 %v5861, %v5845
    %v6246 = vpack.c.b16 %v5862, %v5846
    %v6247 = vpack.c.b16 %v5863, %v5847
    %v6248 = vpack.c.b16 %v5864, %v5848
    %v6249 = vpack.c.b16 %v5865, %v5849
    %v6250 = vpack.c.b16 %v5866, %v5850
    %v6251 = vpack.c.b16 %v5867, %v5851
    %v6252 = vpack.c.b16 %v5868, %v5852
    %v6253 = vpack.c.b16 %v5885, %v5869
    %v6254 = vpack.c.b16 %v5886, %v5870
    %v6255 = vpack.c.b16 %v5887, %v5871
    %v6256 = vpack.c.b16 %v5888, %v5872
    %v6257 = vpack.c.b16 %v5889, %v5873
    %v6258 = vpack.c.b16 %v5890, %v5874
    %v6259 = vpack.c.b16 %v5891, %v5875
    %v6260 = vpack.c.b16 %v5892, %v5876
    %v6261 = vpack.c.b16 %v5893, %v5877
    %v6262 = vpack.c.b16 %v5894, %v5878
    %v6263 = vpack.c.b16 %v5895, %v5879
    %v6264 = vpack.c.b16 %v5896, %v5880
    %v6265 = vpack.c.b16 %v5897, %v5881
    %v6266 = vpack.c.b16 %v5898, %v5882
    %v6267 = vpack.c.b16 %v5899, %v5883
    %v6268 = vpack.c.b16 %v5900, %v5884
    %v6269 = vpack.c.b16 %v5917, %v5901
    %v6270 = vpack.c.b16 %v5918, %v5902
    %v6271 = vpack.c.b16 %v5919, %v5903
    %v6272 = vpack.c.b16 %v5920, %v5904
    %v6273 = vpack.c.b16 %v5921, %v5905
    %v6274 = vpack.c.b16 %v5922, %v5906
    %v6275 = vpack.c.b16 %v5923, %v5907
    %v6276 = vpack.c.b16 %v5924, %v5908
    %v6277 = vpack.c.b16 %v5925, %v5909
    %v6278 = vpack.c.b16 %v5926, %v5910
    %v6279 = vpack.c.b16 %v5927, %v5911
    %v6280 = vpack.c.b16 %v5928, %v5912
    %v6281 = vpack.c.b16 %v5929, %v5913
    %v6282 = vpack.c.b16 %v5930, %v5914
    %v6283 = vpack.c.b16 %v5931, %v5915
    %v6284 = vpack.c.b16 %v5932, %v5916
    %v6285 = vpack.c.b16 %v5949, %v5933
    %v6286 = vpack.c.b16 %v5950, %v5934
    %v6287 = vpack.c.b16 %v5951, %v5935
    %v6288 = vpack.c.b16 %v5952, %v5936
    %v6289 = vpack.c.b16 %v5953, %v5937
    %v6290 = vpack.c.b16 %v5954, %v5938
    %v6291 = vpack.c.b16 %v5955, %v5939
    %v6292 = vpack.c.b16 %v5956, %v5940
    %v6293 = vpack.c.b16 %v5957, %v5941
    %v6294 = vpack.c.b16 %v5958, %v5942
    %v6295 = vpack.c.b16 %v5959, %v5943
    %v6296 = vpack.c.b16 %v5960, %v5944
    %v6297 = vpack.c.b16 %v5961, %v5945
    %v6298 = vpack.c.b16 %v5962, %v5946
    %v6299 = vpack.c.b16 %v5963, %v5947
    %v6300 = vpack.c.b16 %v5964, %v5948
    %v6301 = vpack.c.b16 %v5981, %v5965
    %v6302 = vpack.c.b16 %v5982, %v5966
    %v6303 = vpack.c.b16 %v5983, %v5967
    %v6304 = vpack.c.b16 %v5984, %v5968
    %v6305 = vpack.c.b16 %v5985, %v5969
    %v6306 = vpack.c.b16 %v5986, %v5970
    %v6307 = vpack.c.b16 %v5987, %v5971
    %v6308 = vpack.c.b16 %v5988, %v5972
    %v6309 = vpack.c.b16 %v5989, %v5973
    %v6310 = vpack.c.b16 %v5990, %v5974
    %v6311 = vpack.c.b16 %v5991, %v5975
    %v6312 = vpack.c.b16 %v5992, %v5976
    %v6313 = vpack.c.b16 %v5993, %v5977
    %v6314 = vpack.c.b16 %v5994, %v5978
    %v6315 = vpack.c.b16 %v5995, %v5979
    %v6316 = vpack.c.b16 %v5996, %v5980
    %v6317 = vpack.c.b16 %v6013, %v5997
    %v6318 = vpack.c.b16 %v6014, %v5998
    %v6319 = vpack.c.b16 %v6015, %v5999
    %v6320 = vpack.c.b16 %v6016, %v6000
    %v6321 = vpack.c.b16 %v6017, %v6001
    %v6322 = vpack.c.b16 %v6018, %v6002
    %v6323 = vpack.c.b16 %v6019, %v6003
    %v6324 = vpack.c.b16 %v6020, %v6004
    %v6325 = vpack.c.b16 %v6021, %v6005
    %v6326 = vpack.c.b16 %v6022, %v6006
    %v6327 = vpack.c.b16 %v6023, %v6007
    %v6328 = vpack.c.b16 %v6024, %v6008
    %v6329 = vpack.c.b16 %v6025, %v6009
    %v6330 = vpack.c.b16 %v6026, %v6010
    %v6331 = vpack.c.b16 %v6027, %v6011
    %v6332 = vpack.c.b16 %v6028, %v6012
    %v6333 = vpack.c.b16 %v6045, %v6029
    %v6334 = vpack.c.b16 %v6046, %v6030
    %v6335 = vpack.c.b16 %v6047, %v6031
    %v6336 = vpack.c.b16 %v6048, %v6032
    %v6337 = vpack.c.b16 %v6049, %v6033
    %v6338 = vpack.c.b16 %v6050, %v6034
    %v6339 = vpack.c.b16 %v6051, %v6035
    %v6340 = vpack.c.b16 %v6052, %v6036
    %v6341 = vpack.c.b16 %v6053, %v6037
    %v6342 = vpack.c.b16 %v6054, %v6038
    %v6343 = vpack.c.b16 %v6055, %v6039
    %v6344 = vpack.c.b16 %v6056, %v6040
    %v6345 = vpack.c.b16 %v6057, %v6041
    %v6346 = vpack.c.b16 %v6058, %v6042
    %v6347 = vpack.c.b16 %v6059, %v6043
    %v6348 = vpack.c.b16 %v6060, %v6044
    %v6349 = vpack.c.b16 %v6077, %v6061
    %v6350 = vpack.c.b16 %v6078, %v6062
    %v6351 = vpack.c.b16 %v6079, %v6063
    %v6352 = vpack.c.b16 %v6080, %v6064
    %v6353 = vpack.c.b16 %v6081, %v6065
    %v6354 = vpack.c.b16 %v6082, %v6066
    %v6355 = vpack.c.b16 %v6083, %v6067
    %v6356 = vpack.c.b16 %v6084, %v6068
    %v6357 = vpack.c.b16 %v6085, %v6069
    %v6358 = vpack.c.b16 %v6086, %v6070
    %v6359 = vpack.c.b16 %v6087, %v6071
    %v6360 = vpack.c.b16 %v6088, %v6072
    %v6361 = vpack.c.b16 %v6089, %v6073
    %v6362 = vpack.c.b16 %v6090, %v6074
    %v6363 = vpack.c.b16 %v6091, %v6075
    %v6364 = vpack.c.b16 %v6092, %v6076
    %v6365 = vpack.c.b16 %v6109, %v6093
    %v6366 = vpack.c.b16 %v6110, %v6094
    %v6367 = vpack.c.b16 %v6111, %v6095
    %v6368 = vpack.c.b16 %v6112, %v6096
    %v6369 = vpack.c.b16 %v6113, %v6097
    %v6370 = vpack.c.b16 %v6114, %v6098
    %v6371 = vpack.c.b16 %v6115, %v6099
    %v6372 = vpack.c.b16 %v6116, %v6100
    %v6373 = vpack.c.b16 %v6117, %v6101
    %v6374 = vpack.c.b16 %v6118, %v6102
    %v6375 = vpack.c.b16 %v6119, %v6103
    %v6376 = vpack.c.b16 %v6120, %v6104
    %v6377 = vpack.c.b16 %v6121, %v6105
    %v6378 = vpack.c.b16 %v6122, %v6106
    %v6379 = vpack.c.b16 %v6123, %v6107
    %v6380 = vpack.c.b16 %v6124, %v6108
    %6637 = vmatprep.subr.bf16.mxu0 %v6126
    %6638 = vmatpush1.bf16.msra.mxu0 %v6125
    %6639 = vmatprep.subr.bf16.mxu0 %v6142
    %6640 = vmatpush1.bf16.msra.mxu0 %v6141
    %6641 = vmatprep.subr.bf16.mxu0 %v6158
    %6642 = vmatpush1.bf16.msra.mxu0 %v6157
    %6643 = vmatprep.subr.bf16.mxu0 %v6174
    %6644 = vmatpush1.bf16.msra.mxu0 %v6173
    %6645 = vmatprep.subr.bf16.mxu0 %v6190
    %6646 = vmatpush1.bf16.msra.mxu0 %v6189
    %6647 = vmatprep.subr.bf16.mxu0 %v6206
    %6648 = vmatpush1.bf16.msra.mxu0 %v6205
    %6649 = vmatprep.subr.bf16.mxu0 %v6222
    %6650 = vmatpush1.bf16.msra.mxu0 %v6221
    %6651 = vmatprep.subr.bf16.mxu0 %v6238
    %6652 = vmatpush1.bf16.msra.mxu0 %v6237
    %6653 = vmatprep.subr.bf16.mxu0 %v6254
    %6654 = vmatpush1.bf16.msra.mxu0 %v6253
    %6655 = vmatprep.subr.bf16.mxu0 %v6270
    %6656 = vmatpush1.bf16.msra.mxu0 %v6269
    %6657 = vmatprep.subr.bf16.mxu0 %v6286
    %6658 = vmatpush1.bf16.msra.mxu0 %v6285
    %6659 = vmatprep.subr.bf16.mxu0 %v6302
    %6660 = vmatpush1.bf16.msra.mxu0 %v6301
    %6661 = vmatprep.subr.bf16.mxu0 %v6318
    %6662 = vmatpush1.bf16.msra.mxu0 %v6317
    %6663 = vmatprep.subr.bf16.mxu0 %v6334
    %6664 = vmatpush1.bf16.msra.mxu0 %v6333
    %6665 = vmatprep.subr.bf16.mxu0 %v6350
    %6666 = vmatpush1.bf16.msra.mxu0 %v6349
    %6667 = vmatprep.subr.bf16.mxu0 %v6366
    %6668 = vmatpush1.bf16.msra.mxu0 %v6365
    %6669 = vmatprep.mubr.bf16.mxu0 %v5100
    %6670 = vmatmul.mubr.bf16.gmra.mrb[0].mxu0 %v5099
    %v6671 = vpop.f32.mrb[0].mxu0
    %v6672 = vadd.f32 0.0, %v6671
    %v6673 = vpop.f32.mrb[0].mxu0
    %v6674 = vadd.f32 0.0, %v6673
    %v6675 = vpop.f32.mrb[0].mxu0
    %v6676 = vpop.f32.mrb[0].mxu0
    %6677 = vdwg.mxu0
    %6678 = vmatprep.subr.bf16.mxu0 %v6128
    %6679 = vmatpush1.bf16.msra.mxu0 %v6127
    %6680 = vmatprep.subr.bf16.mxu0 %v6144
    %6681 = vmatpush1.bf16.msra.mxu0 %v6143
    %6682 = vmatprep.subr.bf16.mxu0 %v6160
    %6683 = vmatpush1.bf16.msra.mxu0 %v6159
    %6684 = vmatprep.subr.bf16.mxu0 %v6176
    %6685 = vmatpush1.bf16.msra.mxu0 %v6175
    %6686 = vmatprep.subr.bf16.mxu0 %v6192
    %6687 = vmatpush1.bf16.msra.mxu0 %v6191
    %6688 = vmatprep.subr.bf16.mxu0 %v6208
    %6689 = vmatpush1.bf16.msra.mxu0 %v6207
    %6690 = vmatprep.subr.bf16.mxu0 %v6224
    %6691 = vmatpush1.bf16.msra.mxu0 %v6223
    %6692 = vmatprep.subr.bf16.mxu0 %v6240
    %6693 = vmatpush1.bf16.msra.mxu0 %v6239
    %6694 = vmatprep.subr.bf16.mxu0 %v6256
    %6695 = vmatpush1.bf16.msra.mxu0 %v6255
    %6696 = vmatprep.subr.bf16.mxu0 %v6272
    %6697 = vmatpush1.bf16.msra.mxu0 %v6271
    %6698 = vmatprep.subr.bf16.mxu0 %v6288
    %6699 = vmatpush1.bf16.msra.mxu0 %v6287
    %6700 = vmatprep.subr.bf16.mxu0 %v6304
    %6701 = vmatpush1.bf16.msra.mxu0 %v6303
    %6702 = vmatprep.subr.bf16.mxu0 %v6320
    %6703 = vmatpush1.bf16.msra.mxu0 %v6319
    %6704 = vmatprep.subr.bf16.mxu0 %v6336
    %6705 = vmatpush1.bf16.msra.mxu0 %v6335
    %6706 = vmatprep.subr.bf16.mxu0 %v6352
    %6707 = vmatpush1.bf16.msra.mxu0 %v6351
    %6708 = vmatprep.subr.bf16.mxu0 %v6368
    %6709 = vmatpush1.bf16.msra.mxu0 %v6367
    %6710 = vmatprep.mubr.bf16.mxu0 %v5100
    %6711 = vmatmul.mubr.bf16.gmra.mrb[0].mxu0 %v5099
    %v6712 = vpop.f32.mrb[0].mxu0
    %v6713 = vadd.f32 0.0, %v6712
    %v6714 = vpop.f32.mrb[0].mxu0
    %v6715 = vadd.f32 0.0, %v6714
    %v6716 = vpop.f32.mrb[0].mxu0
    %v6717 = vpop.f32.mrb[0].mxu0
    %6718 = vdwg.mxu0
    %6719 = vmatprep.subr.bf16.mxu0 %v6130
    %6720 = vmatpush1.bf16.msra.mxu0 %v6129
    %6721 = vmatprep.subr.bf16.mxu0 %v6146
    %6722 = vmatpush1.bf16.msra.mxu0 %v6145
    %6723 = vmatprep.subr.bf16.mxu0 %v6162
    %6724 = vmatpush1.bf16.msra.mxu0 %v6161
    %6725 = vmatprep.subr.bf16.mxu0 %v6178
    %6726 = vmatpush1.bf16.msra.mxu0 %v6177
    %6727 = vmatprep.subr.bf16.mxu0 %v6194
    %6728 = vmatpush1.bf16.msra.mxu0 %v6193
    %6729 = vmatprep.subr.bf16.mxu0 %v6210
    %6730 = vmatpush1.bf16.msra.mxu0 %v6209
    %6731 = vmatprep.subr.bf16.mxu0 %v6226
    %6732 = vmatpush1.bf16.msra.mxu0 %v6225
    %6733 = vmatprep.subr.bf16.mxu0 %v6242
    %6734 = vmatpush1.bf16.msra.mxu0 %v6241
    %6735 = vmatprep.subr.bf16.mxu0 %v6258
    %6736 = vmatpush1.bf16.msra.mxu0 %v6257
    %6737 = vmatprep.subr.bf16.mxu0 %v6274
    %6738 = vmatpush1.bf16.msra.mxu0 %v6273
    %6739 = vmatprep.subr.bf16.mxu0 %v6290
    %6740 = vmatpush1.bf16.msra.mxu0 %v6289
    %6741 = vmatprep.subr.bf16.mxu0 %v6306
    %6742 = vmatpush1.bf16.msra.mxu0 %v6305
    %6743 = vmatprep.subr.bf16.mxu0 %v6322
    %6744 = vmatpush1.bf16.msra.mxu0 %v6321
    %6745 = vmatprep.subr.bf16.mxu0 %v6338
    %6746 = vmatpush1.bf16.msra.mxu0 %v6337
    %6747 = vmatprep.subr.bf16.mxu0 %v6354
    %6748 = vmatpush1.bf16.msra.mxu0 %v6353
    %6749 = vmatprep.subr.bf16.mxu0 %v6370
    %6750 = vmatpush1.bf16.msra.mxu0 %v6369
    %6751 = vmatprep.mubr.bf16.mxu0 %v5100
    %6752 = vmatmul.mubr.bf16.gmra.mrb[0].mxu0 %v5099
    %v6753 = vpop.f32.mrb[0].mxu0
    %v6754 = vadd.f32 0.0, %v6753
    %v6755 = vpop.f32.mrb[0].mxu0
    %v6756 = vadd.f32 0.0, %v6755
    %v6757 = vpop.f32.mrb[0].mxu0
    %v6758 = vpop.f32.mrb[0].mxu0
    %6759 = vdwg.mxu0
    %6760 = vmatprep.subr.bf16.mxu0 %v6132
    %6761 = vmatpush1.bf16.msra.mxu0 %v6131
    %6762 = vmatprep.subr.bf16.mxu0 %v6148
    %6763 = vmatpush1.bf16.msra.mxu0 %v6147
    %6764 = vmatprep.subr.bf16.mxu0 %v6164
    %6765 = vmatpush1.bf16.msra.mxu0 %v6163
    %6766 = vmatprep.subr.bf16.mxu0 %v6180
    %6767 = vmatpush1.bf16.msra.mxu0 %v6179
    %6768 = vmatprep.subr.bf16.mxu0 %v6196
    %6769 = vmatpush1.bf16.msra.mxu0 %v6195
    %6770 = vmatprep.subr.bf16.mxu0 %v6212
    %6771 = vmatpush1.bf16.msra.mxu0 %v6211
    %6772 = vmatprep.subr.bf16.mxu0 %v6228
    %6773 = vmatpush1.bf16.msra.mxu0 %v6227
    %6774 = vmatprep.subr.bf16.mxu0 %v6244
    %6775 = vmatpush1.bf16.msra.mxu0 %v6243
    %6776 = vmatprep.subr.bf16.mxu0 %v6260
    %6777 = vmatpush1.bf16.msra.mxu0 %v6259
    %6778 = vmatprep.subr.bf16.mxu0 %v6276
    %6779 = vmatpush1.bf16.msra.mxu0 %v6275
    %6780 = vmatprep.subr.bf16.mxu0 %v6292
    %6781 = vmatpush1.bf16.msra.mxu0 %v6291
    %6782 = vmatprep.subr.bf16.mxu0 %v6308
    %6783 = vmatpush1.bf16.msra.mxu0 %v6307
    %6784 = vmatprep.subr.bf16.mxu0 %v6324
    %6785 = vmatpush1.bf16.msra.mxu0 %v6323
    %6786 = vmatprep.subr.bf16.mxu0 %v6340
    %6787 = vmatpush1.bf16.msra.mxu0 %v6339
    %6788 = vmatprep.subr.bf16.mxu0 %v6356
    %6789 = vmatpush1.bf16.msra.mxu0 %v6355
    %6790 = vmatprep.subr.bf16.mxu0 %v6372
    %6791 = vmatpush1.bf16.msra.mxu0 %v6371
    %6792 = vmatprep.mubr.bf16.mxu0 %v5100
    %6793 = vmatmul.mubr.bf16.gmra.mrb[0].mxu0 %v5099
    %v6794 = vpop.f32.mrb[0].mxu0
    %v6795 = vadd.f32 0.0, %v6794
    %v6796 = vpop.f32.mrb[0].mxu0
    %v6797 = vadd.f32 0.0, %v6796
    %v6798 = vpop.f32.mrb[0].mxu0
    %v6799 = vpop.f32.mrb[0].mxu0
    %6800 = vdwg.mxu0
    %6801 = vmatprep.subr.bf16.mxu0 %v6134
    %6802 = vmatpush1.bf16.msra.mxu0 %v6133
    %6803 = vmatprep.subr.bf16.mxu0 %v6150
    %6804 = vmatpush1.bf16.msra.mxu0 %v6149
    %6805 = vmatprep.subr.bf16.mxu0 %v6166
    %6806 = vmatpush1.bf16.msra.mxu0 %v6165
    %6807 = vmatprep.subr.bf16.mxu0 %v6182
    %6808 = vmatpush1.bf16.msra.mxu0 %v6181
    %6809 = vmatprep.subr.bf16.mxu0 %v6198
    %6810 = vmatpush1.bf16.msra.mxu0 %v6197
    %6811 = vmatprep.subr.bf16.mxu0 %v6214
    %6812 = vmatpush1.bf16.msra.mxu0 %v6213
    %6813 = vmatprep.subr.bf16.mxu0 %v6230
    %6814 = vmatpush1.bf16.msra.mxu0 %v6229
    %6815 = vmatprep.subr.bf16.mxu0 %v6246
    %6816 = vmatpush1.bf16.msra.mxu0 %v6245
    %6817 = vmatprep.subr.bf16.mxu0 %v6262
    %6818 = vmatpush1.bf16.msra.mxu0 %v6261
    %6819 = vmatprep.subr.bf16.mxu0 %v6278
    %6820 = vmatpush1.bf16.msra.mxu0 %v6277
    %6821 = vmatprep.subr.bf16.mxu0 %v6294
    %6822 = vmatpush1.bf16.msra.mxu0 %v6293
    %6823 = vmatprep.subr.bf16.mxu0 %v6310
    %6824 = vmatpush1.bf16.msra.mxu0 %v6309
    %6825 = vmatprep.subr.bf16.mxu0 %v6326
    %6826 = vmatpush1.bf16.msra.mxu0 %v6325
    %6827 = vmatprep.subr.bf16.mxu0 %v6342
    %6828 = vmatpush1.bf16.msra.mxu0 %v6341
    %6829 = vmatprep.subr.bf16.mxu0 %v6358
    %6830 = vmatpush1.bf16.msra.mxu0 %v6357
    %6831 = vmatprep.subr.bf16.mxu0 %v6374
    %6832 = vmatpush1.bf16.msra.mxu0 %v6373
    %6833 = vmatprep.mubr.bf16.mxu0 %v5100
    %6834 = vmatmul.mubr.bf16.gmra.mrb[0].mxu0 %v5099
    %v6835 = vpop.f32.mrb[0].mxu0
    %v6836 = vadd.f32 0.0, %v6835
    %v6837 = vpop.f32.mrb[0].mxu0
    %v6838 = vadd.f32 0.0, %v6837
    %v6839 = vpop.f32.mrb[0].mxu0
    %v6840 = vpop.f32.mrb[0].mxu0
    %6841 = vdwg.mxu0
    %6842 = vmatprep.subr.bf16.mxu0 %v6136
    %6843 = vmatpush1.bf16.msra.mxu0 %v6135
    %6844 = vmatprep.subr.bf16.mxu0 %v6152
    %6845 = vmatpush1.bf16.msra.mxu0 %v6151
    %6846 = vmatprep.subr.bf16.mxu0 %v6168
    %6847 = vmatpush1.bf16.msra.mxu0 %v6167
    %6848 = vmatprep.subr.bf16.mxu0 %v6184
    %6849 = vmatpush1.bf16.msra.mxu0 %v6183
    %6850 = vmatprep.subr.bf16.mxu0 %v6200
    %6851 = vmatpush1.bf16.msra.mxu0 %v6199
    %6852 = vmatprep.subr.bf16.mxu0 %v6216
    %6853 = vmatpush1.bf16.msra.mxu0 %v6215
    %6854 = vmatprep.subr.bf16.mxu0 %v6232
    %6855 = vmatpush1.bf16.msra.mxu0 %v6231
    %6856 = vmatprep.subr.bf16.mxu0 %v6248
    %6857 = vmatpush1.bf16.msra.mxu0 %v6247
    %6858 = vmatprep.subr.bf16.mxu0 %v6264
    %6859 = vmatpush1.bf16.msra.mxu0 %v6263
    %6860 = vmatprep.subr.bf16.mxu0 %v6280
    %6861 = vmatpush1.bf16.msra.mxu0 %v6279
    %6862 = vmatprep.subr.bf16.mxu0 %v6296
    %6863 = vmatpush1.bf16.msra.mxu0 %v6295
    %6864 = vmatprep.subr.bf16.mxu0 %v6312
    %6865 = vmatpush1.bf16.msra.mxu0 %v6311
    %6866 = vmatprep.subr.bf16.mxu0 %v6328
    %6867 = vmatpush1.bf16.msra.mxu0 %v6327
    %6868 = vmatprep.subr.bf16.mxu0 %v6344
    %6869 = vmatpush1.bf16.msra.mxu0 %v6343
    %6870 = vmatprep.subr.bf16.mxu0 %v6360
    %6871 = vmatpush1.bf16.msra.mxu0 %v6359
    %6872 = vmatprep.subr.bf16.mxu0 %v6376
    %6873 = vmatpush1.bf16.msra.mxu0 %v6375
    %6874 = vmatprep.mubr.bf16.mxu0 %v5100
    %6875 = vmatmul.mubr.bf16.gmra.mrb[0].mxu0 %v5099
    %v6876 = vpop.f32.mrb[0].mxu0
    %v6877 = vadd.f32 0.0, %v6876
    %v6878 = vpop.f32.mrb[0].mxu0
    %v6879 = vadd.f32 0.0, %v6878
    %v6880 = vpop.f32.mrb[0].mxu0
    %v6881 = vpop.f32.mrb[0].mxu0
    %6882 = vdwg.mxu0
    %6883 = vmatprep.subr.bf16.mxu0 %v6138
    %6884 = vmatpush1.bf16.msra.mxu0 %v6137
    %6885 = vmatprep.subr.bf16.mxu0 %v6154
    %6886 = vmatpush1.bf16.msra.mxu0 %v6153
    %6887 = vmatprep.subr.bf16.mxu0 %v6170
    %6888 = vmatpush1.bf16.msra.mxu0 %v6169
    %6889 = vmatprep.subr.bf16.mxu0 %v6186
    %6890 = vmatpush1.bf16.msra.mxu0 %v6185
    %6891 = vmatprep.subr.bf16.mxu0 %v6202
    %6892 = vmatpush1.bf16.msra.mxu0 %v6201
    %6893 = vmatprep.subr.bf16.mxu0 %v6218
    %6894 = vmatpush1.bf16.msra.mxu0 %v6217
    %6895 = vmatprep.subr.bf16.mxu0 %v6234
    %6896 = vmatpush1.bf16.msra.mxu0 %v6233
    %6897 = vmatprep.subr.bf16.mxu0 %v6250
    %6898 = vmatpush1.bf16.msra.mxu0 %v6249
    %6899 = vmatprep.subr.bf16.mxu0 %v6266
    %6900 = vmatpush1.bf16.msra.mxu0 %v6265
    %6901 = vmatprep.subr.bf16.mxu0 %v6282
    %6902 = vmatpush1.bf16.msra.mxu0 %v6281
    %6903 = vmatprep.subr.bf16.mxu0 %v6298
    %6904 = vmatpush1.bf16.msra.mxu0 %v6297
    %6905 = vmatprep.subr.bf16.mxu0 %v6314
    %6906 = vmatpush1.bf16.msra.mxu0 %v6313
    %6907 = vmatprep.subr.bf16.mxu0 %v6330
    %6908 = vmatpush1.bf16.msra.mxu0 %v6329
    %6909 = vmatprep.subr.bf16.mxu0 %v6346
    %6910 = vmatpush1.bf16.msra.mxu0 %v6345
    %6911 = vmatprep.subr.bf16.mxu0 %v6362
    %6912 = vmatpush1.bf16.msra.mxu0 %v6361
    %6913 = vmatprep.subr.bf16.mxu0 %v6378
    %6914 = vmatpush1.bf16.msra.mxu0 %v6377
    %6915 = vmatprep.mubr.bf16.mxu0 %v5100
    %6916 = vmatmul.mubr.bf16.gmra.mrb[0].mxu0 %v5099
    %v6917 = vpop.f32.mrb[0].mxu0
    %v6918 = vadd.f32 0.0, %v6917
    %v6919 = vpop.f32.mrb[0].mxu0
    %v6920 = vadd.f32 0.0, %v6919
    %v6921 = vpop.f32.mrb[0].mxu0
    %v6922 = vpop.f32.mrb[0].mxu0
    %6923 = vdwg.mxu0
    %6924 = vmatprep.subr.bf16.mxu0 %v6140
    %6925 = vmatpush1.bf16.msra.mxu0 %v6139
    %6926 = vmatprep.subr.bf16.mxu0 %v6156
    %6927 = vmatpush1.bf16.msra.mxu0 %v6155
    %6928 = vmatprep.subr.bf16.mxu0 %v6172
    %6929 = vmatpush1.bf16.msra.mxu0 %v6171
    %6930 = vmatprep.subr.bf16.mxu0 %v6188
    %6931 = vmatpush1.bf16.msra.mxu0 %v6187
    %6932 = vmatprep.subr.bf16.mxu0 %v6204
    %6933 = vmatpush1.bf16.msra.mxu0 %v6203
    %6934 = vmatprep.subr.bf16.mxu0 %v6220
    %6935 = vmatpush1.bf16.msra.mxu0 %v6219
    %6936 = vmatprep.subr.bf16.mxu0 %v6236
    %6937 = vmatpush1.bf16.msra.mxu0 %v6235
    %6938 = vmatprep.subr.bf16.mxu0 %v6252
    %6939 = vmatpush1.bf16.msra.mxu0 %v6251
    %6940 = vmatprep.subr.bf16.mxu0 %v6268
    %6941 = vmatpush1.bf16.msra.mxu0 %v6267
    %6942 = vmatprep.subr.bf16.mxu0 %v6284
    %6943 = vmatpush1.bf16.msra.mxu0 %v6283
    %6944 = vmatprep.subr.bf16.mxu0 %v6300
    %6945 = vmatpush1.bf16.msra.mxu0 %v6299
    %6946 = vmatprep.subr.bf16.mxu0 %v6316
    %6947 = vmatpush1.bf16.msra.mxu0 %v6315
    %6948 = vmatprep.subr.bf16.mxu0 %v6332
    %6949 = vmatpush1.bf16.msra.mxu0 %v6331
    %6950 = vmatprep.subr.bf16.mxu0 %v6348
    %6951 = vmatpush1.bf16.msra.mxu0 %v6347
    %6952 = vmatprep.subr.bf16.mxu0 %v6364
    %6953 = vmatpush1.bf16.msra.mxu0 %v6363
    %6954 = vmatprep.subr.bf16.mxu0 %v6380
    %6955 = vmatpush1.bf16.msra.mxu0 %v6379
    %6956 = vmatprep.mubr.bf16.mxu0 %v5100
    %6957 = vmatmul.mubr.bf16.gmra.mrb[0].mxu0 %v5099
    %v6958 = vpop.f32.mrb[0].mxu0
    %v6959 = vadd.f32 0.0, %v6958
    %v6960 = vpop.f32.mrb[0].mxu0
    %v6961 = vadd.f32 0.0, %v6960
    %v6962 = vpop.f32.mrb[0].mxu0
    %v6963 = vpop.f32.mrb[0].mxu0
    %6964 = vdwg.mxu0
    %v6965 = vld [vmem:[%s53] sm:$0xf]
    %v6966 = vld [vmem:[%s55] sm:$0x3]
    %v6968 = vsel %vm4845, %v6966, 0
    %v6971 = vsel %vm4849, %v6672, 0
    %v6974 = vsel %vm4849, %v6674, 0
    %v6977 = vsel %vm4849, %v6713, 0
    %v6980 = vsel %vm4849, %v6715, 0
    %6982 = vmatprep.subr.mxu0 %v6974
    %6983 = vmatpush1.msra.mxu0 %v6971
    %6984 = vmatprep.subr.mxu0 0.0
    %6985 = vmatpush1.msra.mxu0 0.0
    %6986 = vmatprep.subr.mxu0 0.0
    %6987 = vmatpush1.msra.mxu0 0.0
    %6988 = vmatprep.subr.mxu0 0.0
    %6989 = vmatpush1.msra.mxu0 0.0
    %6990 = vmatprep.subr.mxu0 0.0
    %6991 = vmatpush1.msra.mxu0 0.0
    %6992 = vmatprep.subr.mxu0 0.0
    %6993 = vmatpush1.msra.mxu0 0.0
    %6994 = vmatprep.subr.mxu0 0.0
    %6995 = vmatpush1.msra.mxu0 0.0
    %6996 = vmatprep.subr.mxu0 0.0
    %6997 = vmatpush1.msra.mxu0 0.0
    %6998 = vmatprep.subr.mxu0 0.0
    %6999 = vmatpush1.msra.mxu0 0.0
    %7000 = vmatprep.subr.mxu0 0.0
    %7001 = vmatpush1.msra.mxu0 0.0
    %7002 = vmatprep.subr.mxu0 0.0
    %7003 = vmatpush1.msra.mxu0 0.0
    %7004 = vmatprep.subr.mxu0 0.0
    %7005 = vmatpush1.msra.mxu0 0.0
    %7006 = vmatprep.subr.mxu0 0.0
    %7007 = vmatpush1.msra.mxu0 0.0
    %7008 = vmatprep.subr.mxu0 0.0
    %7009 = vmatpush1.msra.mxu0 0.0
    %7010 = vmatprep.subr.mxu0 0.0
    %7011 = vmatpush1.msra.mxu0 0.0
    %7012 = vmatprep.subr.mxu0 0.0
    %7013 = vmatpush1.msra.mxu0 0.0
    %7014 = vmatprep.subr.mxu0 0.0
    %7015 = vmatpush1.msra.mxu0 0.0
    %7016 = vmatprep.subr.mxu0 0.0
    %7017 = vmatpush1.msra.mxu0 0.0
    %7018 = vmatprep.subr.mxu0 0.0
    %7019 = vmatpush1.msra.mxu0 0.0
    %7020 = vmatprep.subr.mxu0 0.0
    %7021 = vmatpush1.msra.mxu0 0.0
    %7022 = vmatprep.subr.mxu0 0.0
    %7023 = vmatpush1.msra.mxu0 0.0
    %7024 = vmatprep.subr.mxu0 0.0
    %7025 = vmatpush1.msra.mxu0 0.0
    %7026 = vmatprep.subr.mxu0 0.0
    %7027 = vmatpush1.msra.mxu0 0.0
    %7028 = vmatprep.subr.mxu0 0.0
    %7029 = vmatpush1.msra.mxu0 0.0
    %7030 = vmatprep.subr.mxu0 0.0
    %7031 = vmatpush1.msra.mxu0 0.0
    %7032 = vmatprep.subr.mxu0 0.0
    %7033 = vmatpush1.msra.mxu0 0.0
    %7034 = vmatprep.subr.mxu0 0.0
    %7035 = vmatpush1.msra.mxu0 0.0
    %7036 = vmatprep.subr.mxu0 0.0
    %7037 = vmatpush1.msra.mxu0 0.0
    %7038 = vmatprep.subr.mxu0 0.0
    %7039 = vmatpush1.msra.mxu0 0.0
    %7040 = vmatprep.subr.mxu0 0.0
    %7041 = vmatpush1.msra.mxu0 0.0
    %7042 = vmatprep.subr.mxu0 0.0
    %7043 = vmatpush1.msra.mxu0 0.0
    %7044 = vmatprep.subr.mxu0 0.0
    %7045 = vmatpush1.msra.mxu0 0.0
    %7046 = vmatprep.mubr.f32.mxu0 0.0
    %7047 = vmatmul.mubr.f32.gmra.mrb[0].mxu0 %v6968
    %v7048 = vpop.f32.mrb[0].mxu0
    %v7049 = vadd.f32 0.0, %v7048
    %v7050 = vpop.f32.mrb[0].mxu0
    %v7051 = vadd.f32 0.0, %v7050
    %7052 = vdwg.mxu0
    %7053 = vmatprep.subr.mxu0 %v6980
    %7054 = vmatpush1.msra.mxu0 %v6977
    %7055 = vmatprep.subr.mxu0 0.0
    %7056 = vmatpush1.msra.mxu0 0.0
    %7057 = vmatprep.subr.mxu0 0.0
    %7058 = vmatpush1.msra.mxu0 0.0
    %7059 = vmatprep.subr.mxu0 0.0
    %7060 = vmatpush1.msra.mxu0 0.0
    %7061 = vmatprep.subr.mxu0 0.0
    %7062 = vmatpush1.msra.mxu0 0.0
    %7063 = vmatprep.subr.mxu0 0.0
    %7064 = vmatpush1.msra.mxu0 0.0
    %7065 = vmatprep.subr.mxu0 0.0
    %7066 = vmatpush1.msra.mxu0 0.0
    %7067 = vmatprep.subr.mxu0 0.0
    %7068 = vmatpush1.msra.mxu0 0.0
    %7069 = vmatprep.subr.mxu0 0.0
    %7070 = vmatpush1.msra.mxu0 0.0
    %7071 = vmatprep.subr.mxu0 0.0
    %7072 = vmatpush1.msra.mxu0 0.0
    %7073 = vmatprep.subr.mxu0 0.0
    %7074 = vmatpush1.msra.mxu0 0.0
    %7075 = vmatprep.subr.mxu0 0.0
    %7076 = vmatpush1.msra.mxu0 0.0
    %7077 = vmatprep.subr.mxu0 0.0
    %7078 = vmatpush1.msra.mxu0 0.0
    %7079 = vmatprep.subr.mxu0 0.0
    %7080 = vmatpush1.msra.mxu0 0.0
    %7081 = vmatprep.subr.mxu0 0.0
    %7082 = vmatpush1.msra.mxu0 0.0
    %7083 = vmatprep.subr.mxu0 0.0
    %7084 = vmatpush1.msra.mxu0 0.0
    %7085 = vmatprep.subr.mxu0 0.0
    %7086 = vmatpush1.msra.mxu0 0.0
    %7087 = vmatprep.subr.mxu0 0.0
    %7088 = vmatpush1.msra.mxu0 0.0
    %7089 = vmatprep.subr.mxu0 0.0
    %7090 = vmatpush1.msra.mxu0 0.0
    %7091 = vmatprep.subr.mxu0 0.0
    %7092 = vmatpush1.msra.mxu0 0.0
    %7093 = vmatprep.subr.mxu0 0.0
    %7094 = vmatpush1.msra.mxu0 0.0
    %7095 = vmatprep.subr.mxu0 0.0
    %7096 = vmatpush1.msra.mxu0 0.0
    %7097 = vmatprep.subr.mxu0 0.0
    %7098 = vmatpush1.msra.mxu0 0.0
    %7099 = vmatprep.subr.mxu0 0.0
    %7100 = vmatpush1.msra.mxu0 0.0
    %7101 = vmatprep.subr.mxu0 0.0
    %7102 = vmatpush1.msra.mxu0 0.0
    %7103 = vmatprep.subr.mxu0 0.0
    %7104 = vmatpush1.msra.mxu0 0.0
    %7105 = vmatprep.subr.mxu0 0.0
    %7106 = vmatpush1.msra.mxu0 0.0
    %7107 = vmatprep.subr.mxu0 0.0
    %7108 = vmatpush1.msra.mxu0 0.0
    %7109 = vmatprep.subr.mxu0 0.0
    %7110 = vmatpush1.msra.mxu0 0.0
    %7111 = vmatprep.subr.mxu0 0.0
    %7112 = vmatpush1.msra.mxu0 0.0
    %7113 = vmatprep.subr.mxu0 0.0
    %7114 = vmatpush1.msra.mxu0 0.0
    %7115 = vmatprep.subr.mxu0 0.0
    %7116 = vmatpush1.msra.mxu0 0.0
    %7117 = vmatprep.mubr.f32.mxu0 0.0
    %7118 = vmatmul.mubr.f32.gmra.mrb[0].mxu0 %v6968
    %v7119 = vpop.f32.mrb[0].mxu0
    %v7120 = vadd.f32 0.0, %v7119
    %v7121 = vpop.f32.mrb[0].mxu0
    %v7122 = vadd.f32 0.0, %v7121
    %7123 = vdwg.mxu0
    %v7125 = vlaneseq
    %v7126 = vshrl.u32 %v7125, 7
    %v7127 = vsub.s32 0, %v7126
    %v7128 = vrot.slane %v6965, %v7127
    %v7129 = vlaneseq
    %v7130 = vshrl.u32 %v7129, 7
    %v7131 = vsub.s32 1, %v7130
    %v7132 = vrot.slane %v6965, %v7131
    %v7133 = vlaneseq
    %v7134 = vshrl.u32 %v7133, 7
    %v7135 = vsub.s32 2, %v7134
    %v7136 = vrot.slane %v6965, %v7135
    %v7137 = vlaneseq
    %v7138 = vshrl.u32 %v7137, 7
    %v7139 = vsub.s32 3, %v7138
    %v7140 = vrot.slane %v6965, %v7139
    %v7145 = vadd.f32 %v7128, %v7049
    %v7146 = vadd.f32 %v7132, %v7051
    %v7147 = vadd.f32 %v7136, %v7120
    %v7148 = vadd.f32 %v7140, %v7122
    %s7149 = scalar_lea.vmem %s55, 2
    %v7150 = vld [vmem:[%s7149] sm:$0x3]
    %v7152 = vsel %vm4845, %v7150, 0
    %v7155 = vsel %vm4849, %v6754, 0
    %v7158 = vsel %vm4849, %v6756, 0
    %v7161 = vsel %vm4849, %v6795, 0
    %v7164 = vsel %vm4849, %v6797, 0
    %7166 = vmatprep.subr.mxu0 %v7158
    %7167 = vmatpush1.msra.mxu0 %v7155
    %7168 = vmatprep.subr.mxu0 0.0
    %7169 = vmatpush1.msra.mxu0 0.0
    %7170 = vmatprep.subr.mxu0 0.0
    %7171 = vmatpush1.msra.mxu0 0.0
    %7172 = vmatprep.subr.mxu0 0.0
    %7173 = vmatpush1.msra.mxu0 0.0
    %7174 = vmatprep.subr.mxu0 0.0
    %7175 = vmatpush1.msra.mxu0 0.0
    %7176 = vmatprep.subr.mxu0 0.0
    %7177 = vmatpush1.msra.mxu0 0.0
    %7178 = vmatprep.subr.mxu0 0.0
    %7179 = vmatpush1.msra.mxu0 0.0
    %7180 = vmatprep.subr.mxu0 0.0
    %7181 = vmatpush1.msra.mxu0 0.0
    %7182 = vmatprep.subr.mxu0 0.0
    %7183 = vmatpush1.msra.mxu0 0.0
    %7184 = vmatprep.subr.mxu0 0.0
    %7185 = vmatpush1.msra.mxu0 0.0
    %7186 = vmatprep.subr.mxu0 0.0
    %7187 = vmatpush1.msra.mxu0 0.0
    %7188 = vmatprep.subr.mxu0 0.0
    %7189 = vmatpush1.msra.mxu0 0.0
    %7190 = vmatprep.subr.mxu0 0.0
    %7191 = vmatpush1.msra.mxu0 0.0
    %7192 = vmatprep.subr.mxu0 0.0
    %7193 = vmatpush1.msra.mxu0 0.0
    %7194 = vmatprep.subr.mxu0 0.0
    %7195 = vmatpush1.msra.mxu0 0.0
    %7196 = vmatprep.subr.mxu0 0.0
    %7197 = vmatpush1.msra.mxu0 0.0
    %7198 = vmatprep.subr.mxu0 0.0
    %7199 = vmatpush1.msra.mxu0 0.0
    %7200 = vmatprep.subr.mxu0 0.0
    %7201 = vmatpush1.msra.mxu0 0.0
    %7202 = vmatprep.subr.mxu0 0.0
    %7203 = vmatpush1.msra.mxu0 0.0
    %7204 = vmatprep.subr.mxu0 0.0
    %7205 = vmatpush1.msra.mxu0 0.0
    %7206 = vmatprep.subr.mxu0 0.0
    %7207 = vmatpush1.msra.mxu0 0.0
    %7208 = vmatprep.subr.mxu0 0.0
    %7209 = vmatpush1.msra.mxu0 0.0
    %7210 = vmatprep.subr.mxu0 0.0
    %7211 = vmatpush1.msra.mxu0 0.0
    %7212 = vmatprep.subr.mxu0 0.0
    %7213 = vmatpush1.msra.mxu0 0.0
    %7214 = vmatprep.subr.mxu0 0.0
    %7215 = vmatpush1.msra.mxu0 0.0
    %7216 = vmatprep.subr.mxu0 0.0
    %7217 = vmatpush1.msra.mxu0 0.0
    %7218 = vmatprep.subr.mxu0 0.0
    %7219 = vmatpush1.msra.mxu0 0.0
    %7220 = vmatprep.subr.mxu0 0.0
    %7221 = vmatpush1.msra.mxu0 0.0
    %7222 = vmatprep.subr.mxu0 0.0
    %7223 = vmatpush1.msra.mxu0 0.0
    %7224 = vmatprep.subr.mxu0 0.0
    %7225 = vmatpush1.msra.mxu0 0.0
    %7226 = vmatprep.subr.mxu0 0.0
    %7227 = vmatpush1.msra.mxu0 0.0
    %7228 = vmatprep.subr.mxu0 0.0
    %7229 = vmatpush1.msra.mxu0 0.0
    %7230 = vmatprep.mubr.f32.mxu0 0.0
    %7231 = vmatmul.mubr.f32.gmra.mrb[0].mxu0 %v7152
    %v7232 = vpop.f32.mrb[0].mxu0
    %v7233 = vadd.f32 0.0, %v7232
    %v7234 = vpop.f32.mrb[0].mxu0
    %v7235 = vadd.f32 0.0, %v7234
    %7236 = vdwg.mxu0
    %7237 = vmatprep.subr.mxu0 %v7164
    %7238 = vmatpush1.msra.mxu0 %v7161
    %7239 = vmatprep.subr.mxu0 0.0
    %7240 = vmatpush1.msra.mxu0 0.0
    %7241 = vmatprep.subr.mxu0 0.0
    %7242 = vmatpush1.msra.mxu0 0.0
    %7243 = vmatprep.subr.mxu0 0.0
    %7244 = vmatpush1.msra.mxu0 0.0
    %7245 = vmatprep.subr.mxu0 0.0
    %7246 = vmatpush1.msra.mxu0 0.0
    %7247 = vmatprep.subr.mxu0 0.0
    %7248 = vmatpush1.msra.mxu0 0.0
    %7249 = vmatprep.subr.mxu0 0.0
    %7250 = vmatpush1.msra.mxu0 0.0
    %7251 = vmatprep.subr.mxu0 0.0
    %7252 = vmatpush1.msra.mxu0 0.0
    %7253 = vmatprep.subr.mxu0 0.0
    %7254 = vmatpush1.msra.mxu0 0.0
    %7255 = vmatprep.subr.mxu0 0.0
    %7256 = vmatpush1.msra.mxu0 0.0
    %7257 = vmatprep.subr.mxu0 0.0
    %7258 = vmatpush1.msra.mxu0 0.0
    %7259 = vmatprep.subr.mxu0 0.0
    %7260 = vmatpush1.msra.mxu0 0.0
    %7261 = vmatprep.subr.mxu0 0.0
    %7262 = vmatpush1.msra.mxu0 0.0
    %7263 = vmatprep.subr.mxu0 0.0
    %7264 = vmatpush1.msra.mxu0 0.0
    %7265 = vmatprep.subr.mxu0 0.0
    %7266 = vmatpush1.msra.mxu0 0.0
    %7267 = vmatprep.subr.mxu0 0.0
    %7268 = vmatpush1.msra.mxu0 0.0
    %7269 = vmatprep.subr.mxu0 0.0
    %7270 = vmatpush1.msra.mxu0 0.0
    %7271 = vmatprep.subr.mxu0 0.0
    %7272 = vmatpush1.msra.mxu0 0.0
    %7273 = vmatprep.subr.mxu0 0.0
    %7274 = vmatpush1.msra.mxu0 0.0
    %7275 = vmatprep.subr.mxu0 0.0
    %7276 = vmatpush1.msra.mxu0 0.0
    %7277 = vmatprep.subr.mxu0 0.0
    %7278 = vmatpush1.msra.mxu0 0.0
    %7279 = vmatprep.subr.mxu0 0.0
    %7280 = vmatpush1.msra.mxu0 0.0
    %7281 = vmatprep.subr.mxu0 0.0
    %7282 = vmatpush1.msra.mxu0 0.0
    %7283 = vmatprep.subr.mxu0 0.0
    %7284 = vmatpush1.msra.mxu0 0.0
    %7285 = vmatprep.subr.mxu0 0.0
    %7286 = vmatpush1.msra.mxu0 0.0
    %7287 = vmatprep.subr.mxu0 0.0
    %7288 = vmatpush1.msra.mxu0 0.0
    %7289 = vmatprep.subr.mxu0 0.0
    %7290 = vmatpush1.msra.mxu0 0.0
    %7291 = vmatprep.subr.mxu0 0.0
    %7292 = vmatpush1.msra.mxu0 0.0
    %7293 = vmatprep.subr.mxu0 0.0
    %7294 = vmatpush1.msra.mxu0 0.0
    %7295 = vmatprep.subr.mxu0 0.0
    %7296 = vmatpush1.msra.mxu0 0.0
    %7297 = vmatprep.subr.mxu0 0.0
    %7298 = vmatpush1.msra.mxu0 0.0
    %7299 = vmatprep.subr.mxu0 0.0
    %7300 = vmatpush1.msra.mxu0 0.0
    %7301 = vmatprep.mubr.f32.mxu0 0.0
    %7302 = vmatmul.mubr.f32.gmra.mrb[0].mxu0 %v7152
    %v7303 = vpop.f32.mrb[0].mxu0
    %v7304 = vadd.f32 0.0, %v7303
    %v7305 = vpop.f32.mrb[0].mxu0
    %v7306 = vadd.f32 0.0, %v7305
    %7307 = vdwg.mxu0
    %v7308 = vadd.f32 %v7145, %v7233
    %v7309 = vadd.f32 %v7146, %v7235
    %v7310 = vadd.f32 %v7147, %v7304
    %v7311 = vadd.f32 %v7148, %v7306
    %s7312 = scalar_lea.vmem %s55, 4
    %v7313 = vld [vmem:[%s7312] sm:$0x3]
    %v7315 = vsel %vm4845, %v7313, 0
    %v7318 = vsel %vm4849, %v6836, 0
    %v7321 = vsel %vm4849, %v6838, 0
    %v7324 = vsel %vm4849, %v6877, 0
    %v7327 = vsel %vm4849, %v6879, 0
    %7329 = vmatprep.subr.mxu0 %v7321
    %7330 = vmatpush1.msra.mxu0 %v7318
    %7331 = vmatprep.subr.mxu0 0.0
    %7332 = vmatpush1.msra.mxu0 0.0
    %7333 = vmatprep.subr.mxu0 0.0
    %7334 = vmatpush1.msra.mxu0 0.0
    %7335 = vmatprep.subr.mxu0 0.0
    %7336 = vmatpush1.msra.mxu0 0.0
    %7337 = vmatprep.subr.mxu0 0.0
    %7338 = vmatpush1.msra.mxu0 0.0
    %7339 = vmatprep.subr.mxu0 0.0
    %7340 = vmatpush1.msra.mxu0 0.0
    %7341 = vmatprep.subr.mxu0 0.0
    %7342 = vmatpush1.msra.mxu0 0.0
    %7343 = vmatprep.subr.mxu0 0.0
    %7344 = vmatpush1.msra.mxu0 0.0
    %7345 = vmatprep.subr.mxu0 0.0
    %7346 = vmatpush1.msra.mxu0 0.0
    %7347 = vmatprep.subr.mxu0 0.0
    %7348 = vmatpush1.msra.mxu0 0.0
    %7349 = vmatprep.subr.mxu0 0.0
    %7350 = vmatpush1.msra.mxu0 0.0
    %7351 = vmatprep.subr.mxu0 0.0
    %7352 = vmatpush1.msra.mxu0 0.0
    %7353 = vmatprep.subr.mxu0 0.0
    %7354 = vmatpush1.msra.mxu0 0.0
    %7355 = vmatprep.subr.mxu0 0.0
    %7356 = vmatpush1.msra.mxu0 0.0
    %7357 = vmatprep.subr.mxu0 0.0
    %7358 = vmatpush1.msra.mxu0 0.0
    %7359 = vmatprep.subr.mxu0 0.0
    %7360 = vmatpush1.msra.mxu0 0.0
    %7361 = vmatprep.subr.mxu0 0.0
    %7362 = vmatpush1.msra.mxu0 0.0
    %7363 = vmatprep.subr.mxu0 0.0
    %7364 = vmatpush1.msra.mxu0 0.0
    %7365 = vmatprep.subr.mxu0 0.0
    %7366 = vmatpush1.msra.mxu0 0.0
    %7367 = vmatprep.subr.mxu0 0.0
    %7368 = vmatpush1.msra.mxu0 0.0
    %7369 = vmatprep.subr.mxu0 0.0
    %7370 = vmatpush1.msra.mxu0 0.0
    %7371 = vmatprep.subr.mxu0 0.0
    %7372 = vmatpush1.msra.mxu0 0.0
    %7373 = vmatprep.subr.mxu0 0.0
    %7374 = vmatpush1.msra.mxu0 0.0
    %7375 = vmatprep.subr.mxu0 0.0
    %7376 = vmatpush1.msra.mxu0 0.0
    %7377 = vmatprep.subr.mxu0 0.0
    %7378 = vmatpush1.msra.mxu0 0.0
    %7379 = vmatprep.subr.mxu0 0.0
    %7380 = vmatpush1.msra.mxu0 0.0
    %7381 = vmatprep.subr.mxu0 0.0
    %7382 = vmatpush1.msra.mxu0 0.0
    %7383 = vmatprep.subr.mxu0 0.0
    %7384 = vmatpush1.msra.mxu0 0.0
    %7385 = vmatprep.subr.mxu0 0.0
    %7386 = vmatpush1.msra.mxu0 0.0
    %7387 = vmatprep.subr.mxu0 0.0
    %7388 = vmatpush1.msra.mxu0 0.0
    %7389 = vmatprep.subr.mxu0 0.0
    %7390 = vmatpush1.msra.mxu0 0.0
    %7391 = vmatprep.subr.mxu0 0.0
    %7392 = vmatpush1.msra.mxu0 0.0
    %7393 = vmatprep.mubr.f32.mxu0 0.0
    %7394 = vmatmul.mubr.f32.gmra.mrb[0].mxu0 %v7315
    %v7395 = vpop.f32.mrb[0].mxu0
    %v7396 = vadd.f32 0.0, %v7395
    %v7397 = vpop.f32.mrb[0].mxu0
    %v7398 = vadd.f32 0.0, %v7397
    %7399 = vdwg.mxu0
    %7400 = vmatprep.subr.mxu0 %v7327
    %7401 = vmatpush1.msra.mxu0 %v7324
    %7402 = vmatprep.subr.mxu0 0.0
    %7403 = vmatpush1.msra.mxu0 0.0
    %7404 = vmatprep.subr.mxu0 0.0
    %7405 = vmatpush1.msra.mxu0 0.0
    %7406 = vmatprep.subr.mxu0 0.0
    %7407 = vmatpush1.msra.mxu0 0.0
    %7408 = vmatprep.subr.mxu0 0.0
    %7409 = vmatpush1.msra.mxu0 0.0
    %7410 = vmatprep.subr.mxu0 0.0
    %7411 = vmatpush1.msra.mxu0 0.0
    %7412 = vmatprep.subr.mxu0 0.0
    %7413 = vmatpush1.msra.mxu0 0.0
    %7414 = vmatprep.subr.mxu0 0.0
    %7415 = vmatpush1.msra.mxu0 0.0
    %7416 = vmatprep.subr.mxu0 0.0
    %7417 = vmatpush1.msra.mxu0 0.0
    %7418 = vmatprep.subr.mxu0 0.0
    %7419 = vmatpush1.msra.mxu0 0.0
    %7420 = vmatprep.subr.mxu0 0.0
    %7421 = vmatpush1.msra.mxu0 0.0
    %7422 = vmatprep.subr.mxu0 0.0
    %7423 = vmatpush1.msra.mxu0 0.0
    %7424 = vmatprep.subr.mxu0 0.0
    %7425 = vmatpush1.msra.mxu0 0.0
    %7426 = vmatprep.subr.mxu0 0.0
    %7427 = vmatpush1.msra.mxu0 0.0
    %7428 = vmatprep.subr.mxu0 0.0
    %7429 = vmatpush1.msra.mxu0 0.0
    %7430 = vmatprep.subr.mxu0 0.0
    %7431 = vmatpush1.msra.mxu0 0.0
    %7432 = vmatprep.subr.mxu0 0.0
    %7433 = vmatpush1.msra.mxu0 0.0
    %7434 = vmatprep.subr.mxu0 0.0
    %7435 = vmatpush1.msra.mxu0 0.0
    %7436 = vmatprep.subr.mxu0 0.0
    %7437 = vmatpush1.msra.mxu0 0.0
    %7438 = vmatprep.subr.mxu0 0.0
    %7439 = vmatpush1.msra.mxu0 0.0
    %7440 = vmatprep.subr.mxu0 0.0
    %7441 = vmatpush1.msra.mxu0 0.0
    %7442 = vmatprep.subr.mxu0 0.0
    %7443 = vmatpush1.msra.mxu0 0.0
    %7444 = vmatprep.subr.mxu0 0.0
    %7445 = vmatpush1.msra.mxu0 0.0
    %7446 = vmatprep.subr.mxu0 0.0
    %7447 = vmatpush1.msra.mxu0 0.0
    %7448 = vmatprep.subr.mxu0 0.0
    %7449 = vmatpush1.msra.mxu0 0.0
    %7450 = vmatprep.subr.mxu0 0.0
    %7451 = vmatpush1.msra.mxu0 0.0
    %7452 = vmatprep.subr.mxu0 0.0
    %7453 = vmatpush1.msra.mxu0 0.0
    %7454 = vmatprep.subr.mxu0 0.0
    %7455 = vmatpush1.msra.mxu0 0.0
    %7456 = vmatprep.subr.mxu0 0.0
    %7457 = vmatpush1.msra.mxu0 0.0
    %7458 = vmatprep.subr.mxu0 0.0
    %7459 = vmatpush1.msra.mxu0 0.0
    %7460 = vmatprep.subr.mxu0 0.0
    %7461 = vmatpush1.msra.mxu0 0.0
    %7462 = vmatprep.subr.mxu0 0.0
    %7463 = vmatpush1.msra.mxu0 0.0
    %7464 = vmatprep.mubr.f32.mxu0 0.0
    %7465 = vmatmul.mubr.f32.gmra.mrb[0].mxu0 %v7315
    %v7466 = vpop.f32.mrb[0].mxu0
    %v7467 = vadd.f32 0.0, %v7466
    %v7468 = vpop.f32.mrb[0].mxu0
    %v7469 = vadd.f32 0.0, %v7468
    %7470 = vdwg.mxu0
    %v7471 = vadd.f32 %v7308, %v7396
    %v7472 = vadd.f32 %v7309, %v7398
    %v7473 = vadd.f32 %v7310, %v7467
    %v7474 = vadd.f32 %v7311, %v7469
    %v7475 = vmax.f32 %v7471, 0.0
    %v7476 = vmax.f32 %v7472, 0.0
    %v7477 = vmax.f32 %v7473, 0.0
    %v7478 = vmax.f32 %v7474, 0.0
    %v7479 = vld [vmem:[%s57] sm:$0xf]
    %s7480 = scalar_lea.vmem %s55, 6
    %v7481 = vld [vmem:[%s7480] sm:$0x3]
    %v7483 = vsel %vm4845, %v7481, 0
    %v7486 = vsel %vm4849, %v6918, 0
    %v7489 = vsel %vm4849, %v6920, 0
    %v7492 = vsel %vm4849, %v6959, 0
    %v7495 = vsel %vm4849, %v6961, 0
    %7497 = vmatprep.subr.mxu0 %v7489
    %7498 = vmatpush1.msra.mxu0 %v7486
    %7499 = vmatprep.subr.mxu0 0.0
    %7500 = vmatpush1.msra.mxu0 0.0
    %7501 = vmatprep.subr.mxu0 0.0
    %7502 = vmatpush1.msra.mxu0 0.0
    %7503 = vmatprep.subr.mxu0 0.0
    %7504 = vmatpush1.msra.mxu0 0.0
    %7505 = vmatprep.subr.mxu0 0.0
    %7506 = vmatpush1.msra.mxu0 0.0
    %7507 = vmatprep.subr.mxu0 0.0
    %7508 = vmatpush1.msra.mxu0 0.0
    %7509 = vmatprep.subr.mxu0 0.0
    %7510 = vmatpush1.msra.mxu0 0.0
    %7511 = vmatprep.subr.mxu0 0.0
    %7512 = vmatpush1.msra.mxu0 0.0
    %7513 = vmatprep.subr.mxu0 0.0
    %7514 = vmatpush1.msra.mxu0 0.0
    %7515 = vmatprep.subr.mxu0 0.0
    %7516 = vmatpush1.msra.mxu0 0.0
    %7517 = vmatprep.subr.mxu0 0.0
    %7518 = vmatpush1.msra.mxu0 0.0
    %7519 = vmatprep.subr.mxu0 0.0
    %7520 = vmatpush1.msra.mxu0 0.0
    %7521 = vmatprep.subr.mxu0 0.0
    %7522 = vmatpush1.msra.mxu0 0.0
    %7523 = vmatprep.subr.mxu0 0.0
    %7524 = vmatpush1.msra.mxu0 0.0
    %7525 = vmatprep.subr.mxu0 0.0
    %7526 = vmatpush1.msra.mxu0 0.0
    %7527 = vmatprep.subr.mxu0 0.0
    %7528 = vmatpush1.msra.mxu0 0.0
    %7529 = vmatprep.subr.mxu0 0.0
    %7530 = vmatpush1.msra.mxu0 0.0
    %7531 = vmatprep.subr.mxu0 0.0
    %7532 = vmatpush1.msra.mxu0 0.0
    %7533 = vmatprep.subr.mxu0 0.0
    %7534 = vmatpush1.msra.mxu0 0.0
    %7535 = vmatprep.subr.mxu0 0.0
    %7536 = vmatpush1.msra.mxu0 0.0
    %7537 = vmatprep.subr.mxu0 0.0
    %7538 = vmatpush1.msra.mxu0 0.0
    %7539 = vmatprep.subr.mxu0 0.0
    %7540 = vmatpush1.msra.mxu0 0.0
    %7541 = vmatprep.subr.mxu0 0.0
    %7542 = vmatpush1.msra.mxu0 0.0
    %7543 = vmatprep.subr.mxu0 0.0
    %7544 = vmatpush1.msra.mxu0 0.0
    %7545 = vmatprep.subr.mxu0 0.0
    %7546 = vmatpush1.msra.mxu0 0.0
    %7547 = vmatprep.subr.mxu0 0.0
    %7548 = vmatpush1.msra.mxu0 0.0
    %7549 = vmatprep.subr.mxu0 0.0
    %7550 = vmatpush1.msra.mxu0 0.0
    %7551 = vmatprep.subr.mxu0 0.0
    %7552 = vmatpush1.msra.mxu0 0.0
    %7553 = vmatprep.subr.mxu0 0.0
    %7554 = vmatpush1.msra.mxu0 0.0
    %7555 = vmatprep.subr.mxu0 0.0
    %7556 = vmatpush1.msra.mxu0 0.0
    %7557 = vmatprep.subr.mxu0 0.0
    %7558 = vmatpush1.msra.mxu0 0.0
    %7559 = vmatprep.subr.mxu0 0.0
    %7560 = vmatpush1.msra.mxu0 0.0
    %7561 = vmatprep.mubr.f32.mxu0 0.0
    %7562 = vmatmul.mubr.f32.gmra.mrb[0].mxu0 %v7483
    %v7563 = vpop.f32.mrb[0].mxu0
    %v7564 = vadd.f32 0.0, %v7563
    %v7565 = vpop.f32.mrb[0].mxu0
    %v7566 = vadd.f32 0.0, %v7565
    %7567 = vdwg.mxu0
    %7568 = vmatprep.subr.mxu0 %v7495
    %7569 = vmatpush1.msra.mxu0 %v7492
    %7570 = vmatprep.subr.mxu0 0.0
    %7571 = vmatpush1.msra.mxu0 0.0
    %7572 = vmatprep.subr.mxu0 0.0
    %7573 = vmatpush1.msra.mxu0 0.0
    %7574 = vmatprep.subr.mxu0 0.0
    %7575 = vmatpush1.msra.mxu0 0.0
    %7576 = vmatprep.subr.mxu0 0.0
    %7577 = vmatpush1.msra.mxu0 0.0
    %7578 = vmatprep.subr.mxu0 0.0
    %7579 = vmatpush1.msra.mxu0 0.0
    %7580 = vmatprep.subr.mxu0 0.0
    %7581 = vmatpush1.msra.mxu0 0.0
    %7582 = vmatprep.subr.mxu0 0.0
    %7583 = vmatpush1.msra.mxu0 0.0
    %7584 = vmatprep.subr.mxu0 0.0
    %7585 = vmatpush1.msra.mxu0 0.0
    %7586 = vmatprep.subr.mxu0 0.0
    %7587 = vmatpush1.msra.mxu0 0.0
    %7588 = vmatprep.subr.mxu0 0.0
    %7589 = vmatpush1.msra.mxu0 0.0
    %7590 = vmatprep.subr.mxu0 0.0
    %7591 = vmatpush1.msra.mxu0 0.0
    %7592 = vmatprep.subr.mxu0 0.0
    %7593 = vmatpush1.msra.mxu0 0.0
    %7594 = vmatprep.subr.mxu0 0.0
    %7595 = vmatpush1.msra.mxu0 0.0
    %7596 = vmatprep.subr.mxu0 0.0
    %7597 = vmatpush1.msra.mxu0 0.0
    %7598 = vmatprep.subr.mxu0 0.0
    %7599 = vmatpush1.msra.mxu0 0.0
    %7600 = vmatprep.subr.mxu0 0.0
    %7601 = vmatpush1.msra.mxu0 0.0
    %7602 = vmatprep.subr.mxu0 0.0
    %7603 = vmatpush1.msra.mxu0 0.0
    %7604 = vmatprep.subr.mxu0 0.0
    %7605 = vmatpush1.msra.mxu0 0.0
    %7606 = vmatprep.subr.mxu0 0.0
    %7607 = vmatpush1.msra.mxu0 0.0
    %7608 = vmatprep.subr.mxu0 0.0
    %7609 = vmatpush1.msra.mxu0 0.0
    %7610 = vmatprep.subr.mxu0 0.0
    %7611 = vmatpush1.msra.mxu0 0.0
    %7612 = vmatprep.subr.mxu0 0.0
    %7613 = vmatpush1.msra.mxu0 0.0
    %7614 = vmatprep.subr.mxu0 0.0
    %7615 = vmatpush1.msra.mxu0 0.0
    %7616 = vmatprep.subr.mxu0 0.0
    %7617 = vmatpush1.msra.mxu0 0.0
    %7618 = vmatprep.subr.mxu0 0.0
    %7619 = vmatpush1.msra.mxu0 0.0
    %7620 = vmatprep.subr.mxu0 0.0
    %7621 = vmatpush1.msra.mxu0 0.0
    %7622 = vmatprep.subr.mxu0 0.0
    %7623 = vmatpush1.msra.mxu0 0.0
    %7624 = vmatprep.subr.mxu0 0.0
    %7625 = vmatpush1.msra.mxu0 0.0
    %7626 = vmatprep.subr.mxu0 0.0
    %7627 = vmatpush1.msra.mxu0 0.0
    %7628 = vmatprep.subr.mxu0 0.0
    %7629 = vmatpush1.msra.mxu0 0.0
    %7630 = vmatprep.subr.mxu0 0.0
    %7631 = vmatpush1.msra.mxu0 0.0
    %7632 = vmatprep.mubr.f32.mxu0 0.0
    %7633 = vmatmul.mubr.f32.gmra.mrb[0].mxu0 %v7483
    %v7634 = vpop.f32.mrb[0].mxu0
    %v7635 = vadd.f32 0.0, %v7634
    %v7636 = vpop.f32.mrb[0].mxu0
    %v7637 = vadd.f32 0.0, %v7636
    %7638 = vdwg.mxu0
    %v7640 = vlaneseq
    %v7641 = vshrl.u32 %v7640, 7
    %v7642 = vsub.s32 0, %v7641
    %v7643 = vrot.slane %v7479, %v7642
    %v7644 = vlaneseq
    %v7645 = vshrl.u32 %v7644, 7
    %v7646 = vsub.s32 1, %v7645
    %v7647 = vrot.slane %v7479, %v7646
    %v7648 = vlaneseq
    %v7649 = vshrl.u32 %v7648, 7
    %v7650 = vsub.s32 2, %v7649
    %v7651 = vrot.slane %v7479, %v7650
    %v7652 = vlaneseq
    %v7653 = vshrl.u32 %v7652, 7
    %v7654 = vsub.s32 3, %v7653
    %v7655 = vrot.slane %v7479, %v7654
    %v7660 = vadd.f32 %v7643, %v7564
    %v7661 = vadd.f32 %v7647, %v7566
    %v7662 = vadd.f32 %v7651, %v7635
    %v7663 = vadd.f32 %v7655, %v7637
    %v7664 = vpack.c.bf16 %v7475, %v7475
    %v7665 = vpack.c.bf16 %v7476, %v7476
    %v7666 = vpack.c.bf16 %v7477, %v7477
    %v7667 = vpack.c.bf16 %v7478, %v7478
    %v7668 = vld [vmem:[%s59] sm:$0xff]
    %v7669 = vld [vmem:[%s59 + $0x8] sm:$0xff]
    %v7670 = vld [vmem:[%s59 + $0x10] sm:$0xff]
    %v7671 = vld [vmem:[%s59 + $0x18] sm:$0xff]
    %v7672 = vld [vmem:[%s59 + $0x20] sm:$0xff]
    %v7673 = vld [vmem:[%s59 + $0x28] sm:$0xff]
    %v7674 = vld [vmem:[%s59 + $0x30] sm:$0xff]
    %v7675 = vld [vmem:[%s59 + $0x38] sm:$0xff]
    %v7676 = vld [vmem:[%s59 + $0x40] sm:$0xff]
    %v7677 = vld [vmem:[%s59 + $0x48] sm:$0xff]
    %v7678 = vld [vmem:[%s59 + $0x50] sm:$0xff]
    %v7679 = vld [vmem:[%s59 + $0x58] sm:$0xff]
    %v7680 = vld [vmem:[%s59 + $0x60] sm:$0xff]
    %v7681 = vld [vmem:[%s59 + $0x68] sm:$0xff]
    %v7682 = vld [vmem:[%s59 + $0x70] sm:$0xff]
    %v7683 = vld [vmem:[%s59 + $0x78] sm:$0xff]
    %v7684 = vld [vmem:[%s59 + $0x80] sm:$0xff]
    %v7685 = vld [vmem:[%s59 + $0x88] sm:$0xff]
    %v7686 = vld [vmem:[%s59 + $0x90] sm:$0xff]
    %v7687 = vld [vmem:[%s59 + $0x98] sm:$0xff]
    %v7688 = vld [vmem:[%s59 + $0xa0] sm:$0xff]
    %v7689 = vld [vmem:[%s59 + $0xa8] sm:$0xff]
    %v7690 = vld [vmem:[%s59 + $0xb0] sm:$0xff]
    %v7691 = vld [vmem:[%s59 + $0xb8] sm:$0xff]
    %v7692 = vld [vmem:[%s59 + $0xc0] sm:$0xff]
    %v7693 = vld [vmem:[%s59 + $0xc8] sm:$0xff]
    %v7694 = vld [vmem:[%s59 + $0xd0] sm:$0xff]
    %v7695 = vld [vmem:[%s59 + $0xd8] sm:$0xff]
    %v7696 = vld [vmem:[%s59 + $0xe0] sm:$0xff]
    %v7697 = vld [vmem:[%s59 + $0xe8] sm:$0xff]
    %v7698 = vld [vmem:[%s59 + $0xf0] sm:$0xff]
    %v7699 = vld [vmem:[%s59 + $0xf8] sm:$0xff]
    %v7700 = vld [vmem:[%s59 + $0x100] sm:$0xff]
    %v7701 = vld [vmem:[%s59 + $0x108] sm:$0xff]
    %v7702 = vld [vmem:[%s59 + $0x110] sm:$0xff]
    %v7703 = vld [vmem:[%s59 + $0x118] sm:$0xff]
    %v7704 = vld [vmem:[%s59 + $0x120] sm:$0xff]
    %v7705 = vld [vmem:[%s59 + $0x128] sm:$0xff]
    %v7706 = vld [vmem:[%s59 + $0x130] sm:$0xff]
    %v7707 = vld [vmem:[%s59 + $0x138] sm:$0xff]
    %v7708 = vld [vmem:[%s59 + $0x140] sm:$0xff]
    %v7709 = vld [vmem:[%s59 + $0x148] sm:$0xff]
    %v7710 = vld [vmem:[%s59 + $0x150] sm:$0xff]
    %v7711 = vld [vmem:[%s59 + $0x158] sm:$0xff]
    %v7712 = vld [vmem:[%s59 + $0x160] sm:$0xff]
    %v7713 = vld [vmem:[%s59 + $0x168] sm:$0xff]
    %v7714 = vld [vmem:[%s59 + $0x170] sm:$0xff]
    %v7715 = vld [vmem:[%s59 + $0x178] sm:$0xff]
    %v7716 = vld [vmem:[%s59 + $0x180] sm:$0xff]
    %v7717 = vld [vmem:[%s59 + $0x188] sm:$0xff]
    %v7718 = vld [vmem:[%s59 + $0x190] sm:$0xff]
    %v7719 = vld [vmem:[%s59 + $0x198] sm:$0xff]
    %v7720 = vld [vmem:[%s59 + $0x1a0] sm:$0xff]
    %v7721 = vld [vmem:[%s59 + $0x1a8] sm:$0xff]
    %v7722 = vld [vmem:[%s59 + $0x1b0] sm:$0xff]
    %v7723 = vld [vmem:[%s59 + $0x1b8] sm:$0xff]
    %v7724 = vld [vmem:[%s59 + $0x1c0] sm:$0xff]
    %v7725 = vld [vmem:[%s59 + $0x1c8] sm:$0xff]
    %v7726 = vld [vmem:[%s59 + $0x1d0] sm:$0xff]
    %v7727 = vld [vmem:[%s59 + $0x1d8] sm:$0xff]
    %v7728 = vld [vmem:[%s59 + $0x1e0] sm:$0xff]
    %v7729 = vld [vmem:[%s59 + $0x1e8] sm:$0xff]
    %v7730 = vld [vmem:[%s59 + $0x1f0] sm:$0xff]
    %v7731 = vld [vmem:[%s59 + $0x1f8] sm:$0xff]
    %v7732 = vld [vmem:[%s59 + $0x200] sm:$0xff]
    %v7733 = vld [vmem:[%s59 + $0x208] sm:$0xff]
    %v7734 = vld [vmem:[%s59 + $0x210] sm:$0xff]
    %v7735 = vld [vmem:[%s59 + $0x218] sm:$0xff]
    %v7736 = vld [vmem:[%s59 + $0x220] sm:$0xff]
    %v7737 = vld [vmem:[%s59 + $0x228] sm:$0xff]
    %v7738 = vld [vmem:[%s59 + $0x230] sm:$0xff]
    %v7739 = vld [vmem:[%s59 + $0x238] sm:$0xff]
    %v7740 = vld [vmem:[%s59 + $0x240] sm:$0xff]
    %v7741 = vld [vmem:[%s59 + $0x248] sm:$0xff]
    %v7742 = vld [vmem:[%s59 + $0x250] sm:$0xff]
    %v7743 = vld [vmem:[%s59 + $0x258] sm:$0xff]
    %v7744 = vld [vmem:[%s59 + $0x260] sm:$0xff]
    %v7745 = vld [vmem:[%s59 + $0x268] sm:$0xff]
    %v7746 = vld [vmem:[%s59 + $0x270] sm:$0xff]
    %v7747 = vld [vmem:[%s59 + $0x278] sm:$0xff]
    %v7748 = vld [vmem:[%s59 + $0x280] sm:$0xff]
    %v7749 = vld [vmem:[%s59 + $0x288] sm:$0xff]
    %v7750 = vld [vmem:[%s59 + $0x290] sm:$0xff]
    %v7751 = vld [vmem:[%s59 + $0x298] sm:$0xff]
    %v7752 = vld [vmem:[%s59 + $0x2a0] sm:$0xff]
    %v7753 = vld [vmem:[%s59 + $0x2a8] sm:$0xff]
    %v7754 = vld [vmem:[%s59 + $0x2b0] sm:$0xff]
    %v7755 = vld [vmem:[%s59 + $0x2b8] sm:$0xff]
    %v7756 = vld [vmem:[%s59 + $0x2c0] sm:$0xff]
    %v7757 = vld [vmem:[%s59 + $0x2c8] sm:$0xff]
    %v7758 = vld [vmem:[%s59 + $0x2d0] sm:$0xff]
    %v7759 = vld [vmem:[%s59 + $0x2d8] sm:$0xff]
    %v7760 = vld [vmem:[%s59 + $0x2e0] sm:$0xff]
    %v7761 = vld [vmem:[%s59 + $0x2e8] sm:$0xff]
    %v7762 = vld [vmem:[%s59 + $0x2f0] sm:$0xff]
    %v7763 = vld [vmem:[%s59 + $0x2f8] sm:$0xff]
    %v7764 = vld [vmem:[%s59 + $0x300] sm:$0xff]
    %v7765 = vld [vmem:[%s59 + $0x308] sm:$0xff]
    %v7766 = vld [vmem:[%s59 + $0x310] sm:$0xff]
    %v7767 = vld [vmem:[%s59 + $0x318] sm:$0xff]
    %v7768 = vld [vmem:[%s59 + $0x320] sm:$0xff]
    %v7769 = vld [vmem:[%s59 + $0x328] sm:$0xff]
    %v7770 = vld [vmem:[%s59 + $0x330] sm:$0xff]
    %v7771 = vld [vmem:[%s59 + $0x338] sm:$0xff]
    %v7772 = vld [vmem:[%s59 + $0x340] sm:$0xff]
    %v7773 = vld [vmem:[%s59 + $0x348] sm:$0xff]
    %v7774 = vld [vmem:[%s59 + $0x350] sm:$0xff]
    %v7775 = vld [vmem:[%s59 + $0x358] sm:$0xff]
    %v7776 = vld [vmem:[%s59 + $0x360] sm:$0xff]
    %v7777 = vld [vmem:[%s59 + $0x368] sm:$0xff]
    %v7778 = vld [vmem:[%s59 + $0x370] sm:$0xff]
    %v7779 = vld [vmem:[%s59 + $0x378] sm:$0xff]
    %v7780 = vld [vmem:[%s59 + $0x380] sm:$0xff]
    %v7781 = vld [vmem:[%s59 + $0x388] sm:$0xff]
    %v7782 = vld [vmem:[%s59 + $0x390] sm:$0xff]
    %v7783 = vld [vmem:[%s59 + $0x398] sm:$0xff]
    %v7784 = vld [vmem:[%s59 + $0x3a0] sm:$0xff]
    %v7785 = vld [vmem:[%s59 + $0x3a8] sm:$0xff]
    %v7786 = vld [vmem:[%s59 + $0x3b0] sm:$0xff]
    %v7787 = vld [vmem:[%s59 + $0x3b8] sm:$0xff]
    %v7788 = vld [vmem:[%s59 + $0x3c0] sm:$0xff]
    %v7789 = vld [vmem:[%s59 + $0x3c8] sm:$0xff]
    %v7790 = vld [vmem:[%s59 + $0x3d0] sm:$0xff]
    %v7791 = vld [vmem:[%s59 + $0x3d8] sm:$0xff]
    %v7792 = vld [vmem:[%s59 + $0x3e0] sm:$0xff]
    %v7793 = vld [vmem:[%s59 + $0x3e8] sm:$0xff]
    %v7794 = vld [vmem:[%s59 + $0x3f0] sm:$0xff]
    %v7795 = vld [vmem:[%s59 + $0x3f8] sm:$0xff]
    %v7796 = vld [vmem:[%s59 + $0x400] sm:$0xff]
    %v7797 = vld [vmem:[%s59 + $0x408] sm:$0xff]
    %v7798 = vld [vmem:[%s59 + $0x410] sm:$0xff]
    %v7799 = vld [vmem:[%s59 + $0x418] sm:$0xff]
    %v7800 = vld [vmem:[%s59 + $0x420] sm:$0xff]
    %v7801 = vld [vmem:[%s59 + $0x428] sm:$0xff]
    %v7802 = vld [vmem:[%s59 + $0x430] sm:$0xff]
    %v7803 = vld [vmem:[%s59 + $0x438] sm:$0xff]
    %v7804 = vld [vmem:[%s59 + $0x440] sm:$0xff]
    %v7805 = vld [vmem:[%s59 + $0x448] sm:$0xff]
    %v7806 = vld [vmem:[%s59 + $0x450] sm:$0xff]
    %v7807 = vld [vmem:[%s59 + $0x458] sm:$0xff]
    %v7808 = vld [vmem:[%s59 + $0x460] sm:$0xff]
    %v7809 = vld [vmem:[%s59 + $0x468] sm:$0xff]
    %v7810 = vld [vmem:[%s59 + $0x470] sm:$0xff]
    %v7811 = vld [vmem:[%s59 + $0x478] sm:$0xff]
    %v7812 = vld [vmem:[%s59 + $0x480] sm:$0xff]
    %v7813 = vld [vmem:[%s59 + $0x488] sm:$0xff]
    %v7814 = vld [vmem:[%s59 + $0x490] sm:$0xff]
    %v7815 = vld [vmem:[%s59 + $0x498] sm:$0xff]
    %v7816 = vld [vmem:[%s59 + $0x4a0] sm:$0xff]
    %v7817 = vld [vmem:[%s59 + $0x4a8] sm:$0xff]
    %v7818 = vld [vmem:[%s59 + $0x4b0] sm:$0xff]
    %v7819 = vld [vmem:[%s59 + $0x4b8] sm:$0xff]
    %v7820 = vld [vmem:[%s59 + $0x4c0] sm:$0xff]
    %v7821 = vld [vmem:[%s59 + $0x4c8] sm:$0xff]
    %v7822 = vld [vmem:[%s59 + $0x4d0] sm:$0xff]
    %v7823 = vld [vmem:[%s59 + $0x4d8] sm:$0xff]
    %v7824 = vld [vmem:[%s59 + $0x4e0] sm:$0xff]
    %v7825 = vld [vmem:[%s59 + $0x4e8] sm:$0xff]
    %v7826 = vld [vmem:[%s59 + $0x4f0] sm:$0xff]
    %v7827 = vld [vmem:[%s59 + $0x4f8] sm:$0xff]
    %v7828 = vld [vmem:[%s59 + $0x500] sm:$0xff]
    %v7829 = vld [vmem:[%s59 + $0x508] sm:$0xff]
    %v7830 = vld [vmem:[%s59 + $0x510] sm:$0xff]
    %v7831 = vld [vmem:[%s59 + $0x518] sm:$0xff]
    %v7832 = vld [vmem:[%s59 + $0x520] sm:$0xff]
    %v7833 = vld [vmem:[%s59 + $0x528] sm:$0xff]
    %v7834 = vld [vmem:[%s59 + $0x530] sm:$0xff]
    %v7835 = vld [vmem:[%s59 + $0x538] sm:$0xff]
    %v7836 = vld [vmem:[%s59 + $0x540] sm:$0xff]
    %v7837 = vld [vmem:[%s59 + $0x548] sm:$0xff]
    %v7838 = vld [vmem:[%s59 + $0x550] sm:$0xff]
    %v7839 = vld [vmem:[%s59 + $0x558] sm:$0xff]
    %v7840 = vld [vmem:[%s59 + $0x560] sm:$0xff]
    %v7841 = vld [vmem:[%s59 + $0x568] sm:$0xff]
    %v7842 = vld [vmem:[%s59 + $0x570] sm:$0xff]
    %v7843 = vld [vmem:[%s59 + $0x578] sm:$0xff]
    %v7844 = vld [vmem:[%s59 + $0x580] sm:$0xff]
    %v7845 = vld [vmem:[%s59 + $0x588] sm:$0xff]
    %v7846 = vld [vmem:[%s59 + $0x590] sm:$0xff]
    %v7847 = vld [vmem:[%s59 + $0x598] sm:$0xff]
    %v7848 = vld [vmem:[%s59 + $0x5a0] sm:$0xff]
    %v7849 = vld [vmem:[%s59 + $0x5a8] sm:$0xff]
    %v7850 = vld [vmem:[%s59 + $0x5b0] sm:$0xff]
    %v7851 = vld [vmem:[%s59 + $0x5b8] sm:$0xff]
    %v7852 = vld [vmem:[%s59 + $0x5c0] sm:$0xff]
    %v7853 = vld [vmem:[%s59 + $0x5c8] sm:$0xff]
    %v7854 = vld [vmem:[%s59 + $0x5d0] sm:$0xff]
    %v7855 = vld [vmem:[%s59 + $0x5d8] sm:$0xff]
    %v7856 = vld [vmem:[%s59 + $0x5e0] sm:$0xff]
    %v7857 = vld [vmem:[%s59 + $0x5e8] sm:$0xff]
    %v7858 = vld [vmem:[%s59 + $0x5f0] sm:$0xff]
    %v7859 = vld [vmem:[%s59 + $0x5f8] sm:$0xff]
    %v7860 = vld [vmem:[%s59 + $0x600] sm:$0xff]
    %v7861 = vld [vmem:[%s59 + $0x608] sm:$0xff]
    %v7862 = vld [vmem:[%s59 + $0x610] sm:$0xff]
    %v7863 = vld [vmem:[%s59 + $0x618] sm:$0xff]
    %v7864 = vld [vmem:[%s59 + $0x620] sm:$0xff]
    %v7865 = vld [vmem:[%s59 + $0x628] sm:$0xff]
    %v7866 = vld [vmem:[%s59 + $0x630] sm:$0xff]
    %v7867 = vld [vmem:[%s59 + $0x638] sm:$0xff]
    %v7868 = vld [vmem:[%s59 + $0x640] sm:$0xff]
    %v7869 = vld [vmem:[%s59 + $0x648] sm:$0xff]
    %v7870 = vld [vmem:[%s59 + $0x650] sm:$0xff]
    %v7871 = vld [vmem:[%s59 + $0x658] sm:$0xff]
    %v7872 = vld [vmem:[%s59 + $0x660] sm:$0xff]
    %v7873 = vld [vmem:[%s59 + $0x668] sm:$0xff]
    %v7874 = vld [vmem:[%s59 + $0x670] sm:$0xff]
    %v7875 = vld [vmem:[%s59 + $0x678] sm:$0xff]
    %v7876 = vld [vmem:[%s59 + $0x680] sm:$0xff]
    %v7877 = vld [vmem:[%s59 + $0x688] sm:$0xff]
    %v7878 = vld [vmem:[%s59 + $0x690] sm:$0xff]
    %v7879 = vld [vmem:[%s59 + $0x698] sm:$0xff]
    %v7880 = vld [vmem:[%s59 + $0x6a0] sm:$0xff]
    %v7881 = vld [vmem:[%s59 + $0x6a8] sm:$0xff]
    %v7882 = vld [vmem:[%s59 + $0x6b0] sm:$0xff]
    %v7883 = vld [vmem:[%s59 + $0x6b8] sm:$0xff]
    %v7884 = vld [vmem:[%s59 + $0x6c0] sm:$0xff]
    %v7885 = vld [vmem:[%s59 + $0x6c8] sm:$0xff]
    %v7886 = vld [vmem:[%s59 + $0x6d0] sm:$0xff]
    %v7887 = vld [vmem:[%s59 + $0x6d8] sm:$0xff]
    %v7888 = vld [vmem:[%s59 + $0x6e0] sm:$0xff]
    %v7889 = vld [vmem:[%s59 + $0x6e8] sm:$0xff]
    %v7890 = vld [vmem:[%s59 + $0x6f0] sm:$0xff]
    %v7891 = vld [vmem:[%s59 + $0x6f8] sm:$0xff]
    %v7892 = vld [vmem:[%s59 + $0x700] sm:$0xff]
    %v7893 = vld [vmem:[%s59 + $0x708] sm:$0xff]
    %v7894 = vld [vmem:[%s59 + $0x710] sm:$0xff]
    %v7895 = vld [vmem:[%s59 + $0x718] sm:$0xff]
    %v7896 = vld [vmem:[%s59 + $0x720] sm:$0xff]
    %v7897 = vld [vmem:[%s59 + $0x728] sm:$0xff]
    %v7898 = vld [vmem:[%s59 + $0x730] sm:$0xff]
    %v7899 = vld [vmem:[%s59 + $0x738] sm:$0xff]
    %v7900 = vld [vmem:[%s59 + $0x740] sm:$0xff]
    %v7901 = vld [vmem:[%s59 + $0x748] sm:$0xff]
    %v7902 = vld [vmem:[%s59 + $0x750] sm:$0xff]
    %v7903 = vld [vmem:[%s59 + $0x758] sm:$0xff]
    %v7904 = vld [vmem:[%s59 + $0x760] sm:$0xff]
    %v7905 = vld [vmem:[%s59 + $0x768] sm:$0xff]
    %v7906 = vld [vmem:[%s59 + $0x770] sm:$0xff]
    %v7907 = vld [vmem:[%s59 + $0x778] sm:$0xff]
    %v7908 = vld [vmem:[%s59 + $0x780] sm:$0xff]
    %v7909 = vld [vmem:[%s59 + $0x788] sm:$0xff]
    %v7910 = vld [vmem:[%s59 + $0x790] sm:$0xff]
    %v7911 = vld [vmem:[%s59 + $0x798] sm:$0xff]
    %v7912 = vld [vmem:[%s59 + $0x7a0] sm:$0xff]
    %v7913 = vld [vmem:[%s59 + $0x7a8] sm:$0xff]
    %v7914 = vld [vmem:[%s59 + $0x7b0] sm:$0xff]
    %v7915 = vld [vmem:[%s59 + $0x7b8] sm:$0xff]
    %v7916 = vld [vmem:[%s59 + $0x7c0] sm:$0xff]
    %v7917 = vld [vmem:[%s59 + $0x7c8] sm:$0xff]
    %v7918 = vld [vmem:[%s59 + $0x7d0] sm:$0xff]
    %v7919 = vld [vmem:[%s59 + $0x7d8] sm:$0xff]
    %v7920 = vld [vmem:[%s59 + $0x7e0] sm:$0xff]
    %v7921 = vld [vmem:[%s59 + $0x7e8] sm:$0xff]
    %v7922 = vld [vmem:[%s59 + $0x7f0] sm:$0xff]
    %v7923 = vld [vmem:[%s59 + $0x7f8] sm:$0xff]
    %v7924 = vld [vmem:[%s59 + $0x800] sm:$0xff]
    %v7925 = vld [vmem:[%s59 + $0x808] sm:$0xff]
    %v7926 = vld [vmem:[%s59 + $0x810] sm:$0xff]
    %v7927 = vld [vmem:[%s59 + $0x818] sm:$0xff]
    %v7928 = vld [vmem:[%s59 + $0x820] sm:$0xff]
    %v7929 = vld [vmem:[%s59 + $0x828] sm:$0xff]
    %v7930 = vld [vmem:[%s59 + $0x830] sm:$0xff]
    %v7931 = vld [vmem:[%s59 + $0x838] sm:$0xff]
    %v7932 = vld [vmem:[%s59 + $0x840] sm:$0xff]
    %v7933 = vld [vmem:[%s59 + $0x848] sm:$0xff]
    %v7934 = vld [vmem:[%s59 + $0x850] sm:$0xff]
    %v7935 = vld [vmem:[%s59 + $0x858] sm:$0xff]
    %v7936 = vld [vmem:[%s59 + $0x860] sm:$0xff]
    %v7937 = vld [vmem:[%s59 + $0x868] sm:$0xff]
    %v7938 = vld [vmem:[%s59 + $0x870] sm:$0xff]
    %v7939 = vld [vmem:[%s59 + $0x878] sm:$0xff]
    %v7940 = vld [vmem:[%s59 + $0x880] sm:$0xff]
    %v7941 = vld [vmem:[%s59 + $0x888] sm:$0xff]
    %v7942 = vld [vmem:[%s59 + $0x890] sm:$0xff]
    %v7943 = vld [vmem:[%s59 + $0x898] sm:$0xff]
    %v7944 = vld [vmem:[%s59 + $0x8a0] sm:$0xff]
    %v7945 = vld [vmem:[%s59 + $0x8a8] sm:$0xff]
    %v7946 = vld [vmem:[%s59 + $0x8b0] sm:$0xff]
    %v7947 = vld [vmem:[%s59 + $0x8b8] sm:$0xff]
    %v7948 = vld [vmem:[%s59 + $0x8c0] sm:$0xff]
    %v7949 = vld [vmem:[%s59 + $0x8c8] sm:$0xff]
    %v7950 = vld [vmem:[%s59 + $0x8d0] sm:$0xff]
    %v7951 = vld [vmem:[%s59 + $0x8d8] sm:$0xff]
    %v7952 = vld [vmem:[%s59 + $0x8e0] sm:$0xff]
    %v7953 = vld [vmem:[%s59 + $0x8e8] sm:$0xff]
    %v7954 = vld [vmem:[%s59 + $0x8f0] sm:$0xff]
    %v7955 = vld [vmem:[%s59 + $0x8f8] sm:$0xff]
    %v7956 = vld [vmem:[%s59 + $0x900] sm:$0xff]
    %v7957 = vld [vmem:[%s59 + $0x908] sm:$0xff]
    %v7958 = vld [vmem:[%s59 + $0x910] sm:$0xff]
    %v7959 = vld [vmem:[%s59 + $0x918] sm:$0xff]
    %v7960 = vld [vmem:[%s59 + $0x920] sm:$0xff]
    %v7961 = vld [vmem:[%s59 + $0x928] sm:$0xff]
    %v7962 = vld [vmem:[%s59 + $0x930] sm:$0xff]
    %v7963 = vld [vmem:[%s59 + $0x938] sm:$0xff]
    %v7964 = vld [vmem:[%s59 + $0x940] sm:$0xff]
    %v7965 = vld [vmem:[%s59 + $0x948] sm:$0xff]
    %v7966 = vld [vmem:[%s59 + $0x950] sm:$0xff]
    %v7967 = vld [vmem:[%s59 + $0x958] sm:$0xff]
    %v7968 = vld [vmem:[%s59 + $0x960] sm:$0xff]
    %v7969 = vld [vmem:[%s59 + $0x968] sm:$0xff]
    %v7970 = vld [vmem:[%s59 + $0x970] sm:$0xff]
    %v7971 = vld [vmem:[%s59 + $0x978] sm:$0xff]
    %v7972 = vld [vmem:[%s59 + $0x980] sm:$0xff]
    %v7973 = vld [vmem:[%s59 + $0x988] sm:$0xff]
    %v7974 = vld [vmem:[%s59 + $0x990] sm:$0xff]
    %v7975 = vld [vmem:[%s59 + $0x998] sm:$0xff]
    %v7976 = vld [vmem:[%s59 + $0x9a0] sm:$0xff]
    %v7977 = vld [vmem:[%s59 + $0x9a8] sm:$0xff]
    %v7978 = vld [vmem:[%s59 + $0x9b0] sm:$0xff]
    %v7979 = vld [vmem:[%s59 + $0x9b8] sm:$0xff]
    %v7980 = vld [vmem:[%s59 + $0x9c0] sm:$0xff]
    %v7981 = vld [vmem:[%s59 + $0x9c8] sm:$0xff]
    %v7982 = vld [vmem:[%s59 + $0x9d0] sm:$0xff]
    %v7983 = vld [vmem:[%s59 + $0x9d8] sm:$0xff]
    %v7984 = vld [vmem:[%s59 + $0x9e0] sm:$0xff]
    %v7985 = vld [vmem:[%s59 + $0x9e8] sm:$0xff]
    %v7986 = vld [vmem:[%s59 + $0x9f0] sm:$0xff]
    %v7987 = vld [vmem:[%s59 + $0x9f8] sm:$0xff]
    %v7988 = vld [vmem:[%s59 + $0xa00] sm:$0xff]
    %v7989 = vld [vmem:[%s59 + $0xa08] sm:$0xff]
    %v7990 = vld [vmem:[%s59 + $0xa10] sm:$0xff]
    %v7991 = vld [vmem:[%s59 + $0xa18] sm:$0xff]
    %v7992 = vld [vmem:[%s59 + $0xa20] sm:$0xff]
    %v7993 = vld [vmem:[%s59 + $0xa28] sm:$0xff]
    %v7994 = vld [vmem:[%s59 + $0xa30] sm:$0xff]
    %v7995 = vld [vmem:[%s59 + $0xa38] sm:$0xff]
    %v7996 = vld [vmem:[%s59 + $0xa40] sm:$0xff]
    %v7997 = vld [vmem:[%s59 + $0xa48] sm:$0xff]
    %v7998 = vld [vmem:[%s59 + $0xa50] sm:$0xff]
    %v7999 = vld [vmem:[%s59 + $0xa58] sm:$0xff]
    %v8000 = vld [vmem:[%s59 + $0xa60] sm:$0xff]
    %v8001 = vld [vmem:[%s59 + $0xa68] sm:$0xff]
    %v8002 = vld [vmem:[%s59 + $0xa70] sm:$0xff]
    %v8003 = vld [vmem:[%s59 + $0xa78] sm:$0xff]
    %v8004 = vld [vmem:[%s59 + $0xa80] sm:$0xff]
    %v8005 = vld [vmem:[%s59 + $0xa88] sm:$0xff]
    %v8006 = vld [vmem:[%s59 + $0xa90] sm:$0xff]
    %v8007 = vld [vmem:[%s59 + $0xa98] sm:$0xff]
    %v8008 = vld [vmem:[%s59 + $0xaa0] sm:$0xff]
    %v8009 = vld [vmem:[%s59 + $0xaa8] sm:$0xff]
    %v8010 = vld [vmem:[%s59 + $0xab0] sm:$0xff]
    %v8011 = vld [vmem:[%s59 + $0xab8] sm:$0xff]
    %v8012 = vld [vmem:[%s59 + $0xac0] sm:$0xff]
    %v8013 = vld [vmem:[%s59 + $0xac8] sm:$0xff]
    %v8014 = vld [vmem:[%s59 + $0xad0] sm:$0xff]
    %v8015 = vld [vmem:[%s59 + $0xad8] sm:$0xff]
    %v8016 = vld [vmem:[%s59 + $0xae0] sm:$0xff]
    %v8017 = vld [vmem:[%s59 + $0xae8] sm:$0xff]
    %v8018 = vld [vmem:[%s59 + $0xaf0] sm:$0xff]
    %v8019 = vld [vmem:[%s59 + $0xaf8] sm:$0xff]
    %v8020 = vld [vmem:[%s59 + $0xb00] sm:$0xff]
    %v8021 = vld [vmem:[%s59 + $0xb08] sm:$0xff]
    %v8022 = vld [vmem:[%s59 + $0xb10] sm:$0xff]
    %v8023 = vld [vmem:[%s59 + $0xb18] sm:$0xff]
    %v8024 = vld [vmem:[%s59 + $0xb20] sm:$0xff]
    %v8025 = vld [vmem:[%s59 + $0xb28] sm:$0xff]
    %v8026 = vld [vmem:[%s59 + $0xb30] sm:$0xff]
    %v8027 = vld [vmem:[%s59 + $0xb38] sm:$0xff]
    %v8028 = vld [vmem:[%s59 + $0xb40] sm:$0xff]
    %v8029 = vld [vmem:[%s59 + $0xb48] sm:$0xff]
    %v8030 = vld [vmem:[%s59 + $0xb50] sm:$0xff]
    %v8031 = vld [vmem:[%s59 + $0xb58] sm:$0xff]
    %v8032 = vld [vmem:[%s59 + $0xb60] sm:$0xff]
    %v8033 = vld [vmem:[%s59 + $0xb68] sm:$0xff]
    %v8034 = vld [vmem:[%s59 + $0xb70] sm:$0xff]
    %v8035 = vld [vmem:[%s59 + $0xb78] sm:$0xff]
    %v8036 = vld [vmem:[%s59 + $0xb80] sm:$0xff]
    %v8037 = vld [vmem:[%s59 + $0xb88] sm:$0xff]
    %v8038 = vld [vmem:[%s59 + $0xb90] sm:$0xff]
    %v8039 = vld [vmem:[%s59 + $0xb98] sm:$0xff]
    %v8040 = vld [vmem:[%s59 + $0xba0] sm:$0xff]
    %v8041 = vld [vmem:[%s59 + $0xba8] sm:$0xff]
    %v8042 = vld [vmem:[%s59 + $0xbb0] sm:$0xff]
    %v8043 = vld [vmem:[%s59 + $0xbb8] sm:$0xff]
    %v8044 = vld [vmem:[%s59 + $0xbc0] sm:$0xff]
    %v8045 = vld [vmem:[%s59 + $0xbc8] sm:$0xff]
    %v8046 = vld [vmem:[%s59 + $0xbd0] sm:$0xff]
    %v8047 = vld [vmem:[%s59 + $0xbd8] sm:$0xff]
    %v8048 = vld [vmem:[%s59 + $0xbe0] sm:$0xff]
    %v8049 = vld [vmem:[%s59 + $0xbe8] sm:$0xff]
    %v8050 = vld [vmem:[%s59 + $0xbf0] sm:$0xff]
    %v8051 = vld [vmem:[%s59 + $0xbf8] sm:$0xff]
    %v8436 = vunpack.c.l.b16 %v7668
    %v8437 = vunpack.c.h.b16 %v7668
    %v8438 = vunpack.c.l.b16 %v7669
    %v8439 = vunpack.c.h.b16 %v7669
    %v8440 = vunpack.c.l.b16 %v7670
    %v8441 = vunpack.c.h.b16 %v7670
    %v8442 = vunpack.c.l.b16 %v7671
    %v8443 = vunpack.c.h.b16 %v7671
    %v8444 = vunpack.c.l.b16 %v7672
    %v8445 = vunpack.c.h.b16 %v7672
    %v8446 = vunpack.c.l.b16 %v7673
    %v8447 = vunpack.c.h.b16 %v7673
    %v8448 = vunpack.c.l.b16 %v7674
    %v8449 = vunpack.c.h.b16 %v7674
    %v8450 = vunpack.c.l.b16 %v7675
    %v8451 = vunpack.c.h.b16 %v7675
    %v8452 = vunpack.c.l.b16 %v7676
    %v8453 = vunpack.c.h.b16 %v7676
    %v8454 = vunpack.c.l.b16 %v7677
    %v8455 = vunpack.c.h.b16 %v7677
    %v8456 = vunpack.c.l.b16 %v7678
    %v8457 = vunpack.c.h.b16 %v7678
    %v8458 = vunpack.c.l.b16 %v7679
    %v8459 = vunpack.c.h.b16 %v7679
    %v8460 = vunpack.c.l.b16 %v7680
    %v8461 = vunpack.c.h.b16 %v7680
    %v8462 = vunpack.c.l.b16 %v7681
    %v8463 = vunpack.c.h.b16 %v7681
    %v8464 = vunpack.c.l.b16 %v7682
    %v8465 = vunpack.c.h.b16 %v7682
    %v8466 = vunpack.c.l.b16 %v7683
    %v8467 = vunpack.c.h.b16 %v7683
    %v8468 = vunpack.c.l.b16 %v7684
    %v8469 = vunpack.c.h.b16 %v7684
    %v8470 = vunpack.c.l.b16 %v7685
    %v8471 = vunpack.c.h.b16 %v7685
    %v8472 = vunpack.c.l.b16 %v7686
    %v8473 = vunpack.c.h.b16 %v7686
    %v8474 = vunpack.c.l.b16 %v7687
    %v8475 = vunpack.c.h.b16 %v7687
    %v8476 = vunpack.c.l.b16 %v7688
    %v8477 = vunpack.c.h.b16 %v7688
    %v8478 = vunpack.c.l.b16 %v7689
    %v8479 = vunpack.c.h.b16 %v7689
    %v8480 = vunpack.c.l.b16 %v7690
    %v8481 = vunpack.c.h.b16 %v7690
    %v8482 = vunpack.c.l.b16 %v7691
    %v8483 = vunpack.c.h.b16 %v7691
    %v8484 = vunpack.c.l.b16 %v7692
    %v8485 = vunpack.c.h.b16 %v7692
    %v8486 = vunpack.c.l.b16 %v7693
    %v8487 = vunpack.c.h.b16 %v7693
    %v8488 = vunpack.c.l.b16 %v7694
    %v8489 = vunpack.c.h.b16 %v7694
    %v8490 = vunpack.c.l.b16 %v7695
    %v8491 = vunpack.c.h.b16 %v7695
    %v8492 = vunpack.c.l.b16 %v7696
    %v8493 = vunpack.c.h.b16 %v7696
    %v8494 = vunpack.c.l.b16 %v7697
    %v8495 = vunpack.c.h.b16 %v7697
    %v8496 = vunpack.c.l.b16 %v7698
    %v8497 = vunpack.c.h.b16 %v7698
    %v8498 = vunpack.c.l.b16 %v7699
    %v8499 = vunpack.c.h.b16 %v7699
    %v8500 = vunpack.c.l.b16 %v7700
    %v8501 = vunpack.c.h.b16 %v7700
    %v8502 = vunpack.c.l.b16 %v7701
    %v8503 = vunpack.c.h.b16 %v7701
    %v8504 = vunpack.c.l.b16 %v7702
    %v8505 = vunpack.c.h.b16 %v7702
    %v8506 = vunpack.c.l.b16 %v7703
    %v8507 = vunpack.c.h.b16 %v7703
    %v8508 = vunpack.c.l.b16 %v7704
    %v8509 = vunpack.c.h.b16 %v7704
    %v8510 = vunpack.c.l.b16 %v7705
    %v8511 = vunpack.c.h.b16 %v7705
    %v8512 = vunpack.c.l.b16 %v7706
    %v8513 = vunpack.c.h.b16 %v7706
    %v8514 = vunpack.c.l.b16 %v7707
    %v8515 = vunpack.c.h.b16 %v7707
    %v8516 = vunpack.c.l.b16 %v7708
    %v8517 = vunpack.c.h.b16 %v7708
    %v8518 = vunpack.c.l.b16 %v7709
    %v8519 = vunpack.c.h.b16 %v7709
    %v8520 = vunpack.c.l.b16 %v7710
    %v8521 = vunpack.c.h.b16 %v7710
    %v8522 = vunpack.c.l.b16 %v7711
    %v8523 = vunpack.c.h.b16 %v7711
    %v8524 = vunpack.c.l.b16 %v7712
    %v8525 = vunpack.c.h.b16 %v7712
    %v8526 = vunpack.c.l.b16 %v7713
    %v8527 = vunpack.c.h.b16 %v7713
    %v8528 = vunpack.c.l.b16 %v7714
    %v8529 = vunpack.c.h.b16 %v7714
    %v8530 = vunpack.c.l.b16 %v7715
    %v8531 = vunpack.c.h.b16 %v7715
    %v8532 = vunpack.c.l.b16 %v7716
    %v8533 = vunpack.c.h.b16 %v7716
    %v8534 = vunpack.c.l.b16 %v7717
    %v8535 = vunpack.c.h.b16 %v7717
    %v8536 = vunpack.c.l.b16 %v7718
    %v8537 = vunpack.c.h.b16 %v7718
    %v8538 = vunpack.c.l.b16 %v7719
    %v8539 = vunpack.c.h.b16 %v7719
    %v8540 = vunpack.c.l.b16 %v7720
    %v8541 = vunpack.c.h.b16 %v7720
    %v8542 = vunpack.c.l.b16 %v7721
    %v8543 = vunpack.c.h.b16 %v7721
    %v8544 = vunpack.c.l.b16 %v7722
    %v8545 = vunpack.c.h.b16 %v7722
    %v8546 = vunpack.c.l.b16 %v7723
    %v8547 = vunpack.c.h.b16 %v7723
    %v8548 = vunpack.c.l.b16 %v7724
    %v8549 = vunpack.c.h.b16 %v7724
    %v8550 = vunpack.c.l.b16 %v7725
    %v8551 = vunpack.c.h.b16 %v7725
    %v8552 = vunpack.c.l.b16 %v7726
    %v8553 = vunpack.c.h.b16 %v7726
    %v8554 = vunpack.c.l.b16 %v7727
    %v8555 = vunpack.c.h.b16 %v7727
    %v8556 = vunpack.c.l.b16 %v7728
    %v8557 = vunpack.c.h.b16 %v7728
    %v8558 = vunpack.c.l.b16 %v7729
    %v8559 = vunpack.c.h.b16 %v7729
    %v8560 = vunpack.c.l.b16 %v7730
    %v8561 = vunpack.c.h.b16 %v7730
    %v8562 = vunpack.c.l.b16 %v7731
    %v8563 = vunpack.c.h.b16 %v7731
    %v8564 = vunpack.c.l.b16 %v7732
    %v8565 = vunpack.c.h.b16 %v7732
    %v8566 = vunpack.c.l.b16 %v7733
    %v8567 = vunpack.c.h.b16 %v7733
    %v8568 = vunpack.c.l.b16 %v7734
    %v8569 = vunpack.c.h.b16 %v7734
    %v8570 = vunpack.c.l.b16 %v7735
    %v8571 = vunpack.c.h.b16 %v7735
    %v8572 = vunpack.c.l.b16 %v7736
    %v8573 = vunpack.c.h.b16 %v7736
    %v8574 = vunpack.c.l.b16 %v7737
    %v8575 = vunpack.c.h.b16 %v7737
    %v8576 = vunpack.c.l.b16 %v7738
    %v8577 = vunpack.c.h.b16 %v7738
    %v8578 = vunpack.c.l.b16 %v7739
    %v8579 = vunpack.c.h.b16 %v7739
    %v8580 = vunpack.c.l.b16 %v7740
    %v8581 = vunpack.c.h.b16 %v7740
    %v8582 = vunpack.c.l.b16 %v7741
    %v8583 = vunpack.c.h.b16 %v7741
    %v8584 = vunpack.c.l.b16 %v7742
    %v8585 = vunpack.c.h.b16 %v7742
    %v8586 = vunpack.c.l.b16 %v7743
    %v8587 = vunpack.c.h.b16 %v7743
    %v8588 = vunpack.c.l.b16 %v7744
    %v8589 = vunpack.c.h.b16 %v7744
    %v8590 = vunpack.c.l.b16 %v7745
    %v8591 = vunpack.c.h.b16 %v7745
    %v8592 = vunpack.c.l.b16 %v7746
    %v8593 = vunpack.c.h.b16 %v7746
    %v8594 = vunpack.c.l.b16 %v7747
    %v8595 = vunpack.c.h.b16 %v7747
    %v8596 = vunpack.c.l.b16 %v7748
    %v8597 = vunpack.c.h.b16 %v7748
    %v8598 = vunpack.c.l.b16 %v7749
    %v8599 = vunpack.c.h.b16 %v7749
    %v8600 = vunpack.c.l.b16 %v7750
    %v8601 = vunpack.c.h.b16 %v7750
    %v8602 = vunpack.c.l.b16 %v7751
    %v8603 = vunpack.c.h.b16 %v7751
    %v8604 = vunpack.c.l.b16 %v7752
    %v8605 = vunpack.c.h.b16 %v7752
    %v8606 = vunpack.c.l.b16 %v7753
    %v8607 = vunpack.c.h.b16 %v7753
    %v8608 = vunpack.c.l.b16 %v7754
    %v8609 = vunpack.c.h.b16 %v7754
    %v8610 = vunpack.c.l.b16 %v7755
    %v8611 = vunpack.c.h.b16 %v7755
    %v8612 = vunpack.c.l.b16 %v7756
    %v8613 = vunpack.c.h.b16 %v7756
    %v8614 = vunpack.c.l.b16 %v7757
    %v8615 = vunpack.c.h.b16 %v7757
    %v8616 = vunpack.c.l.b16 %v7758
    %v8617 = vunpack.c.h.b16 %v7758
    %v8618 = vunpack.c.l.b16 %v7759
    %v8619 = vunpack.c.h.b16 %v7759
    %v8620 = vunpack.c.l.b16 %v7760
    %v8621 = vunpack.c.h.b16 %v7760
    %v8622 = vunpack.c.l.b16 %v7761
    %v8623 = vunpack.c.h.b16 %v7761
    %v8624 = vunpack.c.l.b16 %v7762
    %v8625 = vunpack.c.h.b16 %v7762
    %v8626 = vunpack.c.l.b16 %v7763
    %v8627 = vunpack.c.h.b16 %v7763
    %v8628 = vunpack.c.l.b16 %v7764
    %v8629 = vunpack.c.h.b16 %v7764
    %v8630 = vunpack.c.l.b16 %v7765
    %v8631 = vunpack.c.h.b16 %v7765
    %v8632 = vunpack.c.l.b16 %v7766
    %v8633 = vunpack.c.h.b16 %v7766
    %v8634 = vunpack.c.l.b16 %v7767
    %v8635 = vunpack.c.h.b16 %v7767
    %v8636 = vunpack.c.l.b16 %v7768
    %v8637 = vunpack.c.h.b16 %v7768
    %v8638 = vunpack.c.l.b16 %v7769
    %v8639 = vunpack.c.h.b16 %v7769
    %v8640 = vunpack.c.l.b16 %v7770
    %v8641 = vunpack.c.h.b16 %v7770
    %v8642 = vunpack.c.l.b16 %v7771
    %v8643 = vunpack.c.h.b16 %v7771
    %v8644 = vunpack.c.l.b16 %v7772
    %v8645 = vunpack.c.h.b16 %v7772
    %v8646 = vunpack.c.l.b16 %v7773
    %v8647 = vunpack.c.h.b16 %v7773
    %v8648 = vunpack.c.l.b16 %v7774
    %v8649 = vunpack.c.h.b16 %v7774
    %v8650 = vunpack.c.l.b16 %v7775
    %v8651 = vunpack.c.h.b16 %v7775
    %v8652 = vunpack.c.l.b16 %v7776
    %v8653 = vunpack.c.h.b16 %v7776
    %v8654 = vunpack.c.l.b16 %v7777
    %v8655 = vunpack.c.h.b16 %v7777
    %v8656 = vunpack.c.l.b16 %v7778
    %v8657 = vunpack.c.h.b16 %v7778
    %v8658 = vunpack.c.l.b16 %v7779
    %v8659 = vunpack.c.h.b16 %v7779
    %v8660 = vunpack.c.l.b16 %v7780
    %v8661 = vunpack.c.h.b16 %v7780
    %v8662 = vunpack.c.l.b16 %v7781
    %v8663 = vunpack.c.h.b16 %v7781
    %v8664 = vunpack.c.l.b16 %v7782
    %v8665 = vunpack.c.h.b16 %v7782
    %v8666 = vunpack.c.l.b16 %v7783
    %v8667 = vunpack.c.h.b16 %v7783
    %v8668 = vunpack.c.l.b16 %v7784
    %v8669 = vunpack.c.h.b16 %v7784
    %v8670 = vunpack.c.l.b16 %v7785
    %v8671 = vunpack.c.h.b16 %v7785
    %v8672 = vunpack.c.l.b16 %v7786
    %v8673 = vunpack.c.h.b16 %v7786
    %v8674 = vunpack.c.l.b16 %v7787
    %v8675 = vunpack.c.h.b16 %v7787
    %v8676 = vunpack.c.l.b16 %v7788
    %v8677 = vunpack.c.h.b16 %v7788
    %v8678 = vunpack.c.l.b16 %v7789
    %v8679 = vunpack.c.h.b16 %v7789
    %v8680 = vunpack.c.l.b16 %v7790
    %v8681 = vunpack.c.h.b16 %v7790
    %v8682 = vunpack.c.l.b16 %v7791
    %v8683 = vunpack.c.h.b16 %v7791
    %v8684 = vunpack.c.l.b16 %v7792
    %v8685 = vunpack.c.h.b16 %v7792
    %v8686 = vunpack.c.l.b16 %v7793
    %v8687 = vunpack.c.h.b16 %v7793
    %v8688 = vunpack.c.l.b16 %v7794
    %v8689 = vunpack.c.h.b16 %v7794
    %v8690 = vunpack.c.l.b16 %v7795
    %v8691 = vunpack.c.h.b16 %v7795
    %v8692 = vunpack.c.l.b16 %v7796
    %v8693 = vunpack.c.h.b16 %v7796
    %v8694 = vunpack.c.l.b16 %v7797
    %v8695 = vunpack.c.h.b16 %v7797
    %v8696 = vunpack.c.l.b16 %v7798
    %v8697 = vunpack.c.h.b16 %v7798
    %v8698 = vunpack.c.l.b16 %v7799
    %v8699 = vunpack.c.h.b16 %v7799
    %v8700 = vunpack.c.l.b16 %v7800
    %v8701 = vunpack.c.h.b16 %v7800
    %v8702 = vunpack.c.l.b16 %v7801
    %v8703 = vunpack.c.h.b16 %v7801
    %v8704 = vunpack.c.l.b16 %v7802
    %v8705 = vunpack.c.h.b16 %v7802
    %v8706 = vunpack.c.l.b16 %v7803
    %v8707 = vunpack.c.h.b16 %v7803
    %v8708 = vunpack.c.l.b16 %v7804
    %v8709 = vunpack.c.h.b16 %v7804
    %v8710 = vunpack.c.l.b16 %v7805
    %v8711 = vunpack.c.h.b16 %v7805
    %v8712 = vunpack.c.l.b16 %v7806
    %v8713 = vunpack.c.h.b16 %v7806
    %v8714 = vunpack.c.l.b16 %v7807
    %v8715 = vunpack.c.h.b16 %v7807
    %v8716 = vunpack.c.l.b16 %v7808
    %v8717 = vunpack.c.h.b16 %v7808
    %v8718 = vunpack.c.l.b16 %v7809
    %v8719 = vunpack.c.h.b16 %v7809
    %v8720 = vunpack.c.l.b16 %v7810
    %v8721 = vunpack.c.h.b16 %v7810
    %v8722 = vunpack.c.l.b16 %v7811
    %v8723 = vunpack.c.h.b16 %v7811
    %v8724 = vunpack.c.l.b16 %v7812
    %v8725 = vunpack.c.h.b16 %v7812
    %v8726 = vunpack.c.l.b16 %v7813
    %v8727 = vunpack.c.h.b16 %v7813
    %v8728 = vunpack.c.l.b16 %v7814
    %v8729 = vunpack.c.h.b16 %v7814
    %v8730 = vunpack.c.l.b16 %v7815
    %v8731 = vunpack.c.h.b16 %v7815
    %v8732 = vunpack.c.l.b16 %v7816
    %v8733 = vunpack.c.h.b16 %v7816
    %v8734 = vunpack.c.l.b16 %v7817
    %v8735 = vunpack.c.h.b16 %v7817
    %v8736 = vunpack.c.l.b16 %v7818
    %v8737 = vunpack.c.h.b16 %v7818
    %v8738 = vunpack.c.l.b16 %v7819
    %v8739 = vunpack.c.h.b16 %v7819
    %v8740 = vunpack.c.l.b16 %v7820
    %v8741 = vunpack.c.h.b16 %v7820
    %v8742 = vunpack.c.l.b16 %v7821
    %v8743 = vunpack.c.h.b16 %v7821
    %v8744 = vunpack.c.l.b16 %v7822
    %v8745 = vunpack.c.h.b16 %v7822
    %v8746 = vunpack.c.l.b16 %v7823
    %v8747 = vunpack.c.h.b16 %v7823
    %v8748 = vunpack.c.l.b16 %v7824
    %v8749 = vunpack.c.h.b16 %v7824
    %v8750 = vunpack.c.l.b16 %v7825
    %v8751 = vunpack.c.h.b16 %v7825
    %v8752 = vunpack.c.l.b16 %v7826
    %v8753 = vunpack.c.h.b16 %v7826
    %v8754 = vunpack.c.l.b16 %v7827
    %v8755 = vunpack.c.h.b16 %v7827
    %v8756 = vunpack.c.l.b16 %v7828
    %v8757 = vunpack.c.h.b16 %v7828
    %v8758 = vunpack.c.l.b16 %v7829
    %v8759 = vunpack.c.h.b16 %v7829
    %v8760 = vunpack.c.l.b16 %v7830
    %v8761 = vunpack.c.h.b16 %v7830
    %v8762 = vunpack.c.l.b16 %v7831
    %v8763 = vunpack.c.h.b16 %v7831
    %v8764 = vunpack.c.l.b16 %v7832
    %v8765 = vunpack.c.h.b16 %v7832
    %v8766 = vunpack.c.l.b16 %v7833
    %v8767 = vunpack.c.h.b16 %v7833
    %v8768 = vunpack.c.l.b16 %v7834
    %v8769 = vunpack.c.h.b16 %v7834
    %v8770 = vunpack.c.l.b16 %v7835
    %v8771 = vunpack.c.h.b16 %v7835
    %v8772 = vunpack.c.l.b16 %v7836
    %v8773 = vunpack.c.h.b16 %v7836
    %v8774 = vunpack.c.l.b16 %v7837
    %v8775 = vunpack.c.h.b16 %v7837
    %v8776 = vunpack.c.l.b16 %v7838
    %v8777 = vunpack.c.h.b16 %v7838
    %v8778 = vunpack.c.l.b16 %v7839
    %v8779 = vunpack.c.h.b16 %v7839
    %v8780 = vunpack.c.l.b16 %v7840
    %v8781 = vunpack.c.h.b16 %v7840
    %v8782 = vunpack.c.l.b16 %v7841
    %v8783 = vunpack.c.h.b16 %v7841
    %v8784 = vunpack.c.l.b16 %v7842
    %v8785 = vunpack.c.h.b16 %v7842
    %v8786 = vunpack.c.l.b16 %v7843
    %v8787 = vunpack.c.h.b16 %v7843
    %v8788 = vunpack.c.l.b16 %v7844
    %v8789 = vunpack.c.h.b16 %v7844
    %v8790 = vunpack.c.l.b16 %v7845
    %v8791 = vunpack.c.h.b16 %v7845
    %v8792 = vunpack.c.l.b16 %v7846
    %v8793 = vunpack.c.h.b16 %v7846
    %v8794 = vunpack.c.l.b16 %v7847
    %v8795 = vunpack.c.h.b16 %v7847
    %v8796 = vunpack.c.l.b16 %v7848
    %v8797 = vunpack.c.h.b16 %v7848
    %v8798 = vunpack.c.l.b16 %v7849
    %v8799 = vunpack.c.h.b16 %v7849
    %v8800 = vunpack.c.l.b16 %v7850
    %v8801 = vunpack.c.h.b16 %v7850
    %v8802 = vunpack.c.l.b16 %v7851
    %v8803 = vunpack.c.h.b16 %v7851
    %v8804 = vunpack.c.l.b16 %v7852
    %v8805 = vunpack.c.h.b16 %v7852
    %v8806 = vunpack.c.l.b16 %v7853
    %v8807 = vunpack.c.h.b16 %v7853
    %v8808 = vunpack.c.l.b16 %v7854
    %v8809 = vunpack.c.h.b16 %v7854
    %v8810 = vunpack.c.l.b16 %v7855
    %v8811 = vunpack.c.h.b16 %v7855
    %v8812 = vunpack.c.l.b16 %v7856
    %v8813 = vunpack.c.h.b16 %v7856
    %v8814 = vunpack.c.l.b16 %v7857
    %v8815 = vunpack.c.h.b16 %v7857
    %v8816 = vunpack.c.l.b16 %v7858
    %v8817 = vunpack.c.h.b16 %v7858
    %v8818 = vunpack.c.l.b16 %v7859
    %v8819 = vunpack.c.h.b16 %v7859
    %v8820 = vunpack.c.l.b16 %v7860
    %v8821 = vunpack.c.h.b16 %v7860
    %v8822 = vunpack.c.l.b16 %v7861
    %v8823 = vunpack.c.h.b16 %v7861
    %v8824 = vunpack.c.l.b16 %v7862
    %v8825 = vunpack.c.h.b16 %v7862
    %v8826 = vunpack.c.l.b16 %v7863
    %v8827 = vunpack.c.h.b16 %v7863
    %v8828 = vunpack.c.l.b16 %v7864
    %v8829 = vunpack.c.h.b16 %v7864
    %v8830 = vunpack.c.l.b16 %v7865
    %v8831 = vunpack.c.h.b16 %v7865
    %v8832 = vunpack.c.l.b16 %v7866
    %v8833 = vunpack.c.h.b16 %v7866
    %v8834 = vunpack.c.l.b16 %v7867
    %v8835 = vunpack.c.h.b16 %v7867
    %v8836 = vunpack.c.l.b16 %v7868
    %v8837 = vunpack.c.h.b16 %v7868
    %v8838 = vunpack.c.l.b16 %v7869
    %v8839 = vunpack.c.h.b16 %v7869
    %v8840 = vunpack.c.l.b16 %v7870
    %v8841 = vunpack.c.h.b16 %v7870
    %v8842 = vunpack.c.l.b16 %v7871
    %v8843 = vunpack.c.h.b16 %v7871
    %v8844 = vunpack.c.l.b16 %v7872
    %v8845 = vunpack.c.h.b16 %v7872
    %v8846 = vunpack.c.l.b16 %v7873
    %v8847 = vunpack.c.h.b16 %v7873
    %v8848 = vunpack.c.l.b16 %v7874
    %v8849 = vunpack.c.h.b16 %v7874
    %v8850 = vunpack.c.l.b16 %v7875
    %v8851 = vunpack.c.h.b16 %v7875
    %v8852 = vunpack.c.l.b16 %v7876
    %v8853 = vunpack.c.h.b16 %v7876
    %v8854 = vunpack.c.l.b16 %v7877
    %v8855 = vunpack.c.h.b16 %v7877
    %v8856 = vunpack.c.l.b16 %v7878
    %v8857 = vunpack.c.h.b16 %v7878
    %v8858 = vunpack.c.l.b16 %v7879
    %v8859 = vunpack.c.h.b16 %v7879
    %v8860 = vunpack.c.l.b16 %v7880
    %v8861 = vunpack.c.h.b16 %v7880
    %v8862 = vunpack.c.l.b16 %v7881
    %v8863 = vunpack.c.h.b16 %v7881
    %v8864 = vunpack.c.l.b16 %v7882
    %v8865 = vunpack.c.h.b16 %v7882
    %v8866 = vunpack.c.l.b16 %v7883
    %v8867 = vunpack.c.h.b16 %v7883
    %v8868 = vunpack.c.l.b16 %v7884
    %v8869 = vunpack.c.h.b16 %v7884
    %v8870 = vunpack.c.l.b16 %v7885
    %v8871 = vunpack.c.h.b16 %v7885
    %v8872 = vunpack.c.l.b16 %v7886
    %v8873 = vunpack.c.h.b16 %v7886
    %v8874 = vunpack.c.l.b16 %v7887
    %v8875 = vunpack.c.h.b16 %v7887
    %v8876 = vunpack.c.l.b16 %v7888
    %v8877 = vunpack.c.h.b16 %v7888
    %v8878 = vunpack.c.l.b16 %v7889
    %v8879 = vunpack.c.h.b16 %v7889
    %v8880 = vunpack.c.l.b16 %v7890
    %v8881 = vunpack.c.h.b16 %v7890
    %v8882 = vunpack.c.l.b16 %v7891
    %v8883 = vunpack.c.h.b16 %v7891
    %v8884 = vunpack.c.l.b16 %v7892
    %v8885 = vunpack.c.h.b16 %v7892
    %v8886 = vunpack.c.l.b16 %v7893
    %v8887 = vunpack.c.h.b16 %v7893
    %v8888 = vunpack.c.l.b16 %v7894
    %v8889 = vunpack.c.h.b16 %v7894
    %v8890 = vunpack.c.l.b16 %v7895
    %v8891 = vunpack.c.h.b16 %v7895
    %v8892 = vunpack.c.l.b16 %v7896
    %v8893 = vunpack.c.h.b16 %v7896
    %v8894 = vunpack.c.l.b16 %v7897
    %v8895 = vunpack.c.h.b16 %v7897
    %v8896 = vunpack.c.l.b16 %v7898
    %v8897 = vunpack.c.h.b16 %v7898
    %v8898 = vunpack.c.l.b16 %v7899
    %v8899 = vunpack.c.h.b16 %v7899
    %v8900 = vunpack.c.l.b16 %v7900
    %v8901 = vunpack.c.h.b16 %v7900
    %v8902 = vunpack.c.l.b16 %v7901
    %v8903 = vunpack.c.h.b16 %v7901
    %v8904 = vunpack.c.l.b16 %v7902
    %v8905 = vunpack.c.h.b16 %v7902
    %v8906 = vunpack.c.l.b16 %v7903
    %v8907 = vunpack.c.h.b16 %v7903
    %v8908 = vunpack.c.l.b16 %v7904
    %v8909 = vunpack.c.h.b16 %v7904
    %v8910 = vunpack.c.l.b16 %v7905
    %v8911 = vunpack.c.h.b16 %v7905
    %v8912 = vunpack.c.l.b16 %v7906
    %v8913 = vunpack.c.h.b16 %v7906
    %v8914 = vunpack.c.l.b16 %v7907
    %v8915 = vunpack.c.h.b16 %v7907
    %v8916 = vunpack.c.l.b16 %v7908
    %v8917 = vunpack.c.h.b16 %v7908
    %v8918 = vunpack.c.l.b16 %v7909
    %v8919 = vunpack.c.h.b16 %v7909
    %v8920 = vunpack.c.l.b16 %v7910
    %v8921 = vunpack.c.h.b16 %v7910
    %v8922 = vunpack.c.l.b16 %v7911
    %v8923 = vunpack.c.h.b16 %v7911
    %v8924 = vunpack.c.l.b16 %v7912
    %v8925 = vunpack.c.h.b16 %v7912
    %v8926 = vunpack.c.l.b16 %v7913
    %v8927 = vunpack.c.h.b16 %v7913
    %v8928 = vunpack.c.l.b16 %v7914
    %v8929 = vunpack.c.h.b16 %v7914
    %v8930 = vunpack.c.l.b16 %v7915
    %v8931 = vunpack.c.h.b16 %v7915
    %v8932 = vunpack.c.l.b16 %v7916
    %v8933 = vunpack.c.h.b16 %v7916
    %v8934 = vunpack.c.l.b16 %v7917
    %v8935 = vunpack.c.h.b16 %v7917
    %v8936 = vunpack.c.l.b16 %v7918
    %v8937 = vunpack.c.h.b16 %v7918
    %v8938 = vunpack.c.l.b16 %v7919
    %v8939 = vunpack.c.h.b16 %v7919
    %v8940 = vunpack.c.l.b16 %v7920
    %v8941 = vunpack.c.h.b16 %v7920
    %v8942 = vunpack.c.l.b16 %v7921
    %v8943 = vunpack.c.h.b16 %v7921
    %v8944 = vunpack.c.l.b16 %v7922
    %v8945 = vunpack.c.h.b16 %v7922
    %v8946 = vunpack.c.l.b16 %v7923
    %v8947 = vunpack.c.h.b16 %v7923
    %v8948 = vunpack.c.l.b16 %v7924
    %v8949 = vunpack.c.h.b16 %v7924
    %v8950 = vunpack.c.l.b16 %v7925
    %v8951 = vunpack.c.h.b16 %v7925
    %v8952 = vunpack.c.l.b16 %v7926
    %v8953 = vunpack.c.h.b16 %v7926
    %v8954 = vunpack.c.l.b16 %v7927
    %v8955 = vunpack.c.h.b16 %v7927
    %v8956 = vunpack.c.l.b16 %v7928
    %v8957 = vunpack.c.h.b16 %v7928
    %v8958 = vunpack.c.l.b16 %v7929
    %v8959 = vunpack.c.h.b16 %v7929
    %v8960 = vunpack.c.l.b16 %v7930
    %v8961 = vunpack.c.h.b16 %v7930
    %v8962 = vunpack.c.l.b16 %v7931
    %v8963 = vunpack.c.h.b16 %v7931
    %v8964 = vunpack.c.l.b16 %v7932
    %v8965 = vunpack.c.h.b16 %v7932
    %v8966 = vunpack.c.l.b16 %v7933
    %v8967 = vunpack.c.h.b16 %v7933
    %v8968 = vunpack.c.l.b16 %v7934
    %v8969 = vunpack.c.h.b16 %v7934
    %v8970 = vunpack.c.l.b16 %v7935
    %v8971 = vunpack.c.h.b16 %v7935
    %v8972 = vunpack.c.l.b16 %v7936
    %v8973 = vunpack.c.h.b16 %v7936
    %v8974 = vunpack.c.l.b16 %v7937
    %v8975 = vunpack.c.h.b16 %v7937
    %v8976 = vunpack.c.l.b16 %v7938
    %v8977 = vunpack.c.h.b16 %v7938
    %v8978 = vunpack.c.l.b16 %v7939
    %v8979 = vunpack.c.h.b16 %v7939
    %v8980 = vunpack.c.l.b16 %v7940
    %v8981 = vunpack.c.h.b16 %v7940
    %v8982 = vunpack.c.l.b16 %v7941
    %v8983 = vunpack.c.h.b16 %v7941
    %v8984 = vunpack.c.l.b16 %v7942
    %v8985 = vunpack.c.h.b16 %v7942
    %v8986 = vunpack.c.l.b16 %v7943
    %v8987 = vunpack.c.h.b16 %v7943
    %v8988 = vunpack.c.l.b16 %v7944
    %v8989 = vunpack.c.h.b16 %v7944
    %v8990 = vunpack.c.l.b16 %v7945
    %v8991 = vunpack.c.h.b16 %v7945
    %v8992 = vunpack.c.l.b16 %v7946
    %v8993 = vunpack.c.h.b16 %v7946
    %v8994 = vunpack.c.l.b16 %v7947
    %v8995 = vunpack.c.h.b16 %v7947
    %v8996 = vunpack.c.l.b16 %v7948
    %v8997 = vunpack.c.h.b16 %v7948
    %v8998 = vunpack.c.l.b16 %v7949
    %v8999 = vunpack.c.h.b16 %v7949
    %v9000 = vunpack.c.l.b16 %v7950
    %v9001 = vunpack.c.h.b16 %v7950
    %v9002 = vunpack.c.l.b16 %v7951
    %v9003 = vunpack.c.h.b16 %v7951
    %v9004 = vunpack.c.l.b16 %v7952
    %v9005 = vunpack.c.h.b16 %v7952
    %v9006 = vunpack.c.l.b16 %v7953
    %v9007 = vunpack.c.h.b16 %v7953
    %v9008 = vunpack.c.l.b16 %v7954
    %v9009 = vunpack.c.h.b16 %v7954
    %v9010 = vunpack.c.l.b16 %v7955
    %v9011 = vunpack.c.h.b16 %v7955
    %v9012 = vunpack.c.l.b16 %v7956
    %v9013 = vunpack.c.h.b16 %v7956
    %v9014 = vunpack.c.l.b16 %v7957
    %v9015 = vunpack.c.h.b16 %v7957
    %v9016 = vunpack.c.l.b16 %v7958
    %v9017 = vunpack.c.h.b16 %v7958
    %v9018 = vunpack.c.l.b16 %v7959
    %v9019 = vunpack.c.h.b16 %v7959
    %v9020 = vunpack.c.l.b16 %v7960
    %v9021 = vunpack.c.h.b16 %v7960
    %v9022 = vunpack.c.l.b16 %v7961
    %v9023 = vunpack.c.h.b16 %v7961
    %v9024 = vunpack.c.l.b16 %v7962
    %v9025 = vunpack.c.h.b16 %v7962
    %v9026 = vunpack.c.l.b16 %v7963
    %v9027 = vunpack.c.h.b16 %v7963
    %v9028 = vunpack.c.l.b16 %v7964
    %v9029 = vunpack.c.h.b16 %v7964
    %v9030 = vunpack.c.l.b16 %v7965
    %v9031 = vunpack.c.h.b16 %v7965
    %v9032 = vunpack.c.l.b16 %v7966
    %v9033 = vunpack.c.h.b16 %v7966
    %v9034 = vunpack.c.l.b16 %v7967
    %v9035 = vunpack.c.h.b16 %v7967
    %v9036 = vunpack.c.l.b16 %v7968
    %v9037 = vunpack.c.h.b16 %v7968
    %v9038 = vunpack.c.l.b16 %v7969
    %v9039 = vunpack.c.h.b16 %v7969
    %v9040 = vunpack.c.l.b16 %v7970
    %v9041 = vunpack.c.h.b16 %v7970
    %v9042 = vunpack.c.l.b16 %v7971
    %v9043 = vunpack.c.h.b16 %v7971
    %v9044 = vunpack.c.l.b16 %v7972
    %v9045 = vunpack.c.h.b16 %v7972
    %v9046 = vunpack.c.l.b16 %v7973
    %v9047 = vunpack.c.h.b16 %v7973
    %v9048 = vunpack.c.l.b16 %v7974
    %v9049 = vunpack.c.h.b16 %v7974
    %v9050 = vunpack.c.l.b16 %v7975
    %v9051 = vunpack.c.h.b16 %v7975
    %v9052 = vunpack.c.l.b16 %v7976
    %v9053 = vunpack.c.h.b16 %v7976
    %v9054 = vunpack.c.l.b16 %v7977
    %v9055 = vunpack.c.h.b16 %v7977
    %v9056 = vunpack.c.l.b16 %v7978
    %v9057 = vunpack.c.h.b16 %v7978
    %v9058 = vunpack.c.l.b16 %v7979
    %v9059 = vunpack.c.h.b16 %v7979
    %v9060 = vunpack.c.l.b16 %v7980
    %v9061 = vunpack.c.h.b16 %v7980
    %v9062 = vunpack.c.l.b16 %v7981
    %v9063 = vunpack.c.h.b16 %v7981
    %v9064 = vunpack.c.l.b16 %v7982
    %v9065 = vunpack.c.h.b16 %v7982
    %v9066 = vunpack.c.l.b16 %v7983
    %v9067 = vunpack.c.h.b16 %v7983
    %v9068 = vunpack.c.l.b16 %v7984
    %v9069 = vunpack.c.h.b16 %v7984
    %v9070 = vunpack.c.l.b16 %v7985
    %v9071 = vunpack.c.h.b16 %v7985
    %v9072 = vunpack.c.l.b16 %v7986
    %v9073 = vunpack.c.h.b16 %v7986
    %v9074 = vunpack.c.l.b16 %v7987
    %v9075 = vunpack.c.h.b16 %v7987
    %v9076 = vunpack.c.l.b16 %v7988
    %v9077 = vunpack.c.h.b16 %v7988
    %v9078 = vunpack.c.l.b16 %v7989
    %v9079 = vunpack.c.h.b16 %v7989
    %v9080 = vunpack.c.l.b16 %v7990
    %v9081 = vunpack.c.h.b16 %v7990
    %v9082 = vunpack.c.l.b16 %v7991
    %v9083 = vunpack.c.h.b16 %v7991
    %v9084 = vunpack.c.l.b16 %v7992
    %v9085 = vunpack.c.h.b16 %v7992
    %v9086 = vunpack.c.l.b16 %v7993
    %v9087 = vunpack.c.h.b16 %v7993
    %v9088 = vunpack.c.l.b16 %v7994
    %v9089 = vunpack.c.h.b16 %v7994
    %v9090 = vunpack.c.l.b16 %v7995
    %v9091 = vunpack.c.h.b16 %v7995
    %v9092 = vunpack.c.l.b16 %v7996
    %v9093 = vunpack.c.h.b16 %v7996
    %v9094 = vunpack.c.l.b16 %v7997
    %v9095 = vunpack.c.h.b16 %v7997
    %v9096 = vunpack.c.l.b16 %v7998
    %v9097 = vunpack.c.h.b16 %v7998
    %v9098 = vunpack.c.l.b16 %v7999
    %v9099 = vunpack.c.h.b16 %v7999
    %v9100 = vunpack.c.l.b16 %v8000
    %v9101 = vunpack.c.h.b16 %v8000
    %v9102 = vunpack.c.l.b16 %v8001
    %v9103 = vunpack.c.h.b16 %v8001
    %v9104 = vunpack.c.l.b16 %v8002
    %v9105 = vunpack.c.h.b16 %v8002
    %v9106 = vunpack.c.l.b16 %v8003
    %v9107 = vunpack.c.h.b16 %v8003
    %v9108 = vunpack.c.l.b16 %v8004
    %v9109 = vunpack.c.h.b16 %v8004
    %v9110 = vunpack.c.l.b16 %v8005
    %v9111 = vunpack.c.h.b16 %v8005
    %v9112 = vunpack.c.l.b16 %v8006
    %v9113 = vunpack.c.h.b16 %v8006
    %v9114 = vunpack.c.l.b16 %v8007
    %v9115 = vunpack.c.h.b16 %v8007
    %v9116 = vunpack.c.l.b16 %v8008
    %v9117 = vunpack.c.h.b16 %v8008
    %v9118 = vunpack.c.l.b16 %v8009
    %v9119 = vunpack.c.h.b16 %v8009
    %v9120 = vunpack.c.l.b16 %v8010
    %v9121 = vunpack.c.h.b16 %v8010
    %v9122 = vunpack.c.l.b16 %v8011
    %v9123 = vunpack.c.h.b16 %v8011
    %v9124 = vunpack.c.l.b16 %v8012
    %v9125 = vunpack.c.h.b16 %v8012
    %v9126 = vunpack.c.l.b16 %v8013
    %v9127 = vunpack.c.h.b16 %v8013
    %v9128 = vunpack.c.l.b16 %v8014
    %v9129 = vunpack.c.h.b16 %v8014
    %v9130 = vunpack.c.l.b16 %v8015
    %v9131 = vunpack.c.h.b16 %v8015
    %v9132 = vunpack.c.l.b16 %v8016
    %v9133 = vunpack.c.h.b16 %v8016
    %v9134 = vunpack.c.l.b16 %v8017
    %v9135 = vunpack.c.h.b16 %v8017
    %v9136 = vunpack.c.l.b16 %v8018
    %v9137 = vunpack.c.h.b16 %v8018
    %v9138 = vunpack.c.l.b16 %v8019
    %v9139 = vunpack.c.h.b16 %v8019
    %v9140 = vunpack.c.l.b16 %v8020
    %v9141 = vunpack.c.h.b16 %v8020
    %v9142 = vunpack.c.l.b16 %v8021
    %v9143 = vunpack.c.h.b16 %v8021
    %v9144 = vunpack.c.l.b16 %v8022
    %v9145 = vunpack.c.h.b16 %v8022
    %v9146 = vunpack.c.l.b16 %v8023
    %v9147 = vunpack.c.h.b16 %v8023
    %v9148 = vunpack.c.l.b16 %v8024
    %v9149 = vunpack.c.h.b16 %v8024
    %v9150 = vunpack.c.l.b16 %v8025
    %v9151 = vunpack.c.h.b16 %v8025
    %v9152 = vunpack.c.l.b16 %v8026
    %v9153 = vunpack.c.h.b16 %v8026
    %v9154 = vunpack.c.l.b16 %v8027
    %v9155 = vunpack.c.h.b16 %v8027
    %v9156 = vunpack.c.l.b16 %v8028
    %v9157 = vunpack.c.h.b16 %v8028
    %v9158 = vunpack.c.l.b16 %v8029
    %v9159 = vunpack.c.h.b16 %v8029
    %v9160 = vunpack.c.l.b16 %v8030
    %v9161 = vunpack.c.h.b16 %v8030
    %v9162 = vunpack.c.l.b16 %v8031
    %v9163 = vunpack.c.h.b16 %v8031
    %v9164 = vunpack.c.l.b16 %v8032
    %v9165 = vunpack.c.h.b16 %v8032
    %v9166 = vunpack.c.l.b16 %v8033
    %v9167 = vunpack.c.h.b16 %v8033
    %v9168 = vunpack.c.l.b16 %v8034
    %v9169 = vunpack.c.h.b16 %v8034
    %v9170 = vunpack.c.l.b16 %v8035
    %v9171 = vunpack.c.h.b16 %v8035
    %v9172 = vunpack.c.l.b16 %v8036
    %v9173 = vunpack.c.h.b16 %v8036
    %v9174 = vunpack.c.l.b16 %v8037
    %v9175 = vunpack.c.h.b16 %v8037
    %v9176 = vunpack.c.l.b16 %v8038
    %v9177 = vunpack.c.h.b16 %v8038
    %v9178 = vunpack.c.l.b16 %v8039
    %v9179 = vunpack.c.h.b16 %v8039
    %v9180 = vunpack.c.l.b16 %v8040
    %v9181 = vunpack.c.h.b16 %v8040
    %v9182 = vunpack.c.l.b16 %v8041
    %v9183 = vunpack.c.h.b16 %v8041
    %v9184 = vunpack.c.l.b16 %v8042
    %v9185 = vunpack.c.h.b16 %v8042
    %v9186 = vunpack.c.l.b16 %v8043
    %v9187 = vunpack.c.h.b16 %v8043
    %v9188 = vunpack.c.l.b16 %v8044
    %v9189 = vunpack.c.h.b16 %v8044
    %v9190 = vunpack.c.l.b16 %v8045
    %v9191 = vunpack.c.h.b16 %v8045
    %v9192 = vunpack.c.l.b16 %v8046
    %v9193 = vunpack.c.h.b16 %v8046
    %v9194 = vunpack.c.l.b16 %v8047
    %v9195 = vunpack.c.h.b16 %v8047
    %v9196 = vunpack.c.l.b16 %v8048
    %v9197 = vunpack.c.h.b16 %v8048
    %v9198 = vunpack.c.l.b16 %v8049
    %v9199 = vunpack.c.h.b16 %v8049
    %v9200 = vunpack.c.l.b16 %v8050
    %v9201 = vunpack.c.h.b16 %v8050
    %v9202 = vunpack.c.l.b16 %v8051
    %v9203 = vunpack.c.h.b16 %v8051
    %v9204 = vpack.c.b16 %v8448, %v8436
    %v9205 = vpack.c.b16 %v8449, %v8437
    %v9206 = vpack.c.b16 %v8450, %v8438
    %v9207 = vpack.c.b16 %v8451, %v8439
    %v9208 = vpack.c.b16 %v8452, %v8440
    %v9209 = vpack.c.b16 %v8453, %v8441
    %v9210 = vpack.c.b16 %v8454, %v8442
    %v9211 = vpack.c.b16 %v8455, %v8443
    %v9212 = vpack.c.b16 %v8456, %v8444
    %v9213 = vpack.c.b16 %v8457, %v8445
    %v9214 = vpack.c.b16 %v8458, %v8446
    %v9215 = vpack.c.b16 %v8459, %v8447
    %v9216 = vpack.c.b16 %v8472, %v8460
    %v9217 = vpack.c.b16 %v8473, %v8461
    %v9218 = vpack.c.b16 %v8474, %v8462
    %v9219 = vpack.c.b16 %v8475, %v8463
    %v9220 = vpack.c.b16 %v8476, %v8464
    %v9221 = vpack.c.b16 %v8477, %v8465
    %v9222 = vpack.c.b16 %v8478, %v8466
    %v9223 = vpack.c.b16 %v8479, %v8467
    %v9224 = vpack.c.b16 %v8480, %v8468
    %v9225 = vpack.c.b16 %v8481, %v8469
    %v9226 = vpack.c.b16 %v8482, %v8470
    %v9227 = vpack.c.b16 %v8483, %v8471
    %v9228 = vpack.c.b16 %v8496, %v8484
    %v9229 = vpack.c.b16 %v8497, %v8485
    %v9230 = vpack.c.b16 %v8498, %v8486
    %v9231 = vpack.c.b16 %v8499, %v8487
    %v9232 = vpack.c.b16 %v8500, %v8488
    %v9233 = vpack.c.b16 %v8501, %v8489
    %v9234 = vpack.c.b16 %v8502, %v8490
    %v9235 = vpack.c.b16 %v8503, %v8491
    %v9236 = vpack.c.b16 %v8504, %v8492
    %v9237 = vpack.c.b16 %v8505, %v8493
    %v9238 = vpack.c.b16 %v8506, %v8494
    %v9239 = vpack.c.b16 %v8507, %v8495
    %v9240 = vpack.c.b16 %v8520, %v8508
    %v9241 = vpack.c.b16 %v8521, %v8509
    %v9242 = vpack.c.b16 %v8522, %v8510
    %v9243 = vpack.c.b16 %v8523, %v8511
    %v9244 = vpack.c.b16 %v8524, %v8512
    %v9245 = vpack.c.b16 %v8525, %v8513
    %v9246 = vpack.c.b16 %v8526, %v8514
    %v9247 = vpack.c.b16 %v8527, %v8515
    %v9248 = vpack.c.b16 %v8528, %v8516
    %v9249 = vpack.c.b16 %v8529, %v8517
    %v9250 = vpack.c.b16 %v8530, %v8518
    %v9251 = vpack.c.b16 %v8531, %v8519
    %v9252 = vpack.c.b16 %v8544, %v8532
    %v9253 = vpack.c.b16 %v8545, %v8533
    %v9254 = vpack.c.b16 %v8546, %v8534
    %v9255 = vpack.c.b16 %v8547, %v8535
    %v9256 = vpack.c.b16 %v8548, %v8536
    %v9257 = vpack.c.b16 %v8549, %v8537
    %v9258 = vpack.c.b16 %v8550, %v8538
    %v9259 = vpack.c.b16 %v8551, %v8539
    %v9260 = vpack.c.b16 %v8552, %v8540
    %v9261 = vpack.c.b16 %v8553, %v8541
    %v9262 = vpack.c.b16 %v8554, %v8542
    %v9263 = vpack.c.b16 %v8555, %v8543
    %v9264 = vpack.c.b16 %v8568, %v8556
    %v9265 = vpack.c.b16 %v8569, %v8557
    %v9266 = vpack.c.b16 %v8570, %v8558
    %v9267 = vpack.c.b16 %v8571, %v8559
    %v9268 = vpack.c.b16 %v8572, %v8560
    %v9269 = vpack.c.b16 %v8573, %v8561
    %v9270 = vpack.c.b16 %v8574, %v8562
    %v9271 = vpack.c.b16 %v8575, %v8563
    %v9272 = vpack.c.b16 %v8576, %v8564
    %v9273 = vpack.c.b16 %v8577, %v8565
    %v9274 = vpack.c.b16 %v8578, %v8566
    %v9275 = vpack.c.b16 %v8579, %v8567
    %v9276 = vpack.c.b16 %v8592, %v8580
    %v9277 = vpack.c.b16 %v8593, %v8581
    %v9278 = vpack.c.b16 %v8594, %v8582
    %v9279 = vpack.c.b16 %v8595, %v8583
    %v9280 = vpack.c.b16 %v8596, %v8584
    %v9281 = vpack.c.b16 %v8597, %v8585
    %v9282 = vpack.c.b16 %v8598, %v8586
    %v9283 = vpack.c.b16 %v8599, %v8587
    %v9284 = vpack.c.b16 %v8600, %v8588
    %v9285 = vpack.c.b16 %v8601, %v8589
    %v9286 = vpack.c.b16 %v8602, %v8590
    %v9287 = vpack.c.b16 %v8603, %v8591
    %v9288 = vpack.c.b16 %v8616, %v8604
    %v9289 = vpack.c.b16 %v8617, %v8605
    %v9290 = vpack.c.b16 %v8618, %v8606
    %v9291 = vpack.c.b16 %v8619, %v8607
    %v9292 = vpack.c.b16 %v8620, %v8608
    %v9293 = vpack.c.b16 %v8621, %v8609
    %v9294 = vpack.c.b16 %v8622, %v8610
    %v9295 = vpack.c.b16 %v8623, %v8611
    %v9296 = vpack.c.b16 %v8624, %v8612
    %v9297 = vpack.c.b16 %v8625, %v8613
    %v9298 = vpack.c.b16 %v8626, %v8614
    %v9299 = vpack.c.b16 %v8627, %v8615
    %v9300 = vpack.c.b16 %v8640, %v8628
    %v9301 = vpack.c.b16 %v8641, %v8629
    %v9302 = vpack.c.b16 %v8642, %v8630
    %v9303 = vpack.c.b16 %v8643, %v8631
    %v9304 = vpack.c.b16 %v8644, %v8632
    %v9305 = vpack.c.b16 %v8645, %v8633
    %v9306 = vpack.c.b16 %v8646, %v8634
    %v9307 = vpack.c.b16 %v8647, %v8635
    %v9308 = vpack.c.b16 %v8648, %v8636
    %v9309 = vpack.c.b16 %v8649, %v8637
    %v9310 = vpack.c.b16 %v8650, %v8638
    %v9311 = vpack.c.b16 %v8651, %v8639
    %v9312 = vpack.c.b16 %v8664, %v8652
    %v9313 = vpack.c.b16 %v8665, %v8653
    %v9314 = vpack.c.b16 %v8666, %v8654
    %v9315 = vpack.c.b16 %v8667, %v8655
    %v9316 = vpack.c.b16 %v8668, %v8656
    %v9317 = vpack.c.b16 %v8669, %v8657
    %v9318 = vpack.c.b16 %v8670, %v8658
    %v9319 = vpack.c.b16 %v8671, %v8659
    %v9320 = vpack.c.b16 %v8672, %v8660
    %v9321 = vpack.c.b16 %v8673, %v8661
    %v9322 = vpack.c.b16 %v8674, %v8662
    %v9323 = vpack.c.b16 %v8675, %v8663
    %v9324 = vpack.c.b16 %v8688, %v8676
    %v9325 = vpack.c.b16 %v8689, %v8677
    %v9326 = vpack.c.b16 %v8690, %v8678
    %v9327 = vpack.c.b16 %v8691, %v8679
    %v9328 = vpack.c.b16 %v8692, %v8680
    %v9329 = vpack.c.b16 %v8693, %v8681
    %v9330 = vpack.c.b16 %v8694, %v8682
    %v9331 = vpack.c.b16 %v8695, %v8683
    %v9332 = vpack.c.b16 %v8696, %v8684
    %v9333 = vpack.c.b16 %v8697, %v8685
    %v9334 = vpack.c.b16 %v8698, %v8686
    %v9335 = vpack.c.b16 %v8699, %v8687
    %v9336 = vpack.c.b16 %v8712, %v8700
    %v9337 = vpack.c.b16 %v8713, %v8701
    %v9338 = vpack.c.b16 %v8714, %v8702
    %v9339 = vpack.c.b16 %v8715, %v8703
    %v9340 = vpack.c.b16 %v8716, %v8704
    %v9341 = vpack.c.b16 %v8717, %v8705
    %v9342 = vpack.c.b16 %v8718, %v8706
    %v9343 = vpack.c.b16 %v8719, %v8707
    %v9344 = vpack.c.b16 %v8720, %v8708
    %v9345 = vpack.c.b16 %v8721, %v8709
    %v9346 = vpack.c.b16 %v8722, %v8710
    %v9347 = vpack.c.b16 %v8723, %v8711
    %v9348 = vpack.c.b16 %v8736, %v8724
    %v9349 = vpack.c.b16 %v8737, %v8725
    %v9350 = vpack.c.b16 %v8738, %v8726
    %v9351 = vpack.c.b16 %v8739, %v8727
    %v9352 = vpack.c.b16 %v8740, %v8728
    %v9353 = vpack.c.b16 %v8741, %v8729
    %v9354 = vpack.c.b16 %v8742, %v8730
    %v9355 = vpack.c.b16 %v8743, %v8731
    %v9356 = vpack.c.b16 %v8744, %v8732
    %v9357 = vpack.c.b16 %v8745, %v8733
    %v9358 = vpack.c.b16 %v8746, %v8734
    %v9359 = vpack.c.b16 %v8747, %v8735
    %v9360 = vpack.c.b16 %v8760, %v8748
    %v9361 = vpack.c.b16 %v8761, %v8749
    %v9362 = vpack.c.b16 %v8762, %v8750
    %v9363 = vpack.c.b16 %v8763, %v8751
    %v9364 = vpack.c.b16 %v8764, %v8752
    %v9365 = vpack.c.b16 %v8765, %v8753
    %v9366 = vpack.c.b16 %v8766, %v8754
    %v9367 = vpack.c.b16 %v8767, %v8755
    %v9368 = vpack.c.b16 %v8768, %v8756
    %v9369 = vpack.c.b16 %v8769, %v8757
    %v9370 = vpack.c.b16 %v8770, %v8758
    %v9371 = vpack.c.b16 %v8771, %v8759
    %v9372 = vpack.c.b16 %v8784, %v8772
    %v9373 = vpack.c.b16 %v8785, %v8773
    %v9374 = vpack.c.b16 %v8786, %v8774
    %v9375 = vpack.c.b16 %v8787, %v8775
    %v9376 = vpack.c.b16 %v8788, %v8776
    %v9377 = vpack.c.b16 %v8789, %v8777
    %v9378 = vpack.c.b16 %v8790, %v8778
    %v9379 = vpack.c.b16 %v8791, %v8779
    %v9380 = vpack.c.b16 %v8792, %v8780
    %v9381 = vpack.c.b16 %v8793, %v8781
    %v9382 = vpack.c.b16 %v8794, %v8782
    %v9383 = vpack.c.b16 %v8795, %v8783
    %v9384 = vpack.c.b16 %v8808, %v8796
    %v9385 = vpack.c.b16 %v8809, %v8797
    %v9386 = vpack.c.b16 %v8810, %v8798
    %v9387 = vpack.c.b16 %v8811, %v8799
    %v9388 = vpack.c.b16 %v8812, %v8800
    %v9389 = vpack.c.b16 %v8813, %v8801
    %v9390 = vpack.c.b16 %v8814, %v8802
    %v9391 = vpack.c.b16 %v8815, %v8803
    %v9392 = vpack.c.b16 %v8816, %v8804
    %v9393 = vpack.c.b16 %v8817, %v8805
    %v9394 = vpack.c.b16 %v8818, %v8806
    %v9395 = vpack.c.b16 %v8819, %v8807
    %v9396 = vpack.c.b16 %v8832, %v8820
    %v9397 = vpack.c.b16 %v8833, %v8821
    %v9398 = vpack.c.b16 %v8834, %v8822
    %v9399 = vpack.c.b16 %v8835, %v8823
    %v9400 = vpack.c.b16 %v8836, %v8824
    %v9401 = vpack.c.b16 %v8837, %v8825
    %v9402 = vpack.c.b16 %v8838, %v8826
    %v9403 = vpack.c.b16 %v8839, %v8827
    %v9404 = vpack.c.b16 %v8840, %v8828
    %v9405 = vpack.c.b16 %v8841, %v8829
    %v9406 = vpack.c.b16 %v8842, %v8830
    %v9407 = vpack.c.b16 %v8843, %v8831
    %v9408 = vpack.c.b16 %v8856, %v8844
    %v9409 = vpack.c.b16 %v8857, %v8845
    %v9410 = vpack.c.b16 %v8858, %v8846
    %v9411 = vpack.c.b16 %v8859, %v8847
    %v9412 = vpack.c.b16 %v8860, %v8848
    %v9413 = vpack.c.b16 %v8861, %v8849
    %v9414 = vpack.c.b16 %v8862, %v8850
    %v9415 = vpack.c.b16 %v8863, %v8851
    %v9416 = vpack.c.b16 %v8864, %v8852
    %v9417 = vpack.c.b16 %v8865, %v8853
    %v9418 = vpack.c.b16 %v8866, %v8854
    %v9419 = vpack.c.b16 %v8867, %v8855
    %v9420 = vpack.c.b16 %v8880, %v8868
    %v9421 = vpack.c.b16 %v8881, %v8869
    %v9422 = vpack.c.b16 %v8882, %v8870
    %v9423 = vpack.c.b16 %v8883, %v8871
    %v9424 = vpack.c.b16 %v8884, %v8872
    %v9425 = vpack.c.b16 %v8885, %v8873
    %v9426 = vpack.c.b16 %v8886, %v8874
    %v9427 = vpack.c.b16 %v8887, %v8875
    %v9428 = vpack.c.b16 %v8888, %v8876
    %v9429 = vpack.c.b16 %v8889, %v8877
    %v9430 = vpack.c.b16 %v8890, %v8878
    %v9431 = vpack.c.b16 %v8891, %v8879
    %v9432 = vpack.c.b16 %v8904, %v8892
    %v9433 = vpack.c.b16 %v8905, %v8893
    %v9434 = vpack.c.b16 %v8906, %v8894
    %v9435 = vpack.c.b16 %v8907, %v8895
    %v9436 = vpack.c.b16 %v8908, %v8896
    %v9437 = vpack.c.b16 %v8909, %v8897
    %v9438 = vpack.c.b16 %v8910, %v8898
    %v9439 = vpack.c.b16 %v8911, %v8899
    %v9440 = vpack.c.b16 %v8912, %v8900
    %v9441 = vpack.c.b16 %v8913, %v8901
    %v9442 = vpack.c.b16 %v8914, %v8902
    %v9443 = vpack.c.b16 %v8915, %v8903
    %v9444 = vpack.c.b16 %v8928, %v8916
    %v9445 = vpack.c.b16 %v8929, %v8917
    %v9446 = vpack.c.b16 %v8930, %v8918
    %v9447 = vpack.c.b16 %v8931, %v8919
    %v9448 = vpack.c.b16 %v8932, %v8920
    %v9449 = vpack.c.b16 %v8933, %v8921
    %v9450 = vpack.c.b16 %v8934, %v8922
    %v9451 = vpack.c.b16 %v8935, %v8923
    %v9452 = vpack.c.b16 %v8936, %v8924
    %v9453 = vpack.c.b16 %v8937, %v8925
    %v9454 = vpack.c.b16 %v8938, %v8926
    %v9455 = vpack.c.b16 %v8939, %v8927
    %v9456 = vpack.c.b16 %v8952, %v8940
    %v9457 = vpack.c.b16 %v8953, %v8941
    %v9458 = vpack.c.b16 %v8954, %v8942
    %v9459 = vpack.c.b16 %v8955, %v8943
    %v9460 = vpack.c.b16 %v8956, %v8944
    %v9461 = vpack.c.b16 %v8957, %v8945
    %v9462 = vpack.c.b16 %v8958, %v8946
    %v9463 = vpack.c.b16 %v8959, %v8947
    %v9464 = vpack.c.b16 %v8960, %v8948
    %v9465 = vpack.c.b16 %v8961, %v8949
    %v9466 = vpack.c.b16 %v8962, %v8950
    %v9467 = vpack.c.b16 %v8963, %v8951
    %v9468 = vpack.c.b16 %v8976, %v8964
    %v9469 = vpack.c.b16 %v8977, %v8965
    %v9470 = vpack.c.b16 %v8978, %v8966
    %v9471 = vpack.c.b16 %v8979, %v8967
    %v9472 = vpack.c.b16 %v8980, %v8968
    %v9473 = vpack.c.b16 %v8981, %v8969
    %v9474 = vpack.c.b16 %v8982, %v8970
    %v9475 = vpack.c.b16 %v8983, %v8971
    %v9476 = vpack.c.b16 %v8984, %v8972
    %v9477 = vpack.c.b16 %v8985, %v8973
    %v9478 = vpack.c.b16 %v8986, %v8974
    %v9479 = vpack.c.b16 %v8987, %v8975
    %v9480 = vpack.c.b16 %v9000, %v8988
    %v9481 = vpack.c.b16 %v9001, %v8989
    %v9482 = vpack.c.b16 %v9002, %v8990
    %v9483 = vpack.c.b16 %v9003, %v8991
    %v9484 = vpack.c.b16 %v9004, %v8992
    %v9485 = vpack.c.b16 %v9005, %v8993
    %v9486 = vpack.c.b16 %v9006, %v8994
    %v9487 = vpack.c.b16 %v9007, %v8995
    %v9488 = vpack.c.b16 %v9008, %v8996
    %v9489 = vpack.c.b16 %v9009, %v8997
    %v9490 = vpack.c.b16 %v9010, %v8998
    %v9491 = vpack.c.b16 %v9011, %v8999
    %v9492 = vpack.c.b16 %v9024, %v9012
    %v9493 = vpack.c.b16 %v9025, %v9013
    %v9494 = vpack.c.b16 %v9026, %v9014
    %v9495 = vpack.c.b16 %v9027, %v9015
    %v9496 = vpack.c.b16 %v9028, %v9016
    %v9497 = vpack.c.b16 %v9029, %v9017
    %v9498 = vpack.c.b16 %v9030, %v9018
    %v9499 = vpack.c.b16 %v9031, %v9019
    %v9500 = vpack.c.b16 %v9032, %v9020
    %v9501 = vpack.c.b16 %v9033, %v9021
    %v9502 = vpack.c.b16 %v9034, %v9022
    %v9503 = vpack.c.b16 %v9035, %v9023
    %v9504 = vpack.c.b16 %v9048, %v9036
    %v9505 = vpack.c.b16 %v9049, %v9037
    %v9506 = vpack.c.b16 %v9050, %v9038
    %v9507 = vpack.c.b16 %v9051, %v9039
    %v9508 = vpack.c.b16 %v9052, %v9040
    %v9509 = vpack.c.b16 %v9053, %v9041
    %v9510 = vpack.c.b16 %v9054, %v9042
    %v9511 = vpack.c.b16 %v9055, %v9043
    %v9512 = vpack.c.b16 %v9056, %v9044
    %v9513 = vpack.c.b16 %v9057, %v9045
    %v9514 = vpack.c.b16 %v9058, %v9046
    %v9515 = vpack.c.b16 %v9059, %v9047
    %v9516 = vpack.c.b16 %v9072, %v9060
    %v9517 = vpack.c.b16 %v9073, %v9061
    %v9518 = vpack.c.b16 %v9074, %v9062
    %v9519 = vpack.c.b16 %v9075, %v9063
    %v9520 = vpack.c.b16 %v9076, %v9064
    %v9521 = vpack.c.b16 %v9077, %v9065
    %v9522 = vpack.c.b16 %v9078, %v9066
    %v9523 = vpack.c.b16 %v9079, %v9067
    %v9524 = vpack.c.b16 %v9080, %v9068
    %v9525 = vpack.c.b16 %v9081, %v9069
    %v9526 = vpack.c.b16 %v9082, %v9070
    %v9527 = vpack.c.b16 %v9083, %v9071
    %v9528 = vpack.c.b16 %v9096, %v9084
    %v9529 = vpack.c.b16 %v9097, %v9085
    %v9530 = vpack.c.b16 %v9098, %v9086
    %v9531 = vpack.c.b16 %v9099, %v9087
    %v9532 = vpack.c.b16 %v9100, %v9088
    %v9533 = vpack.c.b16 %v9101, %v9089
    %v9534 = vpack.c.b16 %v9102, %v9090
    %v9535 = vpack.c.b16 %v9103, %v9091
    %v9536 = vpack.c.b16 %v9104, %v9092
    %v9537 = vpack.c.b16 %v9105, %v9093
    %v9538 = vpack.c.b16 %v9106, %v9094
    %v9539 = vpack.c.b16 %v9107, %v9095
    %v9540 = vpack.c.b16 %v9120, %v9108
    %v9541 = vpack.c.b16 %v9121, %v9109
    %v9542 = vpack.c.b16 %v9122, %v9110
    %v9543 = vpack.c.b16 %v9123, %v9111
    %v9544 = vpack.c.b16 %v9124, %v9112
    %v9545 = vpack.c.b16 %v9125, %v9113
    %v9546 = vpack.c.b16 %v9126, %v9114
    %v9547 = vpack.c.b16 %v9127, %v9115
    %v9548 = vpack.c.b16 %v9128, %v9116
    %v9549 = vpack.c.b16 %v9129, %v9117
    %v9550 = vpack.c.b16 %v9130, %v9118
    %v9551 = vpack.c.b16 %v9131, %v9119
    %v9552 = vpack.c.b16 %v9144, %v9132
    %v9553 = vpack.c.b16 %v9145, %v9133
    %v9554 = vpack.c.b16 %v9146, %v9134
    %v9555 = vpack.c.b16 %v9147, %v9135
    %v9556 = vpack.c.b16 %v9148, %v9136
    %v9557 = vpack.c.b16 %v9149, %v9137
    %v9558 = vpack.c.b16 %v9150, %v9138
    %v9559 = vpack.c.b16 %v9151, %v9139
    %v9560 = vpack.c.b16 %v9152, %v9140
    %v9561 = vpack.c.b16 %v9153, %v9141
    %v9562 = vpack.c.b16 %v9154, %v9142
    %v9563 = vpack.c.b16 %v9155, %v9143
    %v9564 = vpack.c.b16 %v9168, %v9156
    %v9565 = vpack.c.b16 %v9169, %v9157
    %v9566 = vpack.c.b16 %v9170, %v9158
    %v9567 = vpack.c.b16 %v9171, %v9159
    %v9568 = vpack.c.b16 %v9172, %v9160
    %v9569 = vpack.c.b16 %v9173, %v9161
    %v9570 = vpack.c.b16 %v9174, %v9162
    %v9571 = vpack.c.b16 %v9175, %v9163
    %v9572 = vpack.c.b16 %v9176, %v9164
    %v9573 = vpack.c.b16 %v9177, %v9165
    %v9574 = vpack.c.b16 %v9178, %v9166
    %v9575 = vpack.c.b16 %v9179, %v9167
    %v9576 = vpack.c.b16 %v9192, %v9180
    %v9577 = vpack.c.b16 %v9193, %v9181
    %v9578 = vpack.c.b16 %v9194, %v9182
    %v9579 = vpack.c.b16 %v9195, %v9183
    %v9580 = vpack.c.b16 %v9196, %v9184
    %v9581 = vpack.c.b16 %v9197, %v9185
    %v9582 = vpack.c.b16 %v9198, %v9186
    %v9583 = vpack.c.b16 %v9199, %v9187
    %v9584 = vpack.c.b16 %v9200, %v9188
    %v9585 = vpack.c.b16 %v9201, %v9189
    %v9586 = vpack.c.b16 %v9202, %v9190
    %v9587 = vpack.c.b16 %v9203, %v9191
    %9972 = vmatprep.subr.bf16.mxu0 %v9205
    %9973 = vmatpush1.bf16.msra.mxu0 %v9204
    %9974 = vmatprep.subr.bf16.mxu0 %v9217
    %9975 = vmatpush1.bf16.msra.mxu0 %v9216
    %9976 = vmatprep.subr.bf16.mxu0 %v9229
    %9977 = vmatpush1.bf16.msra.mxu0 %v9228
    %9978 = vmatprep.subr.bf16.mxu0 %v9241
    %9979 = vmatpush1.bf16.msra.mxu0 %v9240
    %9980 = vmatprep.subr.bf16.mxu0 %v9253
    %9981 = vmatpush1.bf16.msra.mxu0 %v9252
    %9982 = vmatprep.subr.bf16.mxu0 %v9265
    %9983 = vmatpush1.bf16.msra.mxu0 %v9264
    %9984 = vmatprep.subr.bf16.mxu0 %v9277
    %9985 = vmatpush1.bf16.msra.mxu0 %v9276
    %9986 = vmatprep.subr.bf16.mxu0 %v9289
    %9987 = vmatpush1.bf16.msra.mxu0 %v9288
    %9988 = vmatprep.subr.bf16.mxu0 %v9301
    %9989 = vmatpush1.bf16.msra.mxu0 %v9300
    %9990 = vmatprep.subr.bf16.mxu0 %v9313
    %9991 = vmatpush1.bf16.msra.mxu0 %v9312
    %9992 = vmatprep.subr.bf16.mxu0 %v9325
    %9993 = vmatpush1.bf16.msra.mxu0 %v9324
    %9994 = vmatprep.subr.bf16.mxu0 %v9337
    %9995 = vmatpush1.bf16.msra.mxu0 %v9336
    %9996 = vmatprep.subr.bf16.mxu0 %v9349
    %9997 = vmatpush1.bf16.msra.mxu0 %v9348
    %9998 = vmatprep.subr.bf16.mxu0 %v9361
    %9999 = vmatpush1.bf16.msra.mxu0 %v9360
    %10000 = vmatprep.subr.bf16.mxu0 %v9373
    %10001 = vmatpush1.bf16.msra.mxu0 %v9372
    %10002 = vmatprep.subr.bf16.mxu0 %v9385
    %10003 = vmatpush1.bf16.msra.mxu0 %v9384
    %10004 = vmatprep.mubr.bf16.mxu0 %v7665
    %10005 = vmatmul.mubr.bf16.gmra.mrb[0].mxu0 %v7664
    %v10006 = vpop.f32.mrb[0].mxu0
    %v10007 = vadd.f32 0.0, %v10006
    %v10008 = vpop.f32.mrb[0].mxu0
    %v10009 = vadd.f32 0.0, %v10008
    %v10010 = vpop.f32.mrb[0].mxu0
    %v10011 = vpop.f32.mrb[0].mxu0
    %10012 = vdwg.mxu0
    %10013 = vmatprep.subr.bf16.mxu0 %v9397
    %10014 = vmatpush1.bf16.msra.mxu0 %v9396
    %10015 = vmatprep.subr.bf16.mxu0 %v9409
    %10016 = vmatpush1.bf16.msra.mxu0 %v9408
    %10017 = vmatprep.subr.bf16.mxu0 %v9421
    %10018 = vmatpush1.bf16.msra.mxu0 %v9420
    %10019 = vmatprep.subr.bf16.mxu0 %v9433
    %10020 = vmatpush1.bf16.msra.mxu0 %v9432
    %10021 = vmatprep.subr.bf16.mxu0 %v9445
    %10022 = vmatpush1.bf16.msra.mxu0 %v9444
    %10023 = vmatprep.subr.bf16.mxu0 %v9457
    %10024 = vmatpush1.bf16.msra.mxu0 %v9456
    %10025 = vmatprep.subr.bf16.mxu0 %v9469
    %10026 = vmatpush1.bf16.msra.mxu0 %v9468
    %10027 = vmatprep.subr.bf16.mxu0 %v9481
    %10028 = vmatpush1.bf16.msra.mxu0 %v9480
    %10029 = vmatprep.subr.bf16.mxu0 %v9493
    %10030 = vmatpush1.bf16.msra.mxu0 %v9492
    %10031 = vmatprep.subr.bf16.mxu0 %v9505
    %10032 = vmatpush1.bf16.msra.mxu0 %v9504
    %10033 = vmatprep.subr.bf16.mxu0 %v9517
    %10034 = vmatpush1.bf16.msra.mxu0 %v9516
    %10035 = vmatprep.subr.bf16.mxu0 %v9529
    %10036 = vmatpush1.bf16.msra.mxu0 %v9528
    %10037 = vmatprep.subr.bf16.mxu0 %v9541
    %10038 = vmatpush1.bf16.msra.mxu0 %v9540
    %10039 = vmatprep.subr.bf16.mxu0 %v9553
    %10040 = vmatpush1.bf16.msra.mxu0 %v9552
    %10041 = vmatprep.subr.bf16.mxu0 %v9565
    %10042 = vmatpush1.bf16.msra.mxu0 %v9564
    %10043 = vmatprep.subr.bf16.mxu0 %v9577
    %10044 = vmatpush1.bf16.msra.mxu0 %v9576
    %10045 = vmatprep.mubr.bf16.mxu0 %v7667
    %10046 = vmatmul.mubr.bf16.gmra.mrb[0].mxu0 %v7666
    %v10047 = vpop.f32.mrb[0].mxu0
    %v10048 = vadd.f32 %v10007, %v10047
    %v10049 = vpop.f32.mrb[0].mxu0
    %v10050 = vadd.f32 %v10009, %v10049
    %v10051 = vpop.f32.mrb[0].mxu0
    %v10052 = vpop.f32.mrb[0].mxu0
    %10053 = vdwg.mxu0
    %10054 = vmatprep.subr.bf16.mxu0 %v9207
    %10055 = vmatpush1.bf16.msra.mxu0 %v9206
    %10056 = vmatprep.subr.bf16.mxu0 %v9219
    %10057 = vmatpush1.bf16.msra.mxu0 %v9218
    %10058 = vmatprep.subr.bf16.mxu0 %v9231
    %10059 = vmatpush1.bf16.msra.mxu0 %v9230
    %10060 = vmatprep.subr.bf16.mxu0 %v9243
    %10061 = vmatpush1.bf16.msra.mxu0 %v9242
    %10062 = vmatprep.subr.bf16.mxu0 %v9255
    %10063 = vmatpush1.bf16.msra.mxu0 %v9254
    %10064 = vmatprep.subr.bf16.mxu0 %v9267
    %10065 = vmatpush1.bf16.msra.mxu0 %v9266
    %10066 = vmatprep.subr.bf16.mxu0 %v9279
    %10067 = vmatpush1.bf16.msra.mxu0 %v9278
    %10068 = vmatprep.subr.bf16.mxu0 %v9291
    %10069 = vmatpush1.bf16.msra.mxu0 %v9290
    %10070 = vmatprep.subr.bf16.mxu0 %v9303
    %10071 = vmatpush1.bf16.msra.mxu0 %v9302
    %10072 = vmatprep.subr.bf16.mxu0 %v9315
    %10073 = vmatpush1.bf16.msra.mxu0 %v9314
    %10074 = vmatprep.subr.bf16.mxu0 %v9327
    %10075 = vmatpush1.bf16.msra.mxu0 %v9326
    %10076 = vmatprep.subr.bf16.mxu0 %v9339
    %10077 = vmatpush1.bf16.msra.mxu0 %v9338
    %10078 = vmatprep.subr.bf16.mxu0 %v9351
    %10079 = vmatpush1.bf16.msra.mxu0 %v9350
    %10080 = vmatprep.subr.bf16.mxu0 %v9363
    %10081 = vmatpush1.bf16.msra.mxu0 %v9362
    %10082 = vmatprep.subr.bf16.mxu0 %v9375
    %10083 = vmatpush1.bf16.msra.mxu0 %v9374
    %10084 = vmatprep.subr.bf16.mxu0 %v9387
    %10085 = vmatpush1.bf16.msra.mxu0 %v9386
    %10086 = vmatprep.mubr.bf16.mxu0 %v7665
    %10087 = vmatmul.mubr.bf16.gmra.mrb[0].mxu0 %v7664
    %v10088 = vpop.f32.mrb[0].mxu0
    %v10089 = vadd.f32 0.0, %v10088
    %v10090 = vpop.f32.mrb[0].mxu0
    %v10091 = vadd.f32 0.0, %v10090
    %v10092 = vpop.f32.mrb[0].mxu0
    %v10093 = vpop.f32.mrb[0].mxu0
    %10094 = vdwg.mxu0
    %10095 = vmatprep.subr.bf16.mxu0 %v9399
    %10096 = vmatpush1.bf16.msra.mxu0 %v9398
    %10097 = vmatprep.subr.bf16.mxu0 %v9411
    %10098 = vmatpush1.bf16.msra.mxu0 %v9410
    %10099 = vmatprep.subr.bf16.mxu0 %v9423
    %10100 = vmatpush1.bf16.msra.mxu0 %v9422
    %10101 = vmatprep.subr.bf16.mxu0 %v9435
    %10102 = vmatpush1.bf16.msra.mxu0 %v9434
    %10103 = vmatprep.subr.bf16.mxu0 %v9447
    %10104 = vmatpush1.bf16.msra.mxu0 %v9446
    %10105 = vmatprep.subr.bf16.mxu0 %v9459
    %10106 = vmatpush1.bf16.msra.mxu0 %v9458
    %10107 = vmatprep.subr.bf16.mxu0 %v9471
    %10108 = vmatpush1.bf16.msra.mxu0 %v9470
    %10109 = vmatprep.subr.bf16.mxu0 %v9483
    %10110 = vmatpush1.bf16.msra.mxu0 %v9482
    %10111 = vmatprep.subr.bf16.mxu0 %v9495
    %10112 = vmatpush1.bf16.msra.mxu0 %v9494
    %10113 = vmatprep.subr.bf16.mxu0 %v9507
    %10114 = vmatpush1.bf16.msra.mxu0 %v9506
    %10115 = vmatprep.subr.bf16.mxu0 %v9519
    %10116 = vmatpush1.bf16.msra.mxu0 %v9518
    %10117 = vmatprep.subr.bf16.mxu0 %v9531
    %10118 = vmatpush1.bf16.msra.mxu0 %v9530
    %10119 = vmatprep.subr.bf16.mxu0 %v9543
    %10120 = vmatpush1.bf16.msra.mxu0 %v9542
    %10121 = vmatprep.subr.bf16.mxu0 %v9555
    %10122 = vmatpush1.bf16.msra.mxu0 %v9554
    %10123 = vmatprep.subr.bf16.mxu0 %v9567
    %10124 = vmatpush1.bf16.msra.mxu0 %v9566
    %10125 = vmatprep.subr.bf16.mxu0 %v9579
    %10126 = vmatpush1.bf16.msra.mxu0 %v9578
    %10127 = vmatprep.mubr.bf16.mxu0 %v7667
    %10128 = vmatmul.mubr.bf16.gmra.mrb[0].mxu0 %v7666
    %v10129 = vpop.f32.mrb[0].mxu0
    %v10130 = vadd.f32 %v10089, %v10129
    %v10131 = vpop.f32.mrb[0].mxu0
    %v10132 = vadd.f32 %v10091, %v10131
    %v10133 = vpop.f32.mrb[0].mxu0
    %v10134 = vpop.f32.mrb[0].mxu0
    %10135 = vdwg.mxu0
    %10136 = vmatprep.subr.bf16.mxu0 %v9209
    %10137 = vmatpush1.bf16.msra.mxu0 %v9208
    %10138 = vmatprep.subr.bf16.mxu0 %v9221
    %10139 = vmatpush1.bf16.msra.mxu0 %v9220
    %10140 = vmatprep.subr.bf16.mxu0 %v9233
    %10141 = vmatpush1.bf16.msra.mxu0 %v9232
    %10142 = vmatprep.subr.bf16.mxu0 %v9245
    %10143 = vmatpush1.bf16.msra.mxu0 %v9244
    %10144 = vmatprep.subr.bf16.mxu0 %v9257
    %10145 = vmatpush1.bf16.msra.mxu0 %v9256
    %10146 = vmatprep.subr.bf16.mxu0 %v9269
    %10147 = vmatpush1.bf16.msra.mxu0 %v9268
    %10148 = vmatprep.subr.bf16.mxu0 %v9281
    %10149 = vmatpush1.bf16.msra.mxu0 %v9280
    %10150 = vmatprep.subr.bf16.mxu0 %v9293
    %10151 = vmatpush1.bf16.msra.mxu0 %v9292
    %10152 = vmatprep.subr.bf16.mxu0 %v9305
    %10153 = vmatpush1.bf16.msra.mxu0 %v9304
    %10154 = vmatprep.subr.bf16.mxu0 %v9317
    %10155 = vmatpush1.bf16.msra.mxu0 %v9316
    %10156 = vmatprep.subr.bf16.mxu0 %v9329
    %10157 = vmatpush1.bf16.msra.mxu0 %v9328
    %10158 = vmatprep.subr.bf16.mxu0 %v9341
    %10159 = vmatpush1.bf16.msra.mxu0 %v9340
    %10160 = vmatprep.subr.bf16.mxu0 %v9353
    %10161 = vmatpush1.bf16.msra.mxu0 %v9352
    %10162 = vmatprep.subr.bf16.mxu0 %v9365
    %10163 = vmatpush1.bf16.msra.mxu0 %v9364
    %10164 = vmatprep.subr.bf16.mxu0 %v9377
    %10165 = vmatpush1.bf16.msra.mxu0 %v9376
    %10166 = vmatprep.subr.bf16.mxu0 %v9389
    %10167 = vmatpush1.bf16.msra.mxu0 %v9388
    %10168 = vmatprep.mubr.bf16.mxu0 %v7665
    %10169 = vmatmul.mubr.bf16.gmra.mrb[0].mxu0 %v7664
    %v10170 = vpop.f32.mrb[0].mxu0
    %v10171 = vadd.f32 0.0, %v10170
    %v10172 = vpop.f32.mrb[0].mxu0
    %v10173 = vadd.f32 0.0, %v10172
    %v10174 = vpop.f32.mrb[0].mxu0
    %v10175 = vpop.f32.mrb[0].mxu0
    %10176 = vdwg.mxu0
    %10177 = vmatprep.subr.bf16.mxu0 %v9401
    %10178 = vmatpush1.bf16.msra.mxu0 %v9400
    %10179 = vmatprep.subr.bf16.mxu0 %v9413
    %10180 = vmatpush1.bf16.msra.mxu0 %v9412
    %10181 = vmatprep.subr.bf16.mxu0 %v9425
    %10182 = vmatpush1.bf16.msra.mxu0 %v9424
    %10183 = vmatprep.subr.bf16.mxu0 %v9437
    %10184 = vmatpush1.bf16.msra.mxu0 %v9436
    %10185 = vmatprep.subr.bf16.mxu0 %v9449
    %10186 = vmatpush1.bf16.msra.mxu0 %v9448
    %10187 = vmatprep.subr.bf16.mxu0 %v9461
    %10188 = vmatpush1.bf16.msra.mxu0 %v9460
    %10189 = vmatprep.subr.bf16.mxu0 %v9473
    %10190 = vmatpush1.bf16.msra.mxu0 %v9472
    %10191 = vmatprep.subr.bf16.mxu0 %v9485
    %10192 = vmatpush1.bf16.msra.mxu0 %v9484
    %10193 = vmatprep.subr.bf16.mxu0 %v9497
    %10194 = vmatpush1.bf16.msra.mxu0 %v9496
    %10195 = vmatprep.subr.bf16.mxu0 %v9509
    %10196 = vmatpush1.bf16.msra.mxu0 %v9508
    %10197 = vmatprep.subr.bf16.mxu0 %v9521
    %10198 = vmatpush1.bf16.msra.mxu0 %v9520
    %10199 = vmatprep.subr.bf16.mxu0 %v9533
    %10200 = vmatpush1.bf16.msra.mxu0 %v9532
    %10201 = vmatprep.subr.bf16.mxu0 %v9545
    %10202 = vmatpush1.bf16.msra.mxu0 %v9544
    %10203 = vmatprep.subr.bf16.mxu0 %v9557
    %10204 = vmatpush1.bf16.msra.mxu0 %v9556
    %10205 = vmatprep.subr.bf16.mxu0 %v9569
    %10206 = vmatpush1.bf16.msra.mxu0 %v9568
    %10207 = vmatprep.subr.bf16.mxu0 %v9581
    %10208 = vmatpush1.bf16.msra.mxu0 %v9580
    %10209 = vmatprep.mubr.bf16.mxu0 %v7667
    %10210 = vmatmul.mubr.bf16.gmra.mrb[0].mxu0 %v7666
    %v10211 = vpop.f32.mrb[0].mxu0
    %v10212 = vadd.f32 %v10171, %v10211
    %v10213 = vpop.f32.mrb[0].mxu0
    %v10214 = vadd.f32 %v10173, %v10213
    %v10215 = vpop.f32.mrb[0].mxu0
    %v10216 = vpop.f32.mrb[0].mxu0
    %10217 = vdwg.mxu0
    %10218 = vmatprep.subr.bf16.mxu0 %v9211
    %10219 = vmatpush1.bf16.msra.mxu0 %v9210
    %10220 = vmatprep.subr.bf16.mxu0 %v9223
    %10221 = vmatpush1.bf16.msra.mxu0 %v9222
    %10222 = vmatprep.subr.bf16.mxu0 %v9235
    %10223 = vmatpush1.bf16.msra.mxu0 %v9234
    %10224 = vmatprep.subr.bf16.mxu0 %v9247
    %10225 = vmatpush1.bf16.msra.mxu0 %v9246
    %10226 = vmatprep.subr.bf16.mxu0 %v9259
    %10227 = vmatpush1.bf16.msra.mxu0 %v9258
    %10228 = vmatprep.subr.bf16.mxu0 %v9271
    %10229 = vmatpush1.bf16.msra.mxu0 %v9270
    %10230 = vmatprep.subr.bf16.mxu0 %v9283
    %10231 = vmatpush1.bf16.msra.mxu0 %v9282
    %10232 = vmatprep.subr.bf16.mxu0 %v9295
    %10233 = vmatpush1.bf16.msra.mxu0 %v9294
    %10234 = vmatprep.subr.bf16.mxu0 %v9307
    %10235 = vmatpush1.bf16.msra.mxu0 %v9306
    %10236 = vmatprep.subr.bf16.mxu0 %v9319
    %10237 = vmatpush1.bf16.msra.mxu0 %v9318
    %10238 = vmatprep.subr.bf16.mxu0 %v9331
    %10239 = vmatpush1.bf16.msra.mxu0 %v9330
    %10240 = vmatprep.subr.bf16.mxu0 %v9343
    %10241 = vmatpush1.bf16.msra.mxu0 %v9342
    %10242 = vmatprep.subr.bf16.mxu0 %v9355
    %10243 = vmatpush1.bf16.msra.mxu0 %v9354
    %10244 = vmatprep.subr.bf16.mxu0 %v9367
    %10245 = vmatpush1.bf16.msra.mxu0 %v9366
    %10246 = vmatprep.subr.bf16.mxu0 %v9379
    %10247 = vmatpush1.bf16.msra.mxu0 %v9378
    %10248 = vmatprep.subr.bf16.mxu0 %v9391
    %10249 = vmatpush1.bf16.msra.mxu0 %v9390
    %10250 = vmatprep.mubr.bf16.mxu0 %v7665
    %10251 = vmatmul.mubr.bf16.gmra.mrb[0].mxu0 %v7664
    %v10252 = vpop.f32.mrb[0].mxu0
    %v10253 = vadd.f32 0.0, %v10252
    %v10254 = vpop.f32.mrb[0].mxu0
    %v10255 = vadd.f32 0.0, %v10254
    %v10256 = vpop.f32.mrb[0].mxu0
    %v10257 = vpop.f32.mrb[0].mxu0
    %10258 = vdwg.mxu0
    %10259 = vmatprep.subr.bf16.mxu0 %v9403
    %10260 = vmatpush1.bf16.msra.mxu0 %v9402
    %10261 = vmatprep.subr.bf16.mxu0 %v9415
    %10262 = vmatpush1.bf16.msra.mxu0 %v9414
    %10263 = vmatprep.subr.bf16.mxu0 %v9427
    %10264 = vmatpush1.bf16.msra.mxu0 %v9426
    %10265 = vmatprep.subr.bf16.mxu0 %v9439
    %10266 = vmatpush1.bf16.msra.mxu0 %v9438
    %10267 = vmatprep.subr.bf16.mxu0 %v9451
    %10268 = vmatpush1.bf16.msra.mxu0 %v9450
    %10269 = vmatprep.subr.bf16.mxu0 %v9463
    %10270 = vmatpush1.bf16.msra.mxu0 %v9462
    %10271 = vmatprep.subr.bf16.mxu0 %v9475
    %10272 = vmatpush1.bf16.msra.mxu0 %v9474
    %10273 = vmatprep.subr.bf16.mxu0 %v9487
    %10274 = vmatpush1.bf16.msra.mxu0 %v9486
    %10275 = vmatprep.subr.bf16.mxu0 %v9499
    %10276 = vmatpush1.bf16.msra.mxu0 %v9498
    %10277 = vmatprep.subr.bf16.mxu0 %v9511
    %10278 = vmatpush1.bf16.msra.mxu0 %v9510
    %10279 = vmatprep.subr.bf16.mxu0 %v9523
    %10280 = vmatpush1.bf16.msra.mxu0 %v9522
    %10281 = vmatprep.subr.bf16.mxu0 %v9535
    %10282 = vmatpush1.bf16.msra.mxu0 %v9534
    %10283 = vmatprep.subr.bf16.mxu0 %v9547
    %10284 = vmatpush1.bf16.msra.mxu0 %v9546
    %10285 = vmatprep.subr.bf16.mxu0 %v9559
    %10286 = vmatpush1.bf16.msra.mxu0 %v9558
    %10287 = vmatprep.subr.bf16.mxu0 %v9571
    %10288 = vmatpush1.bf16.msra.mxu0 %v9570
    %10289 = vmatprep.subr.bf16.mxu0 %v9583
    %10290 = vmatpush1.bf16.msra.mxu0 %v9582
    %10291 = vmatprep.mubr.bf16.mxu0 %v7667
    %10292 = vmatmul.mubr.bf16.gmra.mrb[0].mxu0 %v7666
    %v10293 = vpop.f32.mrb[0].mxu0
    %v10294 = vadd.f32 %v10253, %v10293
    %v10295 = vpop.f32.mrb[0].mxu0
    %v10296 = vadd.f32 %v10255, %v10295
    %v10297 = vpop.f32.mrb[0].mxu0
    %v10298 = vpop.f32.mrb[0].mxu0
    %10299 = vdwg.mxu0
    %10300 = vmatprep.subr.bf16.mxu0 %v9213
    %10301 = vmatpush1.bf16.msra.mxu0 %v9212
    %10302 = vmatprep.subr.bf16.mxu0 %v9225
    %10303 = vmatpush1.bf16.msra.mxu0 %v9224
    %10304 = vmatprep.subr.bf16.mxu0 %v9237
    %10305 = vmatpush1.bf16.msra.mxu0 %v9236
    %10306 = vmatprep.subr.bf16.mxu0 %v9249
    %10307 = vmatpush1.bf16.msra.mxu0 %v9248
    %10308 = vmatprep.subr.bf16.mxu0 %v9261
    %10309 = vmatpush1.bf16.msra.mxu0 %v9260
    %10310 = vmatprep.subr.bf16.mxu0 %v9273
    %10311 = vmatpush1.bf16.msra.mxu0 %v9272
    %10312 = vmatprep.subr.bf16.mxu0 %v9285
    %10313 = vmatpush1.bf16.msra.mxu0 %v9284
    %10314 = vmatprep.subr.bf16.mxu0 %v9297
    %10315 = vmatpush1.bf16.msra.mxu0 %v9296
    %10316 = vmatprep.subr.bf16.mxu0 %v9309
    %10317 = vmatpush1.bf16.msra.mxu0 %v9308
    %10318 = vmatprep.subr.bf16.mxu0 %v9321
    %10319 = vmatpush1.bf16.msra.mxu0 %v9320
    %10320 = vmatprep.subr.bf16.mxu0 %v9333
    %10321 = vmatpush1.bf16.msra.mxu0 %v9332
    %10322 = vmatprep.subr.bf16.mxu0 %v9345
    %10323 = vmatpush1.bf16.msra.mxu0 %v9344
    %10324 = vmatprep.subr.bf16.mxu0 %v9357
    %10325 = vmatpush1.bf16.msra.mxu0 %v9356
    %10326 = vmatprep.subr.bf16.mxu0 %v9369
    %10327 = vmatpush1.bf16.msra.mxu0 %v9368
    %10328 = vmatprep.subr.bf16.mxu0 %v9381
    %10329 = vmatpush1.bf16.msra.mxu0 %v9380
    %10330 = vmatprep.subr.bf16.mxu0 %v9393
    %10331 = vmatpush1.bf16.msra.mxu0 %v9392
    %10332 = vmatprep.mubr.bf16.mxu0 %v7665
    %10333 = vmatmul.mubr.bf16.gmra.mrb[0].mxu0 %v7664
    %v10334 = vpop.f32.mrb[0].mxu0
    %v10335 = vadd.f32 0.0, %v10334
    %v10336 = vpop.f32.mrb[0].mxu0
    %v10337 = vadd.f32 0.0, %v10336
    %v10338 = vpop.f32.mrb[0].mxu0
    %v10339 = vpop.f32.mrb[0].mxu0
    %10340 = vdwg.mxu0
    %10341 = vmatprep.subr.bf16.mxu0 %v9405
    %10342 = vmatpush1.bf16.msra.mxu0 %v9404
    %10343 = vmatprep.subr.bf16.mxu0 %v9417
    %10344 = vmatpush1.bf16.msra.mxu0 %v9416
    %10345 = vmatprep.subr.bf16.mxu0 %v9429
    %10346 = vmatpush1.bf16.msra.mxu0 %v9428
    %10347 = vmatprep.subr.bf16.mxu0 %v9441
    %10348 = vmatpush1.bf16.msra.mxu0 %v9440
    %10349 = vmatprep.subr.bf16.mxu0 %v9453
    %10350 = vmatpush1.bf16.msra.mxu0 %v9452
    %10351 = vmatprep.subr.bf16.mxu0 %v9465
    %10352 = vmatpush1.bf16.msra.mxu0 %v9464
    %10353 = vmatprep.subr.bf16.mxu0 %v9477
    %10354 = vmatpush1.bf16.msra.mxu0 %v9476
    %10355 = vmatprep.subr.bf16.mxu0 %v9489
    %10356 = vmatpush1.bf16.msra.mxu0 %v9488
    %10357 = vmatprep.subr.bf16.mxu0 %v9501
    %10358 = vmatpush1.bf16.msra.mxu0 %v9500
    %10359 = vmatprep.subr.bf16.mxu0 %v9513
    %10360 = vmatpush1.bf16.msra.mxu0 %v9512
    %10361 = vmatprep.subr.bf16.mxu0 %v9525
    %10362 = vmatpush1.bf16.msra.mxu0 %v9524
    %10363 = vmatprep.subr.bf16.mxu0 %v9537
    %10364 = vmatpush1.bf16.msra.mxu0 %v9536
    %10365 = vmatprep.subr.bf16.mxu0 %v9549
    %10366 = vmatpush1.bf16.msra.mxu0 %v9548
    %10367 = vmatprep.subr.bf16.mxu0 %v9561
    %10368 = vmatpush1.bf16.msra.mxu0 %v9560
    %10369 = vmatprep.subr.bf16.mxu0 %v9573
    %10370 = vmatpush1.bf16.msra.mxu0 %v9572
    %10371 = vmatprep.subr.bf16.mxu0 %v9585
    %10372 = vmatpush1.bf16.msra.mxu0 %v9584
    %10373 = vmatprep.mubr.bf16.mxu0 %v7667
    %10374 = vmatmul.mubr.bf16.gmra.mrb[0].mxu0 %v7666
    %v10375 = vpop.f32.mrb[0].mxu0
    %v10376 = vadd.f32 %v10335, %v10375
    %v10377 = vpop.f32.mrb[0].mxu0
    %v10378 = vadd.f32 %v10337, %v10377
    %v10379 = vpop.f32.mrb[0].mxu0
    %v10380 = vpop.f32.mrb[0].mxu0
    %10381 = vdwg.mxu0
    %10382 = vmatprep.subr.bf16.mxu0 %v9215
    %10383 = vmatpush1.bf16.msra.mxu0 %v9214
    %10384 = vmatprep.subr.bf16.mxu0 %v9227
    %10385 = vmatpush1.bf16.msra.mxu0 %v9226
    %10386 = vmatprep.subr.bf16.mxu0 %v9239
    %10387 = vmatpush1.bf16.msra.mxu0 %v9238
    %10388 = vmatprep.subr.bf16.mxu0 %v9251
    %10389 = vmatpush1.bf16.msra.mxu0 %v9250
    %10390 = vmatprep.subr.bf16.mxu0 %v9263
    %10391 = vmatpush1.bf16.msra.mxu0 %v9262
    %10392 = vmatprep.subr.bf16.mxu0 %v9275
    %10393 = vmatpush1.bf16.msra.mxu0 %v9274
    %10394 = vmatprep.subr.bf16.mxu0 %v9287
    %10395 = vmatpush1.bf16.msra.mxu0 %v9286
    %10396 = vmatprep.subr.bf16.mxu0 %v9299
    %10397 = vmatpush1.bf16.msra.mxu0 %v9298
    %10398 = vmatprep.subr.bf16.mxu0 %v9311
    %10399 = vmatpush1.bf16.msra.mxu0 %v9310
    %10400 = vmatprep.subr.bf16.mxu0 %v9323
    %10401 = vmatpush1.bf16.msra.mxu0 %v9322
    %10402 = vmatprep.subr.bf16.mxu0 %v9335
    %10403 = vmatpush1.bf16.msra.mxu0 %v9334
    %10404 = vmatprep.subr.bf16.mxu0 %v9347
    %10405 = vmatpush1.bf16.msra.mxu0 %v9346
    %10406 = vmatprep.subr.bf16.mxu0 %v9359
    %10407 = vmatpush1.bf16.msra.mxu0 %v9358
    %10408 = vmatprep.subr.bf16.mxu0 %v9371
    %10409 = vmatpush1.bf16.msra.mxu0 %v9370
    %10410 = vmatprep.subr.bf16.mxu0 %v9383
    %10411 = vmatpush1.bf16.msra.mxu0 %v9382
    %10412 = vmatprep.subr.bf16.mxu0 %v9395
    %10413 = vmatpush1.bf16.msra.mxu0 %v9394
    %10414 = vmatprep.mubr.bf16.mxu0 %v7665
    %10415 = vmatmul.mubr.bf16.gmra.mrb[0].mxu0 %v7664
    %v10416 = vpop.f32.mrb[0].mxu0
    %v10417 = vadd.f32 0.0, %v10416
    %v10418 = vpop.f32.mrb[0].mxu0
    %v10419 = vadd.f32 0.0, %v10418
    %v10420 = vpop.f32.mrb[0].mxu0
    %v10421 = vpop.f32.mrb[0].mxu0
    %10422 = vdwg.mxu0
    %10423 = vmatprep.subr.bf16.mxu0 %v9407
    %10424 = vmatpush1.bf16.msra.mxu0 %v9406
    %10425 = vmatprep.subr.bf16.mxu0 %v9419
    %10426 = vmatpush1.bf16.msra.mxu0 %v9418
    %10427 = vmatprep.subr.bf16.mxu0 %v9431
    %10428 = vmatpush1.bf16.msra.mxu0 %v9430
    %10429 = vmatprep.subr.bf16.mxu0 %v9443
    %10430 = vmatpush1.bf16.msra.mxu0 %v9442
    %10431 = vmatprep.subr.bf16.mxu0 %v9455
    %10432 = vmatpush1.bf16.msra.mxu0 %v9454
    %10433 = vmatprep.subr.bf16.mxu0 %v9467
    %10434 = vmatpush1.bf16.msra.mxu0 %v9466
    %10435 = vmatprep.subr.bf16.mxu0 %v9479
    %10436 = vmatpush1.bf16.msra.mxu0 %v9478
    %10437 = vmatprep.subr.bf16.mxu0 %v9491
    %10438 = vmatpush1.bf16.msra.mxu0 %v9490
    %10439 = vmatprep.subr.bf16.mxu0 %v9503
    %10440 = vmatpush1.bf16.msra.mxu0 %v9502
    %10441 = vmatprep.subr.bf16.mxu0 %v9515
    %10442 = vmatpush1.bf16.msra.mxu0 %v9514
    %10443 = vmatprep.subr.bf16.mxu0 %v9527
    %10444 = vmatpush1.bf16.msra.mxu0 %v9526
    %10445 = vmatprep.subr.bf16.mxu0 %v9539
    %10446 = vmatpush1.bf16.msra.mxu0 %v9538
    %10447 = vmatprep.subr.bf16.mxu0 %v9551
    %10448 = vmatpush1.bf16.msra.mxu0 %v9550
    %10449 = vmatprep.subr.bf16.mxu0 %v9563
    %10450 = vmatpush1.bf16.msra.mxu0 %v9562
    %10451 = vmatprep.subr.bf16.mxu0 %v9575
    %10452 = vmatpush1.bf16.msra.mxu0 %v9574
    %10453 = vmatprep.subr.bf16.mxu0 %v9587
    %10454 = vmatpush1.bf16.msra.mxu0 %v9586
    %10455 = vmatprep.mubr.bf16.mxu0 %v7667
    %10456 = vmatmul.mubr.bf16.gmra.mrb[0].mxu0 %v7666
    %v10457 = vpop.f32.mrb[0].mxu0
    %v10458 = vadd.f32 %v10417, %v10457
    %v10459 = vpop.f32.mrb[0].mxu0
    %v10460 = vadd.f32 %v10419, %v10459
    %v10461 = vpop.f32.mrb[0].mxu0
    %v10462 = vpop.f32.mrb[0].mxu0
    %10463 = vdwg.mxu0
    %v10464 = vld [vmem:[%s61] sm:$0xf]
    %v10466 = vlaneseq
    %v10467 = vshrl.u32 %v10466, 7
    %v10468 = vsub.s32 0, %v10467
    %v10469 = vrot.slane %v10464, %v10468
    %v10470 = vlaneseq
    %v10471 = vshrl.u32 %v10470, 7
    %v10472 = vsub.s32 1, %v10471
    %v10473 = vrot.slane %v10464, %v10472
    %v10474 = vlaneseq
    %v10475 = vshrl.u32 %v10474, 7
    %v10476 = vsub.s32 2, %v10475
    %v10477 = vrot.slane %v10464, %v10476
    %v10478 = vlaneseq
    %v10479 = vshrl.u32 %v10478, 7
    %v10480 = vsub.s32 3, %v10479
    %v10481 = vrot.slane %v10464, %v10480
    %v10486 = vadd.f32 %v10469, %v7660
    %v10487 = vadd.f32 %v10473, %v7661
    %v10488 = vadd.f32 %v10477, %v7662
    %v10489 = vadd.f32 %v10481, %v7663
    %v10490 = vld [vmem:[%s63] sm:$0x3]
    %vm10491 = vcmask 15360
    %v10493 = vsel %vm10491, %v10490, 0
    %vm10495 = vcmask 1041408
    %v10497 = vsel %vm10495, %v10048, 0
    %v10500 = vsel %vm10495, %v10050, 0
    %v10503 = vsel %vm10495, %v10130, 0
    %v10506 = vsel %vm10495, %v10132, 0
    %10508 = vmatprep.subr.mxu0 %v10500
    %10509 = vmatpush1.msra.mxu0 %v10497
    %10510 = vmatprep.subr.mxu0 0.0
    %10511 = vmatpush1.msra.mxu0 0.0
    %10512 = vmatprep.subr.mxu0 0.0
    %10513 = vmatpush1.msra.mxu0 0.0
    %10514 = vmatprep.subr.mxu0 0.0
    %10515 = vmatpush1.msra.mxu0 0.0
    %10516 = vmatprep.subr.mxu0 0.0
    %10517 = vmatpush1.msra.mxu0 0.0
    %10518 = vmatprep.subr.mxu0 0.0
    %10519 = vmatpush1.msra.mxu0 0.0
    %10520 = vmatprep.subr.mxu0 0.0
    %10521 = vmatpush1.msra.mxu0 0.0
    %10522 = vmatprep.subr.mxu0 0.0
    %10523 = vmatpush1.msra.mxu0 0.0
    %10524 = vmatprep.subr.mxu0 0.0
    %10525 = vmatpush1.msra.mxu0 0.0
    %10526 = vmatprep.subr.mxu0 0.0
    %10527 = vmatpush1.msra.mxu0 0.0
    %10528 = vmatprep.subr.mxu0 0.0
    %10529 = vmatpush1.msra.mxu0 0.0
    %10530 = vmatprep.subr.mxu0 0.0
    %10531 = vmatpush1.msra.mxu0 0.0
    %10532 = vmatprep.subr.mxu0 0.0
    %10533 = vmatpush1.msra.mxu0 0.0
    %10534 = vmatprep.subr.mxu0 0.0
    %10535 = vmatpush1.msra.mxu0 0.0
    %10536 = vmatprep.subr.mxu0 0.0
    %10537 = vmatpush1.msra.mxu0 0.0
    %10538 = vmatprep.subr.mxu0 0.0
    %10539 = vmatpush1.msra.mxu0 0.0
    %10540 = vmatprep.subr.mxu0 0.0
    %10541 = vmatpush1.msra.mxu0 0.0
    %10542 = vmatprep.subr.mxu0 0.0
    %10543 = vmatpush1.msra.mxu0 0.0
    %10544 = vmatprep.subr.mxu0 0.0
    %10545 = vmatpush1.msra.mxu0 0.0
    %10546 = vmatprep.subr.mxu0 0.0
    %10547 = vmatpush1.msra.mxu0 0.0
    %10548 = vmatprep.subr.mxu0 0.0
    %10549 = vmatpush1.msra.mxu0 0.0
    %10550 = vmatprep.subr.mxu0 0.0
    %10551 = vmatpush1.msra.mxu0 0.0
    %10552 = vmatprep.subr.mxu0 0.0
    %10553 = vmatpush1.msra.mxu0 0.0
    %10554 = vmatprep.subr.mxu0 0.0
    %10555 = vmatpush1.msra.mxu0 0.0
    %10556 = vmatprep.subr.mxu0 0.0
    %10557 = vmatpush1.msra.mxu0 0.0
    %10558 = vmatprep.subr.mxu0 0.0
    %10559 = vmatpush1.msra.mxu0 0.0
    %10560 = vmatprep.subr.mxu0 0.0
    %10561 = vmatpush1.msra.mxu0 0.0
    %10562 = vmatprep.subr.mxu0 0.0
    %10563 = vmatpush1.msra.mxu0 0.0
    %10564 = vmatprep.subr.mxu0 0.0
    %10565 = vmatpush1.msra.mxu0 0.0
    %10566 = vmatprep.subr.mxu0 0.0
    %10567 = vmatpush1.msra.mxu0 0.0
    %10568 = vmatprep.subr.mxu0 0.0
    %10569 = vmatpush1.msra.mxu0 0.0
    %10570 = vmatprep.subr.mxu0 0.0
    %10571 = vmatpush1.msra.mxu0 0.0
    %10572 = vmatprep.mubr.f32.mxu0 0.0
    %10573 = vmatmul.mubr.f32.gmra.mrb[0].mxu0 %v10493
    %v10574 = vpop.f32.mrb[0].mxu0
    %v10575 = vadd.f32 0.0, %v10574
    %v10576 = vpop.f32.mrb[0].mxu0
    %v10577 = vadd.f32 0.0, %v10576
    %10578 = vdwg.mxu0
    %10579 = vmatprep.subr.mxu0 %v10506
    %10580 = vmatpush1.msra.mxu0 %v10503
    %10581 = vmatprep.subr.mxu0 0.0
    %10582 = vmatpush1.msra.mxu0 0.0
    %10583 = vmatprep.subr.mxu0 0.0
    %10584 = vmatpush1.msra.mxu0 0.0
    %10585 = vmatprep.subr.mxu0 0.0
    %10586 = vmatpush1.msra.mxu0 0.0
    %10587 = vmatprep.subr.mxu0 0.0
    %10588 = vmatpush1.msra.mxu0 0.0
    %10589 = vmatprep.subr.mxu0 0.0
    %10590 = vmatpush1.msra.mxu0 0.0
    %10591 = vmatprep.subr.mxu0 0.0
    %10592 = vmatpush1.msra.mxu0 0.0
    %10593 = vmatprep.subr.mxu0 0.0
    %10594 = vmatpush1.msra.mxu0 0.0
    %10595 = vmatprep.subr.mxu0 0.0
    %10596 = vmatpush1.msra.mxu0 0.0
    %10597 = vmatprep.subr.mxu0 0.0
    %10598 = vmatpush1.msra.mxu0 0.0
    %10599 = vmatprep.subr.mxu0 0.0
    %10600 = vmatpush1.msra.mxu0 0.0
    %10601 = vmatprep.subr.mxu0 0.0
    %10602 = vmatpush1.msra.mxu0 0.0
    %10603 = vmatprep.subr.mxu0 0.0
    %10604 = vmatpush1.msra.mxu0 0.0
    %10605 = vmatprep.subr.mxu0 0.0
    %10606 = vmatpush1.msra.mxu0 0.0
    %10607 = vmatprep.subr.mxu0 0.0
    %10608 = vmatpush1.msra.mxu0 0.0
    %10609 = vmatprep.subr.mxu0 0.0
    %10610 = vmatpush1.msra.mxu0 0.0
    %10611 = vmatprep.subr.mxu0 0.0
    %10612 = vmatpush1.msra.mxu0 0.0
    %10613 = vmatprep.subr.mxu0 0.0
    %10614 = vmatpush1.msra.mxu0 0.0
    %10615 = vmatprep.subr.mxu0 0.0
    %10616 = vmatpush1.msra.mxu0 0.0
    %10617 = vmatprep.subr.mxu0 0.0
    %10618 = vmatpush1.msra.mxu0 0.0
    %10619 = vmatprep.subr.mxu0 0.0
    %10620 = vmatpush1.msra.mxu0 0.0
    %10621 = vmatprep.subr.mxu0 0.0
    %10622 = vmatpush1.msra.mxu0 0.0
    %10623 = vmatprep.subr.mxu0 0.0
    %10624 = vmatpush1.msra.mxu0 0.0
    %10625 = vmatprep.subr.mxu0 0.0
    %10626 = vmatpush1.msra.mxu0 0.0
    %10627 = vmatprep.subr.mxu0 0.0
    %10628 = vmatpush1.msra.mxu0 0.0
    %10629 = vmatprep.subr.mxu0 0.0
    %10630 = vmatpush1.msra.mxu0 0.0
    %10631 = vmatprep.subr.mxu0 0.0
    %10632 = vmatpush1.msra.mxu0 0.0
    %10633 = vmatprep.subr.mxu0 0.0
    %10634 = vmatpush1.msra.mxu0 0.0
    %10635 = vmatprep.subr.mxu0 0.0
    %10636 = vmatpush1.msra.mxu0 0.0
    %10637 = vmatprep.subr.mxu0 0.0
    %10638 = vmatpush1.msra.mxu0 0.0
    %10639 = vmatprep.subr.mxu0 0.0
    %10640 = vmatpush1.msra.mxu0 0.0
    %10641 = vmatprep.subr.mxu0 0.0
    %10642 = vmatpush1.msra.mxu0 0.0
    %10643 = vmatprep.mubr.f32.mxu0 0.0
    %10644 = vmatmul.mubr.f32.gmra.mrb[0].mxu0 %v10493
    %v10645 = vpop.f32.mrb[0].mxu0
    %v10646 = vadd.f32 0.0, %v10645
    %v10647 = vpop.f32.mrb[0].mxu0
    %v10648 = vadd.f32 0.0, %v10647
    %10649 = vdwg.mxu0
    %v10650 = vadd.f32 %v10486, %v10575
    %v10651 = vadd.f32 %v10487, %v10577
    %v10652 = vadd.f32 %v10488, %v10646
    %v10653 = vadd.f32 %v10489, %v10648
    %s10654 = scalar_lea.vmem %s63, 2
    %v10655 = vld [vmem:[%s10654] sm:$0x3]
    %v10657 = vsel %vm10491, %v10655, 0
    %v10660 = vsel %vm10495, %v10212, 0
    %v10663 = vsel %vm10495, %v10214, 0
    %v10666 = vsel %vm10495, %v10294, 0
    %v10669 = vsel %vm10495, %v10296, 0
    %10671 = vmatprep.subr.mxu0 %v10663
    %10672 = vmatpush1.msra.mxu0 %v10660
    %10673 = vmatprep.subr.mxu0 0.0
    %10674 = vmatpush1.msra.mxu0 0.0
    %10675 = vmatprep.subr.mxu0 0.0
    %10676 = vmatpush1.msra.mxu0 0.0
    %10677 = vmatprep.subr.mxu0 0.0
    %10678 = vmatpush1.msra.mxu0 0.0
    %10679 = vmatprep.subr.mxu0 0.0
    %10680 = vmatpush1.msra.mxu0 0.0
    %10681 = vmatprep.subr.mxu0 0.0
    %10682 = vmatpush1.msra.mxu0 0.0
    %10683 = vmatprep.subr.mxu0 0.0
    %10684 = vmatpush1.msra.mxu0 0.0
    %10685 = vmatprep.subr.mxu0 0.0
    %10686 = vmatpush1.msra.mxu0 0.0
    %10687 = vmatprep.subr.mxu0 0.0
    %10688 = vmatpush1.msra.mxu0 0.0
    %10689 = vmatprep.subr.mxu0 0.0
    %10690 = vmatpush1.msra.mxu0 0.0
    %10691 = vmatprep.subr.mxu0 0.0
    %10692 = vmatpush1.msra.mxu0 0.0
    %10693 = vmatprep.subr.mxu0 0.0
    %10694 = vmatpush1.msra.mxu0 0.0
    %10695 = vmatprep.subr.mxu0 0.0
    %10696 = vmatpush1.msra.mxu0 0.0
    %10697 = vmatprep.subr.mxu0 0.0
    %10698 = vmatpush1.msra.mxu0 0.0
    %10699 = vmatprep.subr.mxu0 0.0
    %10700 = vmatpush1.msra.mxu0 0.0
    %10701 = vmatprep.subr.mxu0 0.0
    %10702 = vmatpush1.msra.mxu0 0.0
    %10703 = vmatprep.subr.mxu0 0.0
    %10704 = vmatpush1.msra.mxu0 0.0
    %10705 = vmatprep.subr.mxu0 0.0
    %10706 = vmatpush1.msra.mxu0 0.0
    %10707 = vmatprep.subr.mxu0 0.0
    %10708 = vmatpush1.msra.mxu0 0.0
    %10709 = vmatprep.subr.mxu0 0.0
    %10710 = vmatpush1.msra.mxu0 0.0
    %10711 = vmatprep.subr.mxu0 0.0
    %10712 = vmatpush1.msra.mxu0 0.0
    %10713 = vmatprep.subr.mxu0 0.0
    %10714 = vmatpush1.msra.mxu0 0.0
    %10715 = vmatprep.subr.mxu0 0.0
    %10716 = vmatpush1.msra.mxu0 0.0
    %10717 = vmatprep.subr.mxu0 0.0
    %10718 = vmatpush1.msra.mxu0 0.0
    %10719 = vmatprep.subr.mxu0 0.0
    %10720 = vmatpush1.msra.mxu0 0.0
    %10721 = vmatprep.subr.mxu0 0.0
    %10722 = vmatpush1.msra.mxu0 0.0
    %10723 = vmatprep.subr.mxu0 0.0
    %10724 = vmatpush1.msra.mxu0 0.0
    %10725 = vmatprep.subr.mxu0 0.0
    %10726 = vmatpush1.msra.mxu0 0.0
    %10727 = vmatprep.subr.mxu0 0.0
    %10728 = vmatpush1.msra.mxu0 0.0
    %10729 = vmatprep.subr.mxu0 0.0
    %10730 = vmatpush1.msra.mxu0 0.0
    %10731 = vmatprep.subr.mxu0 0.0
    %10732 = vmatpush1.msra.mxu0 0.0
    %10733 = vmatprep.subr.mxu0 0.0
    %10734 = vmatpush1.msra.mxu0 0.0
    %10735 = vmatprep.mubr.f32.mxu0 0.0
    %10736 = vmatmul.mubr.f32.gmra.mrb[0].mxu0 %v10657
    %v10737 = vpop.f32.mrb[0].mxu0
    %v10738 = vadd.f32 0.0, %v10737
    %v10739 = vpop.f32.mrb[0].mxu0
    %v10740 = vadd.f32 0.0, %v10739
    %10741 = vdwg.mxu0
    %10742 = vmatprep.subr.mxu0 %v10669
    %10743 = vmatpush1.msra.mxu0 %v10666
    %10744 = vmatprep.subr.mxu0 0.0
    %10745 = vmatpush1.msra.mxu0 0.0
    %10746 = vmatprep.subr.mxu0 0.0
    %10747 = vmatpush1.msra.mxu0 0.0
    %10748 = vmatprep.subr.mxu0 0.0
    %10749 = vmatpush1.msra.mxu0 0.0
    %10750 = vmatprep.subr.mxu0 0.0
    %10751 = vmatpush1.msra.mxu0 0.0
    %10752 = vmatprep.subr.mxu0 0.0
    %10753 = vmatpush1.msra.mxu0 0.0
    %10754 = vmatprep.subr.mxu0 0.0
    %10755 = vmatpush1.msra.mxu0 0.0
    %10756 = vmatprep.subr.mxu0 0.0
    %10757 = vmatpush1.msra.mxu0 0.0
    %10758 = vmatprep.subr.mxu0 0.0
    %10759 = vmatpush1.msra.mxu0 0.0
    %10760 = vmatprep.subr.mxu0 0.0
    %10761 = vmatpush1.msra.mxu0 0.0
    %10762 = vmatprep.subr.mxu0 0.0
    %10763 = vmatpush1.msra.mxu0 0.0
    %10764 = vmatprep.subr.mxu0 0.0
    %10765 = vmatpush1.msra.mxu0 0.0
    %10766 = vmatprep.subr.mxu0 0.0
    %10767 = vmatpush1.msra.mxu0 0.0
    %10768 = vmatprep.subr.mxu0 0.0
    %10769 = vmatpush1.msra.mxu0 0.0
    %10770 = vmatprep.subr.mxu0 0.0
    %10771 = vmatpush1.msra.mxu0 0.0
    %10772 = vmatprep.subr.mxu0 0.0
    %10773 = vmatpush1.msra.mxu0 0.0
    %10774 = vmatprep.subr.mxu0 0.0
    %10775 = vmatpush1.msra.mxu0 0.0
    %10776 = vmatprep.subr.mxu0 0.0
    %10777 = vmatpush1.msra.mxu0 0.0
    %10778 = vmatprep.subr.mxu0 0.0
    %10779 = vmatpush1.msra.mxu0 0.0
    %10780 = vmatprep.subr.mxu0 0.0
    %10781 = vmatpush1.msra.mxu0 0.0
    %10782 = vmatprep.subr.mxu0 0.0
    %10783 = vmatpush1.msra.mxu0 0.0
    %10784 = vmatprep.subr.mxu0 0.0
    %10785 = vmatpush1.msra.mxu0 0.0
    %10786 = vmatprep.subr.mxu0 0.0
    %10787 = vmatpush1.msra.mxu0 0.0
    %10788 = vmatprep.subr.mxu0 0.0
    %10789 = vmatpush1.msra.mxu0 0.0
    %10790 = vmatprep.subr.mxu0 0.0
    %10791 = vmatpush1.msra.mxu0 0.0
    %10792 = vmatprep.subr.mxu0 0.0
    %10793 = vmatpush1.msra.mxu0 0.0
    %10794 = vmatprep.subr.mxu0 0.0
    %10795 = vmatpush1.msra.mxu0 0.0
    %10796 = vmatprep.subr.mxu0 0.0
    %10797 = vmatpush1.msra.mxu0 0.0
    %10798 = vmatprep.subr.mxu0 0.0
    %10799 = vmatpush1.msra.mxu0 0.0
    %10800 = vmatprep.subr.mxu0 0.0
    %10801 = vmatpush1.msra.mxu0 0.0
    %10802 = vmatprep.subr.mxu0 0.0
    %10803 = vmatpush1.msra.mxu0 0.0
    %10804 = vmatprep.subr.mxu0 0.0
    %10805 = vmatpush1.msra.mxu0 0.0
    %10806 = vmatprep.mubr.f32.mxu0 0.0
    %10807 = vmatmul.mubr.f32.gmra.mrb[0].mxu0 %v10657
    %v10808 = vpop.f32.mrb[0].mxu0
    %v10809 = vadd.f32 0.0, %v10808
    %v10810 = vpop.f32.mrb[0].mxu0
    %v10811 = vadd.f32 0.0, %v10810
    %10812 = vdwg.mxu0
    %v10813 = vadd.f32 %v10650, %v10738
    %v10814 = vadd.f32 %v10651, %v10740
    %v10815 = vadd.f32 %v10652, %v10809
    %v10816 = vadd.f32 %v10653, %v10811
    %s10817 = scalar_lea.vmem %s63, 4
    %v10818 = vld [vmem:[%s10817] sm:$0x3]
    %v10820 = vsel %vm10491, %v10818, 0
    %v10823 = vsel %vm10495, %v10376, 0
    %v10826 = vsel %vm10495, %v10378, 0
    %v10829 = vsel %vm10495, %v10458, 0
    %v10832 = vsel %vm10495, %v10460, 0
    %10834 = vmatprep.subr.mxu0 %v10826
    %10835 = vmatpush1.msra.mxu0 %v10823
    %10836 = vmatprep.subr.mxu0 0.0
    %10837 = vmatpush1.msra.mxu0 0.0
    %10838 = vmatprep.subr.mxu0 0.0
    %10839 = vmatpush1.msra.mxu0 0.0
    %10840 = vmatprep.subr.mxu0 0.0
    %10841 = vmatpush1.msra.mxu0 0.0
    %10842 = vmatprep.subr.mxu0 0.0
    %10843 = vmatpush1.msra.mxu0 0.0
    %10844 = vmatprep.subr.mxu0 0.0
    %10845 = vmatpush1.msra.mxu0 0.0
    %10846 = vmatprep.subr.mxu0 0.0
    %10847 = vmatpush1.msra.mxu0 0.0
    %10848 = vmatprep.subr.mxu0 0.0
    %10849 = vmatpush1.msra.mxu0 0.0
    %10850 = vmatprep.subr.mxu0 0.0
    %10851 = vmatpush1.msra.mxu0 0.0
    %10852 = vmatprep.subr.mxu0 0.0
    %10853 = vmatpush1.msra.mxu0 0.0
    %10854 = vmatprep.subr.mxu0 0.0
    %10855 = vmatpush1.msra.mxu0 0.0
    %10856 = vmatprep.subr.mxu0 0.0
    %10857 = vmatpush1.msra.mxu0 0.0
    %10858 = vmatprep.subr.mxu0 0.0
    %10859 = vmatpush1.msra.mxu0 0.0
    %10860 = vmatprep.subr.mxu0 0.0
    %10861 = vmatpush1.msra.mxu0 0.0
    %10862 = vmatprep.subr.mxu0 0.0
    %10863 = vmatpush1.msra.mxu0 0.0
    %10864 = vmatprep.subr.mxu0 0.0
    %10865 = vmatpush1.msra.mxu0 0.0
    %10866 = vmatprep.subr.mxu0 0.0
    %10867 = vmatpush1.msra.mxu0 0.0
    %10868 = vmatprep.subr.mxu0 0.0
    %10869 = vmatpush1.msra.mxu0 0.0
    %10870 = vmatprep.subr.mxu0 0.0
    %10871 = vmatpush1.msra.mxu0 0.0
    %10872 = vmatprep.subr.mxu0 0.0
    %10873 = vmatpush1.msra.mxu0 0.0
    %10874 = vmatprep.subr.mxu0 0.0
    %10875 = vmatpush1.msra.mxu0 0.0
    %10876 = vmatprep.subr.mxu0 0.0
    %10877 = vmatpush1.msra.mxu0 0.0
    %10878 = vmatprep.subr.mxu0 0.0
    %10879 = vmatpush1.msra.mxu0 0.0
    %10880 = vmatprep.subr.mxu0 0.0
    %10881 = vmatpush1.msra.mxu0 0.0
    %10882 = vmatprep.subr.mxu0 0.0
    %10883 = vmatpush1.msra.mxu0 0.0
    %10884 = vmatprep.subr.mxu0 0.0
    %10885 = vmatpush1.msra.mxu0 0.0
    %10886 = vmatprep.subr.mxu0 0.0
    %10887 = vmatpush1.msra.mxu0 0.0
    %10888 = vmatprep.subr.mxu0 0.0
    %10889 = vmatpush1.msra.mxu0 0.0
    %10890 = vmatprep.subr.mxu0 0.0
    %10891 = vmatpush1.msra.mxu0 0.0
    %10892 = vmatprep.subr.mxu0 0.0
    %10893 = vmatpush1.msra.mxu0 0.0
    %10894 = vmatprep.subr.mxu0 0.0
    %10895 = vmatpush1.msra.mxu0 0.0
    %10896 = vmatprep.subr.mxu0 0.0
    %10897 = vmatpush1.msra.mxu0 0.0
    %10898 = vmatprep.mubr.f32.mxu0 0.0
    %10899 = vmatmul.mubr.f32.gmra.mrb[0].mxu0 %v10820
    %v10900 = vpop.f32.mrb[0].mxu0
    %v10901 = vadd.f32 0.0, %v10900
    %v10902 = vpop.f32.mrb[0].mxu0
    %v10903 = vadd.f32 0.0, %v10902
    %10904 = vdwg.mxu0
    %10905 = vmatprep.subr.mxu0 %v10832
    %10906 = vmatpush1.msra.mxu0 %v10829
    %10907 = vmatprep.subr.mxu0 0.0
    %10908 = vmatpush1.msra.mxu0 0.0
    %10909 = vmatprep.subr.mxu0 0.0
    %10910 = vmatpush1.msra.mxu0 0.0
    %10911 = vmatprep.subr.mxu0 0.0
    %10912 = vmatpush1.msra.mxu0 0.0
    %10913 = vmatprep.subr.mxu0 0.0
    %10914 = vmatpush1.msra.mxu0 0.0
    %10915 = vmatprep.subr.mxu0 0.0
    %10916 = vmatpush1.msra.mxu0 0.0
    %10917 = vmatprep.subr.mxu0 0.0
    %10918 = vmatpush1.msra.mxu0 0.0
    %10919 = vmatprep.subr.mxu0 0.0
    %10920 = vmatpush1.msra.mxu0 0.0
    %10921 = vmatprep.subr.mxu0 0.0
    %10922 = vmatpush1.msra.mxu0 0.0
    %10923 = vmatprep.subr.mxu0 0.0
    %10924 = vmatpush1.msra.mxu0 0.0
    %10925 = vmatprep.subr.mxu0 0.0
    %10926 = vmatpush1.msra.mxu0 0.0
    %10927 = vmatprep.subr.mxu0 0.0
    %10928 = vmatpush1.msra.mxu0 0.0
    %10929 = vmatprep.subr.mxu0 0.0
    %10930 = vmatpush1.msra.mxu0 0.0
    %10931 = vmatprep.subr.mxu0 0.0
    %10932 = vmatpush1.msra.mxu0 0.0
    %10933 = vmatprep.subr.mxu0 0.0
    %10934 = vmatpush1.msra.mxu0 0.0
    %10935 = vmatprep.subr.mxu0 0.0
    %10936 = vmatpush1.msra.mxu0 0.0
    %10937 = vmatprep.subr.mxu0 0.0
    %10938 = vmatpush1.msra.mxu0 0.0
    %10939 = vmatprep.subr.mxu0 0.0
    %10940 = vmatpush1.msra.mxu0 0.0
    %10941 = vmatprep.subr.mxu0 0.0
    %10942 = vmatpush1.msra.mxu0 0.0
    %10943 = vmatprep.subr.mxu0 0.0
    %10944 = vmatpush1.msra.mxu0 0.0
    %10945 = vmatprep.subr.mxu0 0.0
    %10946 = vmatpush1.msra.mxu0 0.0
    %10947 = vmatprep.subr.mxu0 0.0
    %10948 = vmatpush1.msra.mxu0 0.0
    %10949 = vmatprep.subr.mxu0 0.0
    %10950 = vmatpush1.msra.mxu0 0.0
    %10951 = vmatprep.subr.mxu0 0.0
    %10952 = vmatpush1.msra.mxu0 0.0
    %10953 = vmatprep.subr.mxu0 0.0
    %10954 = vmatpush1.msra.mxu0 0.0
    %10955 = vmatprep.subr.mxu0 0.0
    %10956 = vmatpush1.msra.mxu0 0.0
    %10957 = vmatprep.subr.mxu0 0.0
    %10958 = vmatpush1.msra.mxu0 0.0
    %10959 = vmatprep.subr.mxu0 0.0
    %10960 = vmatpush1.msra.mxu0 0.0
    %10961 = vmatprep.subr.mxu0 0.0
    %10962 = vmatpush1.msra.mxu0 0.0
    %10963 = vmatprep.subr.mxu0 0.0
    %10964 = vmatpush1.msra.mxu0 0.0
    %10965 = vmatprep.subr.mxu0 0.0
    %10966 = vmatpush1.msra.mxu0 0.0
    %10967 = vmatprep.subr.mxu0 0.0
    %10968 = vmatpush1.msra.mxu0 0.0
    %10969 = vmatprep.mubr.f32.mxu0 0.0
    %10970 = vmatmul.mubr.f32.gmra.mrb[0].mxu0 %v10820
    %v10971 = vpop.f32.mrb[0].mxu0
    %v10972 = vadd.f32 0.0, %v10971
    %v10973 = vpop.f32.mrb[0].mxu0
    %v10974 = vadd.f32 0.0, %v10973
    %10975 = vdwg.mxu0
    %v10976 = vadd.f32 %v10813, %v10901
    %v10977 = vadd.f32 %v10814, %v10903
    %v10978 = vadd.f32 %v10815, %v10972
    %v10979 = vadd.f32 %v10816, %v10974
    %v10980 = vmax.f32 %v10976, 0.0
    %v10981 = vmax.f32 %v10977, 0.0
    %v10982 = vmax.f32 %v10978, 0.0
    %v10983 = vmax.f32 %v10979, 0.0
    %v10984 = vld [vmem:[%s65] sm:$0x3]
    %v10986 = vsel %vm10491, %v10984, 0
    %v10989 = vsel %vm10495, %v10980, 0
    %v10992 = vsel %vm10495, %v10981, 0
    %v10995 = vsel %vm10495, %v10982, 0
    %v10998 = vsel %vm10495, %v10983, 0
    %11000 = vmatprep.subr.mxu0 %v10992
    %11001 = vmatpush1.msra.mxu0 %v10989
    %11002 = vmatprep.subr.mxu0 0.0
    %11003 = vmatpush1.msra.mxu0 0.0
    %11004 = vmatprep.subr.mxu0 0.0
    %11005 = vmatpush1.msra.mxu0 0.0
    %11006 = vmatprep.subr.mxu0 0.0
    %11007 = vmatpush1.msra.mxu0 0.0
    %11008 = vmatprep.subr.mxu0 0.0
    %11009 = vmatpush1.msra.mxu0 0.0
    %11010 = vmatprep.subr.mxu0 0.0
    %11011 = vmatpush1.msra.mxu0 0.0
    %11012 = vmatprep.subr.mxu0 0.0
    %11013 = vmatpush1.msra.mxu0 0.0
    %11014 = vmatprep.subr.mxu0 0.0
    %11015 = vmatpush1.msra.mxu0 0.0
    %11016 = vmatprep.subr.mxu0 0.0
    %11017 = vmatpush1.msra.mxu0 0.0
    %11018 = vmatprep.subr.mxu0 0.0
    %11019 = vmatpush1.msra.mxu0 0.0
    %11020 = vmatprep.subr.mxu0 0.0
    %11021 = vmatpush1.msra.mxu0 0.0
    %11022 = vmatprep.subr.mxu0 0.0
    %11023 = vmatpush1.msra.mxu0 0.0
    %11024 = vmatprep.subr.mxu0 0.0
    %11025 = vmatpush1.msra.mxu0 0.0
    %11026 = vmatprep.subr.mxu0 0.0
    %11027 = vmatpush1.msra.mxu0 0.0
    %11028 = vmatprep.subr.mxu0 0.0
    %11029 = vmatpush1.msra.mxu0 0.0
    %11030 = vmatprep.subr.mxu0 0.0
    %11031 = vmatpush1.msra.mxu0 0.0
    %11032 = vmatprep.subr.mxu0 0.0
    %11033 = vmatpush1.msra.mxu0 0.0
    %11034 = vmatprep.subr.mxu0 0.0
    %11035 = vmatpush1.msra.mxu0 0.0
    %11036 = vmatprep.subr.mxu0 0.0
    %11037 = vmatpush1.msra.mxu0 0.0
    %11038 = vmatprep.subr.mxu0 0.0
    %11039 = vmatpush1.msra.mxu0 0.0
    %11040 = vmatprep.subr.mxu0 0.0
    %11041 = vmatpush1.msra.mxu0 0.0
    %11042 = vmatprep.subr.mxu0 0.0
    %11043 = vmatpush1.msra.mxu0 0.0
    %11044 = vmatprep.subr.mxu0 0.0
    %11045 = vmatpush1.msra.mxu0 0.0
    %11046 = vmatprep.subr.mxu0 0.0
    %11047 = vmatpush1.msra.mxu0 0.0
    %11048 = vmatprep.subr.mxu0 0.0
    %11049 = vmatpush1.msra.mxu0 0.0
    %11050 = vmatprep.subr.mxu0 0.0
    %11051 = vmatpush1.msra.mxu0 0.0
    %11052 = vmatprep.subr.mxu0 0.0
    %11053 = vmatpush1.msra.mxu0 0.0
    %11054 = vmatprep.subr.mxu0 0.0
    %11055 = vmatpush1.msra.mxu0 0.0
    %11056 = vmatprep.subr.mxu0 0.0
    %11057 = vmatpush1.msra.mxu0 0.0
    %11058 = vmatprep.subr.mxu0 0.0
    %11059 = vmatpush1.msra.mxu0 0.0
    %11060 = vmatprep.subr.mxu0 0.0
    %11061 = vmatpush1.msra.mxu0 0.0
    %11062 = vmatprep.subr.mxu0 0.0
    %11063 = vmatpush1.msra.mxu0 0.0
    %11064 = vmatprep.mubr.f32.mxu0 0.0
    %11065 = vmatmul.mubr.f32.gmra.mrb[0].mxu0 %v10986
    %v11066 = vpop.f32.mrb[0].mxu0
    %v11067 = vadd.f32 0.0, %v11066
    %v11068 = vpop.f32.mrb[0].mxu0
    %v11069 = vadd.f32 0.0, %v11068
    %11070 = vdwg.mxu0
    %11071 = vmatprep.subr.mxu0 %v10998
    %11072 = vmatpush1.msra.mxu0 %v10995
    %11073 = vmatprep.subr.mxu0 0.0
    %11074 = vmatpush1.msra.mxu0 0.0
    %11075 = vmatprep.subr.mxu0 0.0
    %11076 = vmatpush1.msra.mxu0 0.0
    %11077 = vmatprep.subr.mxu0 0.0
    %11078 = vmatpush1.msra.mxu0 0.0
    %11079 = vmatprep.subr.mxu0 0.0
    %11080 = vmatpush1.msra.mxu0 0.0
    %11081 = vmatprep.subr.mxu0 0.0
    %11082 = vmatpush1.msra.mxu0 0.0
    %11083 = vmatprep.subr.mxu0 0.0
    %11084 = vmatpush1.msra.mxu0 0.0
    %11085 = vmatprep.subr.mxu0 0.0
    %11086 = vmatpush1.msra.mxu0 0.0
    %11087 = vmatprep.subr.mxu0 0.0
    %11088 = vmatpush1.msra.mxu0 0.0
    %11089 = vmatprep.subr.mxu0 0.0
    %11090 = vmatpush1.msra.mxu0 0.0
    %11091 = vmatprep.subr.mxu0 0.0
    %11092 = vmatpush1.msra.mxu0 0.0
    %11093 = vmatprep.subr.mxu0 0.0
    %11094 = vmatpush1.msra.mxu0 0.0
    %11095 = vmatprep.subr.mxu0 0.0
    %11096 = vmatpush1.msra.mxu0 0.0
    %11097 = vmatprep.subr.mxu0 0.0
    %11098 = vmatpush1.msra.mxu0 0.0
    %11099 = vmatprep.subr.mxu0 0.0
    %11100 = vmatpush1.msra.mxu0 0.0
    %11101 = vmatprep.subr.mxu0 0.0
    %11102 = vmatpush1.msra.mxu0 0.0
    %11103 = vmatprep.subr.mxu0 0.0
    %11104 = vmatpush1.msra.mxu0 0.0
    %11105 = vmatprep.subr.mxu0 0.0
    %11106 = vmatpush1.msra.mxu0 0.0
    %11107 = vmatprep.subr.mxu0 0.0
    %11108 = vmatpush1.msra.mxu0 0.0
    %11109 = vmatprep.subr.mxu0 0.0
    %11110 = vmatpush1.msra.mxu0 0.0
    %11111 = vmatprep.subr.mxu0 0.0
    %11112 = vmatpush1.msra.mxu0 0.0
    %11113 = vmatprep.subr.mxu0 0.0
    %11114 = vmatpush1.msra.mxu0 0.0
    %11115 = vmatprep.subr.mxu0 0.0
    %11116 = vmatpush1.msra.mxu0 0.0
    %11117 = vmatprep.subr.mxu0 0.0
    %11118 = vmatpush1.msra.mxu0 0.0
    %11119 = vmatprep.subr.mxu0 0.0
    %11120 = vmatpush1.msra.mxu0 0.0
    %11121 = vmatprep.subr.mxu0 0.0
    %11122 = vmatpush1.msra.mxu0 0.0
    %11123 = vmatprep.subr.mxu0 0.0
    %11124 = vmatpush1.msra.mxu0 0.0
    %11125 = vmatprep.subr.mxu0 0.0
    %11126 = vmatpush1.msra.mxu0 0.0
    %11127 = vmatprep.subr.mxu0 0.0
    %11128 = vmatpush1.msra.mxu0 0.0
    %11129 = vmatprep.subr.mxu0 0.0
    %11130 = vmatpush1.msra.mxu0 0.0
    %11131 = vmatprep.subr.mxu0 0.0
    %11132 = vmatpush1.msra.mxu0 0.0
    %11133 = vmatprep.subr.mxu0 0.0
    %11134 = vmatpush1.msra.mxu0 0.0
    %11135 = vmatprep.mubr.f32.mxu0 0.0
    %11136 = vmatmul.mubr.f32.gmra.mrb[0].mxu0 %v10986
    %v11137 = vpop.f32.mrb[0].mxu0
    %v11138 = vadd.f32 0.0, %v11137
    %v11139 = vpop.f32.mrb[0].mxu0
    %v11140 = vadd.f32 0.0, %v11139
    %11141 = vdwg.mxu0
    %v11142 = vpack.c.bf16 %v11067, %v11067
    %v11143 = vpack.c.bf16 %v11069, %v11069
    %v11144 = vpack.c.bf16 %v11138, %v11138
    %v11145 = vpack.c.bf16 %v11140, %v11140
    %v11146 = vld [vmem:[%s67] sm:$0xf]
    %v11147 = vld [vmem:[%s67 + $0x4] sm:$0xf]
    %v11148 = vld [vmem:[%s67 + $0x8] sm:$0xf]
    %v11149 = vld [vmem:[%s67 + $0xc] sm:$0xf]
    %v11150 = vld [vmem:[%s67 + $0x10] sm:$0xf]
    %v11151 = vld [vmem:[%s67 + $0x14] sm:$0xf]
    %v11152 = vld [vmem:[%s67 + $0x18] sm:$0xf]
    %v11153 = vld [vmem:[%s67 + $0x1c] sm:$0xf]
    %v11154 = vld [vmem:[%s67 + $0x20] sm:$0xf]
    %v11155 = vld [vmem:[%s67 + $0x24] sm:$0xf]
    %v11156 = vld [vmem:[%s67 + $0x28] sm:$0xf]
    %v11157 = vld [vmem:[%s67 + $0x2c] sm:$0xf]
    %v11158 = vld [vmem:[%s67 + $0x30] sm:$0xf]
    %v11159 = vld [vmem:[%s67 + $0x34] sm:$0xf]
    %v11160 = vld [vmem:[%s67 + $0x38] sm:$0xf]
    %v11161 = vld [vmem:[%s67 + $0x3c] sm:$0xf]
    %v11162 = vld [vmem:[%s67 + $0x40] sm:$0xf]
    %v11163 = vld [vmem:[%s67 + $0x44] sm:$0xf]
    %v11164 = vld [vmem:[%s67 + $0x48] sm:$0xf]
    %v11165 = vld [vmem:[%s67 + $0x4c] sm:$0xf]
    %v11166 = vld [vmem:[%s67 + $0x50] sm:$0xf]
    %v11167 = vld [vmem:[%s67 + $0x54] sm:$0xf]
    %v11168 = vld [vmem:[%s67 + $0x58] sm:$0xf]
    %v11169 = vld [vmem:[%s67 + $0x5c] sm:$0xf]
    %v11170 = vld [vmem:[%s67 + $0x60] sm:$0xf]
    %v11171 = vld [vmem:[%s67 + $0x64] sm:$0xf]
    %v11172 = vld [vmem:[%s67 + $0x68] sm:$0xf]
    %v11173 = vld [vmem:[%s67 + $0x6c] sm:$0xf]
    %v11174 = vld [vmem:[%s67 + $0x70] sm:$0xf]
    %v11175 = vld [vmem:[%s67 + $0x74] sm:$0xf]
    %v11176 = vld [vmem:[%s67 + $0x78] sm:$0xf]
    %v11177 = vld [vmem:[%s67 + $0x7c] sm:$0xf]
    %v11178 = vld [vmem:[%s67 + $0x80] sm:$0xf]
    %v11179 = vld [vmem:[%s67 + $0x84] sm:$0xf]
    %v11180 = vld [vmem:[%s67 + $0x88] sm:$0xf]
    %v11181 = vld [vmem:[%s67 + $0x8c] sm:$0xf]
    %v11182 = vld [vmem:[%s67 + $0x90] sm:$0xf]
    %v11183 = vld [vmem:[%s67 + $0x94] sm:$0xf]
    %v11184 = vld [vmem:[%s67 + $0x98] sm:$0xf]
    %v11185 = vld [vmem:[%s67 + $0x9c] sm:$0xf]
    %v11186 = vld [vmem:[%s67 + $0xa0] sm:$0xf]
    %v11187 = vld [vmem:[%s67 + $0xa4] sm:$0xf]
    %v11188 = vld [vmem:[%s67 + $0xa8] sm:$0xf]
    %v11189 = vld [vmem:[%s67 + $0xac] sm:$0xf]
    %v11190 = vld [vmem:[%s67 + $0xb0] sm:$0xf]
    %v11191 = vld [vmem:[%s67 + $0xb4] sm:$0xf]
    %v11192 = vld [vmem:[%s67 + $0xb8] sm:$0xf]
    %v11193 = vld [vmem:[%s67 + $0xbc] sm:$0xf]
    %v11194 = vld [vmem:[%s67 + $0xc0] sm:$0xf]
    %v11195 = vld [vmem:[%s67 + $0xc4] sm:$0xf]
    %v11196 = vld [vmem:[%s67 + $0xc8] sm:$0xf]
    %v11197 = vld [vmem:[%s67 + $0xcc] sm:$0xf]
    %v11198 = vld [vmem:[%s67 + $0xd0] sm:$0xf]
    %v11199 = vld [vmem:[%s67 + $0xd4] sm:$0xf]
    %v11200 = vld [vmem:[%s67 + $0xd8] sm:$0xf]
    %v11201 = vld [vmem:[%s67 + $0xdc] sm:$0xf]
    %v11202 = vld [vmem:[%s67 + $0xe0] sm:$0xf]
    %v11203 = vld [vmem:[%s67 + $0xe4] sm:$0xf]
    %v11204 = vld [vmem:[%s67 + $0xe8] sm:$0xf]
    %v11205 = vld [vmem:[%s67 + $0xec] sm:$0xf]
    %v11206 = vld [vmem:[%s67 + $0xf0] sm:$0xf]
    %v11207 = vld [vmem:[%s67 + $0xf4] sm:$0xf]
    %v11208 = vld [vmem:[%s67 + $0xf8] sm:$0xf]
    %v11209 = vld [vmem:[%s67 + $0xfc] sm:$0xf]
    %v11210 = vld [vmem:[%s69] sm:$0x1]
    %v11212 = vlaneseq
    %v11213 = vshrl.u32 %v11212, 7
    %v11214 = vsub.s32 0, %v11213
    %v11215 = vrot.slane %v11210, %v11214
    %v11281 = vunpack.c.l.b16 %v11146
    %v11282 = vunpack.c.l.b16 %v11147
    %v11283 = vunpack.c.l.b16 %v11148
    %v11284 = vunpack.c.l.b16 %v11149
    %v11285 = vunpack.c.l.b16 %v11150
    %v11286 = vunpack.c.l.b16 %v11151
    %v11287 = vunpack.c.l.b16 %v11152
    %v11288 = vunpack.c.l.b16 %v11153
    %v11289 = vunpack.c.l.b16 %v11154
    %v11290 = vunpack.c.l.b16 %v11155
    %v11291 = vunpack.c.l.b16 %v11156
    %v11292 = vunpack.c.l.b16 %v11157
    %v11293 = vunpack.c.l.b16 %v11158
    %v11294 = vunpack.c.l.b16 %v11159
    %v11295 = vunpack.c.l.b16 %v11160
    %v11296 = vunpack.c.l.b16 %v11161
    %v11297 = vunpack.c.l.b16 %v11162
    %v11298 = vunpack.c.l.b16 %v11163
    %v11299 = vunpack.c.l.b16 %v11164
    %v11300 = vunpack.c.l.b16 %v11165
    %v11301 = vunpack.c.l.b16 %v11166
    %v11302 = vunpack.c.l.b16 %v11167
    %v11303 = vunpack.c.l.b16 %v11168
    %v11304 = vunpack.c.l.b16 %v11169
    %v11305 = vunpack.c.l.b16 %v11170
    %v11306 = vunpack.c.l.b16 %v11171
    %v11307 = vunpack.c.l.b16 %v11172
    %v11308 = vunpack.c.l.b16 %v11173
    %v11309 = vunpack.c.l.b16 %v11174
    %v11310 = vunpack.c.l.b16 %v11175
    %v11311 = vunpack.c.l.b16 %v11176
    %v11312 = vunpack.c.l.b16 %v11177
    %v11313 = vunpack.c.l.b16 %v11178
    %v11314 = vunpack.c.l.b16 %v11179
    %v11315 = vunpack.c.l.b16 %v11180
    %v11316 = vunpack.c.l.b16 %v11181
    %v11317 = vunpack.c.l.b16 %v11182
    %v11318 = vunpack.c.l.b16 %v11183
    %v11319 = vunpack.c.l.b16 %v11184
    %v11320 = vunpack.c.l.b16 %v11185
    %v11321 = vunpack.c.l.b16 %v11186
    %v11322 = vunpack.c.l.b16 %v11187
    %v11323 = vunpack.c.l.b16 %v11188
    %v11324 = vunpack.c.l.b16 %v11189
    %v11325 = vunpack.c.l.b16 %v11190
    %v11326 = vunpack.c.l.b16 %v11191
    %v11327 = vunpack.c.l.b16 %v11192
    %v11328 = vunpack.c.l.b16 %v11193
    %v11329 = vunpack.c.l.b16 %v11194
    %v11330 = vunpack.c.l.b16 %v11195
    %v11331 = vunpack.c.l.b16 %v11196
    %v11332 = vunpack.c.l.b16 %v11197
    %v11333 = vunpack.c.l.b16 %v11198
    %v11334 = vunpack.c.l.b16 %v11199
    %v11335 = vunpack.c.l.b16 %v11200
    %v11336 = vunpack.c.l.b16 %v11201
    %v11337 = vunpack.c.l.b16 %v11202
    %v11338 = vunpack.c.l.b16 %v11203
    %v11339 = vunpack.c.l.b16 %v11204
    %v11340 = vunpack.c.l.b16 %v11205
    %v11341 = vunpack.c.l.b16 %v11206
    %v11342 = vunpack.c.l.b16 %v11207
    %v11343 = vunpack.c.l.b16 %v11208
    %v11344 = vunpack.c.l.b16 %v11209
    %v11345 = vpack.c.b16 %v11282, %v11281
    %v11346 = vpack.c.b16 %v11284, %v11283
    %v11347 = vpack.c.b16 %v11286, %v11285
    %v11348 = vpack.c.b16 %v11288, %v11287
    %v11349 = vpack.c.b16 %v11290, %v11289
    %v11350 = vpack.c.b16 %v11292, %v11291
    %v11351 = vpack.c.b16 %v11294, %v11293
    %v11352 = vpack.c.b16 %v11296, %v11295
    %v11353 = vpack.c.b16 %v11298, %v11297
    %v11354 = vpack.c.b16 %v11300, %v11299
    %v11355 = vpack.c.b16 %v11302, %v11301
    %v11356 = vpack.c.b16 %v11304, %v11303
    %v11357 = vpack.c.b16 %v11306, %v11305
    %v11358 = vpack.c.b16 %v11308, %v11307
    %v11359 = vpack.c.b16 %v11310, %v11309
    %v11360 = vpack.c.b16 %v11312, %v11311
    %v11361 = vpack.c.b16 %v11314, %v11313
    %v11362 = vpack.c.b16 %v11316, %v11315
    %v11363 = vpack.c.b16 %v11318, %v11317
    %v11364 = vpack.c.b16 %v11320, %v11319
    %v11365 = vpack.c.b16 %v11322, %v11321
    %v11366 = vpack.c.b16 %v11324, %v11323
    %v11367 = vpack.c.b16 %v11326, %v11325
    %v11368 = vpack.c.b16 %v11328, %v11327
    %v11369 = vpack.c.b16 %v11330, %v11329
    %v11370 = vpack.c.b16 %v11332, %v11331
    %v11371 = vpack.c.b16 %v11334, %v11333
    %v11372 = vpack.c.b16 %v11336, %v11335
    %v11373 = vpack.c.b16 %v11338, %v11337
    %v11374 = vpack.c.b16 %v11340, %v11339
    %v11375 = vpack.c.b16 %v11342, %v11341
    %v11376 = vpack.c.b16 %v11344, %v11343
    %11409 = vmatprep.subr.bf16.mxu0 0
    %11410 = vmatpush1.bf16.msra.mxu0 %v11345
    %11411 = vmatprep.subr.bf16.mxu0 0
    %11412 = vmatpush1.bf16.msra.mxu0 %v11346
    %11413 = vmatprep.subr.bf16.mxu0 0
    %11414 = vmatpush1.bf16.msra.mxu0 %v11347
    %11415 = vmatprep.subr.bf16.mxu0 0
    %11416 = vmatpush1.bf16.msra.mxu0 %v11348
    %11417 = vmatprep.subr.bf16.mxu0 0
    %11418 = vmatpush1.bf16.msra.mxu0 %v11349
    %11419 = vmatprep.subr.bf16.mxu0 0
    %11420 = vmatpush1.bf16.msra.mxu0 %v11350
    %11421 = vmatprep.subr.bf16.mxu0 0
    %11422 = vmatpush1.bf16.msra.mxu0 %v11351
    %11423 = vmatprep.subr.bf16.mxu0 0
    %11424 = vmatpush1.bf16.msra.mxu0 %v11352
    %11425 = vmatprep.subr.bf16.mxu0 0
    %11426 = vmatpush1.bf16.msra.mxu0 %v11353
    %11427 = vmatprep.subr.bf16.mxu0 0
    %11428 = vmatpush1.bf16.msra.mxu0 %v11354
    %11429 = vmatprep.subr.bf16.mxu0 0
    %11430 = vmatpush1.bf16.msra.mxu0 %v11355
    %11431 = vmatprep.subr.bf16.mxu0 0
    %11432 = vmatpush1.bf16.msra.mxu0 %v11356
    %11433 = vmatprep.subr.bf16.mxu0 0
    %11434 = vmatpush1.bf16.msra.mxu0 %v11357
    %11435 = vmatprep.subr.bf16.mxu0 0
    %11436 = vmatpush1.bf16.msra.mxu0 %v11358
    %11437 = vmatprep.subr.bf16.mxu0 0
    %11438 = vmatpush1.bf16.msra.mxu0 %v11359
    %11439 = vmatprep.subr.bf16.mxu0 0
    %11440 = vmatpush1.bf16.msra.mxu0 %v11360
    %11441 = vmatprep.mubr.bf16.mxu0 %v11143
    %11442 = vmatmul.mubr.bf16.gmra.mrb[0].mxu0 %v11142
    %v11443 = vpop.f32.mrb[0].mxu0
    %v11444 = vadd.f32 %v11215, %v11443
    %v11445 = vpop.f32.mrb[0].mxu0
    %v11446 = vpop.f32.mrb[0].mxu0
    %v11447 = vpop.f32.mrb[0].mxu0
    %11448 = vdwg.mxu0
    %11449 = vmatprep.subr.bf16.mxu0 0
    %11450 = vmatpush1.bf16.msra.mxu0 %v11361
    %11451 = vmatprep.subr.bf16.mxu0 0
    %11452 = vmatpush1.bf16.msra.mxu0 %v11362
    %11453 = vmatprep.subr.bf16.mxu0 0
    %11454 = vmatpush1.bf16.msra.mxu0 %v11363
    %11455 = vmatprep.subr.bf16.mxu0 0
    %11456 = vmatpush1.bf16.msra.mxu0 %v11364
    %11457 = vmatprep.subr.bf16.mxu0 0
    %11458 = vmatpush1.bf16.msra.mxu0 %v11365
    %11459 = vmatprep.subr.bf16.mxu0 0
    %11460 = vmatpush1.bf16.msra.mxu0 %v11366
    %11461 = vmatprep.subr.bf16.mxu0 0
    %11462 = vmatpush1.bf16.msra.mxu0 %v11367
    %11463 = vmatprep.subr.bf16.mxu0 0
    %11464 = vmatpush1.bf16.msra.mxu0 %v11368
    %11465 = vmatprep.subr.bf16.mxu0 0
    %11466 = vmatpush1.bf16.msra.mxu0 %v11369
    %11467 = vmatprep.subr.bf16.mxu0 0
    %11468 = vmatpush1.bf16.msra.mxu0 %v11370
    %11469 = vmatprep.subr.bf16.mxu0 0
    %11470 = vmatpush1.bf16.msra.mxu0 %v11371
    %11471 = vmatprep.subr.bf16.mxu0 0
    %11472 = vmatpush1.bf16.msra.mxu0 %v11372
    %11473 = vmatprep.subr.bf16.mxu0 0
    %11474 = vmatpush1.bf16.msra.mxu0 %v11373
    %11475 = vmatprep.subr.bf16.mxu0 0
    %11476 = vmatpush1.bf16.msra.mxu0 %v11374
    %11477 = vmatprep.subr.bf16.mxu0 0
    %11478 = vmatpush1.bf16.msra.mxu0 %v11375
    %11479 = vmatprep.subr.bf16.mxu0 0
    %11480 = vmatpush1.bf16.msra.mxu0 %v11376
    %11481 = vmatprep.mubr.bf16.mxu0 %v11145
    %11482 = vmatmul.mubr.bf16.gmra.mrb[0].mxu0 %v11144
    %v11483 = vpop.f32.mrb[0].mxu0
    %v11484 = vadd.f32 %v11444, %v11483
    %v11485 = vpop.f32.mrb[0].mxu0
    %v11486 = vpop.f32.mrb[0].mxu0
    %v11487 = vpop.f32.mrb[0].mxu0
    %11488 = vdwg.mxu0
    %11489 = vst [vmem:[#allocation2] sm:$0x3] %v11484
    // Predicated region
    $region142: #{_lambda_.1} parent=1 // pred_check
      _
    $region143: #{_lambda_.1} parent=1 // pred_check_branch
      %11491 = sbr.rel (0) target = $region145
    $region144: #{_lambda_.1} parent=1 // pred_region
      %s11493 = ssub.s32 32, 32
      %11494 = vsyncadd [#allocation3], %s11493
      %s11496 = sshll.u32 [#allocation2], 4
      %s11497 = int_to_ptr.vmem [resolvable:$true] %s11496
      %11499 = dma.vmem_to_hbm [thread:$0]  %s11497, 32, %s71, [#allocation3]
    $region145: #{_lambda_.1} parent=1 // pred_fallthru
      _
    // Predicated region
    $region146: #{_lambda_.1} parent=1 // pred_check
      _
    $region147: #{_lambda_.1} parent=1 // pred_check_branch
      %11501 = sbr.rel (0) target = $region149
    $region148: #{_lambda_.1} parent=1 // pred_region
      %11502 = dma.done [#allocation3], 32
    $region149: #{_lambda_.1} parent=1 // pred_fallthru
      _
    %11503 = vsyncpa [#allocation3], 1

</llo_original>
